<compile_context>
chip_gen: v7x
topology: tpu7x:2x2x1
jax: 0.10.0
libtpu: 0.0.40
codegen_flags: <defaults>
</compile_context>

<pallas_src>
import numpy as np
import jax
import jax.numpy as jnp
from jax import lax
from jax.experimental import pallas as pl
from jax.experimental.pallas import tpu as pltpu


# -----------------------------------------------------------------------------
# Config (synthetic, small, but structurally identical to the pcdet module)
# -----------------------------------------------------------------------------
MODEL_CFG = dict(
    SA_CONFIG=dict(
        NPOINTS=[16, 8],
        RADIUS=[[0.5, 1.0], [1.0, 2.0]],
        NSAMPLE=[[8, 16], [8, 16]],
        MLPS=[[[8, 8, 16], [8, 8, 16]], [[16, 16, 32], [16, 16, 32]]],
        USE_XYZ=True,
    ),
    FP_MLPS=[[32, 32], [32, 32]],
)
INPUT_CHANNELS = 4          # [x, y, z, intensity]  -> channel_in = 1
BN_EPS = 1e-5


# -----------------------------------------------------------------------------
# Tiling helpers
# -----------------------------------------------------------------------------
def _round_up(x, m):
    return ((x + m - 1) // m) * m


def _choose_tile(m, cap):
    """One big row tile per call (v5e/v6e are single-TC: extra grid steps are
    pure serial-loop overhead).  On v7x a 2-way split only pays once per-step
    blocks are >= ~512 rows, which never happens at these sizes."""
    t = min(_round_up(max(m, 1), 8), cap)
    mp = _round_up(m, t)
    return t, mp


# -----------------------------------------------------------------------------
# Fused Pallas kernel: one or more "scales", each a chain of
# (matmul + folded-BN bias + ReLU) layers, optionally max-pooled over the
# nsample axis; all scale outputs concatenated and stored once.
# -----------------------------------------------------------------------------
def _make_fused_kernel(layer_counts, nsamples):
    num_scales = len(layer_counts)

    def kernel(*refs):
        o_ref = refs[-1]
        x_refs = refs[:num_scales]
        wb = refs[num_scales:-1]
        outs = []
        p = 0
        for s in range(num_scales):
            x = x_refs[s][...]                      # (t*ns, Cin) or (t, Cin)
            for l in range(layer_counts[s]):
                w = wb[p][...]
                b = wb[p + 1][...]
                p += 2
                ci, co = w.shape
                if l == 0 and ci <= 8:
                    # Tiny-K first layer: VPU broadcast-FMA instead of an
                    # almost-empty MXU pass (different VLIW slot, overlaps
                    # with the later wider matmuls).
                    rows = x.shape[0]
                    y = jnp.broadcast_to(b, (rows, co))
                    for k in range(ci):
                        y = y + x[:, k:k + 1] * w[k:k + 1, :]
                else:
                    y = jnp.dot(x, w, preferred_element_type=jnp.float32) + b
                x = jnp.maximum(y, 0.0)
            ns = nsamples[s]
            if ns is not None:
                cout = x.shape[-1]
                tg = x.shape[0] // ns
                x = jnp.max(x.reshape(tg, ns, cout), axis=1)
            outs.append(x)
        o_ref[...] = outs[0] if num_scales == 1 else jnp.concatenate(outs, axis=-1)

    return kernel


def _fused_mlp_call(xs, nsamples, scales_layers, *, cap):
    """Fused multi-scale MLP stack (+ optional nsample max-pool) in one
    pallas_call.

    xs[s]:            (G, ns_s, Cin_s) if nsamples[s] is not None,
                      else (G, Cin_s).
    nsamples[s]:      pool width or None (no pool).
    scales_layers[s]: list of (W_folded, bias); each layer = relu(x @ W + b).
    Returns (G, sum_s Cout_s).
    """
    G = xs[0].shape[0]
    t, Gp = _choose_tile(G, cap)

    args, in_specs = [], []
    for x, ns in zip(xs, nsamples):
        cin = x.shape[-1]
        rows_per_g = 1 if ns is None else ns
        # Group-major 2D layout in the WRAPPER (layout plumbing, not compute):
        # the kernel DMAs plain 2D blocks and never relayouts the big tile.
        x2d = x if ns is None else x.reshape(G * ns, cin)
        if Gp != G:
            x2d = jnp.pad(x2d, ((0, (Gp - G) * rows_per_g), (0, 0)))
        args.append(x2d)
        in_specs.append(pl.BlockSpec((t * rows_per_g, cin), lambda i: (i, 0)))

    for layers in scales_layers:
        for (W, b) in layers:
            ci, co = W.shape
            args.append(W)
            args.append(b.reshape(1, co))
            # TODO(synk): pipeline_mode=pl.Buffered(1) on these constant-index
            # weight specs would save a pipeline buffer each; negligible here.
            in_specs.append(pl.BlockSpec((ci, co), lambda i: (0, 0)))
            in_specs.append(pl.BlockSpec((1, co), lambda i: (0, 0)))

    cout_total = sum(layers[-1][0].shape[1] for layers in scales_layers)
    out = pl.pallas_call(
        _make_fused_kernel([len(l) for l in scales_layers], list(nsamples)),
        out_shape=jax.ShapeDtypeStruct((Gp, cout_total), jnp.float32),
        grid=(Gp // t,),
        in_specs=in_specs,
        out_specs=pl.BlockSpec((t, cout_total), lambda i: (i, 0)),
        compiler_params=pltpu.CompilerParams(
            dimension_semantics=("parallel",)),
    )(*args)
    return out[:G] if Gp != G else out


# -----------------------------------------------------------------------------
# Plain-JAX glue: FPS, ball query, grouping, three-NN  (data-dependent indexing)
# -----------------------------------------------------------------------------
# TODO(synk): farthest-point-sampling / ball-query / three-NN are data-dependent
# sequential/gather ops with no clean Pallas TPU equivalent; kept in plain JAX.
# TODO(synk): at production sizes the grouped-tensor gather should move inside
# the Pallas kernel (idx table via scalar prefetch + manual DMA) to avoid one
# full HBM write+read of the largest intermediate.
def farthest_point_sample(xyz, npoint):
    """xyz: (B, N, 3) -> (B, npoint) int32, matches the CUDA greedy FPS."""
    B, N, _ = xyz.shape

    def per_batch(pts):
        def step(i, state):
            dist, idxs, last = state
            d = jnp.sum((pts - pts[last]) ** 2, axis=-1)
            dist = jnp.minimum(dist, d)
            nxt = jnp.argmax(dist).astype(jnp.int32)
            idxs = idxs.at[i].set(nxt)
            return dist, idxs, nxt

        dist0 = jnp.full((N,), 1e10, dtype=jnp.float32)
        idxs0 = jnp.zeros((npoint,), jnp.int32)      # first centroid is index 0
        _, idxs, _ = lax.fori_loop(1, npoint, step, (dist0, idxs0, jnp.int32(0)))
        return idxs

    return jax.vmap(per_batch)(xyz)


def ball_query(radius, nsample, xyz, new_xyz):
    """Matches the CUDA ball_query: first-found index pads unfilled slots."""
    B, N, _ = xyz.shape
    d2 = jnp.sum((new_xyz[:, :, None, :] - xyz[:, None, :, :]) ** 2, axis=-1)
    mask = d2 < radius ** 2                      # (B, S, N), strict <
    pos = jnp.cumsum(mask, axis=-1) - 1          # slot each hit would occupy
    arange_n = jnp.arange(N)
    big = N

    def per_query(maskq, posq):
        cand = jnp.where(
            maskq[None, :] & (posq[None, :] == jnp.arange(nsample)[:, None]),
            arange_n[None, :], big)
        idx_slot = jnp.min(cand, axis=-1)
        first = jnp.where(jnp.any(maskq), idx_slot[0], 0)
        return jnp.where(idx_slot == big, first, idx_slot).astype(jnp.int32)

    return jax.vmap(jax.vmap(per_query))(mask, pos)


def group_points(data, idx):
    """data: (B, N, C), idx: (B, S, ns) -> (B, S, ns, C)."""
    return jax.vmap(lambda d, i: d[i])(data, idx)


# -----------------------------------------------------------------------------
# SA / FP modules
# -----------------------------------------------------------------------------
def sa_module_forward(xyz, features, npoint, radii, nsamples, params, use_xyz):
    """PointnetSAModuleMSG forward (channels-last).  Both MSG scales of the
    level are processed by ONE fused pallas_call."""
    B, N, _ = xyz.shape
    fps_idx = farthest_point_sample(xyz, npoint)                      # (B, S)
    new_xyz = jnp.take_along_axis(xyz, fps_idx[..., None], axis=1)    # (B, S, 3)

    if features is not None:
        pts = jnp.concatenate([xyz, features], axis=-1) if use_xyz else features
    else:
        pts = xyz
    recentre = (features is None) or use_xyz

    grouped_2d = []
    for radius, nsample in zip(radii, nsamples):
        idx = ball_query(radius, nsample, xyz, new_xyz)               # (B, S, ns)
        grouped = group_points(pts, idx)                              # (B,S,ns,Ct)
        if recentre:
            grouped = jnp.concatenate(
                [grouped[..., :3] - new_xyz[:, :, None, :], grouped[..., 3:]],
                axis=-1)
        grouped_2d.append(grouped.reshape(B * npoint, nsample,
                                          grouped.shape[-1]))

    pooled = _fused_mlp_call(grouped_2d, nsamples, params, cap=512)   # (B*S, Co)
    return new_xyz, pooled.reshape(B, npoint, -1)


def fp_module_forward(unknown, known, unknown_feats, known_feats, layers):
    """PointnetFPModule forward (channels-last)."""
    B, n, _ = unknown.shape
    d2 = jnp.sum((unknown[:, :, None, :] - known[:, None, :, :]) ** 2, axis=-1)
    neg_d, idx = lax.top_k(-d2, 3)                # 3 nearest known points
    dist = -neg_d                                 # squared distances (as CUDA)
    dist_recip = 1.0 / (dist + 1e-8)
    weight = dist_recip / jnp.sum(dist_recip, axis=-1, keepdims=True)
    gathered = jax.vmap(lambda f, i: f[i])(known_feats, idx)   # (B, n, 3, C2)
    interp = jnp.sum(gathered * weight[..., None], axis=2)     # (B, n, C2)

    new_feat = (jnp.concatenate([interp, unknown_feats], axis=-1)
                if unknown_feats is not None else interp)
    Cin = new_feat.shape[-1]
    x = new_feat.reshape(B * n, Cin)
    x = _fused_mlp_call([x], [None], [layers], cap=1024)
    return x.reshape(B, n, -1)


# -----------------------------------------------------------------------------
# Parameter init (deterministic; BN folded into weights/bias; conv bias=False)
# -----------------------------------------------------------------------------
def _init_layer(key, ci, co):
    k1, k2, k3 = jax.random.split(key, 3)
    W = jax.random.normal(k1, (ci, co), jnp.float32) / np.sqrt(ci)
    gamma = 1.0 + 0.1 * jax.random.normal(k2, (co,), jnp.float32)
    beta = 0.1 * jax.random.normal(k3, (co,), jnp.float32)
    mean = jnp.zeros((co,), jnp.float32)
    var = jnp.ones((co,), jnp.float32)
    scale = gamma / jnp.sqrt(var + BN_EPS)
    bias = beta - mean * scale
    W_folded = W * scale[None, :]                 # fold BN scale into weights
    return W_folded, bias


def init_params(key, cfg, input_channels):
    sa_cfg = cfg['SA_CONFIG']
    channel_in = input_channels - 3
    skip_channel_list = [channel_in]
    sa_params = []
    for k in range(len(sa_cfg['NPOINTS'])):
        mlps = [list(m) for m in sa_cfg['MLPS'][k]]
        channel_out = 0
        scales = []
        for m in mlps:
            spec = [channel_in] + m
            if sa_cfg.get('USE_XYZ', True):
                spec = [spec[0] + 3] + spec[1:]
            layers = []
            for ci, co in zip(spec[:-1], spec[1:]):
                key, sub = jax.random.split(key)
                layers.append(_init_layer(sub, ci, co))
            scales.append(layers)
            channel_out += m[-1]
        sa_params.append(scales)
        skip_channel_list.append(channel_out)
        channel_in = channel_out

    fp_params = []
    for k in range(len(cfg['FP_MLPS'])):
        pre = (cfg['FP_MLPS'][k + 1][-1]
               if k + 1 < len(cfg['FP_MLPS']) else channel_out)
        spec = [pre + skip_channel_list[k]] + cfg['FP_MLPS'][k]
        layers = []
        for ci, co in zip(spec[:-1], spec[1:]):
            key, sub = jax.random.split(key)
            layers.append(_init_layer(sub, ci, co))
        fp_params.append(layers)
    return sa_params, fp_params


# -----------------------------------------------------------------------------
# PointNet2MSG forward
# -----------------------------------------------------------------------------
def pointnet2_msg_forward(points, batch_size, sa_params, fp_params, cfg):
    """points: (num_points, 4 + C) = [batch_idx, x, y, z, feats...]."""
    batch_idx = points[:, 0]
    xyz_flat = points[:, 1:4]
    feat_flat = points[:, 4:] if points.shape[-1] > 4 else None

    xyz = xyz_flat.reshape(batch_size, -1, 3)
    features = (feat_flat.reshape(batch_size, xyz.shape[1], -1)
                if feat_flat is not None else None)

    sa_cfg = cfg['SA_CONFIG']
    l_xyz, l_feat = [xyz], [features]
    for i in range(len(sa_params)):
        li_xyz, li_feat = sa_module_forward(
            l_xyz[i], l_feat[i],
            npoint=sa_cfg['NPOINTS'][i],
            radii=sa_cfg['RADIUS'][i],
            nsamples=sa_cfg['NSAMPLE'][i],
            params=sa_params[i],
            use_xyz=sa_cfg.get('USE_XYZ', True))
        l_xyz.append(li_xyz)
        l_feat.append(li_feat)

    for i in range(-1, -(len(fp_params) + 1), -1):
        l_feat[i - 1] = fp_module_forward(
            l_xyz[i - 1], l_xyz[i], l_feat[i - 1], l_feat[i], fp_params[i])

    point_features = l_feat[0].reshape(-1, l_feat[0].shape[-1])     # (B*N, C)
    point_coords = jnp.concatenate(
        [batch_idx[:, None], l_xyz[0].reshape(-1, 3)], axis=1)      # (B*N, 4)
    return point_features, point_coords


# -----------------------------------------------------------------------------
# main
# -----------------------------------------------------------------------------
if __name__ == "__main__":
    key = jax.random.PRNGKey(0)
    k_pts, k_feat, k_params = jax.random.split(key, 3)

    B, N = 2, 32                      # batch_size, points per batch
    C_extra = INPUT_CHANNELS - 3      # 1 extra feature channel

    xyz = jax.random.uniform(k_pts, (B, N, 3), minval=-1.0, maxval=1.0,
                             dtype=jnp.float32)
    feat = jax.random.normal(k_feat, (B, N, C_extra), dtype=jnp.float32)
    batch_idx = jnp.repeat(jnp.arange(B, dtype=jnp.float32), N)
    points = jnp.concatenate(
        [batch_idx[:, None], xyz.reshape(-1, 3), feat.reshape(-1, C_extra)],
        axis=1)                       # (B*N, 4 + C)

    # equal point count per batch (same assert as the PyTorch module)
    counts = np.array([int((np.asarray(batch_idx) == b).sum()) for b in range(B)])
    assert counts.min() == counts.max()

    sa_params, fp_params = init_params(k_params, MODEL_CFG, INPUT_CHANNELS)

    # Whole forward under one jit (single dispatch; all glue fused by XLA).
    fwd = jax.jit(
        lambda pts, sa, fp: pointnet2_msg_forward(pts, B, sa, fp, MODEL_CFG))

    point_features, point_coords = fwd(points, sa_params, fp_params)
    jax.block_until_ready(point_features)
    jax.block_until_ready(point_coords)

    assert point_features.shape == (B * N, MODEL_CFG['FP_MLPS'][0][-1])
    assert point_coords.shape == (B * N, 4)
    assert np.all(np.isfinite(np.asarray(point_features)))
    print("KERNEL_OK")
</pallas_src>

<mosaic_0001>
module attributes {stable_mosaic.version = 11 : i64} {
  func.func @kernel(%arg0: i32, %arg1: memref<256x4xf32, #tpu.memory_space<vmem>>, %arg2: memref<512x4xf32, #tpu.memory_space<vmem>>, %arg3: memref<4x8xf32, #tpu.memory_space<vmem>>, %arg4: memref<1x8xf32, #tpu.memory_space<vmem>>, %arg5: memref<8x8xf32, #tpu.memory_space<vmem>>, %arg6: memref<1x8xf32, #tpu.memory_space<vmem>>, %arg7: memref<8x16xf32, #tpu.memory_space<vmem>>, %arg8: memref<1x16xf32, #tpu.memory_space<vmem>>, %arg9: memref<4x8xf32, #tpu.memory_space<vmem>>, %arg10: memref<1x8xf32, #tpu.memory_space<vmem>>, %arg11: memref<8x8xf32, #tpu.memory_space<vmem>>, %arg12: memref<1x8xf32, #tpu.memory_space<vmem>>, %arg13: memref<8x16xf32, #tpu.memory_space<vmem>>, %arg14: memref<1x16xf32, #tpu.memory_space<vmem>>, %arg15: memref<32x32xf32, #tpu.memory_space<vmem>>) attributes {dimension_semantics = [#tpu.dimension_semantics<parallel>], iteration_bounds = array<i64: 1>, scalar_prefetch = 0 : i64, scratch_operands = 0 : i64, tpu.core_type = #tpu.core_type<tc>, window_params = [{transform_indices = @transform_0, window_bounds = array<i64: 256, 4>}, {transform_indices = @transform_1, window_bounds = array<i64: 512, 4>}, {pipeline_mode = #tpu.pipeline_mode<synchronous>, transform_indices = @transform_2, window_bounds = array<i64: 4, 8>}, {pipeline_mode = #tpu.pipeline_mode<synchronous>, transform_indices = @transform_3, window_bounds = array<i64: 1, 8>}, {pipeline_mode = #tpu.pipeline_mode<synchronous>, transform_indices = @transform_4, window_bounds = array<i64: 8, 8>}, {pipeline_mode = #tpu.pipeline_mode<synchronous>, transform_indices = @transform_5, window_bounds = array<i64: 1, 8>}, {pipeline_mode = #tpu.pipeline_mode<synchronous>, transform_indices = @transform_6, window_bounds = array<i64: 8, 16>}, {pipeline_mode = #tpu.pipeline_mode<synchronous>, transform_indices = @transform_7, window_bounds = array<i64: 1, 16>}, {pipeline_mode = #tpu.pipeline_mode<synchronous>, transform_indices = @transform_8, window_bounds = array<i64: 4, 8>}, {pipeline_mode = #tpu.pipeline_mode<synchronous>, transform_indices = @transform_9, window_bounds = array<i64: 1, 8>}, {pipeline_mode = #tpu.pipeline_mode<synchronous>, transform_indices = @transform_10, window_bounds = array<i64: 8, 8>}, {pipeline_mode = #tpu.pipeline_mode<synchronous>, transform_indices = @transform_11, window_bounds = array<i64: 1, 8>}, {pipeline_mode = #tpu.pipeline_mode<synchronous>, transform_indices = @transform_12, window_bounds = array<i64: 8, 16>}, {pipeline_mode = #tpu.pipeline_mode<synchronous>, transform_indices = @transform_13, window_bounds = array<i64: 1, 16>}, {transform_indices = @transform_14, window_bounds = array<i64: 32, 32>}]} {
    %c0 = arith.constant 0 : index
    %c0_0 = arith.constant 0 : index
    %0 = vector.load %arg1[%c0, %c0_0] : memref<256x4xf32, #tpu.memory_space<vmem>>, vector<256x4xf32>
    %c0_1 = arith.constant 0 : index
    %c0_2 = arith.constant 0 : index
    %1 = vector.load %arg3[%c0_1, %c0_2] : memref<4x8xf32, #tpu.memory_space<vmem>>, vector<4x8xf32>
    %c0_3 = arith.constant 0 : index
    %c0_4 = arith.constant 0 : index
    %2 = vector.load %arg4[%c0_3, %c0_4] : memref<1x8xf32, #tpu.memory_space<vmem>>, vector<1x8xf32>
    %3 = vector.shape_cast %2 : vector<1x8xf32> to vector<1x8xf32>
    %4 = vector.broadcast %3 : vector<1x8xf32> to vector<256x8xf32>
    %5 = vector.extract_strided_slice %0 {offsets = [0, 0], sizes = [256, 1], strides = [1, 1]} : vector<256x4xf32> to vector<256x1xf32>
    %6 = vector.extract_strided_slice %1 {offsets = [0, 0], sizes = [1, 8], strides = [1, 1]} : vector<4x8xf32> to vector<1x8xf32>
    %7 = vector.broadcast %5 : vector<256x1xf32> to vector<256x8xf32>
    %8 = vector.broadcast %6 : vector<1x8xf32> to vector<256x8xf32>
    %9 = arith.mulf %7, %8 : vector<256x8xf32>
    %10 = arith.addf %4, %9 : vector<256x8xf32>
    %11 = vector.extract_strided_slice %0 {offsets = [0, 1], sizes = [256, 1], strides = [1, 1]} : vector<256x4xf32> to vector<256x1xf32>
    %12 = vector.extract_strided_slice %1 {offsets = [1, 0], sizes = [1, 8], strides = [1, 1]} : vector<4x8xf32> to vector<1x8xf32>
    %13 = vector.broadcast %11 : vector<256x1xf32> to vector<256x8xf32>
    %14 = vector.broadcast %12 : vector<1x8xf32> to vector<256x8xf32>
    %15 = arith.mulf %13, %14 : vector<256x8xf32>
    %16 = arith.addf %10, %15 : vector<256x8xf32>
    %17 = vector.extract_strided_slice %0 {offsets = [0, 2], sizes = [256, 1], strides = [1, 1]} : vector<256x4xf32> to vector<256x1xf32>
    %18 = vector.extract_strided_slice %1 {offsets = [2, 0], sizes = [1, 8], strides = [1, 1]} : vector<4x8xf32> to vector<1x8xf32>
    %19 = vector.broadcast %17 : vector<256x1xf32> to vector<256x8xf32>
    %20 = vector.broadcast %18 : vector<1x8xf32> to vector<256x8xf32>
    %21 = arith.mulf %19, %20 : vector<256x8xf32>
    %22 = arith.addf %16, %21 : vector<256x8xf32>
    %23 = vector.extract_strided_slice %0 {offsets = [0, 3], sizes = [256, 1], strides = [1, 1]} : vector<256x4xf32> to vector<256x1xf32>
    %24 = vector.extract_strided_slice %1 {offsets = [3, 0], sizes = [1, 8], strides = [1, 1]} : vector<4x8xf32> to vector<1x8xf32>
    %25 = vector.broadcast %23 : vector<256x1xf32> to vector<256x8xf32>
    %26 = vector.broadcast %24 : vector<1x8xf32> to vector<256x8xf32>
    %27 = arith.mulf %25, %26 : vector<256x8xf32>
    %28 = arith.addf %22, %27 : vector<256x8xf32>
    %cst = arith.constant 0.000000e+00 : f32
    %29 = vector.broadcast %cst : f32 to vector<256x8xf32>
    %30 = arith.maximumf %28, %29 : vector<256x8xf32>
    %c0_5 = arith.constant 0 : index
    %c0_6 = arith.constant 0 : index
    %31 = vector.load %arg5[%c0_5, %c0_6] : memref<8x8xf32, #tpu.memory_space<vmem>>, vector<8x8xf32>
    %c0_7 = arith.constant 0 : index
    %c0_8 = arith.constant 0 : index
    %32 = vector.load %arg6[%c0_7, %c0_8] : memref<1x8xf32, #tpu.memory_space<vmem>>, vector<1x8xf32>
    %cst_9 = arith.constant dense<0.000000e+00> : vector<256x8xf32>
    %33 = tpu.matmul %30, %31, %cst_9 {dimension_numbers = #tpu.dot_dimension_numbers<[1], [0], [0], [1], [0, 0, 1, 1], [], []>} : vector<256x8xf32>, vector<8x8xf32>, vector<256x8xf32> -> vector<256x8xf32>
    %34 = vector.broadcast %32 : vector<1x8xf32> to vector<256x8xf32>
    %35 = arith.addf %33, %34 : vector<256x8xf32>
    %cst_10 = arith.constant 0.000000e+00 : f32
    %36 = vector.broadcast %cst_10 : f32 to vector<256x8xf32>
    %37 = arith.maximumf %35, %36 : vector<256x8xf32>
    %c0_11 = arith.constant 0 : index
    %c0_12 = arith.constant 0 : index
    %38 = vector.load %arg7[%c0_11, %c0_12] : memref<8x16xf32, #tpu.memory_space<vmem>>, vector<8x16xf32>
    %c0_13 = arith.constant 0 : index
    %c0_14 = arith.constant 0 : index
    %39 = vector.load %arg8[%c0_13, %c0_14] : memref<1x16xf32, #tpu.memory_space<vmem>>, vector<1x16xf32>
    %cst_15 = arith.constant dense<0.000000e+00> : vector<256x16xf32>
    %40 = tpu.matmul %37, %38, %cst_15 {dimension_numbers = #tpu.dot_dimension_numbers<[1], [0], [0], [1], [0, 0, 1, 1], [], []>} : vector<256x8xf32>, vector<8x16xf32>, vector<256x16xf32> -> vector<256x16xf32>
    %41 = vector.broadcast %39 : vector<1x16xf32> to vector<256x16xf32>
    %42 = arith.addf %40, %41 : vector<256x16xf32>
    %cst_16 = arith.constant 0.000000e+00 : f32
    %43 = vector.broadcast %cst_16 : f32 to vector<256x16xf32>
    %44 = arith.maximumf %42, %43 : vector<256x16xf32>
    %45 = vector.shape_cast %44 : vector<256x16xf32> to vector<32x8x16xf32>
    %cst_17 = arith.constant dense<0xFF800000> : vector<32x16xf32>
    %46 = vector.multi_reduction <maximumf>, %45, %cst_17 [1] : vector<32x8x16xf32> to vector<32x16xf32>
    %c0_18 = arith.constant 0 : index
    %c0_19 = arith.constant 0 : index
    %47 = vector.load %arg2[%c0_18, %c0_19] : memref<512x4xf32, #tpu.memory_space<vmem>>, vector<512x4xf32>
    %c0_20 = arith.constant 0 : index
    %c0_21 = arith.constant 0 : index
    %48 = vector.load %arg9[%c0_20, %c0_21] : memref<4x8xf32, #tpu.memory_space<vmem>>, vector<4x8xf32>
    %c0_22 = arith.constant 0 : index
    %c0_23 = arith.constant 0 : index
    %49 = vector.load %arg10[%c0_22, %c0_23] : memref<1x8xf32, #tpu.memory_space<vmem>>, vector<1x8xf32>
    %50 = vector.shape_cast %49 : vector<1x8xf32> to vector<1x8xf32>
    %51 = vector.broadcast %50 : vector<1x8xf32> to vector<512x8xf32>
    %52 = vector.extract_strided_slice %47 {offsets = [0, 0], sizes = [512, 1], strides = [1, 1]} : vector<512x4xf32> to vector<512x1xf32>
    %53 = vector.extract_strided_slice %48 {offsets = [0, 0], sizes = [1, 8], strides = [1, 1]} : vector<4x8xf32> to vector<1x8xf32>
    %54 = vector.broadcast %52 : vector<512x1xf32> to vector<512x8xf32>
    %55 = vector.broadcast %53 : vector<1x8xf32> to vector<512x8xf32>
    %56 = arith.mulf %54, %55 : vector<512x8xf32>
    %57 = arith.addf %51, %56 : vector<512x8xf32>
    %58 = vector.extract_strided_slice %47 {offsets = [0, 1], sizes = [512, 1], strides = [1, 1]} : vector<512x4xf32> to vector<512x1xf32>
    %59 = vector.extract_strided_slice %48 {offsets = [1, 0], sizes = [1, 8], strides = [1, 1]} : vector<4x8xf32> to vector<1x8xf32>
    %60 = vector.broadcast %58 : vector<512x1xf32> to vector<512x8xf32>
    %61 = vector.broadcast %59 : vector<1x8xf32> to vector<512x8xf32>
    %62 = arith.mulf %60, %61 : vector<512x8xf32>
    %63 = arith.addf %57, %62 : vector<512x8xf32>
    %64 = vector.extract_strided_slice %47 {offsets = [0, 2], sizes = [512, 1], strides = [1, 1]} : vector<512x4xf32> to vector<512x1xf32>
    %65 = vector.extract_strided_slice %48 {offsets = [2, 0], sizes = [1, 8], strides = [1, 1]} : vector<4x8xf32> to vector<1x8xf32>
    %66 = vector.broadcast %64 : vector<512x1xf32> to vector<512x8xf32>
    %67 = vector.broadcast %65 : vector<1x8xf32> to vector<512x8xf32>
    %68 = arith.mulf %66, %67 : vector<512x8xf32>
    %69 = arith.addf %63, %68 : vector<512x8xf32>
    %70 = vector.extract_strided_slice %47 {offsets = [0, 3], sizes = [512, 1], strides = [1, 1]} : vector<512x4xf32> to vector<512x1xf32>
    %71 = vector.extract_strided_slice %48 {offsets = [3, 0], sizes = [1, 8], strides = [1, 1]} : vector<4x8xf32> to vector<1x8xf32>
    %72 = vector.broadcast %70 : vector<512x1xf32> to vector<512x8xf32>
    %73 = vector.broadcast %71 : vector<1x8xf32> to vector<512x8xf32>
    %74 = arith.mulf %72, %73 : vector<512x8xf32>
    %75 = arith.addf %69, %74 : vector<512x8xf32>
    %cst_24 = arith.constant 0.000000e+00 : f32
    %76 = vector.broadcast %cst_24 : f32 to vector<512x8xf32>
    %77 = arith.maximumf %75, %76 : vector<512x8xf32>
    %c0_25 = arith.constant 0 : index
    %c0_26 = arith.constant 0 : index
    %78 = vector.load %arg11[%c0_25, %c0_26] : memref<8x8xf32, #tpu.memory_space<vmem>>, vector<8x8xf32>
    %c0_27 = arith.constant 0 : index
    %c0_28 = arith.constant 0 : index
    %79 = vector.load %arg12[%c0_27, %c0_28] : memref<1x8xf32, #tpu.memory_space<vmem>>, vector<1x8xf32>
    %cst_29 = arith.constant dense<0.000000e+00> : vector<512x8xf32>
    %80 = tpu.matmul %77, %78, %cst_29 {dimension_numbers = #tpu.dot_dimension_numbers<[1], [0], [0], [1], [0, 0, 1, 1], [], []>} : vector<512x8xf32>, vector<8x8xf32>, vector<512x8xf32> -> vector<512x8xf32>
    %81 = vector.broadcast %79 : vector<1x8xf32> to vector<512x8xf32>
    %82 = arith.addf %80, %81 : vector<512x8xf32>
    %cst_30 = arith.constant 0.000000e+00 : f32
    %83 = vector.broadcast %cst_30 : f32 to vector<512x8xf32>
    %84 = arith.maximumf %82, %83 : vector<512x8xf32>
    %c0_31 = arith.constant 0 : index
    %c0_32 = arith.constant 0 : index
    %85 = vector.load %arg13[%c0_31, %c0_32] : memref<8x16xf32, #tpu.memory_space<vmem>>, vector<8x16xf32>
    %c0_33 = arith.constant 0 : index
    %c0_34 = arith.constant 0 : index
    %86 = vector.load %arg14[%c0_33, %c0_34] : memref<1x16xf32, #tpu.memory_space<vmem>>, vector<1x16xf32>
    %cst_35 = arith.constant dense<0.000000e+00> : vector<512x16xf32>
    %87 = tpu.matmul %84, %85, %cst_35 {dimension_numbers = #tpu.dot_dimension_numbers<[1], [0], [0], [1], [0, 0, 1, 1], [], []>} : vector<512x8xf32>, vector<8x16xf32>, vector<512x16xf32> -> vector<512x16xf32>
    %88 = vector.broadcast %86 : vector<1x16xf32> to vector<512x16xf32>
    %89 = arith.addf %87, %88 : vector<512x16xf32>
    %cst_36 = arith.constant 0.000000e+00 : f32
    %90 = vector.broadcast %cst_36 : f32 to vector<512x16xf32>
    %91 = arith.maximumf %89, %90 : vector<512x16xf32>
    %92 = vector.shape_cast %91 : vector<512x16xf32> to vector<32x16x16xf32>
    %cst_37 = arith.constant dense<0xFF800000> : vector<32x16xf32>
    %93 = vector.multi_reduction <maximumf>, %92, %cst_37 [1] : vector<32x16x16xf32> to vector<32x16xf32>
    %94 = tpu.concatenate %46, %93 in 1 : vector<32x16xf32>, vector<32x16xf32> -> vector<32x32xf32>
    %c0_38 = arith.constant 0 : index
    %c0_39 = arith.constant 0 : index
    %95 = vector.load %arg15[%c0_38, %c0_39] : memref<32x32xf32, #tpu.memory_space<vmem>>, vector<32x32xf32>
    tpu.vector_store %arg15[%c0_38, %c0_39], %94 {strides = array<i32>} : memref<32x32xf32, #tpu.memory_space<vmem>>, vector<32x32xf32>,
    return
  }
  func.func @transform_0(%arg0: i32) -> (i32, i32) {
    %c0_i32 = arith.constant 0 : i32
    %c0_i32_0 = arith.constant 0 : i32
    return %arg0, %c0_i32 : i32, i32
  }
  func.func @transform_1(%arg0: i32) -> (i32, i32) {
    %c0_i32 = arith.constant 0 : i32
    %c0_i32_0 = arith.constant 0 : i32
    return %arg0, %c0_i32 : i32, i32
  }
  func.func @transform_2(%arg0: i32) -> (i32, i32) {
    %c0_i32 = arith.constant 0 : i32
    %c0_i32_0 = arith.constant 0 : i32
    %c0_i32_1 = arith.constant 0 : i32
    return %c0_i32, %c0_i32_0 : i32, i32
  }
  func.func @transform_3(%arg0: i32) -> (i32, i32) {
    %c0_i32 = arith.constant 0 : i32
    %c0_i32_0 = arith.constant 0 : i32
    %c0_i32_1 = arith.constant 0 : i32
    return %c0_i32, %c0_i32_0 : i32, i32
  }
  func.func @transform_4(%arg0: i32) -> (i32, i32) {
    %c0_i32 = arith.constant 0 : i32
    %c0_i32_0 = arith.constant 0 : i32
    %c0_i32_1 = arith.constant 0 : i32
    return %c0_i32, %c0_i32_0 : i32, i32
  }
  func.func @transform_5(%arg0: i32) -> (i32, i32) {
    %c0_i32 = arith.constant 0 : i32
    %c0_i32_0 = arith.constant 0 : i32
    %c0_i32_1 = arith.constant 0 : i32
    return %c0_i32, %c0_i32_0 : i32, i32
  }
  func.func @transform_6(%arg0: i32) -> (i32, i32) {
    %c0_i32 = arith.constant 0 : i32
    %c0_i32_0 = arith.constant 0 : i32
    %c0_i32_1 = arith.constant 0 : i32
    return %c0_i32, %c0_i32_0 : i32, i32
  }
  func.func @transform_7(%arg0: i32) -> (i32, i32) {
    %c0_i32 = arith.constant 0 : i32
    %c0_i32_0 = arith.constant 0 : i32
    %c0_i32_1 = arith.constant 0 : i32
    return %c0_i32, %c0_i32_0 : i32, i32
  }
  func.func @transform_8(%arg0: i32) -> (i32, i32) {
    %c0_i32 = arith.constant 0 : i32
    %c0_i32_0 = arith.constant 0 : i32
    %c0_i32_1 = arith.constant 0 : i32
    return %c0_i32, %c0_i32_0 : i32, i32
  }
  func.func @transform_9(%arg0: i32) -> (i32, i32) {
    %c0_i32 = arith.constant 0 : i32
    %c0_i32_0 = arith.constant 0 : i32
    %c0_i32_1 = arith.constant 0 : i32
    return %c0_i32, %c0_i32_0 : i32, i32
  }
  func.func @transform_10(%arg0: i32) -> (i32, i32) {
    %c0_i32 = arith.constant 0 : i32
    %c0_i32_0 = arith.constant 0 : i32
    %c0_i32_1 = arith.constant 0 : i32
    return %c0_i32, %c0_i32_0 : i32, i32
  }
  func.func @transform_11(%arg0: i32) -> (i32, i32) {
    %c0_i32 = arith.constant 0 : i32
    %c0_i32_0 = arith.constant 0 : i32
    %c0_i32_1 = arith.constant 0 : i32
    return %c0_i32, %c0_i32_0 : i32, i32
  }
  func.func @transform_12(%arg0: i32) -> (i32, i32) {
    %c0_i32 = arith.constant 0 : i32
    %c0_i32_0 = arith.constant 0 : i32
    %c0_i32_1 = arith.constant 0 : i32
    return %c0_i32, %c0_i32_0 : i32, i32
  }
  func.func @transform_13(%arg0: i32) -> (i32, i32) {
    %c0_i32 = arith.constant 0 : i32
    %c0_i32_0 = arith.constant 0 : i32
    %c0_i32_1 = arith.constant 0 : i32
    return %c0_i32, %c0_i32_0 : i32, i32
  }
  func.func @transform_14(%arg0: i32) -> (i32, i32) {
    %c0_i32 = arith.constant 0 : i32
    %c0_i32_0 = arith.constant 0 : i32
    return %arg0, %c0_i32 : i32, i32
  }
}

module attributes {stable_mosaic.version = 11 : i64} {
  func.func @kernel(%arg0: i32, %arg1: memref<128x35xf32, #tpu.memory_space<vmem>>, %arg2: memref<256x35xf32, #tpu.memory_space<vmem>>, %arg3: memref<35x16xf32, #tpu.memory_space<vmem>>, %arg4: memref<1x16xf32, #tpu.memory_space<vmem>>, %arg5: memref<16x16xf32, #tpu.memory_space<vmem>>, %arg6: memref<1x16xf32, #tpu.memory_space<vmem>>, %arg7: memref<16x32xf32, #tpu.memory_space<vmem>>, %arg8: memref<1x32xf32, #tpu.memory_space<vmem>>, %arg9: memref<35x16xf32, #tpu.memory_space<vmem>>, %arg10: memref<1x16xf32, #tpu.memory_space<vmem>>, %arg11: memref<16x16xf32, #tpu.memory_space<vmem>>, %arg12: memref<1x16xf32, #tpu.memory_space<vmem>>, %arg13: memref<16x32xf32, #tpu.memory_space<vmem>>, %arg14: memref<1x32xf32, #tpu.memory_space<vmem>>, %arg15: memref<16x64xf32, #tpu.memory_space<vmem>>) attributes {dimension_semantics = [#tpu.dimension_semantics<parallel>], iteration_bounds = array<i64: 1>, scalar_prefetch = 0 : i64, scratch_operands = 0 : i64, tpu.core_type = #tpu.core_type<tc>, window_params = [{transform_indices = @transform_0, window_bounds = array<i64: 128, 35>}, {transform_indices = @transform_1, window_bounds = array<i64: 256, 35>}, {pipeline_mode = #tpu.pipeline_mode<synchronous>, transform_indices = @transform_2, window_bounds = array<i64: 35, 16>}, {pipeline_mode = #tpu.pipeline_mode<synchronous>, transform_indices = @transform_3, window_bounds = array<i64: 1, 16>}, {pipeline_mode = #tpu.pipeline_mode<synchronous>, transform_indices = @transform_4, window_bounds = array<i64: 16, 16>}, {pipeline_mode = #tpu.pipeline_mode<synchronous>, transform_indices = @transform_5, window_bounds = array<i64: 1, 16>}, {pipeline_mode = #tpu.pipeline_mode<synchronous>, transform_indices = @transform_6, window_bounds = array<i64: 16, 32>}, {pipeline_mode = #tpu.pipeline_mode<synchronous>, transform_indices = @transform_7, window_bounds = array<i64: 1, 32>}, {pipeline_mode = #tpu.pipeline_mode<synchronous>, transform_indices = @transform_8, window_bounds = array<i64: 35, 16>}, {pipeline_mode = #tpu.pipeline_mode<synchronous>, transform_indices = @transform_9, window_bounds = array<i64: 1, 16>}, {pipeline_mode = #tpu.pipeline_mode<synchronous>, transform_indices = @transform_10, window_bounds = array<i64: 16, 16>}, {pipeline_mode = #tpu.pipeline_mode<synchronous>, transform_indices = @transform_11, window_bounds = array<i64: 1, 16>}, {pipeline_mode = #tpu.pipeline_mode<synchronous>, transform_indices = @transform_12, window_bounds = array<i64: 16, 32>}, {pipeline_mode = #tpu.pipeline_mode<synchronous>, transform_indices = @transform_13, window_bounds = array<i64: 1, 32>}, {transform_indices = @transform_14, window_bounds = array<i64: 16, 64>}]} {
    %c0 = arith.constant 0 : index
    %c0_0 = arith.constant 0 : index
    %0 = vector.load %arg1[%c0, %c0_0] : memref<128x35xf32, #tpu.memory_space<vmem>>, vector<128x35xf32>
    %c0_1 = arith.constant 0 : index
    %c0_2 = arith.constant 0 : index
    %1 = vector.load %arg3[%c0_1, %c0_2] : memref<35x16xf32, #tpu.memory_space<vmem>>, vector<35x16xf32>
    %c0_3 = arith.constant 0 : index
    %c0_4 = arith.constant 0 : index
    %2 = vector.load %arg4[%c0_3, %c0_4] : memref<1x16xf32, #tpu.memory_space<vmem>>, vector<1x16xf32>
    %cst = arith.constant dense<0.000000e+00> : vector<128x16xf32>
    %3 = tpu.matmul %0, %1, %cst {dimension_numbers = #tpu.dot_dimension_numbers<[1], [0], [0], [1], [0, 0, 1, 1], [], []>} : vector<128x35xf32>, vector<35x16xf32>, vector<128x16xf32> -> vector<128x16xf32>
    %4 = vector.broadcast %2 : vector<1x16xf32> to vector<128x16xf32>
    %5 = arith.addf %3, %4 : vector<128x16xf32>
    %cst_5 = arith.constant 0.000000e+00 : f32
    %6 = vector.broadcast %cst_5 : f32 to vector<128x16xf32>
    %7 = arith.maximumf %5, %6 : vector<128x16xf32>
    %c0_6 = arith.constant 0 : index
    %c0_7 = arith.constant 0 : index
    %8 = vector.load %arg5[%c0_6, %c0_7] : memref<16x16xf32, #tpu.memory_space<vmem>>, vector<16x16xf32>
    %c0_8 = arith.constant 0 : index
    %c0_9 = arith.constant 0 : index
    %9 = vector.load %arg6[%c0_8, %c0_9] : memref<1x16xf32, #tpu.memory_space<vmem>>, vector<1x16xf32>
    %cst_10 = arith.constant dense<0.000000e+00> : vector<128x16xf32>
    %10 = tpu.matmul %7, %8, %cst_10 {dimension_numbers = #tpu.dot_dimension_numbers<[1], [0], [0], [1], [0, 0, 1, 1], [], []>} : vector<128x16xf32>, vector<16x16xf32>, vector<128x16xf32> -> vector<128x16xf32>
    %11 = vector.broadcast %9 : vector<1x16xf32> to vector<128x16xf32>
    %12 = arith.addf %10, %11 : vector<128x16xf32>
    %cst_11 = arith.constant 0.000000e+00 : f32
    %13 = vector.broadcast %cst_11 : f32 to vector<128x16xf32>
    %14 = arith.maximumf %12, %13 : vector<128x16xf32>
    %c0_12 = arith.constant 0 : index
    %c0_13 = arith.constant 0 : index
    %15 = vector.load %arg7[%c0_12, %c0_13] : memref<16x32xf32, #tpu.memory_space<vmem>>, vector<16x32xf32>
    %c0_14 = arith.constant 0 : index
    %c0_15 = arith.constant 0 : index
    %16 = vector.load %arg8[%c0_14, %c0_15] : memref<1x32xf32, #tpu.memory_space<vmem>>, vector<1x32xf32>
    %cst_16 = arith.constant dense<0.000000e+00> : vector<128x32xf32>
    %17 = tpu.matmul %14, %15, %cst_16 {dimension_numbers = #tpu.dot_dimension_numbers<[1], [0], [0], [1], [0, 0, 1, 1], [], []>} : vector<128x16xf32>, vector<16x32xf32>, vector<128x32xf32> -> vector<128x32xf32>
    %18 = vector.broadcast %16 : vector<1x32xf32> to vector<128x32xf32>
    %19 = arith.addf %17, %18 : vector<128x32xf32>
    %cst_17 = arith.constant 0.000000e+00 : f32
    %20 = vector.broadcast %cst_17 : f32 to vector<128x32xf32>
    %21 = arith.maximumf %19, %20 : vector<128x32xf32>
    %22 = vector.shape_cast %21 : vector<128x32xf32> to vector<16x8x32xf32>
    %cst_18 = arith.constant dense<0xFF800000> : vector<16x32xf32>
    %23 = vector.multi_reduction <maximumf>, %22, %cst_18 [1] : vector<16x8x32xf32> to vector<16x32xf32>
    %c0_19 = arith.constant 0 : index
    %c0_20 = arith.constant 0 : index
    %24 = vector.load %arg2[%c0_19, %c0_20] : memref<256x35xf32, #tpu.memory_space<vmem>>, vector<256x35xf32>
    %c0_21 = arith.constant 0 : index
    %c0_22 = arith.constant 0 : index
    %25 = vector.load %arg9[%c0_21, %c0_22] : memref<35x16xf32, #tpu.memory_space<vmem>>, vector<35x16xf32>
    %c0_23 = arith.constant 0 : index
    %c0_24 = arith.constant 0 : index
    %26 = vector.load %arg10[%c0_23, %c0_24] : memref<1x16xf32, #tpu.memory_space<vmem>>, vector<1x16xf32>
    %cst_25 = arith.constant dense<0.000000e+00> : vector<256x16xf32>
    %27 = tpu.matmul %24, %25, %cst_25 {dimension_numbers = #tpu.dot_dimension_numbers<[1], [0], [0], [1], [0, 0, 1, 1], [], []>} : vector<256x35xf32>, vector<35x16xf32>, vector<256x16xf32> -> vector<256x16xf32>
    %28 = vector.broadcast %26 : vector<1x16xf32> to vector<256x16xf32>
    %29 = arith.addf %27, %28 : vector<256x16xf32>
    %cst_26 = arith.constant 0.000000e+00 : f32
    %30 = vector.broadcast %cst_26 : f32 to vector<256x16xf32>
    %31 = arith.maximumf %29, %30 : vector<256x16xf32>
    %c0_27 = arith.constant 0 : index
    %c0_28 = arith.constant 0 : index
    %32 = vector.load %arg11[%c0_27, %c0_28] : memref<16x16xf32, #tpu.memory_space<vmem>>, vector<16x16xf32>
    %c0_29 = arith.constant 0 : index
    %c0_30 = arith.constant 0 : index
    %33 = vector.load %arg12[%c0_29, %c0_30] : memref<1x16xf32, #tpu.memory_space<vmem>>, vector<1x16xf32>
    %cst_31 = arith.constant dense<0.000000e+00> : vector<256x16xf32>
    %34 = tpu.matmul %31, %32, %cst_31 {dimension_numbers = #tpu.dot_dimension_numbers<[1], [0], [0], [1], [0, 0, 1, 1], [], []>} : vector<256x16xf32>, vector<16x16xf32>, vector<256x16xf32> -> vector<256x16xf32>
    %35 = vector.broadcast %33 : vector<1x16xf32> to vector<256x16xf32>
    %36 = arith.addf %34, %35 : vector<256x16xf32>
    %cst_32 = arith.constant 0.000000e+00 : f32
    %37 = vector.broadcast %cst_32 : f32 to vector<256x16xf32>
    %38 = arith.maximumf %36, %37 : vector<256x16xf32>
    %c0_33 = arith.constant 0 : index
    %c0_34 = arith.constant 0 : index
    %39 = vector.load %arg13[%c0_33, %c0_34] : memref<16x32xf32, #tpu.memory_space<vmem>>, vector<16x32xf32>
    %c0_35 = arith.constant 0 : index
    %c0_36 = arith.constant 0 : index
    %40 = vector.load %arg14[%c0_35, %c0_36] : memref<1x32xf32, #tpu.memory_space<vmem>>, vector<1x32xf32>
    %cst_37 = arith.constant dense<0.000000e+00> : vector<256x32xf32>
    %41 = tpu.matmul %38, %39, %cst_37 {dimension_numbers = #tpu.dot_dimension_numbers<[1], [0], [0], [1], [0, 0, 1, 1], [], []>} : vector<256x16xf32>, vector<16x32xf32>, vector<256x32xf32> -> vector<256x32xf32>
    %42 = vector.broadcast %40 : vector<1x32xf32> to vector<256x32xf32>
    %43 = arith.addf %41, %42 : vector<256x32xf32>
    %cst_38 = arith.constant 0.000000e+00 : f32
    %44 = vector.broadcast %cst_38 : f32 to vector<256x32xf32>
    %45 = arith.maximumf %43, %44 : vector<256x32xf32>
    %46 = vector.shape_cast %45 : vector<256x32xf32> to vector<16x16x32xf32>
    %cst_39 = arith.constant dense<0xFF800000> : vector<16x32xf32>
    %47 = vector.multi_reduction <maximumf>, %46, %cst_39 [1] : vector<16x16x32xf32> to vector<16x32xf32>
    %48 = tpu.concatenate %23, %47 in 1 : vector<16x32xf32>, vector<16x32xf32> -> vector<16x64xf32>
    %c0_40 = arith.constant 0 : index
    %c0_41 = arith.constant 0 : index
    %49 = vector.load %arg15[%c0_40, %c0_41] : memref<16x64xf32, #tpu.memory_space<vmem>>, vector<16x64xf32>
    tpu.vector_store %arg15[%c0_40, %c0_41], %48 {strides = array<i32>} : memref<16x64xf32, #tpu.memory_space<vmem>>, vector<16x64xf32>,
    return
  }
  func.func @transform_0(%arg0: i32) -> (i32, i32) {
    %c0_i32 = arith.constant 0 : i32
    %c0_i32_0 = arith.constant 0 : i32
    return %arg0, %c0_i32 : i32, i32
  }
  func.func @transform_1(%arg0: i32) -> (i32, i32) {
    %c0_i32 = arith.constant 0 : i32
    %c0_i32_0 = arith.constant 0 : i32
    return %arg0, %c0_i32 : i32, i32
  }
  func.func @transform_2(%arg0: i32) -> (i32, i32) {
    %c0_i32 = arith.constant 0 : i32
    %c0_i32_0 = arith.constant 0 : i32
    %c0_i32_1 = arith.constant 0 : i32
    return %c0_i32, %c0_i32_0 : i32, i32
  }
  func.func @transform_3(%arg0: i32) -> (i32, i32) {
    %c0_i32 = arith.constant 0 : i32
    %c0_i32_0 = arith.constant 0 : i32
    %c0_i32_1 = arith.constant 0 : i32
    return %c0_i32, %c0_i32_0 : i32, i32
  }
  func.func @transform_4(%arg0: i32) -> (i32, i32) {
    %c0_i32 = arith.constant 0 : i32
    %c0_i32_0 = arith.constant 0 : i32
    %c0_i32_1 = arith.constant 0 : i32
    return %c0_i32, %c0_i32_0 : i32, i32
  }
  func.func @transform_5(%arg0: i32) -> (i32, i32) {
    %c0_i32 = arith.constant 0 : i32
    %c0_i32_0 = arith.constant 0 : i32
    %c0_i32_1 = arith.constant 0 : i32
    return %c0_i32, %c0_i32_0 : i32, i32
  }
  func.func @transform_6(%arg0: i32) -> (i32, i32) {
    %c0_i32 = arith.constant 0 : i32
    %c0_i32_0 = arith.constant 0 : i32
    %c0_i32_1 = arith.constant 0 : i32
    return %c0_i32, %c0_i32_0 : i32, i32
  }
  func.func @transform_7(%arg0: i32) -> (i32, i32) {
    %c0_i32 = arith.constant 0 : i32
    %c0_i32_0 = arith.constant 0 : i32
    %c0_i32_1 = arith.constant 0 : i32
    return %c0_i32, %c0_i32_0 : i32, i32
  }
  func.func @transform_8(%arg0: i32) -> (i32, i32) {
    %c0_i32 = arith.constant 0 : i32
    %c0_i32_0 = arith.constant 0 : i32
    %c0_i32_1 = arith.constant 0 : i32
    return %c0_i32, %c0_i32_0 : i32, i32
  }
  func.func @transform_9(%arg0: i32) -> (i32, i32) {
    %c0_i32 = arith.constant 0 : i32
    %c0_i32_0 = arith.constant 0 : i32
    %c0_i32_1 = arith.constant 0 : i32
    return %c0_i32, %c0_i32_0 : i32, i32
  }
  func.func @transform_10(%arg0: i32) -> (i32, i32) {
    %c0_i32 = arith.constant 0 : i32
    %c0_i32_0 = arith.constant 0 : i32
    %c0_i32_1 = arith.constant 0 : i32
    return %c0_i32, %c0_i32_0 : i32, i32
  }
  func.func @transform_11(%arg0: i32) -> (i32, i32) {
    %c0_i32 = arith.constant 0 : i32
    %c0_i32_0 = arith.constant 0 : i32
    %c0_i32_1 = arith.constant 0 : i32
    return %c0_i32, %c0_i32_0 : i32, i32
  }
  func.func @transform_12(%arg0: i32) -> (i32, i32) {
    %c0_i32 = arith.constant 0 : i32
    %c0_i32_0 = arith.constant 0 : i32
    %c0_i32_1 = arith.constant 0 : i32
    return %c0_i32, %c0_i32_0 : i32, i32
  }
  func.func @transform_13(%arg0: i32) -> (i32, i32) {
    %c0_i32 = arith.constant 0 : i32
    %c0_i32_0 = arith.constant 0 : i32
    %c0_i32_1 = arith.constant 0 : i32
    return %c0_i32, %c0_i32_0 : i32, i32
  }
  func.func @transform_14(%arg0: i32) -> (i32, i32) {
    %c0_i32 = arith.constant 0 : i32
    %c0_i32_0 = arith.constant 0 : i32
    return %arg0, %c0_i32 : i32, i32
  }
}

module attributes {stable_mosaic.version = 11 : i64} {
  func.func @kernel(%arg0: i32, %arg1: memref<32x96xf32, #tpu.memory_space<vmem>>, %arg2: memref<96x32xf32, #tpu.memory_space<vmem>>, %arg3: memref<1x32xf32, #tpu.memory_space<vmem>>, %arg4: memref<32x32xf32, #tpu.memory_space<vmem>>, %arg5: memref<1x32xf32, #tpu.memory_space<vmem>>, %arg6: memref<32x32xf32, #tpu.memory_space<vmem>>) attributes {dimension_semantics = [#tpu.dimension_semantics<parallel>], iteration_bounds = array<i64: 1>, scalar_prefetch = 0 : i64, scratch_operands = 0 : i64, tpu.core_type = #tpu.core_type<tc>, window_params = [{transform_indices = @transform_0, window_bounds = array<i64: 32, 96>}, {pipeline_mode = #tpu.pipeline_mode<synchronous>, transform_indices = @transform_1, window_bounds = array<i64: 96, 32>}, {pipeline_mode = #tpu.pipeline_mode<synchronous>, transform_indices = @transform_2, window_bounds = array<i64: 1, 32>}, {pipeline_mode = #tpu.pipeline_mode<synchronous>, transform_indices = @transform_3, window_bounds = array<i64: 32, 32>}, {pipeline_mode = #tpu.pipeline_mode<synchronous>, transform_indices = @transform_4, window_bounds = array<i64: 1, 32>}, {transform_indices = @transform_5, window_bounds = array<i64: 32, 32>}]} {
    %c0 = arith.constant 0 : index
    %c0_0 = arith.constant 0 : index
    %0 = vector.load %arg1[%c0, %c0_0] : memref<32x96xf32, #tpu.memory_space<vmem>>, vector<32x96xf32>
    %c0_1 = arith.constant 0 : index
    %c0_2 = arith.constant 0 : index
    %1 = vector.load %arg2[%c0_1, %c0_2] : memref<96x32xf32, #tpu.memory_space<vmem>>, vector<96x32xf32>
    %c0_3 = arith.constant 0 : index
    %c0_4 = arith.constant 0 : index
    %2 = vector.load %arg3[%c0_3, %c0_4] : memref<1x32xf32, #tpu.memory_space<vmem>>, vector<1x32xf32>
    %cst = arith.constant dense<0.000000e+00> : vector<32x32xf32>
    %3 = tpu.matmul %0, %1, %cst {dimension_numbers = #tpu.dot_dimension_numbers<[1], [0], [0], [1], [0, 0, 1, 1], [], []>} : vector<32x96xf32>, vector<96x32xf32>, vector<32x32xf32> -> vector<32x32xf32>
    %4 = vector.broadcast %2 : vector<1x32xf32> to vector<32x32xf32>
    %5 = arith.addf %3, %4 : vector<32x32xf32>
    %cst_5 = arith.constant 0.000000e+00 : f32
    %6 = vector.broadcast %cst_5 : f32 to vector<32x32xf32>
    %7 = arith.maximumf %5, %6 : vector<32x32xf32>
    %c0_6 = arith.constant 0 : index
    %c0_7 = arith.constant 0 : index
    %8 = vector.load %arg4[%c0_6, %c0_7] : memref<32x32xf32, #tpu.memory_space<vmem>>, vector<32x32xf32>
    %c0_8 = arith.constant 0 : index
    %c0_9 = arith.constant 0 : index
    %9 = vector.load %arg5[%c0_8, %c0_9] : memref<1x32xf32, #tpu.memory_space<vmem>>, vector<1x32xf32>
    %cst_10 = arith.constant dense<0.000000e+00> : vector<32x32xf32>
    %10 = tpu.matmul %7, %8, %cst_10 {dimension_numbers = #tpu.dot_dimension_numbers<[1], [0], [0], [1], [0, 0, 1, 1], [], []>} : vector<32x32xf32>, vector<32x32xf32>, vector<32x32xf32> -> vector<32x32xf32>
    %11 = vector.broadcast %9 : vector<1x32xf32> to vector<32x32xf32>
    %12 = arith.addf %10, %11 : vector<32x32xf32>
    %cst_11 = arith.constant 0.000000e+00 : f32
    %13 = vector.broadcast %cst_11 : f32 to vector<32x32xf32>
    %14 = arith.maximumf %12, %13 : vector<32x32xf32>
    %c0_12 = arith.constant 0 : index
    %c0_13 = arith.constant 0 : index
    %15 = vector.load %arg6[%c0_12, %c0_13] : memref<32x32xf32, #tpu.memory_space<vmem>>, vector<32x32xf32>
    tpu.vector_store %arg6[%c0_12, %c0_13], %14 {strides = array<i32>} : memref<32x32xf32, #tpu.memory_space<vmem>>, vector<32x32xf32>,
    return
  }
  func.func @transform_0(%arg0: i32) -> (i32, i32) {
    %c0_i32 = arith.constant 0 : i32
    %c0_i32_0 = arith.constant 0 : i32
    return %arg0, %c0_i32 : i32, i32
  }
  func.func @transform_1(%arg0: i32) -> (i32, i32) {
    %c0_i32 = arith.constant 0 : i32
    %c0_i32_0 = arith.constant 0 : i32
    %c0_i32_1 = arith.constant 0 : i32
    return %c0_i32, %c0_i32_0 : i32, i32
  }
  func.func @transform_2(%arg0: i32) -> (i32, i32) {
    %c0_i32 = arith.constant 0 : i32
    %c0_i32_0 = arith.constant 0 : i32
    %c0_i32_1 = arith.constant 0 : i32
    return %c0_i32, %c0_i32_0 : i32, i32
  }
  func.func @transform_3(%arg0: i32) -> (i32, i32) {
    %c0_i32 = arith.constant 0 : i32
    %c0_i32_0 = arith.constant 0 : i32
    %c0_i32_1 = arith.constant 0 : i32
    return %c0_i32, %c0_i32_0 : i32, i32
  }
  func.func @transform_4(%arg0: i32) -> (i32, i32) {
    %c0_i32 = arith.constant 0 : i32
    %c0_i32_0 = arith.constant 0 : i32
    %c0_i32_1 = arith.constant 0 : i32
    return %c0_i32, %c0_i32_0 : i32, i32
  }
  func.func @transform_5(%arg0: i32) -> (i32, i32) {
    %c0_i32 = arith.constant 0 : i32
    %c0_i32_0 = arith.constant 0 : i32
    return %arg0, %c0_i32 : i32, i32
  }
}

module attributes {stable_mosaic.version = 11 : i64} {
  func.func @kernel(%arg0: i32, %arg1: memref<64x33xf32, #tpu.memory_space<vmem>>, %arg2: memref<33x32xf32, #tpu.memory_space<vmem>>, %arg3: memref<1x32xf32, #tpu.memory_space<vmem>>, %arg4: memref<32x32xf32, #tpu.memory_space<vmem>>, %arg5: memref<1x32xf32, #tpu.memory_space<vmem>>, %arg6: memref<64x32xf32, #tpu.memory_space<vmem>>) attributes {dimension_semantics = [#tpu.dimension_semantics<parallel>], iteration_bounds = array<i64: 1>, scalar_prefetch = 0 : i64, scratch_operands = 0 : i64, tpu.core_type = #tpu.core_type<tc>, window_params = [{transform_indices = @transform_0, window_bounds = array<i64: 64, 33>}, {pipeline_mode = #tpu.pipeline_mode<synchronous>, transform_indices = @transform_1, window_bounds = array<i64: 33, 32>}, {pipeline_mode = #tpu.pipeline_mode<synchronous>, transform_indices = @transform_2, window_bounds = array<i64: 1, 32>}, {pipeline_mode = #tpu.pipeline_mode<synchronous>, transform_indices = @transform_3, window_bounds = array<i64: 32, 32>}, {pipeline_mode = #tpu.pipeline_mode<synchronous>, transform_indices = @transform_4, window_bounds = array<i64: 1, 32>}, {transform_indices = @transform_5, window_bounds = array<i64: 64, 32>}]} {
    %c0 = arith.constant 0 : index
    %c0_0 = arith.constant 0 : index
    %0 = vector.load %arg1[%c0, %c0_0] : memref<64x33xf32, #tpu.memory_space<vmem>>, vector<64x33xf32>
    %c0_1 = arith.constant 0 : index
    %c0_2 = arith.constant 0 : index
    %1 = vector.load %arg2[%c0_1, %c0_2] : memref<33x32xf32, #tpu.memory_space<vmem>>, vector<33x32xf32>
    %c0_3 = arith.constant 0 : index
    %c0_4 = arith.constant 0 : index
    %2 = vector.load %arg3[%c0_3, %c0_4] : memref<1x32xf32, #tpu.memory_space<vmem>>, vector<1x32xf32>
    %cst = arith.constant dense<0.000000e+00> : vector<64x32xf32>
    %3 = tpu.matmul %0, %1, %cst {dimension_numbers = #tpu.dot_dimension_numbers<[1], [0], [0], [1], [0, 0, 1, 1], [], []>} : vector<64x33xf32>, vector<33x32xf32>, vector<64x32xf32> -> vector<64x32xf32>
    %4 = vector.broadcast %2 : vector<1x32xf32> to vector<64x32xf32>
    %5 = arith.addf %3, %4 : vector<64x32xf32>
    %cst_5 = arith.constant 0.000000e+00 : f32
    %6 = vector.broadcast %cst_5 : f32 to vector<64x32xf32>
    %7 = arith.maximumf %5, %6 : vector<64x32xf32>
    %c0_6 = arith.constant 0 : index
    %c0_7 = arith.constant 0 : index
    %8 = vector.load %arg4[%c0_6, %c0_7] : memref<32x32xf32, #tpu.memory_space<vmem>>, vector<32x32xf32>
    %c0_8 = arith.constant 0 : index
    %c0_9 = arith.constant 0 : index
    %9 = vector.load %arg5[%c0_8, %c0_9] : memref<1x32xf32, #tpu.memory_space<vmem>>, vector<1x32xf32>
    %cst_10 = arith.constant dense<0.000000e+00> : vector<64x32xf32>
    %10 = tpu.matmul %7, %8, %cst_10 {dimension_numbers = #tpu.dot_dimension_numbers<[1], [0], [0], [1], [0, 0, 1, 1], [], []>} : vector<64x32xf32>, vector<32x32xf32>, vector<64x32xf32> -> vector<64x32xf32>
    %11 = vector.broadcast %9 : vector<1x32xf32> to vector<64x32xf32>
    %12 = arith.addf %10, %11 : vector<64x32xf32>
    %cst_11 = arith.constant 0.000000e+00 : f32
    %13 = vector.broadcast %cst_11 : f32 to vector<64x32xf32>
    %14 = arith.maximumf %12, %13 : vector<64x32xf32>
    %c0_12 = arith.constant 0 : index
    %c0_13 = arith.constant 0 : index
    %15 = vector.load %arg6[%c0_12, %c0_13] : memref<64x32xf32, #tpu.memory_space<vmem>>, vector<64x32xf32>
    tpu.vector_store %arg6[%c0_12, %c0_13], %14 {strides = array<i32>} : memref<64x32xf32, #tpu.memory_space<vmem>>, vector<64x32xf32>,
    return
  }
  func.func @transform_0(%arg0: i32) -> (i32, i32) {
    %c0_i32 = arith.constant 0 : i32
    %c0_i32_0 = arith.constant 0 : i32
    return %arg0, %c0_i32 : i32, i32
  }
  func.func @transform_1(%arg0: i32) -> (i32, i32) {
    %c0_i32 = arith.constant 0 : i32
    %c0_i32_0 = arith.constant 0 : i32
    %c0_i32_1 = arith.constant 0 : i32
    return %c0_i32, %c0_i32_0 : i32, i32
  }
  func.func @transform_2(%arg0: i32) -> (i32, i32) {
    %c0_i32 = arith.constant 0 : i32
    %c0_i32_0 = arith.constant 0 : i32
    %c0_i32_1 = arith.constant 0 : i32
    return %c0_i32, %c0_i32_0 : i32, i32
  }
  func.func @transform_3(%arg0: i32) -> (i32, i32) {
    %c0_i32 = arith.constant 0 : i32
    %c0_i32_0 = arith.constant 0 : i32
    %c0_i32_1 = arith.constant 0 : i32
    return %c0_i32, %c0_i32_0 : i32, i32
  }
  func.func @transform_4(%arg0: i32) -> (i32, i32) {
    %c0_i32 = arith.constant 0 : i32
    %c0_i32_0 = arith.constant 0 : i32
    %c0_i32_1 = arith.constant 0 : i32
    return %c0_i32, %c0_i32_0 : i32, i32
  }
  func.func @transform_5(%arg0: i32) -> (i32, i32) {
    %c0_i32 = arith.constant 0 : i32
    %c0_i32_0 = arith.constant 0 : i32
    return %arg0, %c0_i32 : i32, i32
  }
}

</mosaic_0001>

<llo_original>
// kernel: custom-call.20
$region0: #{custom-call.20}
  %s0 = inlined_call_operand.vmem [shape: f32[2,32], index: 0, kind: output, shape index: {}]

// kernel: custom-call.21
$region0: #{custom-call.21}
  %s0 = inlined_call_operand.vmem [shape: f32[2,16], index: 0, kind: output, shape index: {}]

// kernel: neg.4
$region0: #{neg.4}
  #allocation0 [shape = 's32[1]{0}', space=sflag, size = 0x4, scoped, tag = 'scoped memory for neg.4']
  %s0 = inlined_call_operand.vmem [shape: f32[2,16,8], index: 0, kind: input, shape index: {}]
  %s1 = inlined_call_operand.vmem [shape: f32[2,16,8], index: 1, kind: output, shape index: {}]
  %v2 = vld [vmem:[%s0] sm:$0xff]
  %3 = xla_tuple %v2
  %4 = xla_tuple %3
  %v5 = vxor.u32 %v2, 2147483648
  %6 = xla_tuple %v5
  %7 = vst [vmem:[%s1] sm:$0xff] %v5
  %s8 = scalar_lea.vmem %s0, 8
  %v9 = vld [vmem:[%s8] sm:$0xff]
  %10 = xla_tuple %v9
  %11 = xla_tuple %10
  %v12 = vxor.u32 %v9, 2147483648
  %13 = xla_tuple %v12
  %s14 = scalar_lea.vmem %s1, 8
  %15 = vst [vmem:[%s14] sm:$0xff] %v12

// kernel: _lambda_.4
$region0: #{_lambda_.4}
  #allocation0 [shape = 'u32[]', space=smem, size = 0x4, offset = 0x4, fixed_abs, tag = 'smem constant byte address 0x4 - core index']
  #allocation1 [shape = 'u32[144,128]{1,0:T(1,128)}', space=vmem, size = 0x12000, scoped, tag = 'internal scratch']
  %s0 = inlined_call_operand.vmem [shape: f32[256,4], index: 0, kind: input, shape index: {}]
  %s1 = inlined_call_operand.vmem [shape: f32[512,4], index: 1, kind: input, shape index: {}]
  %s2 = inlined_call_operand.vmem [shape: f32[4,8], index: 2, kind: input, shape index: {}]
  %s3 = inlined_call_operand.vmem [shape: f32[1,8], index: 3, kind: input, shape index: {}]
  %s4 = inlined_call_operand.vmem [shape: f32[8,8], index: 4, kind: input, shape index: {}]
  %s5 = inlined_call_operand.vmem [shape: f32[1,8], index: 5, kind: input, shape index: {}]
  %s6 = inlined_call_operand.vmem [shape: f32[8,16], index: 6, kind: input, shape index: {}]
  %s7 = inlined_call_operand.vmem [shape: f32[1,16], index: 7, kind: input, shape index: {}]
  %s8 = inlined_call_operand.vmem [shape: f32[4,8], index: 8, kind: input, shape index: {}]
  %s9 = inlined_call_operand.vmem [shape: f32[1,8], index: 9, kind: input, shape index: {}]
  %s10 = inlined_call_operand.vmem [shape: f32[8,8], index: 10, kind: input, shape index: {}]
  %s11 = inlined_call_operand.vmem [shape: f32[1,8], index: 11, kind: input, shape index: {}]
  %s12 = inlined_call_operand.vmem [shape: f32[8,16], index: 12, kind: input, shape index: {}]
  %s13 = inlined_call_operand.vmem [shape: f32[1,16], index: 13, kind: input, shape index: {}]
  %s14 = inlined_call_operand.vmem [shape: f32[32,32], index: 14, kind: output, shape index: {}]
  %s15 = sld [smem:[#allocation0]]
  $region66: #{_lambda_.4} parent=0
    _
  %s17 = ssub.s32 1, %s15
  %s18 = scalar_select 0, %s17, %s15
  // Predicated region
  $region2: #{_lambda_.4} parent=0 // pred_check
    _
  $region3: #{_lambda_.4} parent=0 // pred_check_branch
    %20 = sbr.rel (0) target = $region5
  $region4: #{_lambda_.4} parent=0 // pred_region
    _
  $region5: #{_lambda_.4} parent=0 // pred_fallthru
    _
  // Predicated region
  $region6: #{_lambda_.4} parent=0 // pred_check
    _
  $region7: #{_lambda_.4} parent=0 // pred_check_branch
    %22 = sbr.rel (0) target = $region9
  $region8: #{_lambda_.4} parent=0 // pred_region
    _
  $region9: #{_lambda_.4} parent=0 // pred_fallthru
    _
  // Predicated region
  $region10: #{_lambda_.4} parent=0 // pred_check
    _
  $region11: #{_lambda_.4} parent=0 // pred_check_branch
    %24 = sbr.rel (0) target = $region13
  $region12: #{_lambda_.4} parent=0 // pred_region
    _
  $region13: #{_lambda_.4} parent=0 // pred_fallthru
    _
  // Predicated region
  $region14: #{_lambda_.4} parent=0 // pred_check
    _
  $region15: #{_lambda_.4} parent=0 // pred_check_branch
    %26 = sbr.rel (0) target = $region17
  $region16: #{_lambda_.4} parent=0 // pred_region
    _
  $region17: #{_lambda_.4} parent=0 // pred_fallthru
    _
  // Predicated region
  $region18: #{_lambda_.4} parent=0 // pred_check
    _
  $region19: #{_lambda_.4} parent=0 // pred_check_branch
    %28 = sbr.rel (0) target = $region21
  $region20: #{_lambda_.4} parent=0 // pred_region
    _
  $region21: #{_lambda_.4} parent=0 // pred_fallthru
    _
  // Predicated region
  $region22: #{_lambda_.4} parent=0 // pred_check
    _
  $region23: #{_lambda_.4} parent=0 // pred_check_branch
    %30 = sbr.rel (0) target = $region25
  $region24: #{_lambda_.4} parent=0 // pred_region
    _
  $region25: #{_lambda_.4} parent=0 // pred_fallthru
    _
  // Predicated region
  $region26: #{_lambda_.4} parent=0 // pred_check
    _
  $region27: #{_lambda_.4} parent=0 // pred_check_branch
    %32 = sbr.rel (0) target = $region29
  $region28: #{_lambda_.4} parent=0 // pred_region
    _
  $region29: #{_lambda_.4} parent=0 // pred_fallthru
    _
  // Predicated region
  $region30: #{_lambda_.4} parent=0 // pred_check
    _
  $region31: #{_lambda_.4} parent=0 // pred_check_branch
    %34 = sbr.rel (0) target = $region33
  $region32: #{_lambda_.4} parent=0 // pred_region
    _
  $region33: #{_lambda_.4} parent=0 // pred_fallthru
    _
  // Predicated region
  $region34: #{_lambda_.4} parent=0 // pred_check
    _
  $region35: #{_lambda_.4} parent=0 // pred_check_branch
    %36 = sbr.rel (0) target = $region37
  $region36: #{_lambda_.4} parent=0 // pred_region
    _
  $region37: #{_lambda_.4} parent=0 // pred_fallthru
    _
  // Predicated region
  $region38: #{_lambda_.4} parent=0 // pred_check
    _
  $region39: #{_lambda_.4} parent=0 // pred_check_branch
    %38 = sbr.rel (0) target = $region41
  $region40: #{_lambda_.4} parent=0 // pred_region
    _
  $region41: #{_lambda_.4} parent=0 // pred_fallthru
    _
  // Predicated region
  $region42: #{_lambda_.4} parent=0 // pred_check
    _
  $region43: #{_lambda_.4} parent=0 // pred_check_branch
    %40 = sbr.rel (0) target = $region45
  $region44: #{_lambda_.4} parent=0 // pred_region
    _
  $region45: #{_lambda_.4} parent=0 // pred_fallthru
    _
  // Predicated region
  $region46: #{_lambda_.4} parent=0 // pred_check
    _
  $region47: #{_lambda_.4} parent=0 // pred_check_branch
    %42 = sbr.rel (0) target = $region49
  $region48: #{_lambda_.4} parent=0 // pred_region
    _
  $region49: #{_lambda_.4} parent=0 // pred_fallthru
    _
  // Predicated region
  $region50: #{_lambda_.4} parent=0 // pred_check
    _
  $region51: #{_lambda_.4} parent=0 // pred_check_branch
    %44 = sbr.rel (0) target = $region53
  $region52: #{_lambda_.4} parent=0 // pred_region
    _
  $region53: #{_lambda_.4} parent=0 // pred_fallthru
    _
  // Predicated region
  $region54: #{_lambda_.4} parent=0 // pred_check
    _
  $region55: #{_lambda_.4} parent=0 // pred_check_branch
    %46 = sbr.rel (0) target = $region57
  $region56: #{_lambda_.4} parent=0 // pred_region
    _
  $region57: #{_lambda_.4} parent=0 // pred_fallthru
    _
  %v47 = vld [vmem:[%s0] sm:$0xff]
  %v48 = vld [vmem:[%s0 + $0x8] sm:$0xff]
  %v49 = vld [vmem:[%s0 + $0x10] sm:$0xff]
  %v50 = vld [vmem:[%s0 + $0x18] sm:$0xff]
  %v51 = vld [vmem:[%s0 + $0x20] sm:$0xff]
  %v52 = vld [vmem:[%s0 + $0x28] sm:$0xff]
  %v53 = vld [vmem:[%s0 + $0x30] sm:$0xff]
  %v54 = vld [vmem:[%s0 + $0x38] sm:$0xff]
  %v55 = vld [vmem:[%s0 + $0x40] sm:$0xff]
  %v56 = vld [vmem:[%s0 + $0x48] sm:$0xff]
  %v57 = vld [vmem:[%s0 + $0x50] sm:$0xff]
  %v58 = vld [vmem:[%s0 + $0x58] sm:$0xff]
  %v59 = vld [vmem:[%s0 + $0x60] sm:$0xff]
  %v60 = vld [vmem:[%s0 + $0x68] sm:$0xff]
  %v61 = vld [vmem:[%s0 + $0x70] sm:$0xff]
  %v62 = vld [vmem:[%s0 + $0x78] sm:$0xff]
  %v63 = vld [vmem:[%s0 + $0x80] sm:$0xff]
  %v64 = vld [vmem:[%s0 + $0x88] sm:$0xff]
  %v65 = vld [vmem:[%s0 + $0x90] sm:$0xff]
  %v66 = vld [vmem:[%s0 + $0x98] sm:$0xff]
  %v67 = vld [vmem:[%s0 + $0xa0] sm:$0xff]
  %v68 = vld [vmem:[%s0 + $0xa8] sm:$0xff]
  %v69 = vld [vmem:[%s0 + $0xb0] sm:$0xff]
  %v70 = vld [vmem:[%s0 + $0xb8] sm:$0xff]
  %v71 = vld [vmem:[%s0 + $0xc0] sm:$0xff]
  %v72 = vld [vmem:[%s0 + $0xc8] sm:$0xff]
  %v73 = vld [vmem:[%s0 + $0xd0] sm:$0xff]
  %v74 = vld [vmem:[%s0 + $0xd8] sm:$0xff]
  %v75 = vld [vmem:[%s0 + $0xe0] sm:$0xff]
  %v76 = vld [vmem:[%s0 + $0xe8] sm:$0xff]
  %v77 = vld [vmem:[%s0 + $0xf0] sm:$0xff]
  %v78 = vld [vmem:[%s0 + $0xf8] sm:$0xff]
  %v79 = vld [vmem:[%s2] sm:$0xf]
  %v80 = vld [vmem:[%s3] sm:$0x1]
  %v82 = vlaneseq
  %v83 = vshrl.u32 %v82, 7
  %v84 = vsub.s32 0, %v83
  %v85 = vrot.slane %v80, %v84
  %88 = vset.pattern.permute.xlu0 0
  %89 = vperm.xlu0 %88, %v47
  %v90 = vpop.permute.xlu0 %89
  %93 = vset.pattern.permute.xlu0 0
  %94 = vperm.xlu0 %93, %v48
  %v95 = vpop.permute.xlu0 %94
  %98 = vset.pattern.permute.xlu0 0
  %99 = vperm.xlu0 %98, %v49
  %v100 = vpop.permute.xlu0 %99
  %103 = vset.pattern.permute.xlu0 0
  %104 = vperm.xlu0 %103, %v50
  %v105 = vpop.permute.xlu0 %104
  %108 = vset.pattern.permute.xlu0 0
  %109 = vperm.xlu0 %108, %v51
  %v110 = vpop.permute.xlu0 %109
  %113 = vset.pattern.permute.xlu0 0
  %114 = vperm.xlu0 %113, %v52
  %v115 = vpop.permute.xlu0 %114
  %118 = vset.pattern.permute.xlu0 0
  %119 = vperm.xlu0 %118, %v53
  %v120 = vpop.permute.xlu0 %119
  %123 = vset.pattern.permute.xlu0 0
  %124 = vperm.xlu0 %123, %v54
  %v125 = vpop.permute.xlu0 %124
  %128 = vset.pattern.permute.xlu0 0
  %129 = vperm.xlu0 %128, %v55
  %v130 = vpop.permute.xlu0 %129
  %133 = vset.pattern.permute.xlu0 0
  %134 = vperm.xlu0 %133, %v56
  %v135 = vpop.permute.xlu0 %134
  %138 = vset.pattern.permute.xlu0 0
  %139 = vperm.xlu0 %138, %v57
  %v140 = vpop.permute.xlu0 %139
  %143 = vset.pattern.permute.xlu0 0
  %144 = vperm.xlu0 %143, %v58
  %v145 = vpop.permute.xlu0 %144
  %148 = vset.pattern.permute.xlu0 0
  %149 = vperm.xlu0 %148, %v59
  %v150 = vpop.permute.xlu0 %149
  %153 = vset.pattern.permute.xlu0 0
  %154 = vperm.xlu0 %153, %v60
  %v155 = vpop.permute.xlu0 %154
  %158 = vset.pattern.permute.xlu0 0
  %159 = vperm.xlu0 %158, %v61
  %v160 = vpop.permute.xlu0 %159
  %163 = vset.pattern.permute.xlu0 0
  %164 = vperm.xlu0 %163, %v62
  %v165 = vpop.permute.xlu0 %164
  %168 = vset.pattern.permute.xlu0 0
  %169 = vperm.xlu0 %168, %v63
  %v170 = vpop.permute.xlu0 %169
  %173 = vset.pattern.permute.xlu0 0
  %174 = vperm.xlu0 %173, %v64
  %v175 = vpop.permute.xlu0 %174
  %178 = vset.pattern.permute.xlu0 0
  %179 = vperm.xlu0 %178, %v65
  %v180 = vpop.permute.xlu0 %179
  %183 = vset.pattern.permute.xlu0 0
  %184 = vperm.xlu0 %183, %v66
  %v185 = vpop.permute.xlu0 %184
  %188 = vset.pattern.permute.xlu0 0
  %189 = vperm.xlu0 %188, %v67
  %v190 = vpop.permute.xlu0 %189
  %193 = vset.pattern.permute.xlu0 0
  %194 = vperm.xlu0 %193, %v68
  %v195 = vpop.permute.xlu0 %194
  %198 = vset.pattern.permute.xlu0 0
  %199 = vperm.xlu0 %198, %v69
  %v200 = vpop.permute.xlu0 %199
  %203 = vset.pattern.permute.xlu0 0
  %204 = vperm.xlu0 %203, %v70
  %v205 = vpop.permute.xlu0 %204
  %208 = vset.pattern.permute.xlu0 0
  %209 = vperm.xlu0 %208, %v71
  %v210 = vpop.permute.xlu0 %209
  %213 = vset.pattern.permute.xlu0 0
  %214 = vperm.xlu0 %213, %v72
  %v215 = vpop.permute.xlu0 %214
  %218 = vset.pattern.permute.xlu0 0
  %219 = vperm.xlu0 %218, %v73
  %v220 = vpop.permute.xlu0 %219
  %223 = vset.pattern.permute.xlu0 0
  %224 = vperm.xlu0 %223, %v74
  %v225 = vpop.permute.xlu0 %224
  %228 = vset.pattern.permute.xlu0 0
  %229 = vperm.xlu0 %228, %v75
  %v230 = vpop.permute.xlu0 %229
  %233 = vset.pattern.permute.xlu0 0
  %234 = vperm.xlu0 %233, %v76
  %v235 = vpop.permute.xlu0 %234
  %238 = vset.pattern.permute.xlu0 0
  %239 = vperm.xlu0 %238, %v77
  %v240 = vpop.permute.xlu0 %239
  %243 = vset.pattern.permute.xlu0 0
  %244 = vperm.xlu0 %243, %v78
  %v245 = vpop.permute.xlu0 %244
  %v247 = vlaneseq
  %v248 = vshrl.u32 %v247, 7
  %v249 = vsub.s32 0, %v248
  %v250 = vrot.slane %v79, %v249
  %v251 = vmul.f32 %v90, %v250
  %v252 = vmul.f32 %v95, %v250
  %v253 = vmul.f32 %v100, %v250
  %v254 = vmul.f32 %v105, %v250
  %v255 = vmul.f32 %v110, %v250
  %v256 = vmul.f32 %v115, %v250
  %v257 = vmul.f32 %v120, %v250
  %v258 = vmul.f32 %v125, %v250
  %v259 = vmul.f32 %v130, %v250
  %v260 = vmul.f32 %v135, %v250
  %v261 = vmul.f32 %v140, %v250
  %v262 = vmul.f32 %v145, %v250
  %v263 = vmul.f32 %v150, %v250
  %v264 = vmul.f32 %v155, %v250
  %v265 = vmul.f32 %v160, %v250
  %v266 = vmul.f32 %v165, %v250
  %v267 = vmul.f32 %v170, %v250
  %v268 = vmul.f32 %v175, %v250
  %v269 = vmul.f32 %v180, %v250
  %v270 = vmul.f32 %v185, %v250
  %v271 = vmul.f32 %v190, %v250
  %v272 = vmul.f32 %v195, %v250
  %v273 = vmul.f32 %v200, %v250
  %v274 = vmul.f32 %v205, %v250
  %v275 = vmul.f32 %v210, %v250
  %v276 = vmul.f32 %v215, %v250
  %v277 = vmul.f32 %v220, %v250
  %v278 = vmul.f32 %v225, %v250
  %v279 = vmul.f32 %v230, %v250
  %v280 = vmul.f32 %v235, %v250
  %v281 = vmul.f32 %v240, %v250
  %v282 = vmul.f32 %v245, %v250
  %v283 = vadd.f32 %v85, %v251
  %v284 = vadd.f32 %v85, %v252
  %v285 = vadd.f32 %v85, %v253
  %v286 = vadd.f32 %v85, %v254
  %v287 = vadd.f32 %v85, %v255
  %v288 = vadd.f32 %v85, %v256
  %v289 = vadd.f32 %v85, %v257
  %v290 = vadd.f32 %v85, %v258
  %v291 = vadd.f32 %v85, %v259
  %v292 = vadd.f32 %v85, %v260
  %v293 = vadd.f32 %v85, %v261
  %v294 = vadd.f32 %v85, %v262
  %v295 = vadd.f32 %v85, %v263
  %v296 = vadd.f32 %v85, %v264
  %v297 = vadd.f32 %v85, %v265
  %v298 = vadd.f32 %v85, %v266
  %v299 = vadd.f32 %v85, %v267
  %v300 = vadd.f32 %v85, %v268
  %v301 = vadd.f32 %v85, %v269
  %v302 = vadd.f32 %v85, %v270
  %v303 = vadd.f32 %v85, %v271
  %v304 = vadd.f32 %v85, %v272
  %v305 = vadd.f32 %v85, %v273
  %v306 = vadd.f32 %v85, %v274
  %v307 = vadd.f32 %v85, %v275
  %v308 = vadd.f32 %v85, %v276
  %v309 = vadd.f32 %v85, %v277
  %v310 = vadd.f32 %v85, %v278
  %v311 = vadd.f32 %v85, %v279
  %v312 = vadd.f32 %v85, %v280
  %v313 = vadd.f32 %v85, %v281
  %v314 = vadd.f32 %v85, %v282
  %315 = vset.pattern.permute.xlu0 1
  %316 = vperm.xlu0 %315, %v47
  %v317 = vpop.permute.xlu0 %316
  %319 = vset.pattern.permute.xlu0 1
  %320 = vperm.xlu0 %319, %v48
  %v321 = vpop.permute.xlu0 %320
  %323 = vset.pattern.permute.xlu0 1
  %324 = vperm.xlu0 %323, %v49
  %v325 = vpop.permute.xlu0 %324
  %327 = vset.pattern.permute.xlu0 1
  %328 = vperm.xlu0 %327, %v50
  %v329 = vpop.permute.xlu0 %328
  %331 = vset.pattern.permute.xlu0 1
  %332 = vperm.xlu0 %331, %v51
  %v333 = vpop.permute.xlu0 %332
  %335 = vset.pattern.permute.xlu0 1
  %336 = vperm.xlu0 %335, %v52
  %v337 = vpop.permute.xlu0 %336
  %339 = vset.pattern.permute.xlu0 1
  %340 = vperm.xlu0 %339, %v53
  %v341 = vpop.permute.xlu0 %340
  %343 = vset.pattern.permute.xlu0 1
  %344 = vperm.xlu0 %343, %v54
  %v345 = vpop.permute.xlu0 %344
  %347 = vset.pattern.permute.xlu0 1
  %348 = vperm.xlu0 %347, %v55
  %v349 = vpop.permute.xlu0 %348
  %351 = vset.pattern.permute.xlu0 1
  %352 = vperm.xlu0 %351, %v56
  %v353 = vpop.permute.xlu0 %352
  %355 = vset.pattern.permute.xlu0 1
  %356 = vperm.xlu0 %355, %v57
  %v357 = vpop.permute.xlu0 %356
  %359 = vset.pattern.permute.xlu0 1
  %360 = vperm.xlu0 %359, %v58
  %v361 = vpop.permute.xlu0 %360
  %363 = vset.pattern.permute.xlu0 1
  %364 = vperm.xlu0 %363, %v59
  %v365 = vpop.permute.xlu0 %364
  %367 = vset.pattern.permute.xlu0 1
  %368 = vperm.xlu0 %367, %v60
  %v369 = vpop.permute.xlu0 %368
  %371 = vset.pattern.permute.xlu0 1
  %372 = vperm.xlu0 %371, %v61
  %v373 = vpop.permute.xlu0 %372
  %375 = vset.pattern.permute.xlu0 1
  %376 = vperm.xlu0 %375, %v62
  %v377 = vpop.permute.xlu0 %376
  %379 = vset.pattern.permute.xlu0 1
  %380 = vperm.xlu0 %379, %v63
  %v381 = vpop.permute.xlu0 %380
  %383 = vset.pattern.permute.xlu0 1
  %384 = vperm.xlu0 %383, %v64
  %v385 = vpop.permute.xlu0 %384
  %387 = vset.pattern.permute.xlu0 1
  %388 = vperm.xlu0 %387, %v65
  %v389 = vpop.permute.xlu0 %388
  %391 = vset.pattern.permute.xlu0 1
  %392 = vperm.xlu0 %391, %v66
  %v393 = vpop.permute.xlu0 %392
  %395 = vset.pattern.permute.xlu0 1
  %396 = vperm.xlu0 %395, %v67
  %v397 = vpop.permute.xlu0 %396
  %399 = vset.pattern.permute.xlu0 1
  %400 = vperm.xlu0 %399, %v68
  %v401 = vpop.permute.xlu0 %400
  %403 = vset.pattern.permute.xlu0 1
  %404 = vperm.xlu0 %403, %v69
  %v405 = vpop.permute.xlu0 %404
  %407 = vset.pattern.permute.xlu0 1
  %408 = vperm.xlu0 %407, %v70
  %v409 = vpop.permute.xlu0 %408
  %411 = vset.pattern.permute.xlu0 1
  %412 = vperm.xlu0 %411, %v71
  %v413 = vpop.permute.xlu0 %412
  %415 = vset.pattern.permute.xlu0 1
  %416 = vperm.xlu0 %415, %v72
  %v417 = vpop.permute.xlu0 %416
  %419 = vset.pattern.permute.xlu0 1
  %420 = vperm.xlu0 %419, %v73
  %v421 = vpop.permute.xlu0 %420
  %423 = vset.pattern.permute.xlu0 1
  %424 = vperm.xlu0 %423, %v74
  %v425 = vpop.permute.xlu0 %424
  %427 = vset.pattern.permute.xlu0 1
  %428 = vperm.xlu0 %427, %v75
  %v429 = vpop.permute.xlu0 %428
  %431 = vset.pattern.permute.xlu0 1
  %432 = vperm.xlu0 %431, %v76
  %v433 = vpop.permute.xlu0 %432
  %435 = vset.pattern.permute.xlu0 1
  %436 = vperm.xlu0 %435, %v77
  %v437 = vpop.permute.xlu0 %436
  %439 = vset.pattern.permute.xlu0 1
  %440 = vperm.xlu0 %439, %v78
  %v441 = vpop.permute.xlu0 %440
  %v443 = vlaneseq
  %v444 = vshrl.u32 %v443, 7
  %v445 = vsub.s32 1, %v444
  %v446 = vrot.slane %v79, %v445
  %v447 = vmul.f32 %v317, %v446
  %v448 = vmul.f32 %v321, %v446
  %v449 = vmul.f32 %v325, %v446
  %v450 = vmul.f32 %v329, %v446
  %v451 = vmul.f32 %v333, %v446
  %v452 = vmul.f32 %v337, %v446
  %v453 = vmul.f32 %v341, %v446
  %v454 = vmul.f32 %v345, %v446
  %v455 = vmul.f32 %v349, %v446
  %v456 = vmul.f32 %v353, %v446
  %v457 = vmul.f32 %v357, %v446
  %v458 = vmul.f32 %v361, %v446
  %v459 = vmul.f32 %v365, %v446
  %v460 = vmul.f32 %v369, %v446
  %v461 = vmul.f32 %v373, %v446
  %v462 = vmul.f32 %v377, %v446
  %v463 = vmul.f32 %v381, %v446
  %v464 = vmul.f32 %v385, %v446
  %v465 = vmul.f32 %v389, %v446
  %v466 = vmul.f32 %v393, %v446
  %v467 = vmul.f32 %v397, %v446
  %v468 = vmul.f32 %v401, %v446
  %v469 = vmul.f32 %v405, %v446
  %v470 = vmul.f32 %v409, %v446
  %v471 = vmul.f32 %v413, %v446
  %v472 = vmul.f32 %v417, %v446
  %v473 = vmul.f32 %v421, %v446
  %v474 = vmul.f32 %v425, %v446
  %v475 = vmul.f32 %v429, %v446
  %v476 = vmul.f32 %v433, %v446
  %v477 = vmul.f32 %v437, %v446
  %v478 = vmul.f32 %v441, %v446
  %v479 = vadd.f32 %v283, %v447
  %v480 = vadd.f32 %v284, %v448
  %v481 = vadd.f32 %v285, %v449
  %v482 = vadd.f32 %v286, %v450
  %v483 = vadd.f32 %v287, %v451
  %v484 = vadd.f32 %v288, %v452
  %v485 = vadd.f32 %v289, %v453
  %v486 = vadd.f32 %v290, %v454
  %v487 = vadd.f32 %v291, %v455
  %v488 = vadd.f32 %v292, %v456
  %v489 = vadd.f32 %v293, %v457
  %v490 = vadd.f32 %v294, %v458
  %v491 = vadd.f32 %v295, %v459
  %v492 = vadd.f32 %v296, %v460
  %v493 = vadd.f32 %v297, %v461
  %v494 = vadd.f32 %v298, %v462
  %v495 = vadd.f32 %v299, %v463
  %v496 = vadd.f32 %v300, %v464
  %v497 = vadd.f32 %v301, %v465
  %v498 = vadd.f32 %v302, %v466
  %v499 = vadd.f32 %v303, %v467
  %v500 = vadd.f32 %v304, %v468
  %v501 = vadd.f32 %v305, %v469
  %v502 = vadd.f32 %v306, %v470
  %v503 = vadd.f32 %v307, %v471
  %v504 = vadd.f32 %v308, %v472
  %v505 = vadd.f32 %v309, %v473
  %v506 = vadd.f32 %v310, %v474
  %v507 = vadd.f32 %v311, %v475
  %v508 = vadd.f32 %v312, %v476
  %v509 = vadd.f32 %v313, %v477
  %v510 = vadd.f32 %v314, %v478
  %511 = vset.pattern.permute.xlu0 2
  %512 = vperm.xlu0 %511, %v47
  %v513 = vpop.permute.xlu0 %512
  %515 = vset.pattern.permute.xlu0 2
  %516 = vperm.xlu0 %515, %v48
  %v517 = vpop.permute.xlu0 %516
  %519 = vset.pattern.permute.xlu0 2
  %520 = vperm.xlu0 %519, %v49
  %v521 = vpop.permute.xlu0 %520
  %523 = vset.pattern.permute.xlu0 2
  %524 = vperm.xlu0 %523, %v50
  %v525 = vpop.permute.xlu0 %524
  %527 = vset.pattern.permute.xlu0 2
  %528 = vperm.xlu0 %527, %v51
  %v529 = vpop.permute.xlu0 %528
  %531 = vset.pattern.permute.xlu0 2
  %532 = vperm.xlu0 %531, %v52
  %v533 = vpop.permute.xlu0 %532
  %535 = vset.pattern.permute.xlu0 2
  %536 = vperm.xlu0 %535, %v53
  %v537 = vpop.permute.xlu0 %536
  %539 = vset.pattern.permute.xlu0 2
  %540 = vperm.xlu0 %539, %v54
  %v541 = vpop.permute.xlu0 %540
  %543 = vset.pattern.permute.xlu0 2
  %544 = vperm.xlu0 %543, %v55
  %v545 = vpop.permute.xlu0 %544
  %547 = vset.pattern.permute.xlu0 2
  %548 = vperm.xlu0 %547, %v56
  %v549 = vpop.permute.xlu0 %548
  %551 = vset.pattern.permute.xlu0 2
  %552 = vperm.xlu0 %551, %v57
  %v553 = vpop.permute.xlu0 %552
  %555 = vset.pattern.permute.xlu0 2
  %556 = vperm.xlu0 %555, %v58
  %v557 = vpop.permute.xlu0 %556
  %559 = vset.pattern.permute.xlu0 2
  %560 = vperm.xlu0 %559, %v59
  %v561 = vpop.permute.xlu0 %560
  %563 = vset.pattern.permute.xlu0 2
  %564 = vperm.xlu0 %563, %v60
  %v565 = vpop.permute.xlu0 %564
  %567 = vset.pattern.permute.xlu0 2
  %568 = vperm.xlu0 %567, %v61
  %v569 = vpop.permute.xlu0 %568
  %571 = vset.pattern.permute.xlu0 2
  %572 = vperm.xlu0 %571, %v62
  %v573 = vpop.permute.xlu0 %572
  %575 = vset.pattern.permute.xlu0 2
  %576 = vperm.xlu0 %575, %v63
  %v577 = vpop.permute.xlu0 %576
  %579 = vset.pattern.permute.xlu0 2
  %580 = vperm.xlu0 %579, %v64
  %v581 = vpop.permute.xlu0 %580
  %583 = vset.pattern.permute.xlu0 2
  %584 = vperm.xlu0 %583, %v65
  %v585 = vpop.permute.xlu0 %584
  %587 = vset.pattern.permute.xlu0 2
  %588 = vperm.xlu0 %587, %v66
  %v589 = vpop.permute.xlu0 %588
  %591 = vset.pattern.permute.xlu0 2
  %592 = vperm.xlu0 %591, %v67
  %v593 = vpop.permute.xlu0 %592
  %595 = vset.pattern.permute.xlu0 2
  %596 = vperm.xlu0 %595, %v68
  %v597 = vpop.permute.xlu0 %596
  %599 = vset.pattern.permute.xlu0 2
  %600 = vperm.xlu0 %599, %v69
  %v601 = vpop.permute.xlu0 %600
  %603 = vset.pattern.permute.xlu0 2
  %604 = vperm.xlu0 %603, %v70
  %v605 = vpop.permute.xlu0 %604
  %607 = vset.pattern.permute.xlu0 2
  %608 = vperm.xlu0 %607, %v71
  %v609 = vpop.permute.xlu0 %608
  %611 = vset.pattern.permute.xlu0 2
  %612 = vperm.xlu0 %611, %v72
  %v613 = vpop.permute.xlu0 %612
  %615 = vset.pattern.permute.xlu0 2
  %616 = vperm.xlu0 %615, %v73
  %v617 = vpop.permute.xlu0 %616
  %619 = vset.pattern.permute.xlu0 2
  %620 = vperm.xlu0 %619, %v74
  %v621 = vpop.permute.xlu0 %620
  %623 = vset.pattern.permute.xlu0 2
  %624 = vperm.xlu0 %623, %v75
  %v625 = vpop.permute.xlu0 %624
  %627 = vset.pattern.permute.xlu0 2
  %628 = vperm.xlu0 %627, %v76
  %v629 = vpop.permute.xlu0 %628
  %631 = vset.pattern.permute.xlu0 2
  %632 = vperm.xlu0 %631, %v77
  %v633 = vpop.permute.xlu0 %632
  %635 = vset.pattern.permute.xlu0 2
  %636 = vperm.xlu0 %635, %v78
  %v637 = vpop.permute.xlu0 %636
  %v639 = vlaneseq
  %v640 = vshrl.u32 %v639, 7
  %v641 = vsub.s32 2, %v640
  %v642 = vrot.slane %v79, %v641
  %v643 = vmul.f32 %v513, %v642
  %v644 = vmul.f32 %v517, %v642
  %v645 = vmul.f32 %v521, %v642
  %v646 = vmul.f32 %v525, %v642
  %v647 = vmul.f32 %v529, %v642
  %v648 = vmul.f32 %v533, %v642
  %v649 = vmul.f32 %v537, %v642
  %v650 = vmul.f32 %v541, %v642
  %v651 = vmul.f32 %v545, %v642
  %v652 = vmul.f32 %v549, %v642
  %v653 = vmul.f32 %v553, %v642
  %v654 = vmul.f32 %v557, %v642
  %v655 = vmul.f32 %v561, %v642
  %v656 = vmul.f32 %v565, %v642
  %v657 = vmul.f32 %v569, %v642
  %v658 = vmul.f32 %v573, %v642
  %v659 = vmul.f32 %v577, %v642
  %v660 = vmul.f32 %v581, %v642
  %v661 = vmul.f32 %v585, %v642
  %v662 = vmul.f32 %v589, %v642
  %v663 = vmul.f32 %v593, %v642
  %v664 = vmul.f32 %v597, %v642
  %v665 = vmul.f32 %v601, %v642
  %v666 = vmul.f32 %v605, %v642
  %v667 = vmul.f32 %v609, %v642
  %v668 = vmul.f32 %v613, %v642
  %v669 = vmul.f32 %v617, %v642
  %v670 = vmul.f32 %v621, %v642
  %v671 = vmul.f32 %v625, %v642
  %v672 = vmul.f32 %v629, %v642
  %v673 = vmul.f32 %v633, %v642
  %v674 = vmul.f32 %v637, %v642
  %v675 = vadd.f32 %v479, %v643
  %v676 = vadd.f32 %v480, %v644
  %v677 = vadd.f32 %v481, %v645
  %v678 = vadd.f32 %v482, %v646
  %v679 = vadd.f32 %v483, %v647
  %v680 = vadd.f32 %v484, %v648
  %v681 = vadd.f32 %v485, %v649
  %v682 = vadd.f32 %v486, %v650
  %v683 = vadd.f32 %v487, %v651
  %v684 = vadd.f32 %v488, %v652
  %v685 = vadd.f32 %v489, %v653
  %v686 = vadd.f32 %v490, %v654
  %v687 = vadd.f32 %v491, %v655
  %v688 = vadd.f32 %v492, %v656
  %v689 = vadd.f32 %v493, %v657
  %v690 = vadd.f32 %v494, %v658
  %v691 = vadd.f32 %v495, %v659
  %v692 = vadd.f32 %v496, %v660
  %v693 = vadd.f32 %v497, %v661
  %v694 = vadd.f32 %v498, %v662
  %v695 = vadd.f32 %v499, %v663
  %v696 = vadd.f32 %v500, %v664
  %v697 = vadd.f32 %v501, %v665
  %v698 = vadd.f32 %v502, %v666
  %v699 = vadd.f32 %v503, %v667
  %v700 = vadd.f32 %v504, %v668
  %v701 = vadd.f32 %v505, %v669
  %v702 = vadd.f32 %v506, %v670
  %v703 = vadd.f32 %v507, %v671
  %v704 = vadd.f32 %v508, %v672
  %v705 = vadd.f32 %v509, %v673
  %v706 = vadd.f32 %v510, %v674
  %707 = vset.pattern.permute.xlu0 3
  %708 = vperm.xlu0 %707, %v47
  %v709 = vpop.permute.xlu0 %708
  %711 = vset.pattern.permute.xlu0 3
  %712 = vperm.xlu0 %711, %v48
  %v713 = vpop.permute.xlu0 %712
  %715 = vset.pattern.permute.xlu0 3
  %716 = vperm.xlu0 %715, %v49
  %v717 = vpop.permute.xlu0 %716
  %719 = vset.pattern.permute.xlu0 3
  %720 = vperm.xlu0 %719, %v50
  %v721 = vpop.permute.xlu0 %720
  %723 = vset.pattern.permute.xlu0 3
  %724 = vperm.xlu0 %723, %v51
  %v725 = vpop.permute.xlu0 %724
  %727 = vset.pattern.permute.xlu0 3
  %728 = vperm.xlu0 %727, %v52
  %v729 = vpop.permute.xlu0 %728
  %731 = vset.pattern.permute.xlu0 3
  %732 = vperm.xlu0 %731, %v53
  %v733 = vpop.permute.xlu0 %732
  %735 = vset.pattern.permute.xlu0 3
  %736 = vperm.xlu0 %735, %v54
  %v737 = vpop.permute.xlu0 %736
  %739 = vset.pattern.permute.xlu0 3
  %740 = vperm.xlu0 %739, %v55
  %v741 = vpop.permute.xlu0 %740
  %743 = vset.pattern.permute.xlu0 3
  %744 = vperm.xlu0 %743, %v56
  %v745 = vpop.permute.xlu0 %744
  %747 = vset.pattern.permute.xlu0 3
  %748 = vperm.xlu0 %747, %v57
  %v749 = vpop.permute.xlu0 %748
  %751 = vset.pattern.permute.xlu0 3
  %752 = vperm.xlu0 %751, %v58
  %v753 = vpop.permute.xlu0 %752
  %755 = vset.pattern.permute.xlu0 3
  %756 = vperm.xlu0 %755, %v59
  %v757 = vpop.permute.xlu0 %756
  %759 = vset.pattern.permute.xlu0 3
  %760 = vperm.xlu0 %759, %v60
  %v761 = vpop.permute.xlu0 %760
  %763 = vset.pattern.permute.xlu0 3
  %764 = vperm.xlu0 %763, %v61
  %v765 = vpop.permute.xlu0 %764
  %767 = vset.pattern.permute.xlu0 3
  %768 = vperm.xlu0 %767, %v62
  %v769 = vpop.permute.xlu0 %768
  %771 = vset.pattern.permute.xlu0 3
  %772 = vperm.xlu0 %771, %v63
  %v773 = vpop.permute.xlu0 %772
  %775 = vset.pattern.permute.xlu0 3
  %776 = vperm.xlu0 %775, %v64
  %v777 = vpop.permute.xlu0 %776
  %779 = vset.pattern.permute.xlu0 3
  %780 = vperm.xlu0 %779, %v65
  %v781 = vpop.permute.xlu0 %780
  %783 = vset.pattern.permute.xlu0 3
  %784 = vperm.xlu0 %783, %v66
  %v785 = vpop.permute.xlu0 %784
  %787 = vset.pattern.permute.xlu0 3
  %788 = vperm.xlu0 %787, %v67
  %v789 = vpop.permute.xlu0 %788
  %791 = vset.pattern.permute.xlu0 3
  %792 = vperm.xlu0 %791, %v68
  %v793 = vpop.permute.xlu0 %792
  %795 = vset.pattern.permute.xlu0 3
  %796 = vperm.xlu0 %795, %v69
  %v797 = vpop.permute.xlu0 %796
  %799 = vset.pattern.permute.xlu0 3
  %800 = vperm.xlu0 %799, %v70
  %v801 = vpop.permute.xlu0 %800
  %803 = vset.pattern.permute.xlu0 3
  %804 = vperm.xlu0 %803, %v71
  %v805 = vpop.permute.xlu0 %804
  %807 = vset.pattern.permute.xlu0 3
  %808 = vperm.xlu0 %807, %v72
  %v809 = vpop.permute.xlu0 %808
  %811 = vset.pattern.permute.xlu0 3
  %812 = vperm.xlu0 %811, %v73
  %v813 = vpop.permute.xlu0 %812
  %815 = vset.pattern.permute.xlu0 3
  %816 = vperm.xlu0 %815, %v74
  %v817 = vpop.permute.xlu0 %816
  %819 = vset.pattern.permute.xlu0 3
  %820 = vperm.xlu0 %819, %v75
  %v821 = vpop.permute.xlu0 %820
  %823 = vset.pattern.permute.xlu0 3
  %824 = vperm.xlu0 %823, %v76
  %v825 = vpop.permute.xlu0 %824
  %827 = vset.pattern.permute.xlu0 3
  %828 = vperm.xlu0 %827, %v77
  %v829 = vpop.permute.xlu0 %828
  %831 = vset.pattern.permute.xlu0 3
  %832 = vperm.xlu0 %831, %v78
  %v833 = vpop.permute.xlu0 %832
  %v835 = vlaneseq
  %v836 = vshrl.u32 %v835, 7
  %v837 = vsub.s32 3, %v836
  %v838 = vrot.slane %v79, %v837
  %v839 = vmul.f32 %v709, %v838
  %v840 = vmul.f32 %v713, %v838
  %v841 = vmul.f32 %v717, %v838
  %v842 = vmul.f32 %v721, %v838
  %v843 = vmul.f32 %v725, %v838
  %v844 = vmul.f32 %v729, %v838
  %v845 = vmul.f32 %v733, %v838
  %v846 = vmul.f32 %v737, %v838
  %v847 = vmul.f32 %v741, %v838
  %v848 = vmul.f32 %v745, %v838
  %v849 = vmul.f32 %v749, %v838
  %v850 = vmul.f32 %v753, %v838
  %v851 = vmul.f32 %v757, %v838
  %v852 = vmul.f32 %v761, %v838
  %v853 = vmul.f32 %v765, %v838
  %v854 = vmul.f32 %v769, %v838
  %v855 = vmul.f32 %v773, %v838
  %v856 = vmul.f32 %v777, %v838
  %v857 = vmul.f32 %v781, %v838
  %v858 = vmul.f32 %v785, %v838
  %v859 = vmul.f32 %v789, %v838
  %v860 = vmul.f32 %v793, %v838
  %v861 = vmul.f32 %v797, %v838
  %v862 = vmul.f32 %v801, %v838
  %v863 = vmul.f32 %v805, %v838
  %v864 = vmul.f32 %v809, %v838
  %v865 = vmul.f32 %v813, %v838
  %v866 = vmul.f32 %v817, %v838
  %v867 = vmul.f32 %v821, %v838
  %v868 = vmul.f32 %v825, %v838
  %v869 = vmul.f32 %v829, %v838
  %v870 = vmul.f32 %v833, %v838
  %v871 = vadd.f32 %v675, %v839
  %v872 = vadd.f32 %v676, %v840
  %v873 = vadd.f32 %v677, %v841
  %v874 = vadd.f32 %v678, %v842
  %v875 = vadd.f32 %v679, %v843
  %v876 = vadd.f32 %v680, %v844
  %v877 = vadd.f32 %v681, %v845
  %v878 = vadd.f32 %v682, %v846
  %v879 = vadd.f32 %v683, %v847
  %v880 = vadd.f32 %v684, %v848
  %v881 = vadd.f32 %v685, %v849
  %v882 = vadd.f32 %v686, %v850
  %v883 = vadd.f32 %v687, %v851
  %v884 = vadd.f32 %v688, %v852
  %v885 = vadd.f32 %v689, %v853
  %v886 = vadd.f32 %v690, %v854
  %v887 = vadd.f32 %v691, %v855
  %v888 = vadd.f32 %v692, %v856
  %v889 = vadd.f32 %v693, %v857
  %v890 = vadd.f32 %v694, %v858
  %v891 = vadd.f32 %v695, %v859
  %v892 = vadd.f32 %v696, %v860
  %v893 = vadd.f32 %v697, %v861
  %v894 = vadd.f32 %v698, %v862
  %v895 = vadd.f32 %v699, %v863
  %v896 = vadd.f32 %v700, %v864
  %v897 = vadd.f32 %v701, %v865
  %v898 = vadd.f32 %v702, %v866
  %v899 = vadd.f32 %v703, %v867
  %v900 = vadd.f32 %v704, %v868
  %v901 = vadd.f32 %v705, %v869
  %v902 = vadd.f32 %v706, %v870
  %v903 = vmax.f32 %v871, 0.0
  %v904 = vmax.f32 %v872, 0.0
  %v905 = vmax.f32 %v873, 0.0
  %v906 = vmax.f32 %v874, 0.0
  %v907 = vmax.f32 %v875, 0.0
  %v908 = vmax.f32 %v876, 0.0
  %v909 = vmax.f32 %v877, 0.0
  %v910 = vmax.f32 %v878, 0.0
  %v911 = vmax.f32 %v879, 0.0
  %v912 = vmax.f32 %v880, 0.0
  %v913 = vmax.f32 %v881, 0.0
  %v914 = vmax.f32 %v882, 0.0
  %v915 = vmax.f32 %v883, 0.0
  %v916 = vmax.f32 %v884, 0.0
  %v917 = vmax.f32 %v885, 0.0
  %v918 = vmax.f32 %v886, 0.0
  %v919 = vmax.f32 %v887, 0.0
  %v920 = vmax.f32 %v888, 0.0
  %v921 = vmax.f32 %v889, 0.0
  %v922 = vmax.f32 %v890, 0.0
  %v923 = vmax.f32 %v891, 0.0
  %v924 = vmax.f32 %v892, 0.0
  %v925 = vmax.f32 %v893, 0.0
  %v926 = vmax.f32 %v894, 0.0
  %v927 = vmax.f32 %v895, 0.0
  %v928 = vmax.f32 %v896, 0.0
  %v929 = vmax.f32 %v897, 0.0
  %v930 = vmax.f32 %v898, 0.0
  %v931 = vmax.f32 %v899, 0.0
  %v932 = vmax.f32 %v900, 0.0
  %v933 = vmax.f32 %v901, 0.0
  %v934 = vmax.f32 %v902, 0.0
  %v935 = vld [vmem:[%s4] sm:$0xff]
  %v936 = vld [vmem:[%s5] sm:$0x1]
  %v938 = vlaneseq
  %v939 = vshrl.u32 %v938, 7
  %v940 = vsub.s32 0, %v939
  %v941 = vrot.slane %v936, %v940
  %vm943 = vcmask 64512
  %v945 = vsel %vm943, %v903, 0
  %v948 = vsel %vm943, %v904, 0
  %v951 = vsel %vm943, %v905, 0
  %v954 = vsel %vm943, %v906, 0
  %v957 = vsel %vm943, %v907, 0
  %v960 = vsel %vm943, %v908, 0
  %v963 = vsel %vm943, %v909, 0
  %v966 = vsel %vm943, %v910, 0
  %v969 = vsel %vm943, %v911, 0
  %v972 = vsel %vm943, %v912, 0
  %v975 = vsel %vm943, %v913, 0
  %v978 = vsel %vm943, %v914, 0
  %v981 = vsel %vm943, %v915, 0
  %v984 = vsel %vm943, %v916, 0
  %v987 = vsel %vm943, %v917, 0
  %v990 = vsel %vm943, %v918, 0
  %v993 = vsel %vm943, %v919, 0
  %v996 = vsel %vm943, %v920, 0
  %v999 = vsel %vm943, %v921, 0
  %v1002 = vsel %vm943, %v922, 0
  %v1005 = vsel %vm943, %v923, 0
  %v1008 = vsel %vm943, %v924, 0
  %v1011 = vsel %vm943, %v925, 0
  %v1014 = vsel %vm943, %v926, 0
  %v1017 = vsel %vm943, %v927, 0
  %v1020 = vsel %vm943, %v928, 0
  %v1023 = vsel %vm943, %v929, 0
  %v1026 = vsel %vm943, %v930, 0
  %v1029 = vsel %vm943, %v931, 0
  %v1032 = vsel %vm943, %v932, 0
  %v1035 = vsel %vm943, %v933, 0
  %v1038 = vsel %vm943, %v934, 0
  %1040 = vmatprep.subr.mxu0 0.0
  %1041 = vmatpush1.msra.mxu0 %v935
  %1042 = vmatprep.subr.mxu0 0.0
  %1043 = vmatpush1.msra.mxu0 0.0
  %1044 = vmatprep.subr.mxu0 0.0
  %1045 = vmatpush1.msra.mxu0 0.0
  %1046 = vmatprep.subr.mxu0 0.0
  %1047 = vmatpush1.msra.mxu0 0.0
  %1048 = vmatprep.subr.mxu0 0.0
  %1049 = vmatpush1.msra.mxu0 0.0
  %1050 = vmatprep.subr.mxu0 0.0
  %1051 = vmatpush1.msra.mxu0 0.0
  %1052 = vmatprep.subr.mxu0 0.0
  %1053 = vmatpush1.msra.mxu0 0.0
  %1054 = vmatprep.subr.mxu0 0.0
  %1055 = vmatpush1.msra.mxu0 0.0
  %1056 = vmatprep.subr.mxu0 0.0
  %1057 = vmatpush1.msra.mxu0 0.0
  %1058 = vmatprep.subr.mxu0 0.0
  %1059 = vmatpush1.msra.mxu0 0.0
  %1060 = vmatprep.subr.mxu0 0.0
  %1061 = vmatpush1.msra.mxu0 0.0
  %1062 = vmatprep.subr.mxu0 0.0
  %1063 = vmatpush1.msra.mxu0 0.0
  %1064 = vmatprep.subr.mxu0 0.0
  %1065 = vmatpush1.msra.mxu0 0.0
  %1066 = vmatprep.subr.mxu0 0.0
  %1067 = vmatpush1.msra.mxu0 0.0
  %1068 = vmatprep.subr.mxu0 0.0
  %1069 = vmatpush1.msra.mxu0 0.0
  %1070 = vmatprep.subr.mxu0 0.0
  %1071 = vmatpush1.msra.mxu0 0.0
  %1072 = vmatprep.subr.mxu0 0.0
  %1073 = vmatpush1.msra.mxu0 0.0
  %1074 = vmatprep.subr.mxu0 0.0
  %1075 = vmatpush1.msra.mxu0 0.0
  %1076 = vmatprep.subr.mxu0 0.0
  %1077 = vmatpush1.msra.mxu0 0.0
  %1078 = vmatprep.subr.mxu0 0.0
  %1079 = vmatpush1.msra.mxu0 0.0
  %1080 = vmatprep.subr.mxu0 0.0
  %1081 = vmatpush1.msra.mxu0 0.0
  %1082 = vmatprep.subr.mxu0 0.0
  %1083 = vmatpush1.msra.mxu0 0.0
  %1084 = vmatprep.subr.mxu0 0.0
  %1085 = vmatpush1.msra.mxu0 0.0
  %1086 = vmatprep.subr.mxu0 0.0
  %1087 = vmatpush1.msra.mxu0 0.0
  %1088 = vmatprep.subr.mxu0 0.0
  %1089 = vmatpush1.msra.mxu0 0.0
  %1090 = vmatprep.subr.mxu0 0.0
  %1091 = vmatpush1.msra.mxu0 0.0
  %1092 = vmatprep.subr.mxu0 0.0
  %1093 = vmatpush1.msra.mxu0 0.0
  %1094 = vmatprep.subr.mxu0 0.0
  %1095 = vmatpush1.msra.mxu0 0.0
  %1096 = vmatprep.subr.mxu0 0.0
  %1097 = vmatpush1.msra.mxu0 0.0
  %1098 = vmatprep.subr.mxu0 0.0
  %1099 = vmatpush1.msra.mxu0 0.0
  %1100 = vmatprep.subr.mxu0 0.0
  %1101 = vmatpush1.msra.mxu0 0.0
  %1102 = vmatprep.subr.mxu0 0.0
  %1103 = vmatpush1.msra.mxu0 0.0
  %1104 = vmatprep.mubr.f32.mxu0 0.0
  %1105 = vmatmul.mubr.f32.gmra.mrb[0].mxu0 %v945
  %v1106 = vpop.f32.mrb[0].mxu0
  %v1107 = vadd.f32 %v941, %v1106
  %v1108 = vpop.f32.mrb[0].mxu0
  %1109 = vmatprep.mubr.f32.mxu0 0.0
  %1110 = vmatmul.mubr.f32.gmra.mrb[0].mxu0 %v948
  %v1111 = vpop.f32.mrb[0].mxu0
  %v1112 = vadd.f32 %v941, %v1111
  %v1113 = vpop.f32.mrb[0].mxu0
  %1114 = vmatprep.mubr.f32.mxu0 0.0
  %1115 = vmatmul.mubr.f32.gmra.mrb[0].mxu0 %v951
  %v1116 = vpop.f32.mrb[0].mxu0
  %v1117 = vadd.f32 %v941, %v1116
  %v1118 = vpop.f32.mrb[0].mxu0
  %1119 = vmatprep.mubr.f32.mxu0 0.0
  %1120 = vmatmul.mubr.f32.gmra.mrb[0].mxu0 %v954
  %v1121 = vpop.f32.mrb[0].mxu0
  %v1122 = vadd.f32 %v941, %v1121
  %v1123 = vpop.f32.mrb[0].mxu0
  %1124 = vmatprep.mubr.f32.mxu0 0.0
  %1125 = vmatmul.mubr.f32.gmra.mrb[0].mxu0 %v957
  %v1126 = vpop.f32.mrb[0].mxu0
  %v1127 = vadd.f32 %v941, %v1126
  %v1128 = vpop.f32.mrb[0].mxu0
  %1129 = vmatprep.mubr.f32.mxu0 0.0
  %1130 = vmatmul.mubr.f32.gmra.mrb[0].mxu0 %v960
  %v1131 = vpop.f32.mrb[0].mxu0
  %v1132 = vadd.f32 %v941, %v1131
  %v1133 = vpop.f32.mrb[0].mxu0
  %1134 = vmatprep.mubr.f32.mxu0 0.0
  %1135 = vmatmul.mubr.f32.gmra.mrb[0].mxu0 %v963
  %v1136 = vpop.f32.mrb[0].mxu0
  %v1137 = vadd.f32 %v941, %v1136
  %v1138 = vpop.f32.mrb[0].mxu0
  %1139 = vmatprep.mubr.f32.mxu0 0.0
  %1140 = vmatmul.mubr.f32.gmra.mrb[0].mxu0 %v966
  %v1141 = vpop.f32.mrb[0].mxu0
  %v1142 = vadd.f32 %v941, %v1141
  %v1143 = vpop.f32.mrb[0].mxu0
  %1144 = vmatprep.mubr.f32.mxu0 0.0
  %1145 = vmatmul.mubr.f32.gmra.mrb[0].mxu0 %v969
  %v1146 = vpop.f32.mrb[0].mxu0
  %v1147 = vadd.f32 %v941, %v1146
  %v1148 = vpop.f32.mrb[0].mxu0
  %1149 = vmatprep.mubr.f32.mxu0 0.0
  %1150 = vmatmul.mubr.f32.gmra.mrb[0].mxu0 %v972
  %v1151 = vpop.f32.mrb[0].mxu0
  %v1152 = vadd.f32 %v941, %v1151
  %v1153 = vpop.f32.mrb[0].mxu0
  %1154 = vmatprep.mubr.f32.mxu0 0.0
  %1155 = vmatmul.mubr.f32.gmra.mrb[0].mxu0 %v975
  %v1156 = vpop.f32.mrb[0].mxu0
  %v1157 = vadd.f32 %v941, %v1156
  %v1158 = vpop.f32.mrb[0].mxu0
  %1159 = vmatprep.mubr.f32.mxu0 0.0
  %1160 = vmatmul.mubr.f32.gmra.mrb[0].mxu0 %v978
  %v1161 = vpop.f32.mrb[0].mxu0
  %v1162 = vadd.f32 %v941, %v1161
  %v1163 = vpop.f32.mrb[0].mxu0
  %1164 = vmatprep.mubr.f32.mxu0 0.0
  %1165 = vmatmul.mubr.f32.gmra.mrb[0].mxu0 %v981
  %v1166 = vpop.f32.mrb[0].mxu0
  %v1167 = vadd.f32 %v941, %v1166
  %v1168 = vpop.f32.mrb[0].mxu0
  %1169 = vmatprep.mubr.f32.mxu0 0.0
  %1170 = vmatmul.mubr.f32.gmra.mrb[0].mxu0 %v984
  %v1171 = vpop.f32.mrb[0].mxu0
  %v1172 = vadd.f32 %v941, %v1171
  %v1173 = vpop.f32.mrb[0].mxu0
  %1174 = vmatprep.mubr.f32.mxu0 0.0
  %1175 = vmatmul.mubr.f32.gmra.mrb[0].mxu0 %v987
  %v1176 = vpop.f32.mrb[0].mxu0
  %v1177 = vadd.f32 %v941, %v1176
  %v1178 = vpop.f32.mrb[0].mxu0
  %1179 = vmatprep.mubr.f32.mxu0 0.0
  %1180 = vmatmul.mubr.f32.gmra.mrb[0].mxu0 %v990
  %v1181 = vpop.f32.mrb[0].mxu0
  %v1182 = vadd.f32 %v941, %v1181
  %v1183 = vpop.f32.mrb[0].mxu0
  %1184 = vmatprep.mubr.f32.mxu0 0.0
  %1185 = vmatmul.mubr.f32.gmra.mrb[0].mxu0 %v993
  %v1186 = vpop.f32.mrb[0].mxu0
  %v1187 = vadd.f32 %v941, %v1186
  %v1188 = vpop.f32.mrb[0].mxu0
  %1189 = vmatprep.mubr.f32.mxu0 0.0
  %1190 = vmatmul.mubr.f32.gmra.mrb[0].mxu0 %v996
  %v1191 = vpop.f32.mrb[0].mxu0
  %v1192 = vadd.f32 %v941, %v1191
  %v1193 = vpop.f32.mrb[0].mxu0
  %1194 = vmatprep.mubr.f32.mxu0 0.0
  %1195 = vmatmul.mubr.f32.gmra.mrb[0].mxu0 %v999
  %v1196 = vpop.f32.mrb[0].mxu0
  %v1197 = vadd.f32 %v941, %v1196
  %v1198 = vpop.f32.mrb[0].mxu0
  %1199 = vmatprep.mubr.f32.mxu0 0.0
  %1200 = vmatmul.mubr.f32.gmra.mrb[0].mxu0 %v1002
  %v1201 = vpop.f32.mrb[0].mxu0
  %v1202 = vadd.f32 %v941, %v1201
  %v1203 = vpop.f32.mrb[0].mxu0
  %1204 = vmatprep.mubr.f32.mxu0 0.0
  %1205 = vmatmul.mubr.f32.gmra.mrb[0].mxu0 %v1005
  %v1206 = vpop.f32.mrb[0].mxu0
  %v1207 = vadd.f32 %v941, %v1206
  %v1208 = vpop.f32.mrb[0].mxu0
  %1209 = vmatprep.mubr.f32.mxu0 0.0
  %1210 = vmatmul.mubr.f32.gmra.mrb[0].mxu0 %v1008
  %v1211 = vpop.f32.mrb[0].mxu0
  %v1212 = vadd.f32 %v941, %v1211
  %v1213 = vpop.f32.mrb[0].mxu0
  %1214 = vmatprep.mubr.f32.mxu0 0.0
  %1215 = vmatmul.mubr.f32.gmra.mrb[0].mxu0 %v1011
  %v1216 = vpop.f32.mrb[0].mxu0
  %v1217 = vadd.f32 %v941, %v1216
  %v1218 = vpop.f32.mrb[0].mxu0
  %1219 = vmatprep.mubr.f32.mxu0 0.0
  %1220 = vmatmul.mubr.f32.gmra.mrb[0].mxu0 %v1014
  %v1221 = vpop.f32.mrb[0].mxu0
  %v1222 = vadd.f32 %v941, %v1221
  %v1223 = vpop.f32.mrb[0].mxu0
  %1224 = vmatprep.mubr.f32.mxu0 0.0
  %1225 = vmatmul.mubr.f32.gmra.mrb[0].mxu0 %v1017
  %v1226 = vpop.f32.mrb[0].mxu0
  %v1227 = vadd.f32 %v941, %v1226
  %v1228 = vpop.f32.mrb[0].mxu0
  %1229 = vmatprep.mubr.f32.mxu0 0.0
  %1230 = vmatmul.mubr.f32.gmra.mrb[0].mxu0 %v1020
  %v1231 = vpop.f32.mrb[0].mxu0
  %v1232 = vadd.f32 %v941, %v1231
  %v1233 = vpop.f32.mrb[0].mxu0
  %1234 = vmatprep.mubr.f32.mxu0 0.0
  %1235 = vmatmul.mubr.f32.gmra.mrb[0].mxu0 %v1023
  %v1236 = vpop.f32.mrb[0].mxu0
  %v1237 = vadd.f32 %v941, %v1236
  %v1238 = vpop.f32.mrb[0].mxu0
  %1239 = vmatprep.mubr.f32.mxu0 0.0
  %1240 = vmatmul.mubr.f32.gmra.mrb[0].mxu0 %v1026
  %v1241 = vpop.f32.mrb[0].mxu0
  %v1242 = vadd.f32 %v941, %v1241
  %v1243 = vpop.f32.mrb[0].mxu0
  %1244 = vmatprep.mubr.f32.mxu0 0.0
  %1245 = vmatmul.mubr.f32.gmra.mrb[0].mxu0 %v1029
  %v1246 = vpop.f32.mrb[0].mxu0
  %v1247 = vadd.f32 %v941, %v1246
  %v1248 = vpop.f32.mrb[0].mxu0
  %1249 = vmatprep.mubr.f32.mxu0 0.0
  %1250 = vmatmul.mubr.f32.gmra.mrb[0].mxu0 %v1032
  %v1251 = vpop.f32.mrb[0].mxu0
  %v1252 = vadd.f32 %v941, %v1251
  %v1253 = vpop.f32.mrb[0].mxu0
  %1254 = vmatprep.mubr.f32.mxu0 0.0
  %1255 = vmatmul.mubr.f32.gmra.mrb[0].mxu0 %v1035
  %v1256 = vpop.f32.mrb[0].mxu0
  %v1257 = vadd.f32 %v941, %v1256
  %v1258 = vpop.f32.mrb[0].mxu0
  %1259 = vmatprep.mubr.f32.mxu0 0.0
  %1260 = vmatmul.mubr.f32.gmra.mrb[0].mxu0 %v1038
  %v1261 = vpop.f32.mrb[0].mxu0
  %v1262 = vadd.f32 %v941, %v1261
  %v1263 = vpop.f32.mrb[0].mxu0
  %1264 = vdwg.mxu0
  %v1265 = vmax.f32 %v1107, 0.0
  %v1266 = vmax.f32 %v1112, 0.0
  %v1267 = vmax.f32 %v1117, 0.0
  %v1268 = vmax.f32 %v1122, 0.0
  %v1269 = vmax.f32 %v1127, 0.0
  %v1270 = vmax.f32 %v1132, 0.0
  %v1271 = vmax.f32 %v1137, 0.0
  %v1272 = vmax.f32 %v1142, 0.0
  %v1273 = vmax.f32 %v1147, 0.0
  %v1274 = vmax.f32 %v1152, 0.0
  %v1275 = vmax.f32 %v1157, 0.0
  %v1276 = vmax.f32 %v1162, 0.0
  %v1277 = vmax.f32 %v1167, 0.0
  %v1278 = vmax.f32 %v1172, 0.0
  %v1279 = vmax.f32 %v1177, 0.0
  %v1280 = vmax.f32 %v1182, 0.0
  %v1281 = vmax.f32 %v1187, 0.0
  %v1282 = vmax.f32 %v1192, 0.0
  %v1283 = vmax.f32 %v1197, 0.0
  %v1284 = vmax.f32 %v1202, 0.0
  %v1285 = vmax.f32 %v1207, 0.0
  %v1286 = vmax.f32 %v1212, 0.0
  %v1287 = vmax.f32 %v1217, 0.0
  %v1288 = vmax.f32 %v1222, 0.0
  %v1289 = vmax.f32 %v1227, 0.0
  %v1290 = vmax.f32 %v1232, 0.0
  %v1291 = vmax.f32 %v1237, 0.0
  %v1292 = vmax.f32 %v1242, 0.0
  %v1293 = vmax.f32 %v1247, 0.0
  %v1294 = vmax.f32 %v1252, 0.0
  %v1295 = vmax.f32 %v1257, 0.0
  %v1296 = vmax.f32 %v1262, 0.0
  %v1297 = vld [vmem:[%s6] sm:$0xff]
  %v1298 = vld [vmem:[%s7] sm:$0x1]
  %v1300 = vlaneseq
  %v1301 = vshrl.u32 %v1300, 7
  %v1302 = vsub.s32 0, %v1301
  %v1303 = vrot.slane %v1298, %v1302
  %v1306 = vsel %vm943, %v1265, 0
  %v1309 = vsel %vm943, %v1266, 0
  %v1312 = vsel %vm943, %v1267, 0
  %v1315 = vsel %vm943, %v1268, 0
  %v1318 = vsel %vm943, %v1269, 0
  %v1321 = vsel %vm943, %v1270, 0
  %v1324 = vsel %vm943, %v1271, 0
  %v1327 = vsel %vm943, %v1272, 0
  %v1330 = vsel %vm943, %v1273, 0
  %v1333 = vsel %vm943, %v1274, 0
  %v1336 = vsel %vm943, %v1275, 0
  %v1339 = vsel %vm943, %v1276, 0
  %v1342 = vsel %vm943, %v1277, 0
  %v1345 = vsel %vm943, %v1278, 0
  %v1348 = vsel %vm943, %v1279, 0
  %v1351 = vsel %vm943, %v1280, 0
  %v1354 = vsel %vm943, %v1281, 0
  %v1357 = vsel %vm943, %v1282, 0
  %v1360 = vsel %vm943, %v1283, 0
  %v1363 = vsel %vm943, %v1284, 0
  %v1366 = vsel %vm943, %v1285, 0
  %v1369 = vsel %vm943, %v1286, 0
  %v1372 = vsel %vm943, %v1287, 0
  %v1375 = vsel %vm943, %v1288, 0
  %v1378 = vsel %vm943, %v1289, 0
  %v1381 = vsel %vm943, %v1290, 0
  %v1384 = vsel %vm943, %v1291, 0
  %v1387 = vsel %vm943, %v1292, 0
  %v1390 = vsel %vm943, %v1293, 0
  %v1393 = vsel %vm943, %v1294, 0
  %v1396 = vsel %vm943, %v1295, 0
  %v1399 = vsel %vm943, %v1296, 0
  %1401 = vmatprep.subr.mxu0 0.0
  %1402 = vmatpush1.msra.mxu0 %v1297
  %1403 = vmatprep.subr.mxu0 0.0
  %1404 = vmatpush1.msra.mxu0 0.0
  %1405 = vmatprep.subr.mxu0 0.0
  %1406 = vmatpush1.msra.mxu0 0.0
  %1407 = vmatprep.subr.mxu0 0.0
  %1408 = vmatpush1.msra.mxu0 0.0
  %1409 = vmatprep.subr.mxu0 0.0
  %1410 = vmatpush1.msra.mxu0 0.0
  %1411 = vmatprep.subr.mxu0 0.0
  %1412 = vmatpush1.msra.mxu0 0.0
  %1413 = vmatprep.subr.mxu0 0.0
  %1414 = vmatpush1.msra.mxu0 0.0
  %1415 = vmatprep.subr.mxu0 0.0
  %1416 = vmatpush1.msra.mxu0 0.0
  %1417 = vmatprep.subr.mxu0 0.0
  %1418 = vmatpush1.msra.mxu0 0.0
  %1419 = vmatprep.subr.mxu0 0.0
  %1420 = vmatpush1.msra.mxu0 0.0
  %1421 = vmatprep.subr.mxu0 0.0
  %1422 = vmatpush1.msra.mxu0 0.0
  %1423 = vmatprep.subr.mxu0 0.0
  %1424 = vmatpush1.msra.mxu0 0.0
  %1425 = vmatprep.subr.mxu0 0.0
  %1426 = vmatpush1.msra.mxu0 0.0
  %1427 = vmatprep.subr.mxu0 0.0
  %1428 = vmatpush1.msra.mxu0 0.0
  %1429 = vmatprep.subr.mxu0 0.0
  %1430 = vmatpush1.msra.mxu0 0.0
  %1431 = vmatprep.subr.mxu0 0.0
  %1432 = vmatpush1.msra.mxu0 0.0
  %1433 = vmatprep.subr.mxu0 0.0
  %1434 = vmatpush1.msra.mxu0 0.0
  %1435 = vmatprep.subr.mxu0 0.0
  %1436 = vmatpush1.msra.mxu0 0.0
  %1437 = vmatprep.subr.mxu0 0.0
  %1438 = vmatpush1.msra.mxu0 0.0
  %1439 = vmatprep.subr.mxu0 0.0
  %1440 = vmatpush1.msra.mxu0 0.0
  %1441 = vmatprep.subr.mxu0 0.0
  %1442 = vmatpush1.msra.mxu0 0.0
  %1443 = vmatprep.subr.mxu0 0.0
  %1444 = vmatpush1.msra.mxu0 0.0
  %1445 = vmatprep.subr.mxu0 0.0
  %1446 = vmatpush1.msra.mxu0 0.0
  %1447 = vmatprep.subr.mxu0 0.0
  %1448 = vmatpush1.msra.mxu0 0.0
  %1449 = vmatprep.subr.mxu0 0.0
  %1450 = vmatpush1.msra.mxu0 0.0
  %1451 = vmatprep.subr.mxu0 0.0
  %1452 = vmatpush1.msra.mxu0 0.0
  %1453 = vmatprep.subr.mxu0 0.0
  %1454 = vmatpush1.msra.mxu0 0.0
  %1455 = vmatprep.subr.mxu0 0.0
  %1456 = vmatpush1.msra.mxu0 0.0
  %1457 = vmatprep.subr.mxu0 0.0
  %1458 = vmatpush1.msra.mxu0 0.0
  %1459 = vmatprep.subr.mxu0 0.0
  %1460 = vmatpush1.msra.mxu0 0.0
  %1461 = vmatprep.subr.mxu0 0.0
  %1462 = vmatpush1.msra.mxu0 0.0
  %1463 = vmatprep.subr.mxu0 0.0
  %1464 = vmatpush1.msra.mxu0 0.0
  %1465 = vmatprep.mubr.f32.mxu0 0.0
  %1466 = vmatmul.mubr.f32.gmra.mrb[0].mxu0 %v1306
  %v1467 = vpop.f32.mrb[0].mxu0
  %v1468 = vadd.f32 %v1303, %v1467
  %v1469 = vpop.f32.mrb[0].mxu0
  %1470 = vmatprep.mubr.f32.mxu0 0.0
  %1471 = vmatmul.mubr.f32.gmra.mrb[0].mxu0 %v1309
  %v1472 = vpop.f32.mrb[0].mxu0
  %v1473 = vadd.f32 %v1303, %v1472
  %v1474 = vpop.f32.mrb[0].mxu0
  %1475 = vmatprep.mubr.f32.mxu0 0.0
  %1476 = vmatmul.mubr.f32.gmra.mrb[0].mxu0 %v1312
  %v1477 = vpop.f32.mrb[0].mxu0
  %v1478 = vadd.f32 %v1303, %v1477
  %v1479 = vpop.f32.mrb[0].mxu0
  %1480 = vmatprep.mubr.f32.mxu0 0.0
  %1481 = vmatmul.mubr.f32.gmra.mrb[0].mxu0 %v1315
  %v1482 = vpop.f32.mrb[0].mxu0
  %v1483 = vadd.f32 %v1303, %v1482
  %v1484 = vpop.f32.mrb[0].mxu0
  %1485 = vmatprep.mubr.f32.mxu0 0.0
  %1486 = vmatmul.mubr.f32.gmra.mrb[0].mxu0 %v1318
  %v1487 = vpop.f32.mrb[0].mxu0
  %v1488 = vadd.f32 %v1303, %v1487
  %v1489 = vpop.f32.mrb[0].mxu0
  %1490 = vmatprep.mubr.f32.mxu0 0.0
  %1491 = vmatmul.mubr.f32.gmra.mrb[0].mxu0 %v1321
  %v1492 = vpop.f32.mrb[0].mxu0
  %v1493 = vadd.f32 %v1303, %v1492
  %v1494 = vpop.f32.mrb[0].mxu0
  %1495 = vmatprep.mubr.f32.mxu0 0.0
  %1496 = vmatmul.mubr.f32.gmra.mrb[0].mxu0 %v1324
  %v1497 = vpop.f32.mrb[0].mxu0
  %v1498 = vadd.f32 %v1303, %v1497
  %v1499 = vpop.f32.mrb[0].mxu0
  %1500 = vmatprep.mubr.f32.mxu0 0.0
  %1501 = vmatmul.mubr.f32.gmra.mrb[0].mxu0 %v1327
  %v1502 = vpop.f32.mrb[0].mxu0
  %v1503 = vadd.f32 %v1303, %v1502
  %v1504 = vpop.f32.mrb[0].mxu0
  %1505 = vmatprep.mubr.f32.mxu0 0.0
  %1506 = vmatmul.mubr.f32.gmra.mrb[0].mxu0 %v1330
  %v1507 = vpop.f32.mrb[0].mxu0
  %v1508 = vadd.f32 %v1303, %v1507
  %v1509 = vpop.f32.mrb[0].mxu0
  %1510 = vmatprep.mubr.f32.mxu0 0.0
  %1511 = vmatmul.mubr.f32.gmra.mrb[0].mxu0 %v1333
  %v1512 = vpop.f32.mrb[0].mxu0
  %v1513 = vadd.f32 %v1303, %v1512
  %v1514 = vpop.f32.mrb[0].mxu0
  %1515 = vmatprep.mubr.f32.mxu0 0.0
  %1516 = vmatmul.mubr.f32.gmra.mrb[0].mxu0 %v1336
  %v1517 = vpop.f32.mrb[0].mxu0
  %v1518 = vadd.f32 %v1303, %v1517
  %v1519 = vpop.f32.mrb[0].mxu0
  %1520 = vmatprep.mubr.f32.mxu0 0.0
  %1521 = vmatmul.mubr.f32.gmra.mrb[0].mxu0 %v1339
  %v1522 = vpop.f32.mrb[0].mxu0
  %v1523 = vadd.f32 %v1303, %v1522
  %v1524 = vpop.f32.mrb[0].mxu0
  %1525 = vmatprep.mubr.f32.mxu0 0.0
  %1526 = vmatmul.mubr.f32.gmra.mrb[0].mxu0 %v1342
  %v1527 = vpop.f32.mrb[0].mxu0
  %v1528 = vadd.f32 %v1303, %v1527
  %v1529 = vpop.f32.mrb[0].mxu0
  %1530 = vmatprep.mubr.f32.mxu0 0.0
  %1531 = vmatmul.mubr.f32.gmra.mrb[0].mxu0 %v1345
  %v1532 = vpop.f32.mrb[0].mxu0
  %v1533 = vadd.f32 %v1303, %v1532
  %v1534 = vpop.f32.mrb[0].mxu0
  %1535 = vmatprep.mubr.f32.mxu0 0.0
  %1536 = vmatmul.mubr.f32.gmra.mrb[0].mxu0 %v1348
  %v1537 = vpop.f32.mrb[0].mxu0
  %v1538 = vadd.f32 %v1303, %v1537
  %v1539 = vpop.f32.mrb[0].mxu0
  %1540 = vmatprep.mubr.f32.mxu0 0.0
  %1541 = vmatmul.mubr.f32.gmra.mrb[0].mxu0 %v1351
  %v1542 = vpop.f32.mrb[0].mxu0
  %v1543 = vadd.f32 %v1303, %v1542
  %v1544 = vpop.f32.mrb[0].mxu0
  %1545 = vmatprep.mubr.f32.mxu0 0.0
  %1546 = vmatmul.mubr.f32.gmra.mrb[0].mxu0 %v1354
  %v1547 = vpop.f32.mrb[0].mxu0
  %v1548 = vadd.f32 %v1303, %v1547
  %v1549 = vpop.f32.mrb[0].mxu0
  %1550 = vmatprep.mubr.f32.mxu0 0.0
  %1551 = vmatmul.mubr.f32.gmra.mrb[0].mxu0 %v1357
  %v1552 = vpop.f32.mrb[0].mxu0
  %v1553 = vadd.f32 %v1303, %v1552
  %v1554 = vpop.f32.mrb[0].mxu0
  %1555 = vmatprep.mubr.f32.mxu0 0.0
  %1556 = vmatmul.mubr.f32.gmra.mrb[0].mxu0 %v1360
  %v1557 = vpop.f32.mrb[0].mxu0
  %v1558 = vadd.f32 %v1303, %v1557
  %v1559 = vpop.f32.mrb[0].mxu0
  %1560 = vmatprep.mubr.f32.mxu0 0.0
  %1561 = vmatmul.mubr.f32.gmra.mrb[0].mxu0 %v1363
  %v1562 = vpop.f32.mrb[0].mxu0
  %v1563 = vadd.f32 %v1303, %v1562
  %v1564 = vpop.f32.mrb[0].mxu0
  %1565 = vmatprep.mubr.f32.mxu0 0.0
  %1566 = vmatmul.mubr.f32.gmra.mrb[0].mxu0 %v1366
  %v1567 = vpop.f32.mrb[0].mxu0
  %v1568 = vadd.f32 %v1303, %v1567
  %v1569 = vpop.f32.mrb[0].mxu0
  %1570 = vmatprep.mubr.f32.mxu0 0.0
  %1571 = vmatmul.mubr.f32.gmra.mrb[0].mxu0 %v1369
  %v1572 = vpop.f32.mrb[0].mxu0
  %v1573 = vadd.f32 %v1303, %v1572
  %v1574 = vpop.f32.mrb[0].mxu0
  %1575 = vmatprep.mubr.f32.mxu0 0.0
  %1576 = vmatmul.mubr.f32.gmra.mrb[0].mxu0 %v1372
  %v1577 = vpop.f32.mrb[0].mxu0
  %v1578 = vadd.f32 %v1303, %v1577
  %v1579 = vpop.f32.mrb[0].mxu0
  %1580 = vmatprep.mubr.f32.mxu0 0.0
  %1581 = vmatmul.mubr.f32.gmra.mrb[0].mxu0 %v1375
  %v1582 = vpop.f32.mrb[0].mxu0
  %v1583 = vadd.f32 %v1303, %v1582
  %v1584 = vpop.f32.mrb[0].mxu0
  %1585 = vmatprep.mubr.f32.mxu0 0.0
  %1586 = vmatmul.mubr.f32.gmra.mrb[0].mxu0 %v1378
  %v1587 = vpop.f32.mrb[0].mxu0
  %v1588 = vadd.f32 %v1303, %v1587
  %v1589 = vpop.f32.mrb[0].mxu0
  %1590 = vmatprep.mubr.f32.mxu0 0.0
  %1591 = vmatmul.mubr.f32.gmra.mrb[0].mxu0 %v1381
  %v1592 = vpop.f32.mrb[0].mxu0
  %v1593 = vadd.f32 %v1303, %v1592
  %v1594 = vpop.f32.mrb[0].mxu0
  %1595 = vmatprep.mubr.f32.mxu0 0.0
  %1596 = vmatmul.mubr.f32.gmra.mrb[0].mxu0 %v1384
  %v1597 = vpop.f32.mrb[0].mxu0
  %v1598 = vadd.f32 %v1303, %v1597
  %v1599 = vpop.f32.mrb[0].mxu0
  %1600 = vmatprep.mubr.f32.mxu0 0.0
  %1601 = vmatmul.mubr.f32.gmra.mrb[0].mxu0 %v1387
  %v1602 = vpop.f32.mrb[0].mxu0
  %v1603 = vadd.f32 %v1303, %v1602
  %v1604 = vpop.f32.mrb[0].mxu0
  %1605 = vmatprep.mubr.f32.mxu0 0.0
  %1606 = vmatmul.mubr.f32.gmra.mrb[0].mxu0 %v1390
  %v1607 = vpop.f32.mrb[0].mxu0
  %v1608 = vadd.f32 %v1303, %v1607
  %v1609 = vpop.f32.mrb[0].mxu0
  %1610 = vmatprep.mubr.f32.mxu0 0.0
  %1611 = vmatmul.mubr.f32.gmra.mrb[0].mxu0 %v1393
  %v1612 = vpop.f32.mrb[0].mxu0
  %v1613 = vadd.f32 %v1303, %v1612
  %v1614 = vpop.f32.mrb[0].mxu0
  %1615 = vmatprep.mubr.f32.mxu0 0.0
  %1616 = vmatmul.mubr.f32.gmra.mrb[0].mxu0 %v1396
  %v1617 = vpop.f32.mrb[0].mxu0
  %v1618 = vadd.f32 %v1303, %v1617
  %v1619 = vpop.f32.mrb[0].mxu0
  %1620 = vmatprep.mubr.f32.mxu0 0.0
  %1621 = vmatmul.mubr.f32.gmra.mrb[0].mxu0 %v1399
  %v1622 = vpop.f32.mrb[0].mxu0
  %v1623 = vadd.f32 %v1303, %v1622
  %v1624 = vpop.f32.mrb[0].mxu0
  %1625 = vdwg.mxu0
  %v1626 = vmax.f32 %v1468, 0.0
  %v1627 = vmax.f32 %v1473, 0.0
  %v1628 = vmax.f32 %v1478, 0.0
  %v1629 = vmax.f32 %v1483, 0.0
  %v1630 = vmax.f32 %v1488, 0.0
  %v1631 = vmax.f32 %v1493, 0.0
  %v1632 = vmax.f32 %v1498, 0.0
  %v1633 = vmax.f32 %v1503, 0.0
  %v1634 = vmax.f32 %v1508, 0.0
  %v1635 = vmax.f32 %v1513, 0.0
  %v1636 = vmax.f32 %v1518, 0.0
  %v1637 = vmax.f32 %v1523, 0.0
  %v1638 = vmax.f32 %v1528, 0.0
  %v1639 = vmax.f32 %v1533, 0.0
  %v1640 = vmax.f32 %v1538, 0.0
  %v1641 = vmax.f32 %v1543, 0.0
  %v1642 = vmax.f32 %v1548, 0.0
  %v1643 = vmax.f32 %v1553, 0.0
  %v1644 = vmax.f32 %v1558, 0.0
  %v1645 = vmax.f32 %v1563, 0.0
  %v1646 = vmax.f32 %v1568, 0.0
  %v1647 = vmax.f32 %v1573, 0.0
  %v1648 = vmax.f32 %v1578, 0.0
  %v1649 = vmax.f32 %v1583, 0.0
  %v1650 = vmax.f32 %v1588, 0.0
  %v1651 = vmax.f32 %v1593, 0.0
  %v1652 = vmax.f32 %v1598, 0.0
  %v1653 = vmax.f32 %v1603, 0.0
  %v1654 = vmax.f32 %v1608, 0.0
  %v1655 = vmax.f32 %v1613, 0.0
  %v1656 = vmax.f32 %v1618, 0.0
  %v1657 = vmax.f32 %v1623, 0.0
  %vm1658 = vcmask 130048
  %v1659 = vsel %vm1658, %v1626, -inf
  %v1660 = vrot.slane %v1659, 4
  %v1661 = vmax.f32 %v1659, %v1660
  %v1662 = vrot.slane %v1661, 2
  %v1663 = vmax.f32 %v1661, %v1662
  %v1664 = vrot.slane %v1663, 1
  %v1665 = vmax.f32 %v1663, %v1664
  %v1666 = vsel %vm1658, %v1627, -inf
  %v1667 = vrot.slane %v1666, 4
  %v1668 = vmax.f32 %v1666, %v1667
  %v1669 = vrot.slane %v1668, 2
  %v1670 = vmax.f32 %v1668, %v1669
  %v1671 = vrot.slane %v1670, 1
  %v1672 = vmax.f32 %v1670, %v1671
  %v1673 = vsel %vm1658, %v1628, -inf
  %v1674 = vrot.slane %v1673, 4
  %v1675 = vmax.f32 %v1673, %v1674
  %v1676 = vrot.slane %v1675, 2
  %v1677 = vmax.f32 %v1675, %v1676
  %v1678 = vrot.slane %v1677, 1
  %v1679 = vmax.f32 %v1677, %v1678
  %v1680 = vsel %vm1658, %v1629, -inf
  %v1681 = vrot.slane %v1680, 4
  %v1682 = vmax.f32 %v1680, %v1681
  %v1683 = vrot.slane %v1682, 2
  %v1684 = vmax.f32 %v1682, %v1683
  %v1685 = vrot.slane %v1684, 1
  %v1686 = vmax.f32 %v1684, %v1685
  %v1687 = vsel %vm1658, %v1630, -inf
  %v1688 = vrot.slane %v1687, 4
  %v1689 = vmax.f32 %v1687, %v1688
  %v1690 = vrot.slane %v1689, 2
  %v1691 = vmax.f32 %v1689, %v1690
  %v1692 = vrot.slane %v1691, 1
  %v1693 = vmax.f32 %v1691, %v1692
  %v1694 = vsel %vm1658, %v1631, -inf
  %v1695 = vrot.slane %v1694, 4
  %v1696 = vmax.f32 %v1694, %v1695
  %v1697 = vrot.slane %v1696, 2
  %v1698 = vmax.f32 %v1696, %v1697
  %v1699 = vrot.slane %v1698, 1
  %v1700 = vmax.f32 %v1698, %v1699
  %v1701 = vsel %vm1658, %v1632, -inf
  %v1702 = vrot.slane %v1701, 4
  %v1703 = vmax.f32 %v1701, %v1702
  %v1704 = vrot.slane %v1703, 2
  %v1705 = vmax.f32 %v1703, %v1704
  %v1706 = vrot.slane %v1705, 1
  %v1707 = vmax.f32 %v1705, %v1706
  %v1708 = vsel %vm1658, %v1633, -inf
  %v1709 = vrot.slane %v1708, 4
  %v1710 = vmax.f32 %v1708, %v1709
  %v1711 = vrot.slane %v1710, 2
  %v1712 = vmax.f32 %v1710, %v1711
  %v1713 = vrot.slane %v1712, 1
  %v1714 = vmax.f32 %v1712, %v1713
  %v1715 = vsel %vm1658, %v1634, -inf
  %v1716 = vrot.slane %v1715, 4
  %v1717 = vmax.f32 %v1715, %v1716
  %v1718 = vrot.slane %v1717, 2
  %v1719 = vmax.f32 %v1717, %v1718
  %v1720 = vrot.slane %v1719, 1
  %v1721 = vmax.f32 %v1719, %v1720
  %v1722 = vsel %vm1658, %v1635, -inf
  %v1723 = vrot.slane %v1722, 4
  %v1724 = vmax.f32 %v1722, %v1723
  %v1725 = vrot.slane %v1724, 2
  %v1726 = vmax.f32 %v1724, %v1725
  %v1727 = vrot.slane %v1726, 1
  %v1728 = vmax.f32 %v1726, %v1727
  %v1729 = vsel %vm1658, %v1636, -inf
  %v1730 = vrot.slane %v1729, 4
  %v1731 = vmax.f32 %v1729, %v1730
  %v1732 = vrot.slane %v1731, 2
  %v1733 = vmax.f32 %v1731, %v1732
  %v1734 = vrot.slane %v1733, 1
  %v1735 = vmax.f32 %v1733, %v1734
  %v1736 = vsel %vm1658, %v1637, -inf
  %v1737 = vrot.slane %v1736, 4
  %v1738 = vmax.f32 %v1736, %v1737
  %v1739 = vrot.slane %v1738, 2
  %v1740 = vmax.f32 %v1738, %v1739
  %v1741 = vrot.slane %v1740, 1
  %v1742 = vmax.f32 %v1740, %v1741
  %v1743 = vsel %vm1658, %v1638, -inf
  %v1744 = vrot.slane %v1743, 4
  %v1745 = vmax.f32 %v1743, %v1744
  %v1746 = vrot.slane %v1745, 2
  %v1747 = vmax.f32 %v1745, %v1746
  %v1748 = vrot.slane %v1747, 1
  %v1749 = vmax.f32 %v1747, %v1748
  %v1750 = vsel %vm1658, %v1639, -inf
  %v1751 = vrot.slane %v1750, 4
  %v1752 = vmax.f32 %v1750, %v1751
  %v1753 = vrot.slane %v1752, 2
  %v1754 = vmax.f32 %v1752, %v1753
  %v1755 = vrot.slane %v1754, 1
  %v1756 = vmax.f32 %v1754, %v1755
  %v1757 = vsel %vm1658, %v1640, -inf
  %v1758 = vrot.slane %v1757, 4
  %v1759 = vmax.f32 %v1757, %v1758
  %v1760 = vrot.slane %v1759, 2
  %v1761 = vmax.f32 %v1759, %v1760
  %v1762 = vrot.slane %v1761, 1
  %v1763 = vmax.f32 %v1761, %v1762
  %v1764 = vsel %vm1658, %v1641, -inf
  %v1765 = vrot.slane %v1764, 4
  %v1766 = vmax.f32 %v1764, %v1765
  %v1767 = vrot.slane %v1766, 2
  %v1768 = vmax.f32 %v1766, %v1767
  %v1769 = vrot.slane %v1768, 1
  %v1770 = vmax.f32 %v1768, %v1769
  %v1771 = vsel %vm1658, %v1642, -inf
  %v1772 = vrot.slane %v1771, 4
  %v1773 = vmax.f32 %v1771, %v1772
  %v1774 = vrot.slane %v1773, 2
  %v1775 = vmax.f32 %v1773, %v1774
  %v1776 = vrot.slane %v1775, 1
  %v1777 = vmax.f32 %v1775, %v1776
  %v1778 = vsel %vm1658, %v1643, -inf
  %v1779 = vrot.slane %v1778, 4
  %v1780 = vmax.f32 %v1778, %v1779
  %v1781 = vrot.slane %v1780, 2
  %v1782 = vmax.f32 %v1780, %v1781
  %v1783 = vrot.slane %v1782, 1
  %v1784 = vmax.f32 %v1782, %v1783
  %v1785 = vsel %vm1658, %v1644, -inf
  %v1786 = vrot.slane %v1785, 4
  %v1787 = vmax.f32 %v1785, %v1786
  %v1788 = vrot.slane %v1787, 2
  %v1789 = vmax.f32 %v1787, %v1788
  %v1790 = vrot.slane %v1789, 1
  %v1791 = vmax.f32 %v1789, %v1790
  %v1792 = vsel %vm1658, %v1645, -inf
  %v1793 = vrot.slane %v1792, 4
  %v1794 = vmax.f32 %v1792, %v1793
  %v1795 = vrot.slane %v1794, 2
  %v1796 = vmax.f32 %v1794, %v1795
  %v1797 = vrot.slane %v1796, 1
  %v1798 = vmax.f32 %v1796, %v1797
  %v1799 = vsel %vm1658, %v1646, -inf
  %v1800 = vrot.slane %v1799, 4
  %v1801 = vmax.f32 %v1799, %v1800
  %v1802 = vrot.slane %v1801, 2
  %v1803 = vmax.f32 %v1801, %v1802
  %v1804 = vrot.slane %v1803, 1
  %v1805 = vmax.f32 %v1803, %v1804
  %v1806 = vsel %vm1658, %v1647, -inf
  %v1807 = vrot.slane %v1806, 4
  %v1808 = vmax.f32 %v1806, %v1807
  %v1809 = vrot.slane %v1808, 2
  %v1810 = vmax.f32 %v1808, %v1809
  %v1811 = vrot.slane %v1810, 1
  %v1812 = vmax.f32 %v1810, %v1811
  %v1813 = vsel %vm1658, %v1648, -inf
  %v1814 = vrot.slane %v1813, 4
  %v1815 = vmax.f32 %v1813, %v1814
  %v1816 = vrot.slane %v1815, 2
  %v1817 = vmax.f32 %v1815, %v1816
  %v1818 = vrot.slane %v1817, 1
  %v1819 = vmax.f32 %v1817, %v1818
  %v1820 = vsel %vm1658, %v1649, -inf
  %v1821 = vrot.slane %v1820, 4
  %v1822 = vmax.f32 %v1820, %v1821
  %v1823 = vrot.slane %v1822, 2
  %v1824 = vmax.f32 %v1822, %v1823
  %v1825 = vrot.slane %v1824, 1
  %v1826 = vmax.f32 %v1824, %v1825
  %v1827 = vsel %vm1658, %v1650, -inf
  %v1828 = vrot.slane %v1827, 4
  %v1829 = vmax.f32 %v1827, %v1828
  %v1830 = vrot.slane %v1829, 2
  %v1831 = vmax.f32 %v1829, %v1830
  %v1832 = vrot.slane %v1831, 1
  %v1833 = vmax.f32 %v1831, %v1832
  %v1834 = vsel %vm1658, %v1651, -inf
  %v1835 = vrot.slane %v1834, 4
  %v1836 = vmax.f32 %v1834, %v1835
  %v1837 = vrot.slane %v1836, 2
  %v1838 = vmax.f32 %v1836, %v1837
  %v1839 = vrot.slane %v1838, 1
  %v1840 = vmax.f32 %v1838, %v1839
  %v1841 = vsel %vm1658, %v1652, -inf
  %v1842 = vrot.slane %v1841, 4
  %v1843 = vmax.f32 %v1841, %v1842
  %v1844 = vrot.slane %v1843, 2
  %v1845 = vmax.f32 %v1843, %v1844
  %v1846 = vrot.slane %v1845, 1
  %v1847 = vmax.f32 %v1845, %v1846
  %v1848 = vsel %vm1658, %v1653, -inf
  %v1849 = vrot.slane %v1848, 4
  %v1850 = vmax.f32 %v1848, %v1849
  %v1851 = vrot.slane %v1850, 2
  %v1852 = vmax.f32 %v1850, %v1851
  %v1853 = vrot.slane %v1852, 1
  %v1854 = vmax.f32 %v1852, %v1853
  %v1855 = vsel %vm1658, %v1654, -inf
  %v1856 = vrot.slane %v1855, 4
  %v1857 = vmax.f32 %v1855, %v1856
  %v1858 = vrot.slane %v1857, 2
  %v1859 = vmax.f32 %v1857, %v1858
  %v1860 = vrot.slane %v1859, 1
  %v1861 = vmax.f32 %v1859, %v1860
  %v1862 = vsel %vm1658, %v1655, -inf
  %v1863 = vrot.slane %v1862, 4
  %v1864 = vmax.f32 %v1862, %v1863
  %v1865 = vrot.slane %v1864, 2
  %v1866 = vmax.f32 %v1864, %v1865
  %v1867 = vrot.slane %v1866, 1
  %v1868 = vmax.f32 %v1866, %v1867
  %v1869 = vsel %vm1658, %v1656, -inf
  %v1870 = vrot.slane %v1869, 4
  %v1871 = vmax.f32 %v1869, %v1870
  %v1872 = vrot.slane %v1871, 2
  %v1873 = vmax.f32 %v1871, %v1872
  %v1874 = vrot.slane %v1873, 1
  %v1875 = vmax.f32 %v1873, %v1874
  %v1876 = vsel %vm1658, %v1657, -inf
  %v1877 = vrot.slane %v1876, 4
  %v1878 = vmax.f32 %v1876, %v1877
  %v1879 = vrot.slane %v1878, 2
  %v1880 = vmax.f32 %v1878, %v1879
  %v1881 = vrot.slane %v1880, 1
  %v1882 = vmax.f32 %v1880, %v1881
  %v1883 = vld [vmem:[%s1] sm:$0xff]
  %v1884 = vld [vmem:[%s1 + $0x8] sm:$0xff]
  %v1885 = vld [vmem:[%s1 + $0x10] sm:$0xff]
  %v1886 = vld [vmem:[%s1 + $0x18] sm:$0xff]
  %v1887 = vld [vmem:[%s1 + $0x20] sm:$0xff]
  %v1888 = vld [vmem:[%s1 + $0x28] sm:$0xff]
  %v1889 = vld [vmem:[%s1 + $0x30] sm:$0xff]
  %v1890 = vld [vmem:[%s1 + $0x38] sm:$0xff]
  %v1891 = vld [vmem:[%s1 + $0x40] sm:$0xff]
  %v1892 = vld [vmem:[%s1 + $0x48] sm:$0xff]
  %v1893 = vld [vmem:[%s1 + $0x50] sm:$0xff]
  %v1894 = vld [vmem:[%s1 + $0x58] sm:$0xff]
  %v1895 = vld [vmem:[%s1 + $0x60] sm:$0xff]
  %v1896 = vld [vmem:[%s1 + $0x68] sm:$0xff]
  %v1897 = vld [vmem:[%s1 + $0x70] sm:$0xff]
  %v1898 = vld [vmem:[%s1 + $0x78] sm:$0xff]
  %v1899 = vld [vmem:[%s1 + $0x80] sm:$0xff]
  %v1900 = vld [vmem:[%s1 + $0x88] sm:$0xff]
  %v1901 = vld [vmem:[%s1 + $0x90] sm:$0xff]
  %v1902 = vld [vmem:[%s1 + $0x98] sm:$0xff]
  %v1903 = vld [vmem:[%s1 + $0xa0] sm:$0xff]
  %v1904 = vld [vmem:[%s1 + $0xa8] sm:$0xff]
  %v1905 = vld [vmem:[%s1 + $0xb0] sm:$0xff]
  %v1906 = vld [vmem:[%s1 + $0xb8] sm:$0xff]
  %v1907 = vld [vmem:[%s1 + $0xc0] sm:$0xff]
  %v1908 = vld [vmem:[%s1 + $0xc8] sm:$0xff]
  %v1909 = vld [vmem:[%s1 + $0xd0] sm:$0xff]
  %v1910 = vld [vmem:[%s1 + $0xd8] sm:$0xff]
  %v1911 = vld [vmem:[%s1 + $0xe0] sm:$0xff]
  %v1912 = vld [vmem:[%s1 + $0xe8] sm:$0xff]
  %v1913 = vld [vmem:[%s1 + $0xf0] sm:$0xff]
  %v1914 = vld [vmem:[%s1 + $0xf8] sm:$0xff]
  %v1915 = vld [vmem:[%s1 + $0x100] sm:$0xff]
  %v1916 = vld [vmem:[%s1 + $0x108] sm:$0xff]
  %v1917 = vld [vmem:[%s1 + $0x110] sm:$0xff]
  %v1918 = vld [vmem:[%s1 + $0x118] sm:$0xff]
  %v1919 = vld [vmem:[%s1 + $0x120] sm:$0xff]
  %v1920 = vld [vmem:[%s1 + $0x128] sm:$0xff]
  %v1921 = vld [vmem:[%s1 + $0x130] sm:$0xff]
  %v1922 = vld [vmem:[%s1 + $0x138] sm:$0xff]
  %v1923 = vld [vmem:[%s1 + $0x140] sm:$0xff]
  %v1924 = vld [vmem:[%s1 + $0x148] sm:$0xff]
  %v1925 = vld [vmem:[%s1 + $0x150] sm:$0xff]
  %v1926 = vld [vmem:[%s1 + $0x158] sm:$0xff]
  %v1927 = vld [vmem:[%s1 + $0x160] sm:$0xff]
  %v1928 = vld [vmem:[%s1 + $0x168] sm:$0xff]
  %v1929 = vld [vmem:[%s1 + $0x170] sm:$0xff]
  %v1930 = vld [vmem:[%s1 + $0x178] sm:$0xff]
  %v1931 = vld [vmem:[%s1 + $0x180] sm:$0xff]
  %v1932 = vld [vmem:[%s1 + $0x188] sm:$0xff]
  %v1933 = vld [vmem:[%s1 + $0x190] sm:$0xff]
  %v1934 = vld [vmem:[%s1 + $0x198] sm:$0xff]
  %v1935 = vld [vmem:[%s1 + $0x1a0] sm:$0xff]
  %v1936 = vld [vmem:[%s1 + $0x1a8] sm:$0xff]
  %v1937 = vld [vmem:[%s1 + $0x1b0] sm:$0xff]
  %v1938 = vld [vmem:[%s1 + $0x1b8] sm:$0xff]
  %v1939 = vld [vmem:[%s1 + $0x1c0] sm:$0xff]
  %v1940 = vld [vmem:[%s1 + $0x1c8] sm:$0xff]
  %v1941 = vld [vmem:[%s1 + $0x1d0] sm:$0xff]
  %v1942 = vld [vmem:[%s1 + $0x1d8] sm:$0xff]
  %v1943 = vld [vmem:[%s1 + $0x1e0] sm:$0xff]
  %v1944 = vld [vmem:[%s1 + $0x1e8] sm:$0xff]
  %v1945 = vld [vmem:[%s1 + $0x1f0] sm:$0xff]
  %v1946 = vld [vmem:[%s1 + $0x1f8] sm:$0xff]
  %v1947 = vld [vmem:[%s8] sm:$0xf]
  %v1948 = vld [vmem:[%s9] sm:$0x1]
  %v1950 = vlaneseq
  %v1951 = vshrl.u32 %v1950, 7
  %v1952 = vsub.s32 0, %v1951
  %v1953 = vrot.slane %v1948, %v1952
  %1956 = vset.pattern.permute.xlu0 0
  %1957 = vperm.xlu0 %1956, %v1883
  %v1958 = vpop.permute.xlu0 %1957
  %1961 = vset.pattern.permute.xlu0 0
  %1962 = vperm.xlu0 %1961, %v1884
  %v1963 = vpop.permute.xlu0 %1962
  %1966 = vset.pattern.permute.xlu0 0
  %1967 = vperm.xlu0 %1966, %v1885
  %v1968 = vpop.permute.xlu0 %1967
  %1971 = vset.pattern.permute.xlu0 0
  %1972 = vperm.xlu0 %1971, %v1886
  %v1973 = vpop.permute.xlu0 %1972
  %1976 = vset.pattern.permute.xlu0 0
  %1977 = vperm.xlu0 %1976, %v1887
  %v1978 = vpop.permute.xlu0 %1977
  %1981 = vset.pattern.permute.xlu0 0
  %1982 = vperm.xlu0 %1981, %v1888
  %v1983 = vpop.permute.xlu0 %1982
  %1986 = vset.pattern.permute.xlu0 0
  %1987 = vperm.xlu0 %1986, %v1889
  %v1988 = vpop.permute.xlu0 %1987
  %1991 = vset.pattern.permute.xlu0 0
  %1992 = vperm.xlu0 %1991, %v1890
  %v1993 = vpop.permute.xlu0 %1992
  %1996 = vset.pattern.permute.xlu0 0
  %1997 = vperm.xlu0 %1996, %v1891
  %v1998 = vpop.permute.xlu0 %1997
  %2001 = vset.pattern.permute.xlu0 0
  %2002 = vperm.xlu0 %2001, %v1892
  %v2003 = vpop.permute.xlu0 %2002
  %2006 = vset.pattern.permute.xlu0 0
  %2007 = vperm.xlu0 %2006, %v1893
  %v2008 = vpop.permute.xlu0 %2007
  %2011 = vset.pattern.permute.xlu0 0
  %2012 = vperm.xlu0 %2011, %v1894
  %v2013 = vpop.permute.xlu0 %2012
  %2016 = vset.pattern.permute.xlu0 0
  %2017 = vperm.xlu0 %2016, %v1895
  %v2018 = vpop.permute.xlu0 %2017
  %2021 = vset.pattern.permute.xlu0 0
  %2022 = vperm.xlu0 %2021, %v1896
  %v2023 = vpop.permute.xlu0 %2022
  %2026 = vset.pattern.permute.xlu0 0
  %2027 = vperm.xlu0 %2026, %v1897
  %v2028 = vpop.permute.xlu0 %2027
  %2031 = vset.pattern.permute.xlu0 0
  %2032 = vperm.xlu0 %2031, %v1898
  %v2033 = vpop.permute.xlu0 %2032
  %2036 = vset.pattern.permute.xlu0 0
  %2037 = vperm.xlu0 %2036, %v1899
  %v2038 = vpop.permute.xlu0 %2037
  %2041 = vset.pattern.permute.xlu0 0
  %2042 = vperm.xlu0 %2041, %v1900
  %v2043 = vpop.permute.xlu0 %2042
  %2046 = vset.pattern.permute.xlu0 0
  %2047 = vperm.xlu0 %2046, %v1901
  %v2048 = vpop.permute.xlu0 %2047
  %2051 = vset.pattern.permute.xlu0 0
  %2052 = vperm.xlu0 %2051, %v1902
  %v2053 = vpop.permute.xlu0 %2052
  %2056 = vset.pattern.permute.xlu0 0
  %2057 = vperm.xlu0 %2056, %v1903
  %v2058 = vpop.permute.xlu0 %2057
  %2061 = vset.pattern.permute.xlu0 0
  %2062 = vperm.xlu0 %2061, %v1904
  %v2063 = vpop.permute.xlu0 %2062
  %2066 = vset.pattern.permute.xlu0 0
  %2067 = vperm.xlu0 %2066, %v1905
  %v2068 = vpop.permute.xlu0 %2067
  %2071 = vset.pattern.permute.xlu0 0
  %2072 = vperm.xlu0 %2071, %v1906
  %v2073 = vpop.permute.xlu0 %2072
  %2076 = vset.pattern.permute.xlu0 0
  %2077 = vperm.xlu0 %2076, %v1907
  %v2078 = vpop.permute.xlu0 %2077
  %2081 = vset.pattern.permute.xlu0 0
  %2082 = vperm.xlu0 %2081, %v1908
  %v2083 = vpop.permute.xlu0 %2082
  %2086 = vset.pattern.permute.xlu0 0
  %2087 = vperm.xlu0 %2086, %v1909
  %v2088 = vpop.permute.xlu0 %2087
  %2091 = vset.pattern.permute.xlu0 0
  %2092 = vperm.xlu0 %2091, %v1910
  %v2093 = vpop.permute.xlu0 %2092
  %2096 = vset.pattern.permute.xlu0 0
  %2097 = vperm.xlu0 %2096, %v1911
  %v2098 = vpop.permute.xlu0 %2097
  %2101 = vset.pattern.permute.xlu0 0
  %2102 = vperm.xlu0 %2101, %v1912
  %v2103 = vpop.permute.xlu0 %2102
  %2106 = vset.pattern.permute.xlu0 0
  %2107 = vperm.xlu0 %2106, %v1913
  %v2108 = vpop.permute.xlu0 %2107
  %2111 = vset.pattern.permute.xlu0 0
  %2112 = vperm.xlu0 %2111, %v1914
  %v2113 = vpop.permute.xlu0 %2112
  %2116 = vset.pattern.permute.xlu0 0
  %2117 = vperm.xlu0 %2116, %v1915
  %v2118 = vpop.permute.xlu0 %2117
  %2121 = vset.pattern.permute.xlu0 0
  %2122 = vperm.xlu0 %2121, %v1916
  %v2123 = vpop.permute.xlu0 %2122
  %2126 = vset.pattern.permute.xlu0 0
  %2127 = vperm.xlu0 %2126, %v1917
  %v2128 = vpop.permute.xlu0 %2127
  %2131 = vset.pattern.permute.xlu0 0
  %2132 = vperm.xlu0 %2131, %v1918
  %v2133 = vpop.permute.xlu0 %2132
  %2136 = vset.pattern.permute.xlu0 0
  %2137 = vperm.xlu0 %2136, %v1919
  %v2138 = vpop.permute.xlu0 %2137
  %2141 = vset.pattern.permute.xlu0 0
  %2142 = vperm.xlu0 %2141, %v1920
  %v2143 = vpop.permute.xlu0 %2142
  %2146 = vset.pattern.permute.xlu0 0
  %2147 = vperm.xlu0 %2146, %v1921
  %v2148 = vpop.permute.xlu0 %2147
  %2151 = vset.pattern.permute.xlu0 0
  %2152 = vperm.xlu0 %2151, %v1922
  %v2153 = vpop.permute.xlu0 %2152
  %2156 = vset.pattern.permute.xlu0 0
  %2157 = vperm.xlu0 %2156, %v1923
  %v2158 = vpop.permute.xlu0 %2157
  %2161 = vset.pattern.permute.xlu0 0
  %2162 = vperm.xlu0 %2161, %v1924
  %v2163 = vpop.permute.xlu0 %2162
  %2166 = vset.pattern.permute.xlu0 0
  %2167 = vperm.xlu0 %2166, %v1925
  %v2168 = vpop.permute.xlu0 %2167
  %2171 = vset.pattern.permute.xlu0 0
  %2172 = vperm.xlu0 %2171, %v1926
  %v2173 = vpop.permute.xlu0 %2172
  %2176 = vset.pattern.permute.xlu0 0
  %2177 = vperm.xlu0 %2176, %v1927
  %v2178 = vpop.permute.xlu0 %2177
  %2181 = vset.pattern.permute.xlu0 0
  %2182 = vperm.xlu0 %2181, %v1928
  %v2183 = vpop.permute.xlu0 %2182
  %2186 = vset.pattern.permute.xlu0 0
  %2187 = vperm.xlu0 %2186, %v1929
  %v2188 = vpop.permute.xlu0 %2187
  %2191 = vset.pattern.permute.xlu0 0
  %2192 = vperm.xlu0 %2191, %v1930
  %v2193 = vpop.permute.xlu0 %2192
  %2196 = vset.pattern.permute.xlu0 0
  %2197 = vperm.xlu0 %2196, %v1931
  %v2198 = vpop.permute.xlu0 %2197
  %2201 = vset.pattern.permute.xlu0 0
  %2202 = vperm.xlu0 %2201, %v1932
  %v2203 = vpop.permute.xlu0 %2202
  %2206 = vset.pattern.permute.xlu0 0
  %2207 = vperm.xlu0 %2206, %v1933
  %v2208 = vpop.permute.xlu0 %2207
  %2211 = vset.pattern.permute.xlu0 0
  %2212 = vperm.xlu0 %2211, %v1934
  %v2213 = vpop.permute.xlu0 %2212
  %2216 = vset.pattern.permute.xlu0 0
  %2217 = vperm.xlu0 %2216, %v1935
  %v2218 = vpop.permute.xlu0 %2217
  %2221 = vset.pattern.permute.xlu0 0
  %2222 = vperm.xlu0 %2221, %v1936
  %v2223 = vpop.permute.xlu0 %2222
  %2226 = vset.pattern.permute.xlu0 0
  %2227 = vperm.xlu0 %2226, %v1937
  %v2228 = vpop.permute.xlu0 %2227
  %2231 = vset.pattern.permute.xlu0 0
  %2232 = vperm.xlu0 %2231, %v1938
  %v2233 = vpop.permute.xlu0 %2232
  %2236 = vset.pattern.permute.xlu0 0
  %2237 = vperm.xlu0 %2236, %v1939
  %v2238 = vpop.permute.xlu0 %2237
  %2241 = vset.pattern.permute.xlu0 0
  %2242 = vperm.xlu0 %2241, %v1940
  %v2243 = vpop.permute.xlu0 %2242
  %2246 = vset.pattern.permute.xlu0 0
  %2247 = vperm.xlu0 %2246, %v1941
  %v2248 = vpop.permute.xlu0 %2247
  %2251 = vset.pattern.permute.xlu0 0
  %2252 = vperm.xlu0 %2251, %v1942
  %v2253 = vpop.permute.xlu0 %2252
  %2256 = vset.pattern.permute.xlu0 0
  %2257 = vperm.xlu0 %2256, %v1943
  %v2258 = vpop.permute.xlu0 %2257
  %2261 = vset.pattern.permute.xlu0 0
  %2262 = vperm.xlu0 %2261, %v1944
  %v2263 = vpop.permute.xlu0 %2262
  %2266 = vset.pattern.permute.xlu0 0
  %2267 = vperm.xlu0 %2266, %v1945
  %v2268 = vpop.permute.xlu0 %2267
  %2271 = vset.pattern.permute.xlu0 0
  %2272 = vperm.xlu0 %2271, %v1946
  %v2273 = vpop.permute.xlu0 %2272
  %v2275 = vlaneseq
  %v2276 = vshrl.u32 %v2275, 7
  %v2277 = vsub.s32 0, %v2276
  %v2278 = vrot.slane %v1947, %v2277
  %v2279 = vmul.f32 %v1958, %v2278
  %v2280 = vmul.f32 %v1963, %v2278
  %v2281 = vmul.f32 %v1968, %v2278
  %v2282 = vmul.f32 %v1973, %v2278
  %v2283 = vmul.f32 %v1978, %v2278
  %v2284 = vmul.f32 %v1983, %v2278
  %v2285 = vmul.f32 %v1988, %v2278
  %v2286 = vmul.f32 %v1993, %v2278
  %v2287 = vmul.f32 %v1998, %v2278
  %v2288 = vmul.f32 %v2003, %v2278
  %v2289 = vmul.f32 %v2008, %v2278
  %v2290 = vmul.f32 %v2013, %v2278
  %v2291 = vmul.f32 %v2018, %v2278
  %v2292 = vmul.f32 %v2023, %v2278
  %v2293 = vmul.f32 %v2028, %v2278
  %v2294 = vmul.f32 %v2033, %v2278
  %v2295 = vmul.f32 %v2038, %v2278
  %v2296 = vmul.f32 %v2043, %v2278
  %v2297 = vmul.f32 %v2048, %v2278
  %v2298 = vmul.f32 %v2053, %v2278
  %v2299 = vmul.f32 %v2058, %v2278
  %v2300 = vmul.f32 %v2063, %v2278
  %v2301 = vmul.f32 %v2068, %v2278
  %v2302 = vmul.f32 %v2073, %v2278
  %v2303 = vmul.f32 %v2078, %v2278
  %v2304 = vmul.f32 %v2083, %v2278
  %v2305 = vmul.f32 %v2088, %v2278
  %v2306 = vmul.f32 %v2093, %v2278
  %v2307 = vmul.f32 %v2098, %v2278
  %v2308 = vmul.f32 %v2103, %v2278
  %v2309 = vmul.f32 %v2108, %v2278
  %v2310 = vmul.f32 %v2113, %v2278
  %v2311 = vmul.f32 %v2118, %v2278
  %v2312 = vmul.f32 %v2123, %v2278
  %v2313 = vmul.f32 %v2128, %v2278
  %v2314 = vmul.f32 %v2133, %v2278
  %v2315 = vmul.f32 %v2138, %v2278
  %v2316 = vmul.f32 %v2143, %v2278
  %v2317 = vmul.f32 %v2148, %v2278
  %v2318 = vmul.f32 %v2153, %v2278
  %v2319 = vmul.f32 %v2158, %v2278
  %v2320 = vmul.f32 %v2163, %v2278
  %v2321 = vmul.f32 %v2168, %v2278
  %v2322 = vmul.f32 %v2173, %v2278
  %v2323 = vmul.f32 %v2178, %v2278
  %v2324 = vmul.f32 %v2183, %v2278
  %v2325 = vmul.f32 %v2188, %v2278
  %v2326 = vmul.f32 %v2193, %v2278
  %v2327 = vmul.f32 %v2198, %v2278
  %v2328 = vmul.f32 %v2203, %v2278
  %v2329 = vmul.f32 %v2208, %v2278
  %v2330 = vmul.f32 %v2213, %v2278
  %v2331 = vmul.f32 %v2218, %v2278
  %v2332 = vmul.f32 %v2223, %v2278
  %v2333 = vmul.f32 %v2228, %v2278
  %v2334 = vmul.f32 %v2233, %v2278
  %v2335 = vmul.f32 %v2238, %v2278
  %v2336 = vmul.f32 %v2243, %v2278
  %v2337 = vmul.f32 %v2248, %v2278
  %v2338 = vmul.f32 %v2253, %v2278
  %v2339 = vmul.f32 %v2258, %v2278
  %v2340 = vmul.f32 %v2263, %v2278
  %v2341 = vmul.f32 %v2268, %v2278
  %v2342 = vmul.f32 %v2273, %v2278
  %v2343 = vadd.f32 %v1953, %v2279
  %v2344 = vadd.f32 %v1953, %v2280
  %v2345 = vadd.f32 %v1953, %v2281
  %v2346 = vadd.f32 %v1953, %v2282
  %v2347 = vadd.f32 %v1953, %v2283
  %v2348 = vadd.f32 %v1953, %v2284
  %v2349 = vadd.f32 %v1953, %v2285
  %v2350 = vadd.f32 %v1953, %v2286
  %v2351 = vadd.f32 %v1953, %v2287
  %v2352 = vadd.f32 %v1953, %v2288
  %v2353 = vadd.f32 %v1953, %v2289
  %v2354 = vadd.f32 %v1953, %v2290
  %v2355 = vadd.f32 %v1953, %v2291
  %v2356 = vadd.f32 %v1953, %v2292
  %v2357 = vadd.f32 %v1953, %v2293
  %v2358 = vadd.f32 %v1953, %v2294
  %v2359 = vadd.f32 %v1953, %v2295
  %v2360 = vadd.f32 %v1953, %v2296
  %v2361 = vadd.f32 %v1953, %v2297
  %v2362 = vadd.f32 %v1953, %v2298
  %v2363 = vadd.f32 %v1953, %v2299
  %v2364 = vadd.f32 %v1953, %v2300
  %v2365 = vadd.f32 %v1953, %v2301
  %v2366 = vadd.f32 %v1953, %v2302
  %v2367 = vadd.f32 %v1953, %v2303
  %v2368 = vadd.f32 %v1953, %v2304
  %v2369 = vadd.f32 %v1953, %v2305
  %v2370 = vadd.f32 %v1953, %v2306
  %v2371 = vadd.f32 %v1953, %v2307
  %v2372 = vadd.f32 %v1953, %v2308
  %v2373 = vadd.f32 %v1953, %v2309
  %v2374 = vadd.f32 %v1953, %v2310
  %v2375 = vadd.f32 %v1953, %v2311
  %v2376 = vadd.f32 %v1953, %v2312
  %v2377 = vadd.f32 %v1953, %v2313
  %v2378 = vadd.f32 %v1953, %v2314
  %v2379 = vadd.f32 %v1953, %v2315
  %v2380 = vadd.f32 %v1953, %v2316
  %v2381 = vadd.f32 %v1953, %v2317
  %v2382 = vadd.f32 %v1953, %v2318
  %v2383 = vadd.f32 %v1953, %v2319
  %v2384 = vadd.f32 %v1953, %v2320
  %v2385 = vadd.f32 %v1953, %v2321
  %v2386 = vadd.f32 %v1953, %v2322
  %v2387 = vadd.f32 %v1953, %v2323
  %v2388 = vadd.f32 %v1953, %v2324
  %v2389 = vadd.f32 %v1953, %v2325
  %v2390 = vadd.f32 %v1953, %v2326
  %v2391 = vadd.f32 %v1953, %v2327
  %v2392 = vadd.f32 %v1953, %v2328
  %v2393 = vadd.f32 %v1953, %v2329
  %v2394 = vadd.f32 %v1953, %v2330
  %v2395 = vadd.f32 %v1953, %v2331
  %v2396 = vadd.f32 %v1953, %v2332
  %v2397 = vadd.f32 %v1953, %v2333
  %v2398 = vadd.f32 %v1953, %v2334
  %v2399 = vadd.f32 %v1953, %v2335
  %v2400 = vadd.f32 %v1953, %v2336
  %v2401 = vadd.f32 %v1953, %v2337
  %v2402 = vadd.f32 %v1953, %v2338
  %v2403 = vadd.f32 %v1953, %v2339
  %v2404 = vadd.f32 %v1953, %v2340
  %v2405 = vadd.f32 %v1953, %v2341
  %v2406 = vadd.f32 %v1953, %v2342
  %2407 = vset.pattern.permute.xlu0 1
  %2408 = vperm.xlu0 %2407, %v1883
  %v2409 = vpop.permute.xlu0 %2408
  %2411 = vset.pattern.permute.xlu0 1
  %2412 = vperm.xlu0 %2411, %v1884
  %v2413 = vpop.permute.xlu0 %2412
  %2415 = vset.pattern.permute.xlu0 1
  %2416 = vperm.xlu0 %2415, %v1885
  %v2417 = vpop.permute.xlu0 %2416
  %2419 = vset.pattern.permute.xlu0 1
  %2420 = vperm.xlu0 %2419, %v1886
  %v2421 = vpop.permute.xlu0 %2420
  %2423 = vset.pattern.permute.xlu0 1
  %2424 = vperm.xlu0 %2423, %v1887
  %v2425 = vpop.permute.xlu0 %2424
  %2427 = vset.pattern.permute.xlu0 1
  %2428 = vperm.xlu0 %2427, %v1888
  %v2429 = vpop.permute.xlu0 %2428
  %2431 = vset.pattern.permute.xlu0 1
  %2432 = vperm.xlu0 %2431, %v1889
  %v2433 = vpop.permute.xlu0 %2432
  %2435 = vset.pattern.permute.xlu0 1
  %2436 = vperm.xlu0 %2435, %v1890
  %v2437 = vpop.permute.xlu0 %2436
  %2439 = vset.pattern.permute.xlu0 1
  %2440 = vperm.xlu0 %2439, %v1891
  %v2441 = vpop.permute.xlu0 %2440
  %2443 = vset.pattern.permute.xlu0 1
  %2444 = vperm.xlu0 %2443, %v1892
  %v2445 = vpop.permute.xlu0 %2444
  %2447 = vset.pattern.permute.xlu0 1
  %2448 = vperm.xlu0 %2447, %v1893
  %v2449 = vpop.permute.xlu0 %2448
  %2451 = vset.pattern.permute.xlu0 1
  %2452 = vperm.xlu0 %2451, %v1894
  %v2453 = vpop.permute.xlu0 %2452
  %2455 = vset.pattern.permute.xlu0 1
  %2456 = vperm.xlu0 %2455, %v1895
  %v2457 = vpop.permute.xlu0 %2456
  %2459 = vset.pattern.permute.xlu0 1
  %2460 = vperm.xlu0 %2459, %v1896
  %v2461 = vpop.permute.xlu0 %2460
  %2463 = vset.pattern.permute.xlu0 1
  %2464 = vperm.xlu0 %2463, %v1897
  %v2465 = vpop.permute.xlu0 %2464
  %2467 = vset.pattern.permute.xlu0 1
  %2468 = vperm.xlu0 %2467, %v1898
  %v2469 = vpop.permute.xlu0 %2468
  %2471 = vset.pattern.permute.xlu0 1
  %2472 = vperm.xlu0 %2471, %v1899
  %v2473 = vpop.permute.xlu0 %2472
  %2475 = vset.pattern.permute.xlu0 1
  %2476 = vperm.xlu0 %2475, %v1900
  %v2477 = vpop.permute.xlu0 %2476
  %2479 = vset.pattern.permute.xlu0 1
  %2480 = vperm.xlu0 %2479, %v1901
  %v2481 = vpop.permute.xlu0 %2480
  %2483 = vset.pattern.permute.xlu0 1
  %2484 = vperm.xlu0 %2483, %v1902
  %v2485 = vpop.permute.xlu0 %2484
  %2487 = vset.pattern.permute.xlu0 1
  %2488 = vperm.xlu0 %2487, %v1903
  %v2489 = vpop.permute.xlu0 %2488
  %2491 = vset.pattern.permute.xlu0 1
  %2492 = vperm.xlu0 %2491, %v1904
  %v2493 = vpop.permute.xlu0 %2492
  %2495 = vset.pattern.permute.xlu0 1
  %2496 = vperm.xlu0 %2495, %v1905
  %v2497 = vpop.permute.xlu0 %2496
  %2499 = vset.pattern.permute.xlu0 1
  %2500 = vperm.xlu0 %2499, %v1906
  %v2501 = vpop.permute.xlu0 %2500
  %2503 = vset.pattern.permute.xlu0 1
  %2504 = vperm.xlu0 %2503, %v1907
  %v2505 = vpop.permute.xlu0 %2504
  %2507 = vset.pattern.permute.xlu0 1
  %2508 = vperm.xlu0 %2507, %v1908
  %v2509 = vpop.permute.xlu0 %2508
  %2511 = vset.pattern.permute.xlu0 1
  %2512 = vperm.xlu0 %2511, %v1909
  %v2513 = vpop.permute.xlu0 %2512
  %2515 = vset.pattern.permute.xlu0 1
  %2516 = vperm.xlu0 %2515, %v1910
  %v2517 = vpop.permute.xlu0 %2516
  %2519 = vset.pattern.permute.xlu0 1
  %2520 = vperm.xlu0 %2519, %v1911
  %v2521 = vpop.permute.xlu0 %2520
  %2523 = vset.pattern.permute.xlu0 1
  %2524 = vperm.xlu0 %2523, %v1912
  %v2525 = vpop.permute.xlu0 %2524
  %2527 = vset.pattern.permute.xlu0 1
  %2528 = vperm.xlu0 %2527, %v1913
  %v2529 = vpop.permute.xlu0 %2528
  %2531 = vset.pattern.permute.xlu0 1
  %2532 = vperm.xlu0 %2531, %v1914
  %v2533 = vpop.permute.xlu0 %2532
  %2535 = vset.pattern.permute.xlu0 1
  %2536 = vperm.xlu0 %2535, %v1915
  %v2537 = vpop.permute.xlu0 %2536
  %2539 = vset.pattern.permute.xlu0 1
  %2540 = vperm.xlu0 %2539, %v1916
  %v2541 = vpop.permute.xlu0 %2540
  %2543 = vset.pattern.permute.xlu0 1
  %2544 = vperm.xlu0 %2543, %v1917
  %v2545 = vpop.permute.xlu0 %2544
  %2547 = vset.pattern.permute.xlu0 1
  %2548 = vperm.xlu0 %2547, %v1918
  %v2549 = vpop.permute.xlu0 %2548
  %2551 = vset.pattern.permute.xlu0 1
  %2552 = vperm.xlu0 %2551, %v1919
  %v2553 = vpop.permute.xlu0 %2552
  %2555 = vset.pattern.permute.xlu0 1
  %2556 = vperm.xlu0 %2555, %v1920
  %v2557 = vpop.permute.xlu0 %2556
  %2559 = vset.pattern.permute.xlu0 1
  %2560 = vperm.xlu0 %2559, %v1921
  %v2561 = vpop.permute.xlu0 %2560
  %2563 = vset.pattern.permute.xlu0 1
  %2564 = vperm.xlu0 %2563, %v1922
  %v2565 = vpop.permute.xlu0 %2564
  %2567 = vset.pattern.permute.xlu0 1
  %2568 = vperm.xlu0 %2567, %v1923
  %v2569 = vpop.permute.xlu0 %2568
  %2571 = vset.pattern.permute.xlu0 1
  %2572 = vperm.xlu0 %2571, %v1924
  %v2573 = vpop.permute.xlu0 %2572
  %2575 = vset.pattern.permute.xlu0 1
  %2576 = vperm.xlu0 %2575, %v1925
  %v2577 = vpop.permute.xlu0 %2576
  %2579 = vset.pattern.permute.xlu0 1
  %2580 = vperm.xlu0 %2579, %v1926
  %v2581 = vpop.permute.xlu0 %2580
  %2583 = vset.pattern.permute.xlu0 1
  %2584 = vperm.xlu0 %2583, %v1927
  %v2585 = vpop.permute.xlu0 %2584
  %2587 = vset.pattern.permute.xlu0 1
  %2588 = vperm.xlu0 %2587, %v1928
  %v2589 = vpop.permute.xlu0 %2588
  %2591 = vset.pattern.permute.xlu0 1
  %2592 = vperm.xlu0 %2591, %v1929
  %v2593 = vpop.permute.xlu0 %2592
  %2595 = vset.pattern.permute.xlu0 1
  %2596 = vperm.xlu0 %2595, %v1930
  %v2597 = vpop.permute.xlu0 %2596
  %2599 = vset.pattern.permute.xlu0 1
  %2600 = vperm.xlu0 %2599, %v1931
  %v2601 = vpop.permute.xlu0 %2600
  %2603 = vset.pattern.permute.xlu0 1
  %2604 = vperm.xlu0 %2603, %v1932
  %v2605 = vpop.permute.xlu0 %2604
  %2607 = vset.pattern.permute.xlu0 1
  %2608 = vperm.xlu0 %2607, %v1933
  %v2609 = vpop.permute.xlu0 %2608
  %2611 = vset.pattern.permute.xlu0 1
  %2612 = vperm.xlu0 %2611, %v1934
  %v2613 = vpop.permute.xlu0 %2612
  %2615 = vset.pattern.permute.xlu0 1
  %2616 = vperm.xlu0 %2615, %v1935
  %v2617 = vpop.permute.xlu0 %2616
  %2619 = vset.pattern.permute.xlu0 1
  %2620 = vperm.xlu0 %2619, %v1936
  %v2621 = vpop.permute.xlu0 %2620
  %2623 = vset.pattern.permute.xlu0 1
  %2624 = vperm.xlu0 %2623, %v1937
  %v2625 = vpop.permute.xlu0 %2624
  %2627 = vset.pattern.permute.xlu0 1
  %2628 = vperm.xlu0 %2627, %v1938
  %v2629 = vpop.permute.xlu0 %2628
  %2631 = vset.pattern.permute.xlu0 1
  %2632 = vperm.xlu0 %2631, %v1939
  %v2633 = vpop.permute.xlu0 %2632
  %2635 = vset.pattern.permute.xlu0 1
  %2636 = vperm.xlu0 %2635, %v1940
  %v2637 = vpop.permute.xlu0 %2636
  %2639 = vset.pattern.permute.xlu0 1
  %2640 = vperm.xlu0 %2639, %v1941
  %v2641 = vpop.permute.xlu0 %2640
  %2643 = vset.pattern.permute.xlu0 1
  %2644 = vperm.xlu0 %2643, %v1942
  %v2645 = vpop.permute.xlu0 %2644
  %2647 = vset.pattern.permute.xlu0 1
  %2648 = vperm.xlu0 %2647, %v1943
  %v2649 = vpop.permute.xlu0 %2648
  %2651 = vset.pattern.permute.xlu0 1
  %2652 = vperm.xlu0 %2651, %v1944
  %v2653 = vpop.permute.xlu0 %2652
  %2655 = vset.pattern.permute.xlu0 1
  %2656 = vperm.xlu0 %2655, %v1945
  %v2657 = vpop.permute.xlu0 %2656
  %2659 = vset.pattern.permute.xlu0 1
  %2660 = vperm.xlu0 %2659, %v1946
  %v2661 = vpop.permute.xlu0 %2660
  %v2663 = vlaneseq
  %v2664 = vshrl.u32 %v2663, 7
  %v2665 = vsub.s32 1, %v2664
  %v2666 = vrot.slane %v1947, %v2665
  %v2667 = vmul.f32 %v2409, %v2666
  %v2668 = vmul.f32 %v2413, %v2666
  %v2669 = vmul.f32 %v2417, %v2666
  %v2670 = vmul.f32 %v2421, %v2666
  %v2671 = vmul.f32 %v2425, %v2666
  %v2672 = vmul.f32 %v2429, %v2666
  %v2673 = vmul.f32 %v2433, %v2666
  %v2674 = vmul.f32 %v2437, %v2666
  %v2675 = vmul.f32 %v2441, %v2666
  %v2676 = vmul.f32 %v2445, %v2666
  %v2677 = vmul.f32 %v2449, %v2666
  %v2678 = vmul.f32 %v2453, %v2666
  %v2679 = vmul.f32 %v2457, %v2666
  %v2680 = vmul.f32 %v2461, %v2666
  %v2681 = vmul.f32 %v2465, %v2666
  %v2682 = vmul.f32 %v2469, %v2666
  %v2683 = vmul.f32 %v2473, %v2666
  %v2684 = vmul.f32 %v2477, %v2666
  %v2685 = vmul.f32 %v2481, %v2666
  %v2686 = vmul.f32 %v2485, %v2666
  %v2687 = vmul.f32 %v2489, %v2666
  %v2688 = vmul.f32 %v2493, %v2666
  %v2689 = vmul.f32 %v2497, %v2666
  %v2690 = vmul.f32 %v2501, %v2666
  %v2691 = vmul.f32 %v2505, %v2666
  %v2692 = vmul.f32 %v2509, %v2666
  %v2693 = vmul.f32 %v2513, %v2666
  %v2694 = vmul.f32 %v2517, %v2666
  %v2695 = vmul.f32 %v2521, %v2666
  %v2696 = vmul.f32 %v2525, %v2666
  %v2697 = vmul.f32 %v2529, %v2666
  %v2698 = vmul.f32 %v2533, %v2666
  %v2699 = vmul.f32 %v2537, %v2666
  %v2700 = vmul.f32 %v2541, %v2666
  %v2701 = vmul.f32 %v2545, %v2666
  %v2702 = vmul.f32 %v2549, %v2666
  %v2703 = vmul.f32 %v2553, %v2666
  %v2704 = vmul.f32 %v2557, %v2666
  %v2705 = vmul.f32 %v2561, %v2666
  %v2706 = vmul.f32 %v2565, %v2666
  %v2707 = vmul.f32 %v2569, %v2666
  %v2708 = vmul.f32 %v2573, %v2666
  %v2709 = vmul.f32 %v2577, %v2666
  %v2710 = vmul.f32 %v2581, %v2666
  %v2711 = vmul.f32 %v2585, %v2666
  %v2712 = vmul.f32 %v2589, %v2666
  %v2713 = vmul.f32 %v2593, %v2666
  %v2714 = vmul.f32 %v2597, %v2666
  %v2715 = vmul.f32 %v2601, %v2666
  %v2716 = vmul.f32 %v2605, %v2666
  %v2717 = vmul.f32 %v2609, %v2666
  %v2718 = vmul.f32 %v2613, %v2666
  %v2719 = vmul.f32 %v2617, %v2666
  %v2720 = vmul.f32 %v2621, %v2666
  %v2721 = vmul.f32 %v2625, %v2666
  %v2722 = vmul.f32 %v2629, %v2666
  %v2723 = vmul.f32 %v2633, %v2666
  %v2724 = vmul.f32 %v2637, %v2666
  %v2725 = vmul.f32 %v2641, %v2666
  %v2726 = vmul.f32 %v2645, %v2666
  %v2727 = vmul.f32 %v2649, %v2666
  %v2728 = vmul.f32 %v2653, %v2666
  %v2729 = vmul.f32 %v2657, %v2666
  %v2730 = vmul.f32 %v2661, %v2666
  %v2731 = vadd.f32 %v2343, %v2667
  %v2732 = vadd.f32 %v2344, %v2668
  %v2733 = vadd.f32 %v2345, %v2669
  %v2734 = vadd.f32 %v2346, %v2670
  %v2735 = vadd.f32 %v2347, %v2671
  %v2736 = vadd.f32 %v2348, %v2672
  %v2737 = vadd.f32 %v2349, %v2673
  %v2738 = vadd.f32 %v2350, %v2674
  %v2739 = vadd.f32 %v2351, %v2675
  %v2740 = vadd.f32 %v2352, %v2676
  %v2741 = vadd.f32 %v2353, %v2677
  %v2742 = vadd.f32 %v2354, %v2678
  %v2743 = vadd.f32 %v2355, %v2679
  %v2744 = vadd.f32 %v2356, %v2680
  %v2745 = vadd.f32 %v2357, %v2681
  %v2746 = vadd.f32 %v2358, %v2682
  %v2747 = vadd.f32 %v2359, %v2683
  %v2748 = vadd.f32 %v2360, %v2684
  %v2749 = vadd.f32 %v2361, %v2685
  %v2750 = vadd.f32 %v2362, %v2686
  %v2751 = vadd.f32 %v2363, %v2687
  %v2752 = vadd.f32 %v2364, %v2688
  %v2753 = vadd.f32 %v2365, %v2689
  %v2754 = vadd.f32 %v2366, %v2690
  %v2755 = vadd.f32 %v2367, %v2691
  %v2756 = vadd.f32 %v2368, %v2692
  %v2757 = vadd.f32 %v2369, %v2693
  %v2758 = vadd.f32 %v2370, %v2694
  %v2759 = vadd.f32 %v2371, %v2695
  %v2760 = vadd.f32 %v2372, %v2696
  %v2761 = vadd.f32 %v2373, %v2697
  %v2762 = vadd.f32 %v2374, %v2698
  %v2763 = vadd.f32 %v2375, %v2699
  %v2764 = vadd.f32 %v2376, %v2700
  %v2765 = vadd.f32 %v2377, %v2701
  %v2766 = vadd.f32 %v2378, %v2702
  %v2767 = vadd.f32 %v2379, %v2703
  %v2768 = vadd.f32 %v2380, %v2704
  %v2769 = vadd.f32 %v2381, %v2705
  %v2770 = vadd.f32 %v2382, %v2706
  %v2771 = vadd.f32 %v2383, %v2707
  %v2772 = vadd.f32 %v2384, %v2708
  %v2773 = vadd.f32 %v2385, %v2709
  %v2774 = vadd.f32 %v2386, %v2710
  %v2775 = vadd.f32 %v2387, %v2711
  %v2776 = vadd.f32 %v2388, %v2712
  %v2777 = vadd.f32 %v2389, %v2713
  %v2778 = vadd.f32 %v2390, %v2714
  %v2779 = vadd.f32 %v2391, %v2715
  %v2780 = vadd.f32 %v2392, %v2716
  %v2781 = vadd.f32 %v2393, %v2717
  %v2782 = vadd.f32 %v2394, %v2718
  %v2783 = vadd.f32 %v2395, %v2719
  %v2784 = vadd.f32 %v2396, %v2720
  %v2785 = vadd.f32 %v2397, %v2721
  %v2786 = vadd.f32 %v2398, %v2722
  %v2787 = vadd.f32 %v2399, %v2723
  %v2788 = vadd.f32 %v2400, %v2724
  %v2789 = vadd.f32 %v2401, %v2725
  %v2790 = vadd.f32 %v2402, %v2726
  %v2791 = vadd.f32 %v2403, %v2727
  %v2792 = vadd.f32 %v2404, %v2728
  %v2793 = vadd.f32 %v2405, %v2729
  %v2794 = vadd.f32 %v2406, %v2730
  %2795 = vset.pattern.permute.xlu0 2
  %2796 = vperm.xlu0 %2795, %v1883
  %v2797 = vpop.permute.xlu0 %2796
  %2799 = vset.pattern.permute.xlu0 2
  %2800 = vperm.xlu0 %2799, %v1884
  %v2801 = vpop.permute.xlu0 %2800
  %2803 = vset.pattern.permute.xlu0 2
  %2804 = vperm.xlu0 %2803, %v1885
  %v2805 = vpop.permute.xlu0 %2804
  %2807 = vset.pattern.permute.xlu0 2
  %2808 = vperm.xlu0 %2807, %v1886
  %v2809 = vpop.permute.xlu0 %2808
  %2811 = vset.pattern.permute.xlu0 2
  %2812 = vperm.xlu0 %2811, %v1887
  %v2813 = vpop.permute.xlu0 %2812
  %2815 = vset.pattern.permute.xlu0 2
  %2816 = vperm.xlu0 %2815, %v1888
  %v2817 = vpop.permute.xlu0 %2816
  %2819 = vset.pattern.permute.xlu0 2
  %2820 = vperm.xlu0 %2819, %v1889
  %v2821 = vpop.permute.xlu0 %2820
  %2823 = vset.pattern.permute.xlu0 2
  %2824 = vperm.xlu0 %2823, %v1890
  %v2825 = vpop.permute.xlu0 %2824
  %2827 = vset.pattern.permute.xlu0 2
  %2828 = vperm.xlu0 %2827, %v1891
  %v2829 = vpop.permute.xlu0 %2828
  %2831 = vset.pattern.permute.xlu0 2
  %2832 = vperm.xlu0 %2831, %v1892
  %v2833 = vpop.permute.xlu0 %2832
  %2835 = vset.pattern.permute.xlu0 2
  %2836 = vperm.xlu0 %2835, %v1893
  %v2837 = vpop.permute.xlu0 %2836
  %2839 = vset.pattern.permute.xlu0 2
  %2840 = vperm.xlu0 %2839, %v1894
  %v2841 = vpop.permute.xlu0 %2840
  %2843 = vset.pattern.permute.xlu0 2
  %2844 = vperm.xlu0 %2843, %v1895
  %v2845 = vpop.permute.xlu0 %2844
  %2847 = vset.pattern.permute.xlu0 2
  %2848 = vperm.xlu0 %2847, %v1896
  %v2849 = vpop.permute.xlu0 %2848
  %2851 = vset.pattern.permute.xlu0 2
  %2852 = vperm.xlu0 %2851, %v1897
  %v2853 = vpop.permute.xlu0 %2852
  %2855 = vset.pattern.permute.xlu0 2
  %2856 = vperm.xlu0 %2855, %v1898
  %v2857 = vpop.permute.xlu0 %2856
  %2859 = vset.pattern.permute.xlu0 2
  %2860 = vperm.xlu0 %2859, %v1899
  %v2861 = vpop.permute.xlu0 %2860
  %2863 = vset.pattern.permute.xlu0 2
  %2864 = vperm.xlu0 %2863, %v1900
  %v2865 = vpop.permute.xlu0 %2864
  %2867 = vset.pattern.permute.xlu0 2
  %2868 = vperm.xlu0 %2867, %v1901
  %v2869 = vpop.permute.xlu0 %2868
  %2871 = vset.pattern.permute.xlu0 2
  %2872 = vperm.xlu0 %2871, %v1902
  %v2873 = vpop.permute.xlu0 %2872
  %2875 = vset.pattern.permute.xlu0 2
  %2876 = vperm.xlu0 %2875, %v1903
  %v2877 = vpop.permute.xlu0 %2876
  %2879 = vset.pattern.permute.xlu0 2
  %2880 = vperm.xlu0 %2879, %v1904
  %v2881 = vpop.permute.xlu0 %2880
  %2883 = vset.pattern.permute.xlu0 2
  %2884 = vperm.xlu0 %2883, %v1905
  %v2885 = vpop.permute.xlu0 %2884
  %2887 = vset.pattern.permute.xlu0 2
  %2888 = vperm.xlu0 %2887, %v1906
  %v2889 = vpop.permute.xlu0 %2888
  %2891 = vset.pattern.permute.xlu0 2
  %2892 = vperm.xlu0 %2891, %v1907
  %v2893 = vpop.permute.xlu0 %2892
  %2895 = vset.pattern.permute.xlu0 2
  %2896 = vperm.xlu0 %2895, %v1908
  %v2897 = vpop.permute.xlu0 %2896
  %2899 = vset.pattern.permute.xlu0 2
  %2900 = vperm.xlu0 %2899, %v1909
  %v2901 = vpop.permute.xlu0 %2900
  %2903 = vset.pattern.permute.xlu0 2
  %2904 = vperm.xlu0 %2903, %v1910
  %v2905 = vpop.permute.xlu0 %2904
  %2907 = vset.pattern.permute.xlu0 2
  %2908 = vperm.xlu0 %2907, %v1911
  %v2909 = vpop.permute.xlu0 %2908
  %2911 = vset.pattern.permute.xlu0 2
  %2912 = vperm.xlu0 %2911, %v1912
  %v2913 = vpop.permute.xlu0 %2912
  %2915 = vset.pattern.permute.xlu0 2
  %2916 = vperm.xlu0 %2915, %v1913
  %v2917 = vpop.permute.xlu0 %2916
  %2919 = vset.pattern.permute.xlu0 2
  %2920 = vperm.xlu0 %2919, %v1914
  %v2921 = vpop.permute.xlu0 %2920
  %2923 = vset.pattern.permute.xlu0 2
  %2924 = vperm.xlu0 %2923, %v1915
  %v2925 = vpop.permute.xlu0 %2924
  %2927 = vset.pattern.permute.xlu0 2
  %2928 = vperm.xlu0 %2927, %v1916
  %v2929 = vpop.permute.xlu0 %2928
  %2931 = vset.pattern.permute.xlu0 2
  %2932 = vperm.xlu0 %2931, %v1917
  %v2933 = vpop.permute.xlu0 %2932
  %2935 = vset.pattern.permute.xlu0 2
  %2936 = vperm.xlu0 %2935, %v1918
  %v2937 = vpop.permute.xlu0 %2936
  %2939 = vset.pattern.permute.xlu0 2
  %2940 = vperm.xlu0 %2939, %v1919
  %v2941 = vpop.permute.xlu0 %2940
  %2943 = vset.pattern.permute.xlu0 2
  %2944 = vperm.xlu0 %2943, %v1920
  %v2945 = vpop.permute.xlu0 %2944
  %2947 = vset.pattern.permute.xlu0 2
  %2948 = vperm.xlu0 %2947, %v1921
  %v2949 = vpop.permute.xlu0 %2948
  %2951 = vset.pattern.permute.xlu0 2
  %2952 = vperm.xlu0 %2951, %v1922
  %v2953 = vpop.permute.xlu0 %2952
  %2955 = vset.pattern.permute.xlu0 2
  %2956 = vperm.xlu0 %2955, %v1923
  %v2957 = vpop.permute.xlu0 %2956
  %2959 = vset.pattern.permute.xlu0 2
  %2960 = vperm.xlu0 %2959, %v1924
  %v2961 = vpop.permute.xlu0 %2960
  %2963 = vset.pattern.permute.xlu0 2
  %2964 = vperm.xlu0 %2963, %v1925
  %v2965 = vpop.permute.xlu0 %2964
  %2967 = vset.pattern.permute.xlu0 2
  %2968 = vperm.xlu0 %2967, %v1926
  %v2969 = vpop.permute.xlu0 %2968
  %2971 = vset.pattern.permute.xlu0 2
  %2972 = vperm.xlu0 %2971, %v1927
  %v2973 = vpop.permute.xlu0 %2972
  %2975 = vset.pattern.permute.xlu0 2
  %2976 = vperm.xlu0 %2975, %v1928
  %v2977 = vpop.permute.xlu0 %2976
  %2979 = vset.pattern.permute.xlu0 2
  %2980 = vperm.xlu0 %2979, %v1929
  %v2981 = vpop.permute.xlu0 %2980
  %2983 = vset.pattern.permute.xlu0 2
  %2984 = vperm.xlu0 %2983, %v1930
  %v2985 = vpop.permute.xlu0 %2984
  %2987 = vset.pattern.permute.xlu0 2
  %2988 = vperm.xlu0 %2987, %v1931
  %v2989 = vpop.permute.xlu0 %2988
  %2991 = vset.pattern.permute.xlu0 2
  %2992 = vperm.xlu0 %2991, %v1932
  %v2993 = vpop.permute.xlu0 %2992
  %2995 = vset.pattern.permute.xlu0 2
  %2996 = vperm.xlu0 %2995, %v1933
  %v2997 = vpop.permute.xlu0 %2996
  %2999 = vset.pattern.permute.xlu0 2
  %3000 = vperm.xlu0 %2999, %v1934
  %v3001 = vpop.permute.xlu0 %3000
  %3003 = vset.pattern.permute.xlu0 2
  %3004 = vperm.xlu0 %3003, %v1935
  %v3005 = vpop.permute.xlu0 %3004
  %3007 = vset.pattern.permute.xlu0 2
  %3008 = vperm.xlu0 %3007, %v1936
  %v3009 = vpop.permute.xlu0 %3008
  %3011 = vset.pattern.permute.xlu0 2
  %3012 = vperm.xlu0 %3011, %v1937
  %v3013 = vpop.permute.xlu0 %3012
  %3015 = vset.pattern.permute.xlu0 2
  %3016 = vperm.xlu0 %3015, %v1938
  %v3017 = vpop.permute.xlu0 %3016
  %3019 = vset.pattern.permute.xlu0 2
  %3020 = vperm.xlu0 %3019, %v1939
  %v3021 = vpop.permute.xlu0 %3020
  %3023 = vset.pattern.permute.xlu0 2
  %3024 = vperm.xlu0 %3023, %v1940
  %v3025 = vpop.permute.xlu0 %3024
  %3027 = vset.pattern.permute.xlu0 2
  %3028 = vperm.xlu0 %3027, %v1941
  %v3029 = vpop.permute.xlu0 %3028
  %3031 = vset.pattern.permute.xlu0 2
  %3032 = vperm.xlu0 %3031, %v1942
  %v3033 = vpop.permute.xlu0 %3032
  %3035 = vset.pattern.permute.xlu0 2
  %3036 = vperm.xlu0 %3035, %v1943
  %v3037 = vpop.permute.xlu0 %3036
  %3039 = vset.pattern.permute.xlu0 2
  %3040 = vperm.xlu0 %3039, %v1944
  %v3041 = vpop.permute.xlu0 %3040
  %3043 = vset.pattern.permute.xlu0 2
  %3044 = vperm.xlu0 %3043, %v1945
  %v3045 = vpop.permute.xlu0 %3044
  %3047 = vset.pattern.permute.xlu0 2
  %3048 = vperm.xlu0 %3047, %v1946
  %v3049 = vpop.permute.xlu0 %3048
  %v3051 = vlaneseq
  %v3052 = vshrl.u32 %v3051, 7
  %v3053 = vsub.s32 2, %v3052
  %v3054 = vrot.slane %v1947, %v3053
  %v3055 = vmul.f32 %v2797, %v3054
  %v3056 = vmul.f32 %v2801, %v3054
  %v3057 = vmul.f32 %v2805, %v3054
  %v3058 = vmul.f32 %v2809, %v3054
  %v3059 = vmul.f32 %v2813, %v3054
  %v3060 = vmul.f32 %v2817, %v3054
  %v3061 = vmul.f32 %v2821, %v3054
  %v3062 = vmul.f32 %v2825, %v3054
  %v3063 = vmul.f32 %v2829, %v3054
  %v3064 = vmul.f32 %v2833, %v3054
  %v3065 = vmul.f32 %v2837, %v3054
  %v3066 = vmul.f32 %v2841, %v3054
  %v3067 = vmul.f32 %v2845, %v3054
  %v3068 = vmul.f32 %v2849, %v3054
  %v3069 = vmul.f32 %v2853, %v3054
  %v3070 = vmul.f32 %v2857, %v3054
  %v3071 = vmul.f32 %v2861, %v3054
  %v3072 = vmul.f32 %v2865, %v3054
  %v3073 = vmul.f32 %v2869, %v3054
  %v3074 = vmul.f32 %v2873, %v3054
  %v3075 = vmul.f32 %v2877, %v3054
  %v3076 = vmul.f32 %v2881, %v3054
  %v3077 = vmul.f32 %v2885, %v3054
  %v3078 = vmul.f32 %v2889, %v3054
  %v3079 = vmul.f32 %v2893, %v3054
  %v3080 = vmul.f32 %v2897, %v3054
  %v3081 = vmul.f32 %v2901, %v3054
  %v3082 = vmul.f32 %v2905, %v3054
  %v3083 = vmul.f32 %v2909, %v3054
  %v3084 = vmul.f32 %v2913, %v3054
  %v3085 = vmul.f32 %v2917, %v3054
  %v3086 = vmul.f32 %v2921, %v3054
  %v3087 = vmul.f32 %v2925, %v3054
  %v3088 = vmul.f32 %v2929, %v3054
  %v3089 = vmul.f32 %v2933, %v3054
  %v3090 = vmul.f32 %v2937, %v3054
  %v3091 = vmul.f32 %v2941, %v3054
  %v3092 = vmul.f32 %v2945, %v3054
  %v3093 = vmul.f32 %v2949, %v3054
  %v3094 = vmul.f32 %v2953, %v3054
  %v3095 = vmul.f32 %v2957, %v3054
  %v3096 = vmul.f32 %v2961, %v3054
  %v3097 = vmul.f32 %v2965, %v3054
  %v3098 = vmul.f32 %v2969, %v3054
  %v3099 = vmul.f32 %v2973, %v3054
  %v3100 = vmul.f32 %v2977, %v3054
  %v3101 = vmul.f32 %v2981, %v3054
  %v3102 = vmul.f32 %v2985, %v3054
  %v3103 = vmul.f32 %v2989, %v3054
  %v3104 = vmul.f32 %v2993, %v3054
  %v3105 = vmul.f32 %v2997, %v3054
  %v3106 = vmul.f32 %v3001, %v3054
  %v3107 = vmul.f32 %v3005, %v3054
  %v3108 = vmul.f32 %v3009, %v3054
  %v3109 = vmul.f32 %v3013, %v3054
  %v3110 = vmul.f32 %v3017, %v3054
  %v3111 = vmul.f32 %v3021, %v3054
  %v3112 = vmul.f32 %v3025, %v3054
  %v3113 = vmul.f32 %v3029, %v3054
  %v3114 = vmul.f32 %v3033, %v3054
  %v3115 = vmul.f32 %v3037, %v3054
  %v3116 = vmul.f32 %v3041, %v3054
  %v3117 = vmul.f32 %v3045, %v3054
  %v3118 = vmul.f32 %v3049, %v3054
  %v3119 = vadd.f32 %v2731, %v3055
  %v3120 = vadd.f32 %v2732, %v3056
  %v3121 = vadd.f32 %v2733, %v3057
  %v3122 = vadd.f32 %v2734, %v3058
  %v3123 = vadd.f32 %v2735, %v3059
  %v3124 = vadd.f32 %v2736, %v3060
  %v3125 = vadd.f32 %v2737, %v3061
  %v3126 = vadd.f32 %v2738, %v3062
  %v3127 = vadd.f32 %v2739, %v3063
  %v3128 = vadd.f32 %v2740, %v3064
  %v3129 = vadd.f32 %v2741, %v3065
  %v3130 = vadd.f32 %v2742, %v3066
  %v3131 = vadd.f32 %v2743, %v3067
  %v3132 = vadd.f32 %v2744, %v3068
  %v3133 = vadd.f32 %v2745, %v3069
  %v3134 = vadd.f32 %v2746, %v3070
  %v3135 = vadd.f32 %v2747, %v3071
  %v3136 = vadd.f32 %v2748, %v3072
  %v3137 = vadd.f32 %v2749, %v3073
  %v3138 = vadd.f32 %v2750, %v3074
  %v3139 = vadd.f32 %v2751, %v3075
  %v3140 = vadd.f32 %v2752, %v3076
  %v3141 = vadd.f32 %v2753, %v3077
  %v3142 = vadd.f32 %v2754, %v3078
  %v3143 = vadd.f32 %v2755, %v3079
  %v3144 = vadd.f32 %v2756, %v3080
  %v3145 = vadd.f32 %v2757, %v3081
  %v3146 = vadd.f32 %v2758, %v3082
  %v3147 = vadd.f32 %v2759, %v3083
  %v3148 = vadd.f32 %v2760, %v3084
  %v3149 = vadd.f32 %v2761, %v3085
  %v3150 = vadd.f32 %v2762, %v3086
  %v3151 = vadd.f32 %v2763, %v3087
  %v3152 = vadd.f32 %v2764, %v3088
  %v3153 = vadd.f32 %v2765, %v3089
  %v3154 = vadd.f32 %v2766, %v3090
  %v3155 = vadd.f32 %v2767, %v3091
  %v3156 = vadd.f32 %v2768, %v3092
  %v3157 = vadd.f32 %v2769, %v3093
  %v3158 = vadd.f32 %v2770, %v3094
  %v3159 = vadd.f32 %v2771, %v3095
  %v3160 = vadd.f32 %v2772, %v3096
  %v3161 = vadd.f32 %v2773, %v3097
  %v3162 = vadd.f32 %v2774, %v3098
  %v3163 = vadd.f32 %v2775, %v3099
  %v3164 = vadd.f32 %v2776, %v3100
  %v3165 = vadd.f32 %v2777, %v3101
  %v3166 = vadd.f32 %v2778, %v3102
  %v3167 = vadd.f32 %v2779, %v3103
  %v3168 = vadd.f32 %v2780, %v3104
  %v3169 = vadd.f32 %v2781, %v3105
  %v3170 = vadd.f32 %v2782, %v3106
  %v3171 = vadd.f32 %v2783, %v3107
  %v3172 = vadd.f32 %v2784, %v3108
  %v3173 = vadd.f32 %v2785, %v3109
  %v3174 = vadd.f32 %v2786, %v3110
  %v3175 = vadd.f32 %v2787, %v3111
  %v3176 = vadd.f32 %v2788, %v3112
  %v3177 = vadd.f32 %v2789, %v3113
  %v3178 = vadd.f32 %v2790, %v3114
  %v3179 = vadd.f32 %v2791, %v3115
  %v3180 = vadd.f32 %v2792, %v3116
  %v3181 = vadd.f32 %v2793, %v3117
  %v3182 = vadd.f32 %v2794, %v3118
  %3183 = vset.pattern.permute.xlu0 3
  %3184 = vperm.xlu0 %3183, %v1883
  %v3185 = vpop.permute.xlu0 %3184
  %3187 = vset.pattern.permute.xlu0 3
  %3188 = vperm.xlu0 %3187, %v1884
  %v3189 = vpop.permute.xlu0 %3188
  %3191 = vset.pattern.permute.xlu0 3
  %3192 = vperm.xlu0 %3191, %v1885
  %v3193 = vpop.permute.xlu0 %3192
  %3195 = vset.pattern.permute.xlu0 3
  %3196 = vperm.xlu0 %3195, %v1886
  %v3197 = vpop.permute.xlu0 %3196
  %3199 = vset.pattern.permute.xlu0 3
  %3200 = vperm.xlu0 %3199, %v1887
  %v3201 = vpop.permute.xlu0 %3200
  %3203 = vset.pattern.permute.xlu0 3
  %3204 = vperm.xlu0 %3203, %v1888
  %v3205 = vpop.permute.xlu0 %3204
  %3207 = vset.pattern.permute.xlu0 3
  %3208 = vperm.xlu0 %3207, %v1889
  %v3209 = vpop.permute.xlu0 %3208
  %3211 = vset.pattern.permute.xlu0 3
  %3212 = vperm.xlu0 %3211, %v1890
  %v3213 = vpop.permute.xlu0 %3212
  %3215 = vset.pattern.permute.xlu0 3
  %3216 = vperm.xlu0 %3215, %v1891
  %v3217 = vpop.permute.xlu0 %3216
  %3219 = vset.pattern.permute.xlu0 3
  %3220 = vperm.xlu0 %3219, %v1892
  %v3221 = vpop.permute.xlu0 %3220
  %3223 = vset.pattern.permute.xlu0 3
  %3224 = vperm.xlu0 %3223, %v1893
  %v3225 = vpop.permute.xlu0 %3224
  %3227 = vset.pattern.permute.xlu0 3
  %3228 = vperm.xlu0 %3227, %v1894
  %v3229 = vpop.permute.xlu0 %3228
  %3231 = vset.pattern.permute.xlu0 3
  %3232 = vperm.xlu0 %3231, %v1895
  %v3233 = vpop.permute.xlu0 %3232
  %3235 = vset.pattern.permute.xlu0 3
  %3236 = vperm.xlu0 %3235, %v1896
  %v3237 = vpop.permute.xlu0 %3236
  %3239 = vset.pattern.permute.xlu0 3
  %3240 = vperm.xlu0 %3239, %v1897
  %v3241 = vpop.permute.xlu0 %3240
  %3243 = vset.pattern.permute.xlu0 3
  %3244 = vperm.xlu0 %3243, %v1898
  %v3245 = vpop.permute.xlu0 %3244
  %3247 = vset.pattern.permute.xlu0 3
  %3248 = vperm.xlu0 %3247, %v1899
  %v3249 = vpop.permute.xlu0 %3248
  %3251 = vset.pattern.permute.xlu0 3
  %3252 = vperm.xlu0 %3251, %v1900
  %v3253 = vpop.permute.xlu0 %3252
  %3255 = vset.pattern.permute.xlu0 3
  %3256 = vperm.xlu0 %3255, %v1901
  %v3257 = vpop.permute.xlu0 %3256
  %3259 = vset.pattern.permute.xlu0 3
  %3260 = vperm.xlu0 %3259, %v1902
  %v3261 = vpop.permute.xlu0 %3260
  %3263 = vset.pattern.permute.xlu0 3
  %3264 = vperm.xlu0 %3263, %v1903
  %v3265 = vpop.permute.xlu0 %3264
  %3267 = vset.pattern.permute.xlu0 3
  %3268 = vperm.xlu0 %3267, %v1904
  %v3269 = vpop.permute.xlu0 %3268
  %3271 = vset.pattern.permute.xlu0 3
  %3272 = vperm.xlu0 %3271, %v1905
  %v3273 = vpop.permute.xlu0 %3272
  %3275 = vset.pattern.permute.xlu0 3
  %3276 = vperm.xlu0 %3275, %v1906
  %v3277 = vpop.permute.xlu0 %3276
  %3279 = vset.pattern.permute.xlu0 3
  %3280 = vperm.xlu0 %3279, %v1907
  %v3281 = vpop.permute.xlu0 %3280
  %3283 = vset.pattern.permute.xlu0 3
  %3284 = vperm.xlu0 %3283, %v1908
  %v3285 = vpop.permute.xlu0 %3284
  %3287 = vset.pattern.permute.xlu0 3
  %3288 = vperm.xlu0 %3287, %v1909
  %v3289 = vpop.permute.xlu0 %3288
  %3291 = vset.pattern.permute.xlu0 3
  %3292 = vperm.xlu0 %3291, %v1910
  %v3293 = vpop.permute.xlu0 %3292
  %3295 = vset.pattern.permute.xlu0 3
  %3296 = vperm.xlu0 %3295, %v1911
  %v3297 = vpop.permute.xlu0 %3296
  %3299 = vset.pattern.permute.xlu0 3
  %3300 = vperm.xlu0 %3299, %v1912
  %v3301 = vpop.permute.xlu0 %3300
  %3303 = vset.pattern.permute.xlu0 3
  %3304 = vperm.xlu0 %3303, %v1913
  %v3305 = vpop.permute.xlu0 %3304
  %3307 = vset.pattern.permute.xlu0 3
  %3308 = vperm.xlu0 %3307, %v1914
  %v3309 = vpop.permute.xlu0 %3308
  %3311 = vset.pattern.permute.xlu0 3
  %3312 = vperm.xlu0 %3311, %v1915
  %v3313 = vpop.permute.xlu0 %3312
  %3315 = vset.pattern.permute.xlu0 3
  %3316 = vperm.xlu0 %3315, %v1916
  %v3317 = vpop.permute.xlu0 %3316
  %3319 = vset.pattern.permute.xlu0 3
  %3320 = vperm.xlu0 %3319, %v1917
  %v3321 = vpop.permute.xlu0 %3320
  %3323 = vset.pattern.permute.xlu0 3
  %3324 = vperm.xlu0 %3323, %v1918
  %v3325 = vpop.permute.xlu0 %3324
  %3327 = vset.pattern.permute.xlu0 3
  %3328 = vperm.xlu0 %3327, %v1919
  %v3329 = vpop.permute.xlu0 %3328
  %3331 = vset.pattern.permute.xlu0 3
  %3332 = vperm.xlu0 %3331, %v1920
  %v3333 = vpop.permute.xlu0 %3332
  %3335 = vset.pattern.permute.xlu0 3
  %3336 = vperm.xlu0 %3335, %v1921
  %v3337 = vpop.permute.xlu0 %3336
  %3339 = vset.pattern.permute.xlu0 3
  %3340 = vperm.xlu0 %3339, %v1922
  %v3341 = vpop.permute.xlu0 %3340
  %3343 = vset.pattern.permute.xlu0 3
  %3344 = vperm.xlu0 %3343, %v1923
  %v3345 = vpop.permute.xlu0 %3344
  %3347 = vset.pattern.permute.xlu0 3
  %3348 = vperm.xlu0 %3347, %v1924
  %v3349 = vpop.permute.xlu0 %3348
  %3351 = vset.pattern.permute.xlu0 3
  %3352 = vperm.xlu0 %3351, %v1925
  %v3353 = vpop.permute.xlu0 %3352
  %3355 = vset.pattern.permute.xlu0 3
  %3356 = vperm.xlu0 %3355, %v1926
  %v3357 = vpop.permute.xlu0 %3356
  %3359 = vset.pattern.permute.xlu0 3
  %3360 = vperm.xlu0 %3359, %v1927
  %v3361 = vpop.permute.xlu0 %3360
  %3363 = vset.pattern.permute.xlu0 3
  %3364 = vperm.xlu0 %3363, %v1928
  %v3365 = vpop.permute.xlu0 %3364
  %3367 = vset.pattern.permute.xlu0 3
  %3368 = vperm.xlu0 %3367, %v1929
  %v3369 = vpop.permute.xlu0 %3368
  %3371 = vset.pattern.permute.xlu0 3
  %3372 = vperm.xlu0 %3371, %v1930
  %v3373 = vpop.permute.xlu0 %3372
  %3375 = vset.pattern.permute.xlu0 3
  %3376 = vperm.xlu0 %3375, %v1931
  %v3377 = vpop.permute.xlu0 %3376
  %3379 = vset.pattern.permute.xlu0 3
  %3380 = vperm.xlu0 %3379, %v1932
  %v3381 = vpop.permute.xlu0 %3380
  %3383 = vset.pattern.permute.xlu0 3
  %3384 = vperm.xlu0 %3383, %v1933
  %v3385 = vpop.permute.xlu0 %3384
  %3387 = vset.pattern.permute.xlu0 3
  %3388 = vperm.xlu0 %3387, %v1934
  %v3389 = vpop.permute.xlu0 %3388
  %3391 = vset.pattern.permute.xlu0 3
  %3392 = vperm.xlu0 %3391, %v1935
  %v3393 = vpop.permute.xlu0 %3392
  %3395 = vset.pattern.permute.xlu0 3
  %3396 = vperm.xlu0 %3395, %v1936
  %v3397 = vpop.permute.xlu0 %3396
  %3399 = vset.pattern.permute.xlu0 3
  %3400 = vperm.xlu0 %3399, %v1937
  %v3401 = vpop.permute.xlu0 %3400
  %3403 = vset.pattern.permute.xlu0 3
  %3404 = vperm.xlu0 %3403, %v1938
  %v3405 = vpop.permute.xlu0 %3404
  %3407 = vset.pattern.permute.xlu0 3
  %3408 = vperm.xlu0 %3407, %v1939
  %v3409 = vpop.permute.xlu0 %3408
  %3411 = vset.pattern.permute.xlu0 3
  %3412 = vperm.xlu0 %3411, %v1940
  %v3413 = vpop.permute.xlu0 %3412
  %3415 = vset.pattern.permute.xlu0 3
  %3416 = vperm.xlu0 %3415, %v1941
  %v3417 = vpop.permute.xlu0 %3416
  %3419 = vset.pattern.permute.xlu0 3
  %3420 = vperm.xlu0 %3419, %v1942
  %v3421 = vpop.permute.xlu0 %3420
  %3423 = vset.pattern.permute.xlu0 3
  %3424 = vperm.xlu0 %3423, %v1943
  %v3425 = vpop.permute.xlu0 %3424
  %3427 = vset.pattern.permute.xlu0 3
  %3428 = vperm.xlu0 %3427, %v1944
  %v3429 = vpop.permute.xlu0 %3428
  %3431 = vset.pattern.permute.xlu0 3
  %3432 = vperm.xlu0 %3431, %v1945
  %v3433 = vpop.permute.xlu0 %3432
  %3435 = vset.pattern.permute.xlu0 3
  %3436 = vperm.xlu0 %3435, %v1946
  %v3437 = vpop.permute.xlu0 %3436
  %v3439 = vlaneseq
  %v3440 = vshrl.u32 %v3439, 7
  %v3441 = vsub.s32 3, %v3440
  %v3442 = vrot.slane %v1947, %v3441
  %v3443 = vmul.f32 %v3185, %v3442
  %v3444 = vmul.f32 %v3189, %v3442
  %v3445 = vmul.f32 %v3193, %v3442
  %v3446 = vmul.f32 %v3197, %v3442
  %v3447 = vmul.f32 %v3201, %v3442
  %v3448 = vmul.f32 %v3205, %v3442
  %v3449 = vmul.f32 %v3209, %v3442
  %v3450 = vmul.f32 %v3213, %v3442
  %v3451 = vmul.f32 %v3217, %v3442
  %v3452 = vmul.f32 %v3221, %v3442
  %v3453 = vmul.f32 %v3225, %v3442
  %v3454 = vmul.f32 %v3229, %v3442
  %v3455 = vmul.f32 %v3233, %v3442
  %v3456 = vmul.f32 %v3237, %v3442
  %v3457 = vmul.f32 %v3241, %v3442
  %v3458 = vmul.f32 %v3245, %v3442
  %v3459 = vmul.f32 %v3249, %v3442
  %v3460 = vmul.f32 %v3253, %v3442
  %v3461 = vmul.f32 %v3257, %v3442
  %v3462 = vmul.f32 %v3261, %v3442
  %v3463 = vmul.f32 %v3265, %v3442
  %v3464 = vmul.f32 %v3269, %v3442
  %v3465 = vmul.f32 %v3273, %v3442
  %v3466 = vmul.f32 %v3277, %v3442
  %v3467 = vmul.f32 %v3281, %v3442
  %v3468 = vmul.f32 %v3285, %v3442
  %v3469 = vmul.f32 %v3289, %v3442
  %v3470 = vmul.f32 %v3293, %v3442
  %v3471 = vmul.f32 %v3297, %v3442
  %v3472 = vmul.f32 %v3301, %v3442
  %v3473 = vmul.f32 %v3305, %v3442
  %v3474 = vmul.f32 %v3309, %v3442
  %v3475 = vmul.f32 %v3313, %v3442
  %v3476 = vmul.f32 %v3317, %v3442
  %v3477 = vmul.f32 %v3321, %v3442
  %v3478 = vmul.f32 %v3325, %v3442
  %v3479 = vmul.f32 %v3329, %v3442
  %v3480 = vmul.f32 %v3333, %v3442
  %v3481 = vmul.f32 %v3337, %v3442
  %v3482 = vmul.f32 %v3341, %v3442
  %v3483 = vmul.f32 %v3345, %v3442
  %v3484 = vmul.f32 %v3349, %v3442
  %v3485 = vmul.f32 %v3353, %v3442
  %v3486 = vmul.f32 %v3357, %v3442
  %v3487 = vmul.f32 %v3361, %v3442
  %v3488 = vmul.f32 %v3365, %v3442
  %v3489 = vmul.f32 %v3369, %v3442
  %v3490 = vmul.f32 %v3373, %v3442
  %v3491 = vmul.f32 %v3377, %v3442
  %v3492 = vmul.f32 %v3381, %v3442
  %v3493 = vmul.f32 %v3385, %v3442
  %v3494 = vmul.f32 %v3389, %v3442
  %v3495 = vmul.f32 %v3393, %v3442
  %v3496 = vmul.f32 %v3397, %v3442
  %v3497 = vmul.f32 %v3401, %v3442
  %v3498 = vmul.f32 %v3405, %v3442
  %v3499 = vmul.f32 %v3409, %v3442
  %v3500 = vmul.f32 %v3413, %v3442
  %v3501 = vmul.f32 %v3417, %v3442
  %v3502 = vmul.f32 %v3421, %v3442
  %v3503 = vmul.f32 %v3425, %v3442
  %v3504 = vmul.f32 %v3429, %v3442
  %v3505 = vmul.f32 %v3433, %v3442
  %v3506 = vmul.f32 %v3437, %v3442
  %v3507 = vadd.f32 %v3119, %v3443
  %v3508 = vadd.f32 %v3120, %v3444
  %v3509 = vadd.f32 %v3121, %v3445
  %v3510 = vadd.f32 %v3122, %v3446
  %v3511 = vadd.f32 %v3123, %v3447
  %v3512 = vadd.f32 %v3124, %v3448
  %v3513 = vadd.f32 %v3125, %v3449
  %v3514 = vadd.f32 %v3126, %v3450
  %v3515 = vadd.f32 %v3127, %v3451
  %v3516 = vadd.f32 %v3128, %v3452
  %v3517 = vadd.f32 %v3129, %v3453
  %v3518 = vadd.f32 %v3130, %v3454
  %v3519 = vadd.f32 %v3131, %v3455
  %v3520 = vadd.f32 %v3132, %v3456
  %v3521 = vadd.f32 %v3133, %v3457
  %v3522 = vadd.f32 %v3134, %v3458
  %v3523 = vadd.f32 %v3135, %v3459
  %v3524 = vadd.f32 %v3136, %v3460
  %v3525 = vadd.f32 %v3137, %v3461
  %v3526 = vadd.f32 %v3138, %v3462
  %v3527 = vadd.f32 %v3139, %v3463
  %v3528 = vadd.f32 %v3140, %v3464
  %v3529 = vadd.f32 %v3141, %v3465
  %v3530 = vadd.f32 %v3142, %v3466
  %v3531 = vadd.f32 %v3143, %v3467
  %v3532 = vadd.f32 %v3144, %v3468
  %v3533 = vadd.f32 %v3145, %v3469
  %v3534 = vadd.f32 %v3146, %v3470
  %v3535 = vadd.f32 %v3147, %v3471
  %v3536 = vadd.f32 %v3148, %v3472
  %v3537 = vadd.f32 %v3149, %v3473
  %v3538 = vadd.f32 %v3150, %v3474
  %v3539 = vadd.f32 %v3151, %v3475
  %v3540 = vadd.f32 %v3152, %v3476
  %v3541 = vadd.f32 %v3153, %v3477
  %v3542 = vadd.f32 %v3154, %v3478
  %v3543 = vadd.f32 %v3155, %v3479
  %v3544 = vadd.f32 %v3156, %v3480
  %v3545 = vadd.f32 %v3157, %v3481
  %v3546 = vadd.f32 %v3158, %v3482
  %v3547 = vadd.f32 %v3159, %v3483
  %v3548 = vadd.f32 %v3160, %v3484
  %v3549 = vadd.f32 %v3161, %v3485
  %v3550 = vadd.f32 %v3162, %v3486
  %v3551 = vadd.f32 %v3163, %v3487
  %v3552 = vadd.f32 %v3164, %v3488
  %v3553 = vadd.f32 %v3165, %v3489
  %v3554 = vadd.f32 %v3166, %v3490
  %v3555 = vadd.f32 %v3167, %v3491
  %v3556 = vadd.f32 %v3168, %v3492
  %v3557 = vadd.f32 %v3169, %v3493
  %v3558 = vadd.f32 %v3170, %v3494
  %v3559 = vadd.f32 %v3171, %v3495
  %v3560 = vadd.f32 %v3172, %v3496
  %v3561 = vadd.f32 %v3173, %v3497
  %v3562 = vadd.f32 %v3174, %v3498
  %v3563 = vadd.f32 %v3175, %v3499
  %v3564 = vadd.f32 %v3176, %v3500
  %v3565 = vadd.f32 %v3177, %v3501
  %v3566 = vadd.f32 %v3178, %v3502
  %v3567 = vadd.f32 %v3179, %v3503
  %v3568 = vadd.f32 %v3180, %v3504
  %v3569 = vadd.f32 %v3181, %v3505
  %v3570 = vadd.f32 %v3182, %v3506
  %v3571 = vmax.f32 %v3507, 0.0
  %v3572 = vmax.f32 %v3508, 0.0
  %v3573 = vmax.f32 %v3509, 0.0
  %v3574 = vmax.f32 %v3510, 0.0
  %v3575 = vmax.f32 %v3511, 0.0
  %v3576 = vmax.f32 %v3512, 0.0
  %v3577 = vmax.f32 %v3513, 0.0
  %v3578 = vmax.f32 %v3514, 0.0
  %v3579 = vmax.f32 %v3515, 0.0
  %v3580 = vmax.f32 %v3516, 0.0
  %v3581 = vmax.f32 %v3517, 0.0
  %v3582 = vmax.f32 %v3518, 0.0
  %v3583 = vmax.f32 %v3519, 0.0
  %v3584 = vmax.f32 %v3520, 0.0
  %v3585 = vmax.f32 %v3521, 0.0
  %v3586 = vmax.f32 %v3522, 0.0
  %v3587 = vmax.f32 %v3523, 0.0
  %v3588 = vmax.f32 %v3524, 0.0
  %v3589 = vmax.f32 %v3525, 0.0
  %v3590 = vmax.f32 %v3526, 0.0
  %v3591 = vmax.f32 %v3527, 0.0
  %v3592 = vmax.f32 %v3528, 0.0
  %v3593 = vmax.f32 %v3529, 0.0
  %v3594 = vmax.f32 %v3530, 0.0
  %v3595 = vmax.f32 %v3531, 0.0
  %v3596 = vmax.f32 %v3532, 0.0
  %v3597 = vmax.f32 %v3533, 0.0
  %v3598 = vmax.f32 %v3534, 0.0
  %v3599 = vmax.f32 %v3535, 0.0
  %v3600 = vmax.f32 %v3536, 0.0
  %v3601 = vmax.f32 %v3537, 0.0
  %v3602 = vmax.f32 %v3538, 0.0
  %v3603 = vmax.f32 %v3539, 0.0
  %v3604 = vmax.f32 %v3540, 0.0
  %v3605 = vmax.f32 %v3541, 0.0
  %v3606 = vmax.f32 %v3542, 0.0
  %v3607 = vmax.f32 %v3543, 0.0
  %v3608 = vmax.f32 %v3544, 0.0
  %v3609 = vmax.f32 %v3545, 0.0
  %v3610 = vmax.f32 %v3546, 0.0
  %v3611 = vmax.f32 %v3547, 0.0
  %v3612 = vmax.f32 %v3548, 0.0
  %v3613 = vmax.f32 %v3549, 0.0
  %v3614 = vmax.f32 %v3550, 0.0
  %v3615 = vmax.f32 %v3551, 0.0
  %v3616 = vmax.f32 %v3552, 0.0
  %v3617 = vmax.f32 %v3553, 0.0
  %v3618 = vmax.f32 %v3554, 0.0
  %v3619 = vmax.f32 %v3555, 0.0
  %v3620 = vmax.f32 %v3556, 0.0
  %v3621 = vmax.f32 %v3557, 0.0
  %v3622 = vmax.f32 %v3558, 0.0
  %v3623 = vmax.f32 %v3559, 0.0
  %v3624 = vmax.f32 %v3560, 0.0
  %v3625 = vmax.f32 %v3561, 0.0
  %v3626 = vmax.f32 %v3562, 0.0
  %v3627 = vmax.f32 %v3563, 0.0
  %v3628 = vmax.f32 %v3564, 0.0
  %v3629 = vmax.f32 %v3565, 0.0
  %v3630 = vmax.f32 %v3566, 0.0
  %v3631 = vmax.f32 %v3567, 0.0
  %v3632 = vmax.f32 %v3568, 0.0
  %v3633 = vmax.f32 %v3569, 0.0
  %v3634 = vmax.f32 %v3570, 0.0
  %v3635 = vld [vmem:[%s10] sm:$0xff]
  %v3636 = vld [vmem:[%s11] sm:$0x1]
  %v3638 = vlaneseq
  %v3639 = vshrl.u32 %v3638, 7
  %v3640 = vsub.s32 0, %v3639
  %v3641 = vrot.slane %v3636, %v3640
  %v3644 = vsel %vm943, %v3571, 0
  %v3647 = vsel %vm943, %v3572, 0
  %v3650 = vsel %vm943, %v3573, 0
  %v3653 = vsel %vm943, %v3574, 0
  %v3656 = vsel %vm943, %v3575, 0
  %v3659 = vsel %vm943, %v3576, 0
  %v3662 = vsel %vm943, %v3577, 0
  %v3665 = vsel %vm943, %v3578, 0
  %v3668 = vsel %vm943, %v3579, 0
  %v3671 = vsel %vm943, %v3580, 0
  %v3674 = vsel %vm943, %v3581, 0
  %v3677 = vsel %vm943, %v3582, 0
  %v3680 = vsel %vm943, %v3583, 0
  %v3683 = vsel %vm943, %v3584, 0
  %v3686 = vsel %vm943, %v3585, 0
  %v3689 = vsel %vm943, %v3586, 0
  %v3692 = vsel %vm943, %v3587, 0
  %v3695 = vsel %vm943, %v3588, 0
  %v3698 = vsel %vm943, %v3589, 0
  %v3701 = vsel %vm943, %v3590, 0
  %v3704 = vsel %vm943, %v3591, 0
  %v3707 = vsel %vm943, %v3592, 0
  %v3710 = vsel %vm943, %v3593, 0
  %v3713 = vsel %vm943, %v3594, 0
  %v3716 = vsel %vm943, %v3595, 0
  %v3719 = vsel %vm943, %v3596, 0
  %v3722 = vsel %vm943, %v3597, 0
  %v3725 = vsel %vm943, %v3598, 0
  %v3728 = vsel %vm943, %v3599, 0
  %v3731 = vsel %vm943, %v3600, 0
  %v3734 = vsel %vm943, %v3601, 0
  %v3737 = vsel %vm943, %v3602, 0
  %v3740 = vsel %vm943, %v3603, 0
  %v3743 = vsel %vm943, %v3604, 0
  %v3746 = vsel %vm943, %v3605, 0
  %v3749 = vsel %vm943, %v3606, 0
  %v3752 = vsel %vm943, %v3607, 0
  %v3755 = vsel %vm943, %v3608, 0
  %v3758 = vsel %vm943, %v3609, 0
  %v3761 = vsel %vm943, %v3610, 0
  %v3764 = vsel %vm943, %v3611, 0
  %v3767 = vsel %vm943, %v3612, 0
  %v3770 = vsel %vm943, %v3613, 0
  %v3773 = vsel %vm943, %v3614, 0
  %v3776 = vsel %vm943, %v3615, 0
  %v3779 = vsel %vm943, %v3616, 0
  %v3782 = vsel %vm943, %v3617, 0
  %v3785 = vsel %vm943, %v3618, 0
  %v3788 = vsel %vm943, %v3619, 0
  %v3791 = vsel %vm943, %v3620, 0
  %v3794 = vsel %vm943, %v3621, 0
  %v3797 = vsel %vm943, %v3622, 0
  %v3800 = vsel %vm943, %v3623, 0
  %v3803 = vsel %vm943, %v3624, 0
  %v3806 = vsel %vm943, %v3625, 0
  %v3809 = vsel %vm943, %v3626, 0
  %v3812 = vsel %vm943, %v3627, 0
  %v3815 = vsel %vm943, %v3628, 0
  %v3818 = vsel %vm943, %v3629, 0
  %v3821 = vsel %vm943, %v3630, 0
  %v3824 = vsel %vm943, %v3631, 0
  %v3827 = vsel %vm943, %v3632, 0
  %v3830 = vsel %vm943, %v3633, 0
  %v3833 = vsel %vm943, %v3634, 0
  %3835 = vmatprep.subr.mxu0 0.0
  %3836 = vmatpush1.msra.mxu0 %v3635
  %3837 = vmatprep.subr.mxu0 0.0
  %3838 = vmatpush1.msra.mxu0 0.0
  %3839 = vmatprep.subr.mxu0 0.0
  %3840 = vmatpush1.msra.mxu0 0.0
  %3841 = vmatprep.subr.mxu0 0.0
  %3842 = vmatpush1.msra.mxu0 0.0
  %3843 = vmatprep.subr.mxu0 0.0
  %3844 = vmatpush1.msra.mxu0 0.0
  %3845 = vmatprep.subr.mxu0 0.0
  %3846 = vmatpush1.msra.mxu0 0.0
  %3847 = vmatprep.subr.mxu0 0.0
  %3848 = vmatpush1.msra.mxu0 0.0
  %3849 = vmatprep.subr.mxu0 0.0
  %3850 = vmatpush1.msra.mxu0 0.0
  %3851 = vmatprep.subr.mxu0 0.0
  %3852 = vmatpush1.msra.mxu0 0.0
  %3853 = vmatprep.subr.mxu0 0.0
  %3854 = vmatpush1.msra.mxu0 0.0
  %3855 = vmatprep.subr.mxu0 0.0
  %3856 = vmatpush1.msra.mxu0 0.0
  %3857 = vmatprep.subr.mxu0 0.0
  %3858 = vmatpush1.msra.mxu0 0.0
  %3859 = vmatprep.subr.mxu0 0.0
  %3860 = vmatpush1.msra.mxu0 0.0
  %3861 = vmatprep.subr.mxu0 0.0
  %3862 = vmatpush1.msra.mxu0 0.0
  %3863 = vmatprep.subr.mxu0 0.0
  %3864 = vmatpush1.msra.mxu0 0.0
  %3865 = vmatprep.subr.mxu0 0.0
  %3866 = vmatpush1.msra.mxu0 0.0
  %3867 = vmatprep.subr.mxu0 0.0
  %3868 = vmatpush1.msra.mxu0 0.0
  %3869 = vmatprep.subr.mxu0 0.0
  %3870 = vmatpush1.msra.mxu0 0.0
  %3871 = vmatprep.subr.mxu0 0.0
  %3872 = vmatpush1.msra.mxu0 0.0
  %3873 = vmatprep.subr.mxu0 0.0
  %3874 = vmatpush1.msra.mxu0 0.0
  %3875 = vmatprep.subr.mxu0 0.0
  %3876 = vmatpush1.msra.mxu0 0.0
  %3877 = vmatprep.subr.mxu0 0.0
  %3878 = vmatpush1.msra.mxu0 0.0
  %3879 = vmatprep.subr.mxu0 0.0
  %3880 = vmatpush1.msra.mxu0 0.0
  %3881 = vmatprep.subr.mxu0 0.0
  %3882 = vmatpush1.msra.mxu0 0.0
  %3883 = vmatprep.subr.mxu0 0.0
  %3884 = vmatpush1.msra.mxu0 0.0
  %3885 = vmatprep.subr.mxu0 0.0
  %3886 = vmatpush1.msra.mxu0 0.0
  %3887 = vmatprep.subr.mxu0 0.0
  %3888 = vmatpush1.msra.mxu0 0.0
  %3889 = vmatprep.subr.mxu0 0.0
  %3890 = vmatpush1.msra.mxu0 0.0
  %3891 = vmatprep.subr.mxu0 0.0
  %3892 = vmatpush1.msra.mxu0 0.0
  %3893 = vmatprep.subr.mxu0 0.0
  %3894 = vmatpush1.msra.mxu0 0.0
  %3895 = vmatprep.subr.mxu0 0.0
  %3896 = vmatpush1.msra.mxu0 0.0
  %3897 = vmatprep.subr.mxu0 0.0
  %3898 = vmatpush1.msra.mxu0 0.0
  %3899 = vmatprep.mubr.f32.mxu0 0.0
  %3900 = vmatmul.mubr.f32.gmra.mrb[0].mxu0 %v3644
  %v3901 = vpop.f32.mrb[0].mxu0
  %v3902 = vadd.f32 %v3641, %v3901
  %v3903 = vpop.f32.mrb[0].mxu0
  %3904 = vmatprep.mubr.f32.mxu0 0.0
  %3905 = vmatmul.mubr.f32.gmra.mrb[0].mxu0 %v3647
  %v3906 = vpop.f32.mrb[0].mxu0
  %v3907 = vadd.f32 %v3641, %v3906
  %v3908 = vpop.f32.mrb[0].mxu0
  %3909 = vmatprep.mubr.f32.mxu0 0.0
  %3910 = vmatmul.mubr.f32.gmra.mrb[0].mxu0 %v3650
  %v3911 = vpop.f32.mrb[0].mxu0
  %v3912 = vadd.f32 %v3641, %v3911
  %v3913 = vpop.f32.mrb[0].mxu0
  %3914 = vmatprep.mubr.f32.mxu0 0.0
  %3915 = vmatmul.mubr.f32.gmra.mrb[0].mxu0 %v3653
  %v3916 = vpop.f32.mrb[0].mxu0
  %v3917 = vadd.f32 %v3641, %v3916
  %v3918 = vpop.f32.mrb[0].mxu0
  %3919 = vmatprep.mubr.f32.mxu0 0.0
  %3920 = vmatmul.mubr.f32.gmra.mrb[0].mxu0 %v3656
  %v3921 = vpop.f32.mrb[0].mxu0
  %v3922 = vadd.f32 %v3641, %v3921
  %v3923 = vpop.f32.mrb[0].mxu0
  %3924 = vmatprep.mubr.f32.mxu0 0.0
  %3925 = vmatmul.mubr.f32.gmra.mrb[0].mxu0 %v3659
  %v3926 = vpop.f32.mrb[0].mxu0
  %v3927 = vadd.f32 %v3641, %v3926
  %v3928 = vpop.f32.mrb[0].mxu0
  %3929 = vmatprep.mubr.f32.mxu0 0.0
  %3930 = vmatmul.mubr.f32.gmra.mrb[0].mxu0 %v3662
  %v3931 = vpop.f32.mrb[0].mxu0
  %v3932 = vadd.f32 %v3641, %v3931
  %v3933 = vpop.f32.mrb[0].mxu0
  %3934 = vmatprep.mubr.f32.mxu0 0.0
  %3935 = vmatmul.mubr.f32.gmra.mrb[0].mxu0 %v3665
  %v3936 = vpop.f32.mrb[0].mxu0
  %v3937 = vadd.f32 %v3641, %v3936
  %v3938 = vpop.f32.mrb[0].mxu0
  %3939 = vmatprep.mubr.f32.mxu0 0.0
  %3940 = vmatmul.mubr.f32.gmra.mrb[0].mxu0 %v3668
  %v3941 = vpop.f32.mrb[0].mxu0
  %v3942 = vadd.f32 %v3641, %v3941
  %v3943 = vpop.f32.mrb[0].mxu0
  %3944 = vmatprep.mubr.f32.mxu0 0.0
  %3945 = vmatmul.mubr.f32.gmra.mrb[0].mxu0 %v3671
  %v3946 = vpop.f32.mrb[0].mxu0
  %v3947 = vadd.f32 %v3641, %v3946
  %v3948 = vpop.f32.mrb[0].mxu0
  %3949 = vmatprep.mubr.f32.mxu0 0.0
  %3950 = vmatmul.mubr.f32.gmra.mrb[0].mxu0 %v3674
  %v3951 = vpop.f32.mrb[0].mxu0
  %v3952 = vadd.f32 %v3641, %v3951
  %v3953 = vpop.f32.mrb[0].mxu0
  %3954 = vmatprep.mubr.f32.mxu0 0.0
  %3955 = vmatmul.mubr.f32.gmra.mrb[0].mxu0 %v3677
  %v3956 = vpop.f32.mrb[0].mxu0
  %v3957 = vadd.f32 %v3641, %v3956
  %v3958 = vpop.f32.mrb[0].mxu0
  %3959 = vmatprep.mubr.f32.mxu0 0.0
  %3960 = vmatmul.mubr.f32.gmra.mrb[0].mxu0 %v3680
  %v3961 = vpop.f32.mrb[0].mxu0
  %v3962 = vadd.f32 %v3641, %v3961
  %v3963 = vpop.f32.mrb[0].mxu0
  %3964 = vmatprep.mubr.f32.mxu0 0.0
  %3965 = vmatmul.mubr.f32.gmra.mrb[0].mxu0 %v3683
  %v3966 = vpop.f32.mrb[0].mxu0
  %v3967 = vadd.f32 %v3641, %v3966
  %v3968 = vpop.f32.mrb[0].mxu0
  %3969 = vmatprep.mubr.f32.mxu0 0.0
  %3970 = vmatmul.mubr.f32.gmra.mrb[0].mxu0 %v3686
  %v3971 = vpop.f32.mrb[0].mxu0
  %v3972 = vadd.f32 %v3641, %v3971
  %v3973 = vpop.f32.mrb[0].mxu0
  %3974 = vmatprep.mubr.f32.mxu0 0.0
  %3975 = vmatmul.mubr.f32.gmra.mrb[0].mxu0 %v3689
  %v3976 = vpop.f32.mrb[0].mxu0
  %v3977 = vadd.f32 %v3641, %v3976
  %v3978 = vpop.f32.mrb[0].mxu0
  %3979 = vmatprep.mubr.f32.mxu0 0.0
  %3980 = vmatmul.mubr.f32.gmra.mrb[0].mxu0 %v3692
  %v3981 = vpop.f32.mrb[0].mxu0
  %v3982 = vadd.f32 %v3641, %v3981
  %v3983 = vpop.f32.mrb[0].mxu0
  %3984 = vmatprep.mubr.f32.mxu0 0.0
  %3985 = vmatmul.mubr.f32.gmra.mrb[0].mxu0 %v3695
  %v3986 = vpop.f32.mrb[0].mxu0
  %v3987 = vadd.f32 %v3641, %v3986
  %v3988 = vpop.f32.mrb[0].mxu0
  %3989 = vmatprep.mubr.f32.mxu0 0.0
  %3990 = vmatmul.mubr.f32.gmra.mrb[0].mxu0 %v3698
  %v3991 = vpop.f32.mrb[0].mxu0
  %v3992 = vadd.f32 %v3641, %v3991
  %v3993 = vpop.f32.mrb[0].mxu0
  %3994 = vmatprep.mubr.f32.mxu0 0.0
  %3995 = vmatmul.mubr.f32.gmra.mrb[0].mxu0 %v3701
  %v3996 = vpop.f32.mrb[0].mxu0
  %v3997 = vadd.f32 %v3641, %v3996
  %v3998 = vpop.f32.mrb[0].mxu0
  %3999 = vmatprep.mubr.f32.mxu0 0.0
  %4000 = vmatmul.mubr.f32.gmra.mrb[0].mxu0 %v3704
  %v4001 = vpop.f32.mrb[0].mxu0
  %v4002 = vadd.f32 %v3641, %v4001
  %v4003 = vpop.f32.mrb[0].mxu0
  %4004 = vmatprep.mubr.f32.mxu0 0.0
  %4005 = vmatmul.mubr.f32.gmra.mrb[0].mxu0 %v3707
  %v4006 = vpop.f32.mrb[0].mxu0
  %v4007 = vadd.f32 %v3641, %v4006
  %v4008 = vpop.f32.mrb[0].mxu0
  %4009 = vmatprep.mubr.f32.mxu0 0.0
  %4010 = vmatmul.mubr.f32.gmra.mrb[0].mxu0 %v3710
  %v4011 = vpop.f32.mrb[0].mxu0
  %v4012 = vadd.f32 %v3641, %v4011
  %v4013 = vpop.f32.mrb[0].mxu0
  %4014 = vmatprep.mubr.f32.mxu0 0.0
  %4015 = vmatmul.mubr.f32.gmra.mrb[0].mxu0 %v3713
  %v4016 = vpop.f32.mrb[0].mxu0
  %v4017 = vadd.f32 %v3641, %v4016
  %v4018 = vpop.f32.mrb[0].mxu0
  %4019 = vmatprep.mubr.f32.mxu0 0.0
  %4020 = vmatmul.mubr.f32.gmra.mrb[0].mxu0 %v3716
  %v4021 = vpop.f32.mrb[0].mxu0
  %v4022 = vadd.f32 %v3641, %v4021
  %v4023 = vpop.f32.mrb[0].mxu0
  %4024 = vmatprep.mubr.f32.mxu0 0.0
  %4025 = vmatmul.mubr.f32.gmra.mrb[0].mxu0 %v3719
  %v4026 = vpop.f32.mrb[0].mxu0
  %v4027 = vadd.f32 %v3641, %v4026
  %v4028 = vpop.f32.mrb[0].mxu0
  %4029 = vmatprep.mubr.f32.mxu0 0.0
  %4030 = vmatmul.mubr.f32.gmra.mrb[0].mxu0 %v3722
  %v4031 = vpop.f32.mrb[0].mxu0
  %v4032 = vadd.f32 %v3641, %v4031
  %v4033 = vpop.f32.mrb[0].mxu0
  %4034 = vmatprep.mubr.f32.mxu0 0.0
  %4035 = vmatmul.mubr.f32.gmra.mrb[0].mxu0 %v3725
  %v4036 = vpop.f32.mrb[0].mxu0
  %v4037 = vadd.f32 %v3641, %v4036
  %v4038 = vpop.f32.mrb[0].mxu0
  %4039 = vmatprep.mubr.f32.mxu0 0.0
  %4040 = vmatmul.mubr.f32.gmra.mrb[0].mxu0 %v3728
  %v4041 = vpop.f32.mrb[0].mxu0
  %v4042 = vadd.f32 %v3641, %v4041
  %v4043 = vpop.f32.mrb[0].mxu0
  %4044 = vmatprep.mubr.f32.mxu0 0.0
  %4045 = vmatmul.mubr.f32.gmra.mrb[0].mxu0 %v3731
  %v4046 = vpop.f32.mrb[0].mxu0
  %v4047 = vadd.f32 %v3641, %v4046
  %v4048 = vpop.f32.mrb[0].mxu0
  %4049 = vmatprep.mubr.f32.mxu0 0.0
  %4050 = vmatmul.mubr.f32.gmra.mrb[0].mxu0 %v3734
  %v4051 = vpop.f32.mrb[0].mxu0
  %v4052 = vadd.f32 %v3641, %v4051
  %v4053 = vpop.f32.mrb[0].mxu0
  %4054 = vmatprep.mubr.f32.mxu0 0.0
  %4055 = vmatmul.mubr.f32.gmra.mrb[0].mxu0 %v3737
  %v4056 = vpop.f32.mrb[0].mxu0
  %v4057 = vadd.f32 %v3641, %v4056
  %v4058 = vpop.f32.mrb[0].mxu0
  %4059 = vmatprep.mubr.f32.mxu0 0.0
  %4060 = vmatmul.mubr.f32.gmra.mrb[0].mxu0 %v3740
  %v4061 = vpop.f32.mrb[0].mxu0
  %v4062 = vadd.f32 %v3641, %v4061
  %v4063 = vpop.f32.mrb[0].mxu0
  %4064 = vmatprep.mubr.f32.mxu0 0.0
  %4065 = vmatmul.mubr.f32.gmra.mrb[0].mxu0 %v3743
  %v4066 = vpop.f32.mrb[0].mxu0
  %v4067 = vadd.f32 %v3641, %v4066
  %v4068 = vpop.f32.mrb[0].mxu0
  %4069 = vmatprep.mubr.f32.mxu0 0.0
  %4070 = vmatmul.mubr.f32.gmra.mrb[0].mxu0 %v3746
  %v4071 = vpop.f32.mrb[0].mxu0
  %v4072 = vadd.f32 %v3641, %v4071
  %v4073 = vpop.f32.mrb[0].mxu0
  %4074 = vmatprep.mubr.f32.mxu0 0.0
  %4075 = vmatmul.mubr.f32.gmra.mrb[0].mxu0 %v3749
  %v4076 = vpop.f32.mrb[0].mxu0
  %v4077 = vadd.f32 %v3641, %v4076
  %v4078 = vpop.f32.mrb[0].mxu0
  %4079 = vmatprep.mubr.f32.mxu0 0.0
  %4080 = vmatmul.mubr.f32.gmra.mrb[0].mxu0 %v3752
  %v4081 = vpop.f32.mrb[0].mxu0
  %v4082 = vadd.f32 %v3641, %v4081
  %v4083 = vpop.f32.mrb[0].mxu0
  %4084 = vmatprep.mubr.f32.mxu0 0.0
  %4085 = vmatmul.mubr.f32.gmra.mrb[0].mxu0 %v3755
  %v4086 = vpop.f32.mrb[0].mxu0
  %v4087 = vadd.f32 %v3641, %v4086
  %v4088 = vpop.f32.mrb[0].mxu0
  %4089 = vmatprep.mubr.f32.mxu0 0.0
  %4090 = vmatmul.mubr.f32.gmra.mrb[0].mxu0 %v3758
  %v4091 = vpop.f32.mrb[0].mxu0
  %v4092 = vadd.f32 %v3641, %v4091
  %v4093 = vpop.f32.mrb[0].mxu0
  %4094 = vmatprep.mubr.f32.mxu0 0.0
  %4095 = vmatmul.mubr.f32.gmra.mrb[0].mxu0 %v3761
  %v4096 = vpop.f32.mrb[0].mxu0
  %v4097 = vadd.f32 %v3641, %v4096
  %v4098 = vpop.f32.mrb[0].mxu0
  %4099 = vmatprep.mubr.f32.mxu0 0.0
  %4100 = vmatmul.mubr.f32.gmra.mrb[0].mxu0 %v3764
  %v4101 = vpop.f32.mrb[0].mxu0
  %v4102 = vadd.f32 %v3641, %v4101
  %v4103 = vpop.f32.mrb[0].mxu0
  %4104 = vmatprep.mubr.f32.mxu0 0.0
  %4105 = vmatmul.mubr.f32.gmra.mrb[0].mxu0 %v3767
  %v4106 = vpop.f32.mrb[0].mxu0
  %v4107 = vadd.f32 %v3641, %v4106
  %v4108 = vpop.f32.mrb[0].mxu0
  %4109 = vmatprep.mubr.f32.mxu0 0.0
  %4110 = vmatmul.mubr.f32.gmra.mrb[0].mxu0 %v3770
  %v4111 = vpop.f32.mrb[0].mxu0
  %v4112 = vadd.f32 %v3641, %v4111
  %v4113 = vpop.f32.mrb[0].mxu0
  %4114 = vmatprep.mubr.f32.mxu0 0.0
  %4115 = vmatmul.mubr.f32.gmra.mrb[0].mxu0 %v3773
  %v4116 = vpop.f32.mrb[0].mxu0
  %v4117 = vadd.f32 %v3641, %v4116
  %v4118 = vpop.f32.mrb[0].mxu0
  %4119 = vmatprep.mubr.f32.mxu0 0.0
  %4120 = vmatmul.mubr.f32.gmra.mrb[0].mxu0 %v3776
  %v4121 = vpop.f32.mrb[0].mxu0
  %v4122 = vadd.f32 %v3641, %v4121
  %v4123 = vpop.f32.mrb[0].mxu0
  %4124 = vmatprep.mubr.f32.mxu0 0.0
  %4125 = vmatmul.mubr.f32.gmra.mrb[0].mxu0 %v3779
  %v4126 = vpop.f32.mrb[0].mxu0
  %v4127 = vadd.f32 %v3641, %v4126
  %v4128 = vpop.f32.mrb[0].mxu0
  %4129 = vmatprep.mubr.f32.mxu0 0.0
  %4130 = vmatmul.mubr.f32.gmra.mrb[0].mxu0 %v3782
  %v4131 = vpop.f32.mrb[0].mxu0
  %v4132 = vadd.f32 %v3641, %v4131
  %v4133 = vpop.f32.mrb[0].mxu0
  %4134 = vmatprep.mubr.f32.mxu0 0.0
  %4135 = vmatmul.mubr.f32.gmra.mrb[0].mxu0 %v3785
  %v4136 = vpop.f32.mrb[0].mxu0
  %v4137 = vadd.f32 %v3641, %v4136
  %v4138 = vpop.f32.mrb[0].mxu0
  %4139 = vmatprep.mubr.f32.mxu0 0.0
  %4140 = vmatmul.mubr.f32.gmra.mrb[0].mxu0 %v3788
  %v4141 = vpop.f32.mrb[0].mxu0
  %v4142 = vadd.f32 %v3641, %v4141
  %v4143 = vpop.f32.mrb[0].mxu0
  %4144 = vmatprep.mubr.f32.mxu0 0.0
  %4145 = vmatmul.mubr.f32.gmra.mrb[0].mxu0 %v3791
  %v4146 = vpop.f32.mrb[0].mxu0
  %v4147 = vadd.f32 %v3641, %v4146
  %v4148 = vpop.f32.mrb[0].mxu0
  %4149 = vmatprep.mubr.f32.mxu0 0.0
  %4150 = vmatmul.mubr.f32.gmra.mrb[0].mxu0 %v3794
  %v4151 = vpop.f32.mrb[0].mxu0
  %v4152 = vadd.f32 %v3641, %v4151
  %v4153 = vpop.f32.mrb[0].mxu0
  %4154 = vmatprep.mubr.f32.mxu0 0.0
  %4155 = vmatmul.mubr.f32.gmra.mrb[0].mxu0 %v3797
  %v4156 = vpop.f32.mrb[0].mxu0
  %v4157 = vadd.f32 %v3641, %v4156
  %v4158 = vpop.f32.mrb[0].mxu0
  %4159 = vmatprep.mubr.f32.mxu0 0.0
  %4160 = vmatmul.mubr.f32.gmra.mrb[0].mxu0 %v3800
  %v4161 = vpop.f32.mrb[0].mxu0
  %v4162 = vadd.f32 %v3641, %v4161
  %v4163 = vpop.f32.mrb[0].mxu0
  %4164 = vmatprep.mubr.f32.mxu0 0.0
  %4165 = vmatmul.mubr.f32.gmra.mrb[0].mxu0 %v3803
  %v4166 = vpop.f32.mrb[0].mxu0
  %v4167 = vadd.f32 %v3641, %v4166
  %v4168 = vpop.f32.mrb[0].mxu0
  %4169 = vmatprep.mubr.f32.mxu0 0.0
  %4170 = vmatmul.mubr.f32.gmra.mrb[0].mxu0 %v3806
  %v4171 = vpop.f32.mrb[0].mxu0
  %v4172 = vadd.f32 %v3641, %v4171
  %v4173 = vpop.f32.mrb[0].mxu0
  %4174 = vmatprep.mubr.f32.mxu0 0.0
  %4175 = vmatmul.mubr.f32.gmra.mrb[0].mxu0 %v3809
  %v4176 = vpop.f32.mrb[0].mxu0
  %v4177 = vadd.f32 %v3641, %v4176
  %v4178 = vpop.f32.mrb[0].mxu0
  %4179 = vmatprep.mubr.f32.mxu0 0.0
  %4180 = vmatmul.mubr.f32.gmra.mrb[0].mxu0 %v3812
  %v4181 = vpop.f32.mrb[0].mxu0
  %v4182 = vadd.f32 %v3641, %v4181
  %v4183 = vpop.f32.mrb[0].mxu0
  %4184 = vmatprep.mubr.f32.mxu0 0.0
  %4185 = vmatmul.mubr.f32.gmra.mrb[0].mxu0 %v3815
  %v4186 = vpop.f32.mrb[0].mxu0
  %v4187 = vadd.f32 %v3641, %v4186
  %v4188 = vpop.f32.mrb[0].mxu0
  %4189 = vmatprep.mubr.f32.mxu0 0.0
  %4190 = vmatmul.mubr.f32.gmra.mrb[0].mxu0 %v3818
  %v4191 = vpop.f32.mrb[0].mxu0
  %v4192 = vadd.f32 %v3641, %v4191
  %v4193 = vpop.f32.mrb[0].mxu0
  %4194 = vmatprep.mubr.f32.mxu0 0.0
  %4195 = vmatmul.mubr.f32.gmra.mrb[0].mxu0 %v3821
  %v4196 = vpop.f32.mrb[0].mxu0
  %v4197 = vadd.f32 %v3641, %v4196
  %v4198 = vpop.f32.mrb[0].mxu0
  %4199 = vmatprep.mubr.f32.mxu0 0.0
  %4200 = vmatmul.mubr.f32.gmra.mrb[0].mxu0 %v3824
  %v4201 = vpop.f32.mrb[0].mxu0
  %v4202 = vadd.f32 %v3641, %v4201
  %v4203 = vpop.f32.mrb[0].mxu0
  %4204 = vmatprep.mubr.f32.mxu0 0.0
  %4205 = vmatmul.mubr.f32.gmra.mrb[0].mxu0 %v3827
  %v4206 = vpop.f32.mrb[0].mxu0
  %v4207 = vadd.f32 %v3641, %v4206
  %v4208 = vpop.f32.mrb[0].mxu0
  %4209 = vmatprep.mubr.f32.mxu0 0.0
  %4210 = vmatmul.mubr.f32.gmra.mrb[0].mxu0 %v3830
  %v4211 = vpop.f32.mrb[0].mxu0
  %v4212 = vadd.f32 %v3641, %v4211
  %v4213 = vpop.f32.mrb[0].mxu0
  %4214 = vmatprep.mubr.f32.mxu0 0.0
  %4215 = vmatmul.mubr.f32.gmra.mrb[0].mxu0 %v3833
  %v4216 = vpop.f32.mrb[0].mxu0
  %v4217 = vadd.f32 %v3641, %v4216
  %v4218 = vpop.f32.mrb[0].mxu0
  %4219 = vdwg.mxu0
  %v4220 = vmax.f32 %v3902, 0.0
  %v4221 = vmax.f32 %v3907, 0.0
  %v4222 = vmax.f32 %v3912, 0.0
  %v4223 = vmax.f32 %v3917, 0.0
  %v4224 = vmax.f32 %v3922, 0.0
  %v4225 = vmax.f32 %v3927, 0.0
  %v4226 = vmax.f32 %v3932, 0.0
  %v4227 = vmax.f32 %v3937, 0.0
  %v4228 = vmax.f32 %v3942, 0.0
  %v4229 = vmax.f32 %v3947, 0.0
  %v4230 = vmax.f32 %v3952, 0.0
  %v4231 = vmax.f32 %v3957, 0.0
  %v4232 = vmax.f32 %v3962, 0.0
  %v4233 = vmax.f32 %v3967, 0.0
  %v4234 = vmax.f32 %v3972, 0.0
  %v4235 = vmax.f32 %v3977, 0.0
  %v4236 = vmax.f32 %v3982, 0.0
  %v4237 = vmax.f32 %v3987, 0.0
  %v4238 = vmax.f32 %v3992, 0.0
  %v4239 = vmax.f32 %v3997, 0.0
  %v4240 = vmax.f32 %v4002, 0.0
  %v4241 = vmax.f32 %v4007, 0.0
  %v4242 = vmax.f32 %v4012, 0.0
  %v4243 = vmax.f32 %v4017, 0.0
  %v4244 = vmax.f32 %v4022, 0.0
  %v4245 = vmax.f32 %v4027, 0.0
  %v4246 = vmax.f32 %v4032, 0.0
  %v4247 = vmax.f32 %v4037, 0.0
  %v4248 = vmax.f32 %v4042, 0.0
  %v4249 = vmax.f32 %v4047, 0.0
  %v4250 = vmax.f32 %v4052, 0.0
  %v4251 = vmax.f32 %v4057, 0.0
  %v4252 = vmax.f32 %v4062, 0.0
  %v4253 = vmax.f32 %v4067, 0.0
  %v4254 = vmax.f32 %v4072, 0.0
  %v4255 = vmax.f32 %v4077, 0.0
  %v4256 = vmax.f32 %v4082, 0.0
  %v4257 = vmax.f32 %v4087, 0.0
  %v4258 = vmax.f32 %v4092, 0.0
  %v4259 = vmax.f32 %v4097, 0.0
  %v4260 = vmax.f32 %v4102, 0.0
  %v4261 = vmax.f32 %v4107, 0.0
  %v4262 = vmax.f32 %v4112, 0.0
  %v4263 = vmax.f32 %v4117, 0.0
  %v4264 = vmax.f32 %v4122, 0.0
  %v4265 = vmax.f32 %v4127, 0.0
  %v4266 = vmax.f32 %v4132, 0.0
  %v4267 = vmax.f32 %v4137, 0.0
  %v4268 = vmax.f32 %v4142, 0.0
  %v4269 = vmax.f32 %v4147, 0.0
  %v4270 = vmax.f32 %v4152, 0.0
  %v4271 = vmax.f32 %v4157, 0.0
  %v4272 = vmax.f32 %v4162, 0.0
  %v4273 = vmax.f32 %v4167, 0.0
  %v4274 = vmax.f32 %v4172, 0.0
  %v4275 = vmax.f32 %v4177, 0.0
  %v4276 = vmax.f32 %v4182, 0.0
  %v4277 = vmax.f32 %v4187, 0.0
  %v4278 = vmax.f32 %v4192, 0.0
  %v4279 = vmax.f32 %v4197, 0.0
  %v4280 = vmax.f32 %v4202, 0.0
  %v4281 = vmax.f32 %v4207, 0.0
  %v4282 = vmax.f32 %v4212, 0.0
  %v4283 = vmax.f32 %v4217, 0.0
  %v4284 = vld [vmem:[%s12] sm:$0xff]
  %v4285 = vld [vmem:[%s13] sm:$0x1]
  %v4287 = vlaneseq
  %v4288 = vshrl.u32 %v4287, 7
  %v4289 = vsub.s32 0, %v4288
  %v4290 = vrot.slane %v4285, %v4289
  %v4293 = vsel %vm943, %v4220, 0
  %v4296 = vsel %vm943, %v4221, 0
  %v4299 = vsel %vm943, %v4222, 0
  %v4302 = vsel %vm943, %v4223, 0
  %v4305 = vsel %vm943, %v4224, 0
  %v4308 = vsel %vm943, %v4225, 0
  %v4311 = vsel %vm943, %v4226, 0
  %v4314 = vsel %vm943, %v4227, 0
  %v4317 = vsel %vm943, %v4228, 0
  %v4320 = vsel %vm943, %v4229, 0
  %v4323 = vsel %vm943, %v4230, 0
  %v4326 = vsel %vm943, %v4231, 0
  %v4329 = vsel %vm943, %v4232, 0
  %v4332 = vsel %vm943, %v4233, 0
  %v4335 = vsel %vm943, %v4234, 0
  %v4338 = vsel %vm943, %v4235, 0
  %v4341 = vsel %vm943, %v4236, 0
  %v4344 = vsel %vm943, %v4237, 0
  %v4347 = vsel %vm943, %v4238, 0
  %v4350 = vsel %vm943, %v4239, 0
  %v4353 = vsel %vm943, %v4240, 0
  %v4356 = vsel %vm943, %v4241, 0
  %v4359 = vsel %vm943, %v4242, 0
  %v4362 = vsel %vm943, %v4243, 0
  %v4365 = vsel %vm943, %v4244, 0
  %v4368 = vsel %vm943, %v4245, 0
  %v4371 = vsel %vm943, %v4246, 0
  %v4374 = vsel %vm943, %v4247, 0
  %v4377 = vsel %vm943, %v4248, 0
  %v4380 = vsel %vm943, %v4249, 0
  %v4383 = vsel %vm943, %v4250, 0
  %v4386 = vsel %vm943, %v4251, 0
  %v4389 = vsel %vm943, %v4252, 0
  %v4392 = vsel %vm943, %v4253, 0
  %v4395 = vsel %vm943, %v4254, 0
  %v4398 = vsel %vm943, %v4255, 0
  %v4401 = vsel %vm943, %v4256, 0
  %v4404 = vsel %vm943, %v4257, 0
  %v4407 = vsel %vm943, %v4258, 0
  %v4410 = vsel %vm943, %v4259, 0
  %v4413 = vsel %vm943, %v4260, 0
  %v4416 = vsel %vm943, %v4261, 0
  %v4419 = vsel %vm943, %v4262, 0
  %v4422 = vsel %vm943, %v4263, 0
  %v4425 = vsel %vm943, %v4264, 0
  %v4428 = vsel %vm943, %v4265, 0
  %v4431 = vsel %vm943, %v4266, 0
  %v4434 = vsel %vm943, %v4267, 0
  %v4437 = vsel %vm943, %v4268, 0
  %v4440 = vsel %vm943, %v4269, 0
  %v4443 = vsel %vm943, %v4270, 0
  %v4446 = vsel %vm943, %v4271, 0
  %v4449 = vsel %vm943, %v4272, 0
  %v4452 = vsel %vm943, %v4273, 0
  %v4455 = vsel %vm943, %v4274, 0
  %v4458 = vsel %vm943, %v4275, 0
  %v4461 = vsel %vm943, %v4276, 0
  %v4464 = vsel %vm943, %v4277, 0
  %v4467 = vsel %vm943, %v4278, 0
  %v4470 = vsel %vm943, %v4279, 0
  %v4473 = vsel %vm943, %v4280, 0
  %v4476 = vsel %vm943, %v4281, 0
  %v4479 = vsel %vm943, %v4282, 0
  %v4482 = vsel %vm943, %v4283, 0
  %4484 = vmatprep.subr.mxu0 0.0
  %4485 = vmatpush1.msra.mxu0 %v4284
  %4486 = vmatprep.subr.mxu0 0.0
  %4487 = vmatpush1.msra.mxu0 0.0
  %4488 = vmatprep.subr.mxu0 0.0
  %4489 = vmatpush1.msra.mxu0 0.0
  %4490 = vmatprep.subr.mxu0 0.0
  %4491 = vmatpush1.msra.mxu0 0.0
  %4492 = vmatprep.subr.mxu0 0.0
  %4493 = vmatpush1.msra.mxu0 0.0
  %4494 = vmatprep.subr.mxu0 0.0
  %4495 = vmatpush1.msra.mxu0 0.0
  %4496 = vmatprep.subr.mxu0 0.0
  %4497 = vmatpush1.msra.mxu0 0.0
  %4498 = vmatprep.subr.mxu0 0.0
  %4499 = vmatpush1.msra.mxu0 0.0
  %4500 = vmatprep.subr.mxu0 0.0
  %4501 = vmatpush1.msra.mxu0 0.0
  %4502 = vmatprep.subr.mxu0 0.0
  %4503 = vmatpush1.msra.mxu0 0.0
  %4504 = vmatprep.subr.mxu0 0.0
  %4505 = vmatpush1.msra.mxu0 0.0
  %4506 = vmatprep.subr.mxu0 0.0
  %4507 = vmatpush1.msra.mxu0 0.0
  %4508 = vmatprep.subr.mxu0 0.0
  %4509 = vmatpush1.msra.mxu0 0.0
  %4510 = vmatprep.subr.mxu0 0.0
  %4511 = vmatpush1.msra.mxu0 0.0
  %4512 = vmatprep.subr.mxu0 0.0
  %4513 = vmatpush1.msra.mxu0 0.0
  %4514 = vmatprep.subr.mxu0 0.0
  %4515 = vmatpush1.msra.mxu0 0.0
  %4516 = vmatprep.subr.mxu0 0.0
  %4517 = vmatpush1.msra.mxu0 0.0
  %4518 = vmatprep.subr.mxu0 0.0
  %4519 = vmatpush1.msra.mxu0 0.0
  %4520 = vmatprep.subr.mxu0 0.0
  %4521 = vmatpush1.msra.mxu0 0.0
  %4522 = vmatprep.subr.mxu0 0.0
  %4523 = vmatpush1.msra.mxu0 0.0
  %4524 = vmatprep.subr.mxu0 0.0
  %4525 = vmatpush1.msra.mxu0 0.0
  %4526 = vmatprep.subr.mxu0 0.0
  %4527 = vmatpush1.msra.mxu0 0.0
  %4528 = vmatprep.subr.mxu0 0.0
  %4529 = vmatpush1.msra.mxu0 0.0
  %4530 = vmatprep.subr.mxu0 0.0
  %4531 = vmatpush1.msra.mxu0 0.0
  %4532 = vmatprep.subr.mxu0 0.0
  %4533 = vmatpush1.msra.mxu0 0.0
  %4534 = vmatprep.subr.mxu0 0.0
  %4535 = vmatpush1.msra.mxu0 0.0
  %4536 = vmatprep.subr.mxu0 0.0
  %4537 = vmatpush1.msra.mxu0 0.0
  %4538 = vmatprep.subr.mxu0 0.0
  %4539 = vmatpush1.msra.mxu0 0.0
  %4540 = vmatprep.subr.mxu0 0.0
  %4541 = vmatpush1.msra.mxu0 0.0
  %4542 = vmatprep.subr.mxu0 0.0
  %4543 = vmatpush1.msra.mxu0 0.0
  %4544 = vmatprep.subr.mxu0 0.0
  %4545 = vmatpush1.msra.mxu0 0.0
  %4546 = vmatprep.subr.mxu0 0.0
  %4547 = vmatpush1.msra.mxu0 0.0
  %4548 = vmatprep.mubr.f32.mxu0 0.0
  %4549 = vmatmul.mubr.f32.gmra.mrb[0].mxu0 %v4293
  %v4550 = vpop.f32.mrb[0].mxu0
  %v4551 = vadd.f32 %v4290, %v4550
  %v4552 = vpop.f32.mrb[0].mxu0
  %4553 = vmatprep.mubr.f32.mxu0 0.0
  %4554 = vmatmul.mubr.f32.gmra.mrb[0].mxu0 %v4296
  %v4555 = vpop.f32.mrb[0].mxu0
  %v4556 = vadd.f32 %v4290, %v4555
  %v4557 = vpop.f32.mrb[0].mxu0
  %4558 = vmatprep.mubr.f32.mxu0 0.0
  %4559 = vmatmul.mubr.f32.gmra.mrb[0].mxu0 %v4299
  %v4560 = vpop.f32.mrb[0].mxu0
  %v4561 = vadd.f32 %v4290, %v4560
  %v4562 = vpop.f32.mrb[0].mxu0
  %4563 = vmatprep.mubr.f32.mxu0 0.0
  %4564 = vmatmul.mubr.f32.gmra.mrb[0].mxu0 %v4302
  %v4565 = vpop.f32.mrb[0].mxu0
  %v4566 = vadd.f32 %v4290, %v4565
  %v4567 = vpop.f32.mrb[0].mxu0
  %4568 = vmatprep.mubr.f32.mxu0 0.0
  %4569 = vmatmul.mubr.f32.gmra.mrb[0].mxu0 %v4305
  %v4570 = vpop.f32.mrb[0].mxu0
  %v4571 = vadd.f32 %v4290, %v4570
  %v4572 = vpop.f32.mrb[0].mxu0
  %4573 = vmatprep.mubr.f32.mxu0 0.0
  %4574 = vmatmul.mubr.f32.gmra.mrb[0].mxu0 %v4308
  %v4575 = vpop.f32.mrb[0].mxu0
  %v4576 = vadd.f32 %v4290, %v4575
  %v4577 = vpop.f32.mrb[0].mxu0
  %4578 = vmatprep.mubr.f32.mxu0 0.0
  %4579 = vmatmul.mubr.f32.gmra.mrb[0].mxu0 %v4311
  %v4580 = vpop.f32.mrb[0].mxu0
  %v4581 = vadd.f32 %v4290, %v4580
  %v4582 = vpop.f32.mrb[0].mxu0
  %4583 = vmatprep.mubr.f32.mxu0 0.0
  %4584 = vmatmul.mubr.f32.gmra.mrb[0].mxu0 %v4314
  %v4585 = vpop.f32.mrb[0].mxu0
  %v4586 = vadd.f32 %v4290, %v4585
  %v4587 = vpop.f32.mrb[0].mxu0
  %4588 = vmatprep.mubr.f32.mxu0 0.0
  %4589 = vmatmul.mubr.f32.gmra.mrb[0].mxu0 %v4317
  %v4590 = vpop.f32.mrb[0].mxu0
  %v4591 = vadd.f32 %v4290, %v4590
  %v4592 = vpop.f32.mrb[0].mxu0
  %4593 = vmatprep.mubr.f32.mxu0 0.0
  %4594 = vmatmul.mubr.f32.gmra.mrb[0].mxu0 %v4320
  %v4595 = vpop.f32.mrb[0].mxu0
  %v4596 = vadd.f32 %v4290, %v4595
  %v4597 = vpop.f32.mrb[0].mxu0
  %4598 = vmatprep.mubr.f32.mxu0 0.0
  %4599 = vmatmul.mubr.f32.gmra.mrb[0].mxu0 %v4323
  %v4600 = vpop.f32.mrb[0].mxu0
  %v4601 = vadd.f32 %v4290, %v4600
  %v4602 = vpop.f32.mrb[0].mxu0
  %4603 = vmatprep.mubr.f32.mxu0 0.0
  %4604 = vmatmul.mubr.f32.gmra.mrb[0].mxu0 %v4326
  %v4605 = vpop.f32.mrb[0].mxu0
  %v4606 = vadd.f32 %v4290, %v4605
  %v4607 = vpop.f32.mrb[0].mxu0
  %4608 = vmatprep.mubr.f32.mxu0 0.0
  %4609 = vmatmul.mubr.f32.gmra.mrb[0].mxu0 %v4329
  %v4610 = vpop.f32.mrb[0].mxu0
  %v4611 = vadd.f32 %v4290, %v4610
  %v4612 = vpop.f32.mrb[0].mxu0
  %4613 = vmatprep.mubr.f32.mxu0 0.0
  %4614 = vmatmul.mubr.f32.gmra.mrb[0].mxu0 %v4332
  %v4615 = vpop.f32.mrb[0].mxu0
  %v4616 = vadd.f32 %v4290, %v4615
  %v4617 = vpop.f32.mrb[0].mxu0
  %4618 = vmatprep.mubr.f32.mxu0 0.0
  %4619 = vmatmul.mubr.f32.gmra.mrb[0].mxu0 %v4335
  %v4620 = vpop.f32.mrb[0].mxu0
  %v4621 = vadd.f32 %v4290, %v4620
  %v4622 = vpop.f32.mrb[0].mxu0
  %4623 = vmatprep.mubr.f32.mxu0 0.0
  %4624 = vmatmul.mubr.f32.gmra.mrb[0].mxu0 %v4338
  %v4625 = vpop.f32.mrb[0].mxu0
  %v4626 = vadd.f32 %v4290, %v4625
  %v4627 = vpop.f32.mrb[0].mxu0
  %4628 = vmatprep.mubr.f32.mxu0 0.0
  %4629 = vmatmul.mubr.f32.gmra.mrb[0].mxu0 %v4341
  %v4630 = vpop.f32.mrb[0].mxu0
  %v4631 = vadd.f32 %v4290, %v4630
  %v4632 = vpop.f32.mrb[0].mxu0
  %4633 = vmatprep.mubr.f32.mxu0 0.0
  %4634 = vmatmul.mubr.f32.gmra.mrb[0].mxu0 %v4344
  %v4635 = vpop.f32.mrb[0].mxu0
  %v4636 = vadd.f32 %v4290, %v4635
  %v4637 = vpop.f32.mrb[0].mxu0
  %4638 = vmatprep.mubr.f32.mxu0 0.0
  %4639 = vmatmul.mubr.f32.gmra.mrb[0].mxu0 %v4347
  %v4640 = vpop.f32.mrb[0].mxu0
  %v4641 = vadd.f32 %v4290, %v4640
  %v4642 = vpop.f32.mrb[0].mxu0
  %4643 = vmatprep.mubr.f32.mxu0 0.0
  %4644 = vmatmul.mubr.f32.gmra.mrb[0].mxu0 %v4350
  %v4645 = vpop.f32.mrb[0].mxu0
  %v4646 = vadd.f32 %v4290, %v4645
  %v4647 = vpop.f32.mrb[0].mxu0
  %4648 = vmatprep.mubr.f32.mxu0 0.0
  %4649 = vmatmul.mubr.f32.gmra.mrb[0].mxu0 %v4353
  %v4650 = vpop.f32.mrb[0].mxu0
  %v4651 = vadd.f32 %v4290, %v4650
  %v4652 = vpop.f32.mrb[0].mxu0
  %4653 = vmatprep.mubr.f32.mxu0 0.0
  %4654 = vmatmul.mubr.f32.gmra.mrb[0].mxu0 %v4356
  %v4655 = vpop.f32.mrb[0].mxu0
  %v4656 = vadd.f32 %v4290, %v4655
  %v4657 = vpop.f32.mrb[0].mxu0
  %4658 = vmatprep.mubr.f32.mxu0 0.0
  %4659 = vmatmul.mubr.f32.gmra.mrb[0].mxu0 %v4359
  %v4660 = vpop.f32.mrb[0].mxu0
  %v4661 = vadd.f32 %v4290, %v4660
  %v4662 = vpop.f32.mrb[0].mxu0
  %4663 = vmatprep.mubr.f32.mxu0 0.0
  %4664 = vmatmul.mubr.f32.gmra.mrb[0].mxu0 %v4362
  %v4665 = vpop.f32.mrb[0].mxu0
  %v4666 = vadd.f32 %v4290, %v4665
  %v4667 = vpop.f32.mrb[0].mxu0
  %4668 = vmatprep.mubr.f32.mxu0 0.0
  %4669 = vmatmul.mubr.f32.gmra.mrb[0].mxu0 %v4365
  %v4670 = vpop.f32.mrb[0].mxu0
  %v4671 = vadd.f32 %v4290, %v4670
  %v4672 = vpop.f32.mrb[0].mxu0
  %4673 = vmatprep.mubr.f32.mxu0 0.0
  %4674 = vmatmul.mubr.f32.gmra.mrb[0].mxu0 %v4368
  %v4675 = vpop.f32.mrb[0].mxu0
  %v4676 = vadd.f32 %v4290, %v4675
  %v4677 = vpop.f32.mrb[0].mxu0
  %4678 = vmatprep.mubr.f32.mxu0 0.0
  %4679 = vmatmul.mubr.f32.gmra.mrb[0].mxu0 %v4371
  %v4680 = vpop.f32.mrb[0].mxu0
  %v4681 = vadd.f32 %v4290, %v4680
  %v4682 = vpop.f32.mrb[0].mxu0
  %4683 = vmatprep.mubr.f32.mxu0 0.0
  %4684 = vmatmul.mubr.f32.gmra.mrb[0].mxu0 %v4374
  %v4685 = vpop.f32.mrb[0].mxu0
  %v4686 = vadd.f32 %v4290, %v4685
  %v4687 = vpop.f32.mrb[0].mxu0
  %4688 = vmatprep.mubr.f32.mxu0 0.0
  %4689 = vmatmul.mubr.f32.gmra.mrb[0].mxu0 %v4377
  %v4690 = vpop.f32.mrb[0].mxu0
  %v4691 = vadd.f32 %v4290, %v4690
  %v4692 = vpop.f32.mrb[0].mxu0
  %4693 = vmatprep.mubr.f32.mxu0 0.0
  %4694 = vmatmul.mubr.f32.gmra.mrb[0].mxu0 %v4380
  %v4695 = vpop.f32.mrb[0].mxu0
  %v4696 = vadd.f32 %v4290, %v4695
  %v4697 = vpop.f32.mrb[0].mxu0
  %4698 = vmatprep.mubr.f32.mxu0 0.0
  %4699 = vmatmul.mubr.f32.gmra.mrb[0].mxu0 %v4383
  %v4700 = vpop.f32.mrb[0].mxu0
  %v4701 = vadd.f32 %v4290, %v4700
  %v4702 = vpop.f32.mrb[0].mxu0
  %4703 = vmatprep.mubr.f32.mxu0 0.0
  %4704 = vmatmul.mubr.f32.gmra.mrb[0].mxu0 %v4386
  %v4705 = vpop.f32.mrb[0].mxu0
  %v4706 = vadd.f32 %v4290, %v4705
  %v4707 = vpop.f32.mrb[0].mxu0
  %4708 = vmatprep.mubr.f32.mxu0 0.0
  %4709 = vmatmul.mubr.f32.gmra.mrb[0].mxu0 %v4389
  %v4710 = vpop.f32.mrb[0].mxu0
  %v4711 = vadd.f32 %v4290, %v4710
  %v4712 = vpop.f32.mrb[0].mxu0
  %4713 = vmatprep.mubr.f32.mxu0 0.0
  %4714 = vmatmul.mubr.f32.gmra.mrb[0].mxu0 %v4392
  %v4715 = vpop.f32.mrb[0].mxu0
  %v4716 = vadd.f32 %v4290, %v4715
  %v4717 = vpop.f32.mrb[0].mxu0
  %4718 = vmatprep.mubr.f32.mxu0 0.0
  %4719 = vmatmul.mubr.f32.gmra.mrb[0].mxu0 %v4395
  %v4720 = vpop.f32.mrb[0].mxu0
  %v4721 = vadd.f32 %v4290, %v4720
  %v4722 = vpop.f32.mrb[0].mxu0
  %4723 = vmatprep.mubr.f32.mxu0 0.0
  %4724 = vmatmul.mubr.f32.gmra.mrb[0].mxu0 %v4398
  %v4725 = vpop.f32.mrb[0].mxu0
  %v4726 = vadd.f32 %v4290, %v4725
  %v4727 = vpop.f32.mrb[0].mxu0
  %4728 = vmatprep.mubr.f32.mxu0 0.0
  %4729 = vmatmul.mubr.f32.gmra.mrb[0].mxu0 %v4401
  %v4730 = vpop.f32.mrb[0].mxu0
  %v4731 = vadd.f32 %v4290, %v4730
  %v4732 = vpop.f32.mrb[0].mxu0
  %4733 = vmatprep.mubr.f32.mxu0 0.0
  %4734 = vmatmul.mubr.f32.gmra.mrb[0].mxu0 %v4404
  %v4735 = vpop.f32.mrb[0].mxu0
  %v4736 = vadd.f32 %v4290, %v4735
  %v4737 = vpop.f32.mrb[0].mxu0
  %4738 = vmatprep.mubr.f32.mxu0 0.0
  %4739 = vmatmul.mubr.f32.gmra.mrb[0].mxu0 %v4407
  %v4740 = vpop.f32.mrb[0].mxu0
  %v4741 = vadd.f32 %v4290, %v4740
  %v4742 = vpop.f32.mrb[0].mxu0
  %4743 = vmatprep.mubr.f32.mxu0 0.0
  %4744 = vmatmul.mubr.f32.gmra.mrb[0].mxu0 %v4410
  %v4745 = vpop.f32.mrb[0].mxu0
  %v4746 = vadd.f32 %v4290, %v4745
  %v4747 = vpop.f32.mrb[0].mxu0
  %4748 = vmatprep.mubr.f32.mxu0 0.0
  %4749 = vmatmul.mubr.f32.gmra.mrb[0].mxu0 %v4413
  %v4750 = vpop.f32.mrb[0].mxu0
  %v4751 = vadd.f32 %v4290, %v4750
  %v4752 = vpop.f32.mrb[0].mxu0
  %4753 = vmatprep.mubr.f32.mxu0 0.0
  %4754 = vmatmul.mubr.f32.gmra.mrb[0].mxu0 %v4416
  %v4755 = vpop.f32.mrb[0].mxu0
  %v4756 = vadd.f32 %v4290, %v4755
  %v4757 = vpop.f32.mrb[0].mxu0
  %4758 = vmatprep.mubr.f32.mxu0 0.0
  %4759 = vmatmul.mubr.f32.gmra.mrb[0].mxu0 %v4419
  %v4760 = vpop.f32.mrb[0].mxu0
  %v4761 = vadd.f32 %v4290, %v4760
  %v4762 = vpop.f32.mrb[0].mxu0
  %4763 = vmatprep.mubr.f32.mxu0 0.0
  %4764 = vmatmul.mubr.f32.gmra.mrb[0].mxu0 %v4422
  %v4765 = vpop.f32.mrb[0].mxu0
  %v4766 = vadd.f32 %v4290, %v4765
  %v4767 = vpop.f32.mrb[0].mxu0
  %4768 = vmatprep.mubr.f32.mxu0 0.0
  %4769 = vmatmul.mubr.f32.gmra.mrb[0].mxu0 %v4425
  %v4770 = vpop.f32.mrb[0].mxu0
  %v4771 = vadd.f32 %v4290, %v4770
  %v4772 = vpop.f32.mrb[0].mxu0
  %4773 = vmatprep.mubr.f32.mxu0 0.0
  %4774 = vmatmul.mubr.f32.gmra.mrb[0].mxu0 %v4428
  %v4775 = vpop.f32.mrb[0].mxu0
  %v4776 = vadd.f32 %v4290, %v4775
  %v4777 = vpop.f32.mrb[0].mxu0
  %4778 = vmatprep.mubr.f32.mxu0 0.0
  %4779 = vmatmul.mubr.f32.gmra.mrb[0].mxu0 %v4431
  %v4780 = vpop.f32.mrb[0].mxu0
  %v4781 = vadd.f32 %v4290, %v4780
  %v4782 = vpop.f32.mrb[0].mxu0
  %4783 = vmatprep.mubr.f32.mxu0 0.0
  %4784 = vmatmul.mubr.f32.gmra.mrb[0].mxu0 %v4434
  %v4785 = vpop.f32.mrb[0].mxu0
  %v4786 = vadd.f32 %v4290, %v4785
  %v4787 = vpop.f32.mrb[0].mxu0
  %4788 = vmatprep.mubr.f32.mxu0 0.0
  %4789 = vmatmul.mubr.f32.gmra.mrb[0].mxu0 %v4437
  %v4790 = vpop.f32.mrb[0].mxu0
  %v4791 = vadd.f32 %v4290, %v4790
  %v4792 = vpop.f32.mrb[0].mxu0
  %4793 = vmatprep.mubr.f32.mxu0 0.0
  %4794 = vmatmul.mubr.f32.gmra.mrb[0].mxu0 %v4440
  %v4795 = vpop.f32.mrb[0].mxu0
  %v4796 = vadd.f32 %v4290, %v4795
  %v4797 = vpop.f32.mrb[0].mxu0
  %4798 = vmatprep.mubr.f32.mxu0 0.0
  %4799 = vmatmul.mubr.f32.gmra.mrb[0].mxu0 %v4443
  %v4800 = vpop.f32.mrb[0].mxu0
  %v4801 = vadd.f32 %v4290, %v4800
  %v4802 = vpop.f32.mrb[0].mxu0
  %4803 = vmatprep.mubr.f32.mxu0 0.0
  %4804 = vmatmul.mubr.f32.gmra.mrb[0].mxu0 %v4446
  %v4805 = vpop.f32.mrb[0].mxu0
  %v4806 = vadd.f32 %v4290, %v4805
  %v4807 = vpop.f32.mrb[0].mxu0
  %4808 = vmatprep.mubr.f32.mxu0 0.0
  %4809 = vmatmul.mubr.f32.gmra.mrb[0].mxu0 %v4449
  %v4810 = vpop.f32.mrb[0].mxu0
  %v4811 = vadd.f32 %v4290, %v4810
  %v4812 = vpop.f32.mrb[0].mxu0
  %4813 = vmatprep.mubr.f32.mxu0 0.0
  %4814 = vmatmul.mubr.f32.gmra.mrb[0].mxu0 %v4452
  %v4815 = vpop.f32.mrb[0].mxu0
  %v4816 = vadd.f32 %v4290, %v4815
  %v4817 = vpop.f32.mrb[0].mxu0
  %4818 = vmatprep.mubr.f32.mxu0 0.0
  %4819 = vmatmul.mubr.f32.gmra.mrb[0].mxu0 %v4455
  %v4820 = vpop.f32.mrb[0].mxu0
  %v4821 = vadd.f32 %v4290, %v4820
  %v4822 = vpop.f32.mrb[0].mxu0
  %4823 = vmatprep.mubr.f32.mxu0 0.0
  %4824 = vmatmul.mubr.f32.gmra.mrb[0].mxu0 %v4458
  %v4825 = vpop.f32.mrb[0].mxu0
  %v4826 = vadd.f32 %v4290, %v4825
  %v4827 = vpop.f32.mrb[0].mxu0
  %4828 = vmatprep.mubr.f32.mxu0 0.0
  %4829 = vmatmul.mubr.f32.gmra.mrb[0].mxu0 %v4461
  %v4830 = vpop.f32.mrb[0].mxu0
  %v4831 = vadd.f32 %v4290, %v4830
  %v4832 = vpop.f32.mrb[0].mxu0
  %4833 = vmatprep.mubr.f32.mxu0 0.0
  %4834 = vmatmul.mubr.f32.gmra.mrb[0].mxu0 %v4464
  %v4835 = vpop.f32.mrb[0].mxu0
  %v4836 = vadd.f32 %v4290, %v4835
  %v4837 = vpop.f32.mrb[0].mxu0
  %4838 = vmatprep.mubr.f32.mxu0 0.0
  %4839 = vmatmul.mubr.f32.gmra.mrb[0].mxu0 %v4467
  %v4840 = vpop.f32.mrb[0].mxu0
  %v4841 = vadd.f32 %v4290, %v4840
  %v4842 = vpop.f32.mrb[0].mxu0
  %4843 = vmatprep.mubr.f32.mxu0 0.0
  %4844 = vmatmul.mubr.f32.gmra.mrb[0].mxu0 %v4470
  %v4845 = vpop.f32.mrb[0].mxu0
  %v4846 = vadd.f32 %v4290, %v4845
  %v4847 = vpop.f32.mrb[0].mxu0
  %4848 = vmatprep.mubr.f32.mxu0 0.0
  %4849 = vmatmul.mubr.f32.gmra.mrb[0].mxu0 %v4473
  %v4850 = vpop.f32.mrb[0].mxu0
  %v4851 = vadd.f32 %v4290, %v4850
  %v4852 = vpop.f32.mrb[0].mxu0
  %4853 = vmatprep.mubr.f32.mxu0 0.0
  %4854 = vmatmul.mubr.f32.gmra.mrb[0].mxu0 %v4476
  %v4855 = vpop.f32.mrb[0].mxu0
  %v4856 = vadd.f32 %v4290, %v4855
  %v4857 = vpop.f32.mrb[0].mxu0
  %4858 = vmatprep.mubr.f32.mxu0 0.0
  %4859 = vmatmul.mubr.f32.gmra.mrb[0].mxu0 %v4479
  %v4860 = vpop.f32.mrb[0].mxu0
  %v4861 = vadd.f32 %v4290, %v4860
  %v4862 = vpop.f32.mrb[0].mxu0
  %4863 = vmatprep.mubr.f32.mxu0 0.0
  %4864 = vmatmul.mubr.f32.gmra.mrb[0].mxu0 %v4482
  %v4865 = vpop.f32.mrb[0].mxu0
  %v4866 = vadd.f32 %v4290, %v4865
  %v4867 = vpop.f32.mrb[0].mxu0
  %4868 = vdwg.mxu0
  %v4869 = vmax.f32 %v4551, 0.0
  %v4870 = vmax.f32 %v4556, 0.0
  %v4871 = vmax.f32 %v4561, 0.0
  %v4872 = vmax.f32 %v4566, 0.0
  %v4873 = vmax.f32 %v4571, 0.0
  %v4874 = vmax.f32 %v4576, 0.0
  %v4875 = vmax.f32 %v4581, 0.0
  %v4876 = vmax.f32 %v4586, 0.0
  %v4877 = vmax.f32 %v4591, 0.0
  %v4878 = vmax.f32 %v4596, 0.0
  %v4879 = vmax.f32 %v4601, 0.0
  %v4880 = vmax.f32 %v4606, 0.0
  %v4881 = vmax.f32 %v4611, 0.0
  %v4882 = vmax.f32 %v4616, 0.0
  %v4883 = vmax.f32 %v4621, 0.0
  %v4884 = vmax.f32 %v4626, 0.0
  %v4885 = vmax.f32 %v4631, 0.0
  %v4886 = vmax.f32 %v4636, 0.0
  %v4887 = vmax.f32 %v4641, 0.0
  %v4888 = vmax.f32 %v4646, 0.0
  %v4889 = vmax.f32 %v4651, 0.0
  %v4890 = vmax.f32 %v4656, 0.0
  %v4891 = vmax.f32 %v4661, 0.0
  %v4892 = vmax.f32 %v4666, 0.0
  %v4893 = vmax.f32 %v4671, 0.0
  %v4894 = vmax.f32 %v4676, 0.0
  %v4895 = vmax.f32 %v4681, 0.0
  %v4896 = vmax.f32 %v4686, 0.0
  %v4897 = vmax.f32 %v4691, 0.0
  %v4898 = vmax.f32 %v4696, 0.0
  %v4899 = vmax.f32 %v4701, 0.0
  %v4900 = vmax.f32 %v4706, 0.0
  %v4901 = vmax.f32 %v4711, 0.0
  %v4902 = vmax.f32 %v4716, 0.0
  %v4903 = vmax.f32 %v4721, 0.0
  %v4904 = vmax.f32 %v4726, 0.0
  %v4905 = vmax.f32 %v4731, 0.0
  %v4906 = vmax.f32 %v4736, 0.0
  %v4907 = vmax.f32 %v4741, 0.0
  %v4908 = vmax.f32 %v4746, 0.0
  %v4909 = vmax.f32 %v4751, 0.0
  %v4910 = vmax.f32 %v4756, 0.0
  %v4911 = vmax.f32 %v4761, 0.0
  %v4912 = vmax.f32 %v4766, 0.0
  %v4913 = vmax.f32 %v4771, 0.0
  %v4914 = vmax.f32 %v4776, 0.0
  %v4915 = vmax.f32 %v4781, 0.0
  %v4916 = vmax.f32 %v4786, 0.0
  %v4917 = vmax.f32 %v4791, 0.0
  %v4918 = vmax.f32 %v4796, 0.0
  %v4919 = vmax.f32 %v4801, 0.0
  %v4920 = vmax.f32 %v4806, 0.0
  %v4921 = vmax.f32 %v4811, 0.0
  %v4922 = vmax.f32 %v4816, 0.0
  %v4923 = vmax.f32 %v4821, 0.0
  %v4924 = vmax.f32 %v4826, 0.0
  %v4925 = vmax.f32 %v4831, 0.0
  %v4926 = vmax.f32 %v4836, 0.0
  %v4927 = vmax.f32 %v4841, 0.0
  %v4928 = vmax.f32 %v4846, 0.0
  %v4929 = vmax.f32 %v4851, 0.0
  %v4930 = vmax.f32 %v4856, 0.0
  %v4931 = vmax.f32 %v4861, 0.0
  %v4932 = vmax.f32 %v4866, 0.0
  %v4933 = vsel %vm1658, %v4869, -inf
  %v4934 = vsel %vm1658, %v4870, -inf
  %v4935 = vmax.f32 %v4933, %v4934
  %v4936 = vrot.slane %v4935, 4
  %v4937 = vmax.f32 %v4935, %v4936
  %v4938 = vrot.slane %v4937, 2
  %v4939 = vmax.f32 %v4937, %v4938
  %v4940 = vrot.slane %v4939, 1
  %v4941 = vmax.f32 %v4939, %v4940
  %v4942 = vsel %vm1658, %v4871, -inf
  %v4943 = vsel %vm1658, %v4872, -inf
  %v4944 = vmax.f32 %v4942, %v4943
  %v4945 = vrot.slane %v4944, 4
  %v4946 = vmax.f32 %v4944, %v4945
  %v4947 = vrot.slane %v4946, 2
  %v4948 = vmax.f32 %v4946, %v4947
  %v4949 = vrot.slane %v4948, 1
  %v4950 = vmax.f32 %v4948, %v4949
  %v4951 = vsel %vm1658, %v4873, -inf
  %v4952 = vsel %vm1658, %v4874, -inf
  %v4953 = vmax.f32 %v4951, %v4952
  %v4954 = vrot.slane %v4953, 4
  %v4955 = vmax.f32 %v4953, %v4954
  %v4956 = vrot.slane %v4955, 2
  %v4957 = vmax.f32 %v4955, %v4956
  %v4958 = vrot.slane %v4957, 1
  %v4959 = vmax.f32 %v4957, %v4958
  %v4960 = vsel %vm1658, %v4875, -inf
  %v4961 = vsel %vm1658, %v4876, -inf
  %v4962 = vmax.f32 %v4960, %v4961
  %v4963 = vrot.slane %v4962, 4
  %v4964 = vmax.f32 %v4962, %v4963
  %v4965 = vrot.slane %v4964, 2
  %v4966 = vmax.f32 %v4964, %v4965
  %v4967 = vrot.slane %v4966, 1
  %v4968 = vmax.f32 %v4966, %v4967
  %v4969 = vsel %vm1658, %v4877, -inf
  %v4970 = vsel %vm1658, %v4878, -inf
  %v4971 = vmax.f32 %v4969, %v4970
  %v4972 = vrot.slane %v4971, 4
  %v4973 = vmax.f32 %v4971, %v4972
  %v4974 = vrot.slane %v4973, 2
  %v4975 = vmax.f32 %v4973, %v4974
  %v4976 = vrot.slane %v4975, 1
  %v4977 = vmax.f32 %v4975, %v4976
  %v4978 = vsel %vm1658, %v4879, -inf
  %v4979 = vsel %vm1658, %v4880, -inf
  %v4980 = vmax.f32 %v4978, %v4979
  %v4981 = vrot.slane %v4980, 4
  %v4982 = vmax.f32 %v4980, %v4981
  %v4983 = vrot.slane %v4982, 2
  %v4984 = vmax.f32 %v4982, %v4983
  %v4985 = vrot.slane %v4984, 1
  %v4986 = vmax.f32 %v4984, %v4985
  %v4987 = vsel %vm1658, %v4881, -inf
  %v4988 = vsel %vm1658, %v4882, -inf
  %v4989 = vmax.f32 %v4987, %v4988
  %v4990 = vrot.slane %v4989, 4
  %v4991 = vmax.f32 %v4989, %v4990
  %v4992 = vrot.slane %v4991, 2
  %v4993 = vmax.f32 %v4991, %v4992
  %v4994 = vrot.slane %v4993, 1
  %v4995 = vmax.f32 %v4993, %v4994
  %v4996 = vsel %vm1658, %v4883, -inf
  %v4997 = vsel %vm1658, %v4884, -inf
  %v4998 = vmax.f32 %v4996, %v4997
  %v4999 = vrot.slane %v4998, 4
  %v5000 = vmax.f32 %v4998, %v4999
  %v5001 = vrot.slane %v5000, 2
  %v5002 = vmax.f32 %v5000, %v5001
  %v5003 = vrot.slane %v5002, 1
  %v5004 = vmax.f32 %v5002, %v5003
  %v5005 = vsel %vm1658, %v4885, -inf
  %v5006 = vsel %vm1658, %v4886, -inf
  %v5007 = vmax.f32 %v5005, %v5006
  %v5008 = vrot.slane %v5007, 4
  %v5009 = vmax.f32 %v5007, %v5008
  %v5010 = vrot.slane %v5009, 2
  %v5011 = vmax.f32 %v5009, %v5010
  %v5012 = vrot.slane %v5011, 1
  %v5013 = vmax.f32 %v5011, %v5012
  %v5014 = vsel %vm1658, %v4887, -inf
  %v5015 = vsel %vm1658, %v4888, -inf
  %v5016 = vmax.f32 %v5014, %v5015
  %v5017 = vrot.slane %v5016, 4
  %v5018 = vmax.f32 %v5016, %v5017
  %v5019 = vrot.slane %v5018, 2
  %v5020 = vmax.f32 %v5018, %v5019
  %v5021 = vrot.slane %v5020, 1
  %v5022 = vmax.f32 %v5020, %v5021
  %v5023 = vsel %vm1658, %v4889, -inf
  %v5024 = vsel %vm1658, %v4890, -inf
  %v5025 = vmax.f32 %v5023, %v5024
  %v5026 = vrot.slane %v5025, 4
  %v5027 = vmax.f32 %v5025, %v5026
  %v5028 = vrot.slane %v5027, 2
  %v5029 = vmax.f32 %v5027, %v5028
  %v5030 = vrot.slane %v5029, 1
  %v5031 = vmax.f32 %v5029, %v5030
  %v5032 = vsel %vm1658, %v4891, -inf
  %v5033 = vsel %vm1658, %v4892, -inf
  %v5034 = vmax.f32 %v5032, %v5033
  %v5035 = vrot.slane %v5034, 4
  %v5036 = vmax.f32 %v5034, %v5035
  %v5037 = vrot.slane %v5036, 2
  %v5038 = vmax.f32 %v5036, %v5037
  %v5039 = vrot.slane %v5038, 1
  %v5040 = vmax.f32 %v5038, %v5039
  %v5041 = vsel %vm1658, %v4893, -inf
  %v5042 = vsel %vm1658, %v4894, -inf
  %v5043 = vmax.f32 %v5041, %v5042
  %v5044 = vrot.slane %v5043, 4
  %v5045 = vmax.f32 %v5043, %v5044
  %v5046 = vrot.slane %v5045, 2
  %v5047 = vmax.f32 %v5045, %v5046
  %v5048 = vrot.slane %v5047, 1
  %v5049 = vmax.f32 %v5047, %v5048
  %v5050 = vsel %vm1658, %v4895, -inf
  %v5051 = vsel %vm1658, %v4896, -inf
  %v5052 = vmax.f32 %v5050, %v5051
  %v5053 = vrot.slane %v5052, 4
  %v5054 = vmax.f32 %v5052, %v5053
  %v5055 = vrot.slane %v5054, 2
  %v5056 = vmax.f32 %v5054, %v5055
  %v5057 = vrot.slane %v5056, 1
  %v5058 = vmax.f32 %v5056, %v5057
  %v5059 = vsel %vm1658, %v4897, -inf
  %v5060 = vsel %vm1658, %v4898, -inf
  %v5061 = vmax.f32 %v5059, %v5060
  %v5062 = vrot.slane %v5061, 4
  %v5063 = vmax.f32 %v5061, %v5062
  %v5064 = vrot.slane %v5063, 2
  %v5065 = vmax.f32 %v5063, %v5064
  %v5066 = vrot.slane %v5065, 1
  %v5067 = vmax.f32 %v5065, %v5066
  %v5068 = vsel %vm1658, %v4899, -inf
  %v5069 = vsel %vm1658, %v4900, -inf
  %v5070 = vmax.f32 %v5068, %v5069
  %v5071 = vrot.slane %v5070, 4
  %v5072 = vmax.f32 %v5070, %v5071
  %v5073 = vrot.slane %v5072, 2
  %v5074 = vmax.f32 %v5072, %v5073
  %v5075 = vrot.slane %v5074, 1
  %v5076 = vmax.f32 %v5074, %v5075
  %v5077 = vsel %vm1658, %v4901, -inf
  %v5078 = vsel %vm1658, %v4902, -inf
  %v5079 = vmax.f32 %v5077, %v5078
  %v5080 = vrot.slane %v5079, 4
  %v5081 = vmax.f32 %v5079, %v5080
  %v5082 = vrot.slane %v5081, 2
  %v5083 = vmax.f32 %v5081, %v5082
  %v5084 = vrot.slane %v5083, 1
  %v5085 = vmax.f32 %v5083, %v5084
  %v5086 = vsel %vm1658, %v4903, -inf
  %v5087 = vsel %vm1658, %v4904, -inf
  %v5088 = vmax.f32 %v5086, %v5087
  %v5089 = vrot.slane %v5088, 4
  %v5090 = vmax.f32 %v5088, %v5089
  %v5091 = vrot.slane %v5090, 2
  %v5092 = vmax.f32 %v5090, %v5091
  %v5093 = vrot.slane %v5092, 1
  %v5094 = vmax.f32 %v5092, %v5093
  %v5095 = vsel %vm1658, %v4905, -inf
  %v5096 = vsel %vm1658, %v4906, -inf
  %v5097 = vmax.f32 %v5095, %v5096
  %v5098 = vrot.slane %v5097, 4
  %v5099 = vmax.f32 %v5097, %v5098
  %v5100 = vrot.slane %v5099, 2
  %v5101 = vmax.f32 %v5099, %v5100
  %v5102 = vrot.slane %v5101, 1
  %v5103 = vmax.f32 %v5101, %v5102
  %v5104 = vsel %vm1658, %v4907, -inf
  %v5105 = vsel %vm1658, %v4908, -inf
  %v5106 = vmax.f32 %v5104, %v5105
  %v5107 = vrot.slane %v5106, 4
  %v5108 = vmax.f32 %v5106, %v5107
  %v5109 = vrot.slane %v5108, 2
  %v5110 = vmax.f32 %v5108, %v5109
  %v5111 = vrot.slane %v5110, 1
  %v5112 = vmax.f32 %v5110, %v5111
  %v5113 = vsel %vm1658, %v4909, -inf
  %v5114 = vsel %vm1658, %v4910, -inf
  %v5115 = vmax.f32 %v5113, %v5114
  %v5116 = vrot.slane %v5115, 4
  %v5117 = vmax.f32 %v5115, %v5116
  %v5118 = vrot.slane %v5117, 2
  %v5119 = vmax.f32 %v5117, %v5118
  %v5120 = vrot.slane %v5119, 1
  %v5121 = vmax.f32 %v5119, %v5120
  %v5122 = vsel %vm1658, %v4911, -inf
  %v5123 = vsel %vm1658, %v4912, -inf
  %v5124 = vmax.f32 %v5122, %v5123
  %v5125 = vrot.slane %v5124, 4
  %v5126 = vmax.f32 %v5124, %v5125
  %v5127 = vrot.slane %v5126, 2
  %v5128 = vmax.f32 %v5126, %v5127
  %v5129 = vrot.slane %v5128, 1
  %v5130 = vmax.f32 %v5128, %v5129
  %v5131 = vsel %vm1658, %v4913, -inf
  %v5132 = vsel %vm1658, %v4914, -inf
  %v5133 = vmax.f32 %v5131, %v5132
  %v5134 = vrot.slane %v5133, 4
  %v5135 = vmax.f32 %v5133, %v5134
  %v5136 = vrot.slane %v5135, 2
  %v5137 = vmax.f32 %v5135, %v5136
  %v5138 = vrot.slane %v5137, 1
  %v5139 = vmax.f32 %v5137, %v5138
  %v5140 = vsel %vm1658, %v4915, -inf
  %v5141 = vsel %vm1658, %v4916, -inf
  %v5142 = vmax.f32 %v5140, %v5141
  %v5143 = vrot.slane %v5142, 4
  %v5144 = vmax.f32 %v5142, %v5143
  %v5145 = vrot.slane %v5144, 2
  %v5146 = vmax.f32 %v5144, %v5145
  %v5147 = vrot.slane %v5146, 1
  %v5148 = vmax.f32 %v5146, %v5147
  %v5149 = vsel %vm1658, %v4917, -inf
  %v5150 = vsel %vm1658, %v4918, -inf
  %v5151 = vmax.f32 %v5149, %v5150
  %v5152 = vrot.slane %v5151, 4
  %v5153 = vmax.f32 %v5151, %v5152
  %v5154 = vrot.slane %v5153, 2
  %v5155 = vmax.f32 %v5153, %v5154
  %v5156 = vrot.slane %v5155, 1
  %v5157 = vmax.f32 %v5155, %v5156
  %v5158 = vsel %vm1658, %v4919, -inf
  %v5159 = vsel %vm1658, %v4920, -inf
  %v5160 = vmax.f32 %v5158, %v5159
  %v5161 = vrot.slane %v5160, 4
  %v5162 = vmax.f32 %v5160, %v5161
  %v5163 = vrot.slane %v5162, 2
  %v5164 = vmax.f32 %v5162, %v5163
  %v5165 = vrot.slane %v5164, 1
  %v5166 = vmax.f32 %v5164, %v5165
  %v5167 = vsel %vm1658, %v4921, -inf
  %v5168 = vsel %vm1658, %v4922, -inf
  %v5169 = vmax.f32 %v5167, %v5168
  %v5170 = vrot.slane %v5169, 4
  %v5171 = vmax.f32 %v5169, %v5170
  %v5172 = vrot.slane %v5171, 2
  %v5173 = vmax.f32 %v5171, %v5172
  %v5174 = vrot.slane %v5173, 1
  %v5175 = vmax.f32 %v5173, %v5174
  %v5176 = vsel %vm1658, %v4923, -inf
  %v5177 = vsel %vm1658, %v4924, -inf
  %v5178 = vmax.f32 %v5176, %v5177
  %v5179 = vrot.slane %v5178, 4
  %v5180 = vmax.f32 %v5178, %v5179
  %v5181 = vrot.slane %v5180, 2
  %v5182 = vmax.f32 %v5180, %v5181
  %v5183 = vrot.slane %v5182, 1
  %v5184 = vmax.f32 %v5182, %v5183
  %v5185 = vsel %vm1658, %v4925, -inf
  %v5186 = vsel %vm1658, %v4926, -inf
  %v5187 = vmax.f32 %v5185, %v5186
  %v5188 = vrot.slane %v5187, 4
  %v5189 = vmax.f32 %v5187, %v5188
  %v5190 = vrot.slane %v5189, 2
  %v5191 = vmax.f32 %v5189, %v5190
  %v5192 = vrot.slane %v5191, 1
  %v5193 = vmax.f32 %v5191, %v5192
  %v5194 = vsel %vm1658, %v4927, -inf
  %v5195 = vsel %vm1658, %v4928, -inf
  %v5196 = vmax.f32 %v5194, %v5195
  %v5197 = vrot.slane %v5196, 4
  %v5198 = vmax.f32 %v5196, %v5197
  %v5199 = vrot.slane %v5198, 2
  %v5200 = vmax.f32 %v5198, %v5199
  %v5201 = vrot.slane %v5200, 1
  %v5202 = vmax.f32 %v5200, %v5201
  %v5203 = vsel %vm1658, %v4929, -inf
  %v5204 = vsel %vm1658, %v4930, -inf
  %v5205 = vmax.f32 %v5203, %v5204
  %v5206 = vrot.slane %v5205, 4
  %v5207 = vmax.f32 %v5205, %v5206
  %v5208 = vrot.slane %v5207, 2
  %v5209 = vmax.f32 %v5207, %v5208
  %v5210 = vrot.slane %v5209, 1
  %v5211 = vmax.f32 %v5209, %v5210
  %v5212 = vsel %vm1658, %v4931, -inf
  %v5213 = vsel %vm1658, %v4932, -inf
  %v5214 = vmax.f32 %v5212, %v5213
  %v5215 = vrot.slane %v5214, 4
  %v5216 = vmax.f32 %v5214, %v5215
  %v5217 = vrot.slane %v5216, 2
  %v5218 = vmax.f32 %v5216, %v5217
  %v5219 = vrot.slane %v5218, 1
  %v5220 = vmax.f32 %v5218, %v5219
  %vm5253 = vcmask 1041409
  %v5254 = vsel %vm5253, %v1672, %v1665
  %vm5255 = vcmask 1042434
  %v5256 = vsel %vm5255, %v1679, %v5254
  %vm5257 = vcmask 1043459
  %v5258 = vsel %vm5257, %v1686, %v5256
  %vm5259 = vcmask 1044484
  %v5260 = vsel %vm5259, %v1693, %v5258
  %vm5261 = vcmask 1045509
  %v5262 = vsel %vm5261, %v1700, %v5260
  %vm5263 = vcmask 1046534
  %v5264 = vsel %vm5263, %v1707, %v5262
  %vm5265 = vcmask 1047559
  %v5266 = vsel %vm5265, %v1714, %v5264
  %v5267 = vsel %vm5253, %v1728, %v1721
  %v5268 = vsel %vm5255, %v1735, %v5267
  %v5269 = vsel %vm5257, %v1742, %v5268
  %v5270 = vsel %vm5259, %v1749, %v5269
  %v5271 = vsel %vm5261, %v1756, %v5270
  %v5272 = vsel %vm5263, %v1763, %v5271
  %v5273 = vsel %vm5265, %v1770, %v5272
  %v5274 = vsel %vm5253, %v1784, %v1777
  %v5275 = vsel %vm5255, %v1791, %v5274
  %v5276 = vsel %vm5257, %v1798, %v5275
  %v5277 = vsel %vm5259, %v1805, %v5276
  %v5278 = vsel %vm5261, %v1812, %v5277
  %v5279 = vsel %vm5263, %v1819, %v5278
  %v5280 = vsel %vm5265, %v1826, %v5279
  %v5281 = vsel %vm5253, %v1840, %v1833
  %v5282 = vsel %vm5255, %v1847, %v5281
  %v5283 = vsel %vm5257, %v1854, %v5282
  %v5284 = vsel %vm5259, %v1861, %v5283
  %v5285 = vsel %vm5261, %v1868, %v5284
  %v5286 = vsel %vm5263, %v1875, %v5285
  %v5287 = vsel %vm5265, %v1882, %v5286
  %v5324 = vsel %vm5253, %v4950, %v4941
  %v5325 = vsel %vm5255, %v4959, %v5324
  %v5326 = vsel %vm5257, %v4968, %v5325
  %v5327 = vsel %vm5259, %v4977, %v5326
  %v5328 = vsel %vm5261, %v4986, %v5327
  %v5329 = vsel %vm5263, %v4995, %v5328
  %v5330 = vsel %vm5265, %v5004, %v5329
  %v5331 = vsel %vm5253, %v5022, %v5013
  %v5332 = vsel %vm5255, %v5031, %v5331
  %v5333 = vsel %vm5257, %v5040, %v5332
  %v5334 = vsel %vm5259, %v5049, %v5333
  %v5335 = vsel %vm5261, %v5058, %v5334
  %v5336 = vsel %vm5263, %v5067, %v5335
  %v5337 = vsel %vm5265, %v5076, %v5336
  %v5338 = vsel %vm5253, %v5094, %v5085
  %v5339 = vsel %vm5255, %v5103, %v5338
  %v5340 = vsel %vm5257, %v5112, %v5339
  %v5341 = vsel %vm5259, %v5121, %v5340
  %v5342 = vsel %vm5261, %v5130, %v5341
  %v5343 = vsel %vm5263, %v5139, %v5342
  %v5344 = vsel %vm5265, %v5148, %v5343
  %v5345 = vsel %vm5253, %v5166, %v5157
  %v5346 = vsel %vm5255, %v5175, %v5345
  %v5347 = vsel %vm5257, %v5184, %v5346
  %v5348 = vsel %vm5259, %v5193, %v5347
  %v5349 = vsel %vm5261, %v5202, %v5348
  %v5350 = vsel %vm5263, %v5211, %v5349
  %v5351 = vsel %vm5265, %v5220, %v5350
  %5352 = vrot.lane.b32.xlu0 %v5330, 16
  %v5353 = vpop.permute.xlu0 %5352
  %5354 = vrot.lane.b32.xlu0 %v5337, 16
  %v5355 = vpop.permute.xlu0 %5354
  %5356 = vrot.lane.b32.xlu0 %v5344, 16
  %v5357 = vpop.permute.xlu0 %5356
  %5358 = vrot.lane.b32.xlu0 %v5351, 16
  %v5359 = vpop.permute.xlu0 %5358
  %v5364 = vsel %vm1658, %v5266, %v5353
  %v5365 = vsel %vm1658, %v5273, %v5355
  %v5366 = vsel %vm1658, %v5280, %v5357
  %v5367 = vsel %vm1658, %v5287, %v5359
  %vm5368 = vcmask 261120
  %5369 = vst.msk [vmem:[%s14] sm:$0xff] %vm5368, %v5364
  %5370 = vst.msk [vmem:[%s14 + $0x8] sm:$0xff] %vm5368, %v5365
  %5371 = vst.msk [vmem:[%s14 + $0x10] sm:$0xff] %vm5368, %v5366
  %5372 = vst.msk [vmem:[%s14 + $0x18] sm:$0xff] %vm5368, %v5367
  // Predicated region
  $region58: #{_lambda_.4} parent=0 // pred_check
    _
  $region59: #{_lambda_.4} parent=0 // pred_check_branch
    %5374 = sbr.rel (0) target = $region61
  $region60: #{_lambda_.4} parent=0 // pred_region
    _
  $region61: #{_lambda_.4} parent=0 // pred_fallthru
    _
  // Predicated region
  $region62: #{_lambda_.4} parent=0 // pred_check
    _
  $region63: #{_lambda_.4} parent=0 // pred_check_branch
    %5376 = sbr.rel (0) target = $region65
  $region64: #{_lambda_.4} parent=0 // pred_region
    _
  $region65: #{_lambda_.4} parent=0 // pred_fallthru
    _

// kernel: _lambda_.6
$region0: #{_lambda_.6}
  #allocation0 [shape = 'u32[]', space=smem, size = 0x4, offset = 0x4, fixed_abs, tag = 'smem constant byte address 0x4 - core index']
  #allocation1 [shape = 'u32[144,128]{1,0:T(1,128)}', space=vmem, size = 0x12000, scoped, tag = 'internal scratch']
  %s0 = inlined_call_operand.vmem [shape: f32[32,96], index: 0, kind: input, shape index: {}]
  %s1 = inlined_call_operand.vmem [shape: f32[96,32], index: 1, kind: input, shape index: {}]
  %s2 = inlined_call_operand.vmem [shape: f32[1,32], index: 2, kind: input, shape index: {}]
  %s3 = inlined_call_operand.vmem [shape: f32[32,32], index: 3, kind: input, shape index: {}]
  %s4 = inlined_call_operand.vmem [shape: f32[1,32], index: 4, kind: input, shape index: {}]
  %s5 = inlined_call_operand.vmem [shape: f32[32,32], index: 5, kind: output, shape index: {}]
  %s6 = sld [smem:[#allocation0]]
  $region30: #{_lambda_.6} parent=0
    _
  %s8 = ssub.s32 1, %s6
  %s9 = scalar_select 0, %s8, %s6
  // Predicated region
  $region2: #{_lambda_.6} parent=0 // pred_check
    _
  $region3: #{_lambda_.6} parent=0 // pred_check_branch
    %11 = sbr.rel (0) target = $region5
  $region4: #{_lambda_.6} parent=0 // pred_region
    _
  $region5: #{_lambda_.6} parent=0 // pred_fallthru
    _
  // Predicated region
  $region6: #{_lambda_.6} parent=0 // pred_check
    _
  $region7: #{_lambda_.6} parent=0 // pred_check_branch
    %13 = sbr.rel (0) target = $region9
  $region8: #{_lambda_.6} parent=0 // pred_region
    _
  $region9: #{_lambda_.6} parent=0 // pred_fallthru
    _
  // Predicated region
  $region10: #{_lambda_.6} parent=0 // pred_check
    _
  $region11: #{_lambda_.6} parent=0 // pred_check_branch
    %15 = sbr.rel (0) target = $region13
  $region12: #{_lambda_.6} parent=0 // pred_region
    _
  $region13: #{_lambda_.6} parent=0 // pred_fallthru
    _
  // Predicated region
  $region14: #{_lambda_.6} parent=0 // pred_check
    _
  $region15: #{_lambda_.6} parent=0 // pred_check_branch
    %17 = sbr.rel (0) target = $region17
  $region16: #{_lambda_.6} parent=0 // pred_region
    _
  $region17: #{_lambda_.6} parent=0 // pred_fallthru
    _
  // Predicated region
  $region18: #{_lambda_.6} parent=0 // pred_check
    _
  $region19: #{_lambda_.6} parent=0 // pred_check_branch
    %19 = sbr.rel (0) target = $region21
  $region20: #{_lambda_.6} parent=0 // pred_region
    _
  $region21: #{_lambda_.6} parent=0 // pred_fallthru
    _
  %v20 = vld [vmem:[%s0] sm:$0xff]
  %v21 = vld [vmem:[%s0 + $0x8] sm:$0xff]
  %v22 = vld [vmem:[%s0 + $0x10] sm:$0xff]
  %v23 = vld [vmem:[%s0 + $0x18] sm:$0xff]
  %v24 = vld [vmem:[%s1] sm:$0xff]
  %v25 = vld [vmem:[%s1 + $0x8] sm:$0xff]
  %v26 = vld [vmem:[%s1 + $0x10] sm:$0xff]
  %v27 = vld [vmem:[%s1 + $0x18] sm:$0xff]
  %v28 = vld [vmem:[%s1 + $0x20] sm:$0xff]
  %v29 = vld [vmem:[%s1 + $0x28] sm:$0xff]
  %v30 = vld [vmem:[%s1 + $0x30] sm:$0xff]
  %v31 = vld [vmem:[%s1 + $0x38] sm:$0xff]
  %v32 = vld [vmem:[%s1 + $0x40] sm:$0xff]
  %v33 = vld [vmem:[%s1 + $0x48] sm:$0xff]
  %v34 = vld [vmem:[%s1 + $0x50] sm:$0xff]
  %v35 = vld [vmem:[%s1 + $0x58] sm:$0xff]
  %v36 = vld [vmem:[%s2] sm:$0x1]
  %v38 = vlaneseq
  %v39 = vshrl.u32 %v38, 7
  %v40 = vsub.s32 0, %v39
  %v41 = vrot.slane %v36, %v40
  %vm43 = vcmask 785408
  %v45 = vsel %vm43, %v20, 0
  %v48 = vsel %vm43, %v21, 0
  %v51 = vsel %vm43, %v22, 0
  %v54 = vsel %vm43, %v23, 0
  %56 = vmatprep.subr.mxu0 0.0
  %57 = vmatpush1.msra.mxu0 %v24
  %58 = vmatprep.subr.mxu0 0.0
  %59 = vmatpush1.msra.mxu0 %v25
  %60 = vmatprep.subr.mxu0 0.0
  %61 = vmatpush1.msra.mxu0 %v26
  %62 = vmatprep.subr.mxu0 0.0
  %63 = vmatpush1.msra.mxu0 %v27
  %64 = vmatprep.subr.mxu0 0.0
  %65 = vmatpush1.msra.mxu0 %v28
  %66 = vmatprep.subr.mxu0 0.0
  %67 = vmatpush1.msra.mxu0 %v29
  %68 = vmatprep.subr.mxu0 0.0
  %69 = vmatpush1.msra.mxu0 %v30
  %70 = vmatprep.subr.mxu0 0.0
  %71 = vmatpush1.msra.mxu0 %v31
  %72 = vmatprep.subr.mxu0 0.0
  %73 = vmatpush1.msra.mxu0 %v32
  %74 = vmatprep.subr.mxu0 0.0
  %75 = vmatpush1.msra.mxu0 %v33
  %76 = vmatprep.subr.mxu0 0.0
  %77 = vmatpush1.msra.mxu0 %v34
  %78 = vmatprep.subr.mxu0 0.0
  %79 = vmatpush1.msra.mxu0 %v35
  %80 = vmatprep.subr.mxu0 0.0
  %81 = vmatpush1.msra.mxu0 0.0
  %82 = vmatprep.subr.mxu0 0.0
  %83 = vmatpush1.msra.mxu0 0.0
  %84 = vmatprep.subr.mxu0 0.0
  %85 = vmatpush1.msra.mxu0 0.0
  %86 = vmatprep.subr.mxu0 0.0
  %87 = vmatpush1.msra.mxu0 0.0
  %88 = vmatprep.subr.mxu0 0.0
  %89 = vmatpush1.msra.mxu0 0.0
  %90 = vmatprep.subr.mxu0 0.0
  %91 = vmatpush1.msra.mxu0 0.0
  %92 = vmatprep.subr.mxu0 0.0
  %93 = vmatpush1.msra.mxu0 0.0
  %94 = vmatprep.subr.mxu0 0.0
  %95 = vmatpush1.msra.mxu0 0.0
  %96 = vmatprep.subr.mxu0 0.0
  %97 = vmatpush1.msra.mxu0 0.0
  %98 = vmatprep.subr.mxu0 0.0
  %99 = vmatpush1.msra.mxu0 0.0
  %100 = vmatprep.subr.mxu0 0.0
  %101 = vmatpush1.msra.mxu0 0.0
  %102 = vmatprep.subr.mxu0 0.0
  %103 = vmatpush1.msra.mxu0 0.0
  %104 = vmatprep.subr.mxu0 0.0
  %105 = vmatpush1.msra.mxu0 0.0
  %106 = vmatprep.subr.mxu0 0.0
  %107 = vmatpush1.msra.mxu0 0.0
  %108 = vmatprep.subr.mxu0 0.0
  %109 = vmatpush1.msra.mxu0 0.0
  %110 = vmatprep.subr.mxu0 0.0
  %111 = vmatpush1.msra.mxu0 0.0
  %112 = vmatprep.subr.mxu0 0.0
  %113 = vmatpush1.msra.mxu0 0.0
  %114 = vmatprep.subr.mxu0 0.0
  %115 = vmatpush1.msra.mxu0 0.0
  %116 = vmatprep.subr.mxu0 0.0
  %117 = vmatpush1.msra.mxu0 0.0
  %118 = vmatprep.subr.mxu0 0.0
  %119 = vmatpush1.msra.mxu0 0.0
  %120 = vmatprep.mubr.f32.mxu0 0.0
  %121 = vmatmul.mubr.f32.gmra.mrb[0].mxu0 %v45
  %v122 = vpop.f32.mrb[0].mxu0
  %v123 = vadd.f32 %v41, %v122
  %v124 = vpop.f32.mrb[0].mxu0
  %125 = vmatprep.mubr.f32.mxu0 0.0
  %126 = vmatmul.mubr.f32.gmra.mrb[0].mxu0 %v48
  %v127 = vpop.f32.mrb[0].mxu0
  %v128 = vadd.f32 %v41, %v127
  %v129 = vpop.f32.mrb[0].mxu0
  %130 = vmatprep.mubr.f32.mxu0 0.0
  %131 = vmatmul.mubr.f32.gmra.mrb[0].mxu0 %v51
  %v132 = vpop.f32.mrb[0].mxu0
  %v133 = vadd.f32 %v41, %v132
  %v134 = vpop.f32.mrb[0].mxu0
  %135 = vmatprep.mubr.f32.mxu0 0.0
  %136 = vmatmul.mubr.f32.gmra.mrb[0].mxu0 %v54
  %v137 = vpop.f32.mrb[0].mxu0
  %v138 = vadd.f32 %v41, %v137
  %v139 = vpop.f32.mrb[0].mxu0
  %140 = vdwg.mxu0
  %v141 = vmax.f32 %v123, 0.0
  %v142 = vmax.f32 %v128, 0.0
  %v143 = vmax.f32 %v133, 0.0
  %v144 = vmax.f32 %v138, 0.0
  %v145 = vld [vmem:[%s3] sm:$0xff]
  %v146 = vld [vmem:[%s3 + $0x8] sm:$0xff]
  %v147 = vld [vmem:[%s3 + $0x10] sm:$0xff]
  %v148 = vld [vmem:[%s3 + $0x18] sm:$0xff]
  %v149 = vld [vmem:[%s4] sm:$0x1]
  %v151 = vlaneseq
  %v152 = vshrl.u32 %v151, 7
  %v153 = vsub.s32 0, %v152
  %v154 = vrot.slane %v149, %v153
  %vm156 = vcmask 261120
  %v158 = vsel %vm156, %v141, 0
  %v161 = vsel %vm156, %v142, 0
  %v164 = vsel %vm156, %v143, 0
  %v167 = vsel %vm156, %v144, 0
  %169 = vmatprep.subr.mxu0 0.0
  %170 = vmatpush1.msra.mxu0 %v145
  %171 = vmatprep.subr.mxu0 0.0
  %172 = vmatpush1.msra.mxu0 %v146
  %173 = vmatprep.subr.mxu0 0.0
  %174 = vmatpush1.msra.mxu0 %v147
  %175 = vmatprep.subr.mxu0 0.0
  %176 = vmatpush1.msra.mxu0 %v148
  %177 = vmatprep.subr.mxu0 0.0
  %178 = vmatpush1.msra.mxu0 0.0
  %179 = vmatprep.subr.mxu0 0.0
  %180 = vmatpush1.msra.mxu0 0.0
  %181 = vmatprep.subr.mxu0 0.0
  %182 = vmatpush1.msra.mxu0 0.0
  %183 = vmatprep.subr.mxu0 0.0
  %184 = vmatpush1.msra.mxu0 0.0
  %185 = vmatprep.subr.mxu0 0.0
  %186 = vmatpush1.msra.mxu0 0.0
  %187 = vmatprep.subr.mxu0 0.0
  %188 = vmatpush1.msra.mxu0 0.0
  %189 = vmatprep.subr.mxu0 0.0
  %190 = vmatpush1.msra.mxu0 0.0
  %191 = vmatprep.subr.mxu0 0.0
  %192 = vmatpush1.msra.mxu0 0.0
  %193 = vmatprep.subr.mxu0 0.0
  %194 = vmatpush1.msra.mxu0 0.0
  %195 = vmatprep.subr.mxu0 0.0
  %196 = vmatpush1.msra.mxu0 0.0
  %197 = vmatprep.subr.mxu0 0.0
  %198 = vmatpush1.msra.mxu0 0.0
  %199 = vmatprep.subr.mxu0 0.0
  %200 = vmatpush1.msra.mxu0 0.0
  %201 = vmatprep.subr.mxu0 0.0
  %202 = vmatpush1.msra.mxu0 0.0
  %203 = vmatprep.subr.mxu0 0.0
  %204 = vmatpush1.msra.mxu0 0.0
  %205 = vmatprep.subr.mxu0 0.0
  %206 = vmatpush1.msra.mxu0 0.0
  %207 = vmatprep.subr.mxu0 0.0
  %208 = vmatpush1.msra.mxu0 0.0
  %209 = vmatprep.subr.mxu0 0.0
  %210 = vmatpush1.msra.mxu0 0.0
  %211 = vmatprep.subr.mxu0 0.0
  %212 = vmatpush1.msra.mxu0 0.0
  %213 = vmatprep.subr.mxu0 0.0
  %214 = vmatpush1.msra.mxu0 0.0
  %215 = vmatprep.subr.mxu0 0.0
  %216 = vmatpush1.msra.mxu0 0.0
  %217 = vmatprep.subr.mxu0 0.0
  %218 = vmatpush1.msra.mxu0 0.0
  %219 = vmatprep.subr.mxu0 0.0
  %220 = vmatpush1.msra.mxu0 0.0
  %221 = vmatprep.subr.mxu0 0.0
  %222 = vmatpush1.msra.mxu0 0.0
  %223 = vmatprep.subr.mxu0 0.0
  %224 = vmatpush1.msra.mxu0 0.0
  %225 = vmatprep.subr.mxu0 0.0
  %226 = vmatpush1.msra.mxu0 0.0
  %227 = vmatprep.subr.mxu0 0.0
  %228 = vmatpush1.msra.mxu0 0.0
  %229 = vmatprep.subr.mxu0 0.0
  %230 = vmatpush1.msra.mxu0 0.0
  %231 = vmatprep.subr.mxu0 0.0
  %232 = vmatpush1.msra.mxu0 0.0
  %233 = vmatprep.mubr.f32.mxu0 0.0
  %234 = vmatmul.mubr.f32.gmra.mrb[0].mxu0 %v158
  %v235 = vpop.f32.mrb[0].mxu0
  %v236 = vadd.f32 %v154, %v235
  %v237 = vpop.f32.mrb[0].mxu0
  %238 = vmatprep.mubr.f32.mxu0 0.0
  %239 = vmatmul.mubr.f32.gmra.mrb[0].mxu0 %v161
  %v240 = vpop.f32.mrb[0].mxu0
  %v241 = vadd.f32 %v154, %v240
  %v242 = vpop.f32.mrb[0].mxu0
  %243 = vmatprep.mubr.f32.mxu0 0.0
  %244 = vmatmul.mubr.f32.gmra.mrb[0].mxu0 %v164
  %v245 = vpop.f32.mrb[0].mxu0
  %v246 = vadd.f32 %v154, %v245
  %v247 = vpop.f32.mrb[0].mxu0
  %248 = vmatprep.mubr.f32.mxu0 0.0
  %249 = vmatmul.mubr.f32.gmra.mrb[0].mxu0 %v167
  %v250 = vpop.f32.mrb[0].mxu0
  %v251 = vadd.f32 %v154, %v250
  %v252 = vpop.f32.mrb[0].mxu0
  %253 = vdwg.mxu0
  %v254 = vmax.f32 %v236, 0.0
  %v255 = vmax.f32 %v241, 0.0
  %v256 = vmax.f32 %v246, 0.0
  %v257 = vmax.f32 %v251, 0.0
  %258 = vst.msk [vmem:[%s5] sm:$0xff] %vm156, %v254
  %259 = vst.msk [vmem:[%s5 + $0x8] sm:$0xff] %vm156, %v255
  %260 = vst.msk [vmem:[%s5 + $0x10] sm:$0xff] %vm156, %v256
  %261 = vst.msk [vmem:[%s5 + $0x18] sm:$0xff] %vm156, %v257
  // Predicated region
  $region22: #{_lambda_.6} parent=0 // pred_check
    _
  $region23: #{_lambda_.6} parent=0 // pred_check_branch
    %263 = sbr.rel (0) target = $region25
  $region24: #{_lambda_.6} parent=0 // pred_region
    _
  $region25: #{_lambda_.6} parent=0 // pred_fallthru
    _
  // Predicated region
  $region26: #{_lambda_.6} parent=0 // pred_check
    _
  $region27: #{_lambda_.6} parent=0 // pred_check_branch
    %265 = sbr.rel (0) target = $region29
  $region28: #{_lambda_.6} parent=0 // pred_region
    _
  $region29: #{_lambda_.6} parent=0 // pred_fallthru
    _

// kernel: neg.6
$region0: #{neg.6}
  #allocation0 [shape = 's32[1]{0}', space=sflag, size = 0x4, scoped, tag = 'scoped memory for neg.6']
  %s0 = inlined_call_operand.vmem [shape: f32[2,32,16], index: 0, kind: input, shape index: {}]
  %s1 = inlined_call_operand.vmem [shape: f32[2,32,16], index: 1, kind: output, shape index: {}]
  %v2 = vld [vmem:[%s0] sm:$0xff]
  %3 = xla_tuple %v2
  %4 = xla_tuple %3
  %v5 = vxor.u32 %v2, 2147483648
  %6 = xla_tuple %v5
  %7 = vst [vmem:[%s1] sm:$0xff] %v5
  %s8 = scalar_lea.vmem %s0, 16
  %v9 = vld [vmem:[%s8] sm:$0xff]
  %10 = xla_tuple %v9
  %11 = xla_tuple %10
  %v12 = vxor.u32 %v9, 2147483648
  %13 = xla_tuple %v12
  %s14 = scalar_lea.vmem %s1, 16
  %15 = vst [vmem:[%s14] sm:$0xff] %v12
  %s16 = scalar_lea.vmem %s0, 8
  %v17 = vld [vmem:[%s16] sm:$0xff]
  %18 = xla_tuple %v17
  %19 = xla_tuple %18
  %v20 = vxor.u32 %v17, 2147483648
  %21 = xla_tuple %v20
  %s22 = scalar_lea.vmem %s1, 8
  %23 = vst [vmem:[%s22] sm:$0xff] %v20
  %s24 = scalar_lea.vmem %s0, 24
  %v25 = vld [vmem:[%s24] sm:$0xff]
  %26 = xla_tuple %v25
  %27 = xla_tuple %26
  %v28 = vxor.u32 %v25, 2147483648
  %29 = xla_tuple %v28
  %s30 = scalar_lea.vmem %s1, 24
  %31 = vst [vmem:[%s30] sm:$0xff] %v28

// kernel: _lambda_.5
$region0: #{_lambda_.5}
  #allocation0 [shape = 'u32[]', space=smem, size = 0x4, offset = 0x4, fixed_abs, tag = 'smem constant byte address 0x4 - core index']
  #allocation1 [shape = 'u32[144,128]{1,0:T(1,128)}', space=vmem, size = 0x12000, scoped, tag = 'internal scratch']
  %s0 = inlined_call_operand.vmem [shape: f32[128,35], index: 0, kind: input, shape index: {}]
  %s1 = inlined_call_operand.vmem [shape: f32[256,35], index: 1, kind: input, shape index: {}]
  %s2 = inlined_call_operand.vmem [shape: f32[35,16], index: 2, kind: input, shape index: {}]
  %s3 = inlined_call_operand.vmem [shape: f32[1,16], index: 3, kind: input, shape index: {}]
  %s4 = inlined_call_operand.vmem [shape: f32[16,16], index: 4, kind: input, shape index: {}]
  %s5 = inlined_call_operand.vmem [shape: f32[1,16], index: 5, kind: input, shape index: {}]
  %s6 = inlined_call_operand.vmem [shape: f32[16,32], index: 6, kind: input, shape index: {}]
  %s7 = inlined_call_operand.vmem [shape: f32[1,32], index: 7, kind: input, shape index: {}]
  %s8 = inlined_call_operand.vmem [shape: f32[35,16], index: 8, kind: input, shape index: {}]
  %s9 = inlined_call_operand.vmem [shape: f32[1,16], index: 9, kind: input, shape index: {}]
  %s10 = inlined_call_operand.vmem [shape: f32[16,16], index: 10, kind: input, shape index: {}]
  %s11 = inlined_call_operand.vmem [shape: f32[1,16], index: 11, kind: input, shape index: {}]
  %s12 = inlined_call_operand.vmem [shape: f32[16,32], index: 12, kind: input, shape index: {}]
  %s13 = inlined_call_operand.vmem [shape: f32[1,32], index: 13, kind: input, shape index: {}]
  %s14 = inlined_call_operand.vmem [shape: f32[16,64], index: 14, kind: output, shape index: {}]
  %s15 = sld [smem:[#allocation0]]
  $region66: #{_lambda_.5} parent=0
    _
  %s17 = ssub.s32 1, %s15
  %s18 = scalar_select 0, %s17, %s15
  // Predicated region
  $region2: #{_lambda_.5} parent=0 // pred_check
    _
  $region3: #{_lambda_.5} parent=0 // pred_check_branch
    %20 = sbr.rel (0) target = $region5
  $region4: #{_lambda_.5} parent=0 // pred_region
    _
  $region5: #{_lambda_.5} parent=0 // pred_fallthru
    _
  // Predicated region
  $region6: #{_lambda_.5} parent=0 // pred_check
    _
  $region7: #{_lambda_.5} parent=0 // pred_check_branch
    %22 = sbr.rel (0) target = $region9
  $region8: #{_lambda_.5} parent=0 // pred_region
    _
  $region9: #{_lambda_.5} parent=0 // pred_fallthru
    _
  // Predicated region
  $region10: #{_lambda_.5} parent=0 // pred_check
    _
  $region11: #{_lambda_.5} parent=0 // pred_check_branch
    %24 = sbr.rel (0) target = $region13
  $region12: #{_lambda_.5} parent=0 // pred_region
    _
  $region13: #{_lambda_.5} parent=0 // pred_fallthru
    _
  // Predicated region
  $region14: #{_lambda_.5} parent=0 // pred_check
    _
  $region15: #{_lambda_.5} parent=0 // pred_check_branch
    %26 = sbr.rel (0) target = $region17
  $region16: #{_lambda_.5} parent=0 // pred_region
    _
  $region17: #{_lambda_.5} parent=0 // pred_fallthru
    _
  // Predicated region
  $region18: #{_lambda_.5} parent=0 // pred_check
    _
  $region19: #{_lambda_.5} parent=0 // pred_check_branch
    %28 = sbr.rel (0) target = $region21
  $region20: #{_lambda_.5} parent=0 // pred_region
    _
  $region21: #{_lambda_.5} parent=0 // pred_fallthru
    _
  // Predicated region
  $region22: #{_lambda_.5} parent=0 // pred_check
    _
  $region23: #{_lambda_.5} parent=0 // pred_check_branch
    %30 = sbr.rel (0) target = $region25
  $region24: #{_lambda_.5} parent=0 // pred_region
    _
  $region25: #{_lambda_.5} parent=0 // pred_fallthru
    _
  // Predicated region
  $region26: #{_lambda_.5} parent=0 // pred_check
    _
  $region27: #{_lambda_.5} parent=0 // pred_check_branch
    %32 = sbr.rel (0) target = $region29
  $region28: #{_lambda_.5} parent=0 // pred_region
    _
  $region29: #{_lambda_.5} parent=0 // pred_fallthru
    _
  // Predicated region
  $region30: #{_lambda_.5} parent=0 // pred_check
    _
  $region31: #{_lambda_.5} parent=0 // pred_check_branch
    %34 = sbr.rel (0) target = $region33
  $region32: #{_lambda_.5} parent=0 // pred_region
    _
  $region33: #{_lambda_.5} parent=0 // pred_fallthru
    _
  // Predicated region
  $region34: #{_lambda_.5} parent=0 // pred_check
    _
  $region35: #{_lambda_.5} parent=0 // pred_check_branch
    %36 = sbr.rel (0) target = $region37
  $region36: #{_lambda_.5} parent=0 // pred_region
    _
  $region37: #{_lambda_.5} parent=0 // pred_fallthru
    _
  // Predicated region
  $region38: #{_lambda_.5} parent=0 // pred_check
    _
  $region39: #{_lambda_.5} parent=0 // pred_check_branch
    %38 = sbr.rel (0) target = $region41
  $region40: #{_lambda_.5} parent=0 // pred_region
    _
  $region41: #{_lambda_.5} parent=0 // pred_fallthru
    _
  // Predicated region
  $region42: #{_lambda_.5} parent=0 // pred_check
    _
  $region43: #{_lambda_.5} parent=0 // pred_check_branch
    %40 = sbr.rel (0) target = $region45
  $region44: #{_lambda_.5} parent=0 // pred_region
    _
  $region45: #{_lambda_.5} parent=0 // pred_fallthru
    _
  // Predicated region
  $region46: #{_lambda_.5} parent=0 // pred_check
    _
  $region47: #{_lambda_.5} parent=0 // pred_check_branch
    %42 = sbr.rel (0) target = $region49
  $region48: #{_lambda_.5} parent=0 // pred_region
    _
  $region49: #{_lambda_.5} parent=0 // pred_fallthru
    _
  // Predicated region
  $region50: #{_lambda_.5} parent=0 // pred_check
    _
  $region51: #{_lambda_.5} parent=0 // pred_check_branch
    %44 = sbr.rel (0) target = $region53
  $region52: #{_lambda_.5} parent=0 // pred_region
    _
  $region53: #{_lambda_.5} parent=0 // pred_fallthru
    _
  // Predicated region
  $region54: #{_lambda_.5} parent=0 // pred_check
    _
  $region55: #{_lambda_.5} parent=0 // pred_check_branch
    %46 = sbr.rel (0) target = $region57
  $region56: #{_lambda_.5} parent=0 // pred_region
    _
  $region57: #{_lambda_.5} parent=0 // pred_fallthru
    _
  %v47 = vld [vmem:[%s0] sm:$0xff]
  %v48 = vld [vmem:[%s0 + $0x8] sm:$0xff]
  %v49 = vld [vmem:[%s0 + $0x10] sm:$0xff]
  %v50 = vld [vmem:[%s0 + $0x18] sm:$0xff]
  %v51 = vld [vmem:[%s0 + $0x20] sm:$0xff]
  %v52 = vld [vmem:[%s0 + $0x28] sm:$0xff]
  %v53 = vld [vmem:[%s0 + $0x30] sm:$0xff]
  %v54 = vld [vmem:[%s0 + $0x38] sm:$0xff]
  %v55 = vld [vmem:[%s0 + $0x40] sm:$0xff]
  %v56 = vld [vmem:[%s0 + $0x48] sm:$0xff]
  %v57 = vld [vmem:[%s0 + $0x50] sm:$0xff]
  %v58 = vld [vmem:[%s0 + $0x58] sm:$0xff]
  %v59 = vld [vmem:[%s0 + $0x60] sm:$0xff]
  %v60 = vld [vmem:[%s0 + $0x68] sm:$0xff]
  %v61 = vld [vmem:[%s0 + $0x70] sm:$0xff]
  %v62 = vld [vmem:[%s0 + $0x78] sm:$0xff]
  %v63 = vld [vmem:[%s2] sm:$0xff]
  %v64 = vld [vmem:[%s2 + $0x8] sm:$0xff]
  %v65 = vld [vmem:[%s2 + $0x10] sm:$0xff]
  %v66 = vld [vmem:[%s2 + $0x18] sm:$0xff]
  %v67 = vld [vmem:[%s2 + $0x20] sm:$0x7]
  %v68 = vld [vmem:[%s3] sm:$0x1]
  %v70 = vlaneseq
  %v71 = vshrl.u32 %v70, 7
  %v72 = vsub.s32 0, %v71
  %v73 = vrot.slane %v68, %v72
  %vm75 = vcmask 285696
  %v77 = vsel %vm75, %v47, 0
  %v80 = vsel %vm75, %v48, 0
  %v83 = vsel %vm75, %v49, 0
  %v86 = vsel %vm75, %v50, 0
  %v89 = vsel %vm75, %v51, 0
  %v92 = vsel %vm75, %v52, 0
  %v95 = vsel %vm75, %v53, 0
  %v98 = vsel %vm75, %v54, 0
  %v101 = vsel %vm75, %v55, 0
  %v104 = vsel %vm75, %v56, 0
  %v107 = vsel %vm75, %v57, 0
  %v110 = vsel %vm75, %v58, 0
  %v113 = vsel %vm75, %v59, 0
  %v116 = vsel %vm75, %v60, 0
  %v119 = vsel %vm75, %v61, 0
  %v122 = vsel %vm75, %v62, 0
  %vm124 = vcmask 1042432
  %v126 = vsel %vm124, %v67, 0
  %128 = vmatprep.subr.mxu0 0.0
  %129 = vmatpush1.msra.mxu0 %v63
  %130 = vmatprep.subr.mxu0 0.0
  %131 = vmatpush1.msra.mxu0 %v64
  %132 = vmatprep.subr.mxu0 0.0
  %133 = vmatpush1.msra.mxu0 %v65
  %134 = vmatprep.subr.mxu0 0.0
  %135 = vmatpush1.msra.mxu0 %v66
  %136 = vmatprep.subr.mxu0 0.0
  %137 = vmatpush1.msra.mxu0 %v126
  %138 = vmatprep.subr.mxu0 0.0
  %139 = vmatpush1.msra.mxu0 0.0
  %140 = vmatprep.subr.mxu0 0.0
  %141 = vmatpush1.msra.mxu0 0.0
  %142 = vmatprep.subr.mxu0 0.0
  %143 = vmatpush1.msra.mxu0 0.0
  %144 = vmatprep.subr.mxu0 0.0
  %145 = vmatpush1.msra.mxu0 0.0
  %146 = vmatprep.subr.mxu0 0.0
  %147 = vmatpush1.msra.mxu0 0.0
  %148 = vmatprep.subr.mxu0 0.0
  %149 = vmatpush1.msra.mxu0 0.0
  %150 = vmatprep.subr.mxu0 0.0
  %151 = vmatpush1.msra.mxu0 0.0
  %152 = vmatprep.subr.mxu0 0.0
  %153 = vmatpush1.msra.mxu0 0.0
  %154 = vmatprep.subr.mxu0 0.0
  %155 = vmatpush1.msra.mxu0 0.0
  %156 = vmatprep.subr.mxu0 0.0
  %157 = vmatpush1.msra.mxu0 0.0
  %158 = vmatprep.subr.mxu0 0.0
  %159 = vmatpush1.msra.mxu0 0.0
  %160 = vmatprep.subr.mxu0 0.0
  %161 = vmatpush1.msra.mxu0 0.0
  %162 = vmatprep.subr.mxu0 0.0
  %163 = vmatpush1.msra.mxu0 0.0
  %164 = vmatprep.subr.mxu0 0.0
  %165 = vmatpush1.msra.mxu0 0.0
  %166 = vmatprep.subr.mxu0 0.0
  %167 = vmatpush1.msra.mxu0 0.0
  %168 = vmatprep.subr.mxu0 0.0
  %169 = vmatpush1.msra.mxu0 0.0
  %170 = vmatprep.subr.mxu0 0.0
  %171 = vmatpush1.msra.mxu0 0.0
  %172 = vmatprep.subr.mxu0 0.0
  %173 = vmatpush1.msra.mxu0 0.0
  %174 = vmatprep.subr.mxu0 0.0
  %175 = vmatpush1.msra.mxu0 0.0
  %176 = vmatprep.subr.mxu0 0.0
  %177 = vmatpush1.msra.mxu0 0.0
  %178 = vmatprep.subr.mxu0 0.0
  %179 = vmatpush1.msra.mxu0 0.0
  %180 = vmatprep.subr.mxu0 0.0
  %181 = vmatpush1.msra.mxu0 0.0
  %182 = vmatprep.subr.mxu0 0.0
  %183 = vmatpush1.msra.mxu0 0.0
  %184 = vmatprep.subr.mxu0 0.0
  %185 = vmatpush1.msra.mxu0 0.0
  %186 = vmatprep.subr.mxu0 0.0
  %187 = vmatpush1.msra.mxu0 0.0
  %188 = vmatprep.subr.mxu0 0.0
  %189 = vmatpush1.msra.mxu0 0.0
  %190 = vmatprep.subr.mxu0 0.0
  %191 = vmatpush1.msra.mxu0 0.0
  %192 = vmatprep.mubr.f32.mxu0 0.0
  %193 = vmatmul.mubr.f32.gmra.mrb[0].mxu0 %v77
  %v194 = vpop.f32.mrb[0].mxu0
  %v195 = vadd.f32 %v73, %v194
  %v196 = vpop.f32.mrb[0].mxu0
  %197 = vmatprep.mubr.f32.mxu0 0.0
  %198 = vmatmul.mubr.f32.gmra.mrb[0].mxu0 %v80
  %v199 = vpop.f32.mrb[0].mxu0
  %v200 = vadd.f32 %v73, %v199
  %v201 = vpop.f32.mrb[0].mxu0
  %202 = vmatprep.mubr.f32.mxu0 0.0
  %203 = vmatmul.mubr.f32.gmra.mrb[0].mxu0 %v83
  %v204 = vpop.f32.mrb[0].mxu0
  %v205 = vadd.f32 %v73, %v204
  %v206 = vpop.f32.mrb[0].mxu0
  %207 = vmatprep.mubr.f32.mxu0 0.0
  %208 = vmatmul.mubr.f32.gmra.mrb[0].mxu0 %v86
  %v209 = vpop.f32.mrb[0].mxu0
  %v210 = vadd.f32 %v73, %v209
  %v211 = vpop.f32.mrb[0].mxu0
  %212 = vmatprep.mubr.f32.mxu0 0.0
  %213 = vmatmul.mubr.f32.gmra.mrb[0].mxu0 %v89
  %v214 = vpop.f32.mrb[0].mxu0
  %v215 = vadd.f32 %v73, %v214
  %v216 = vpop.f32.mrb[0].mxu0
  %217 = vmatprep.mubr.f32.mxu0 0.0
  %218 = vmatmul.mubr.f32.gmra.mrb[0].mxu0 %v92
  %v219 = vpop.f32.mrb[0].mxu0
  %v220 = vadd.f32 %v73, %v219
  %v221 = vpop.f32.mrb[0].mxu0
  %222 = vmatprep.mubr.f32.mxu0 0.0
  %223 = vmatmul.mubr.f32.gmra.mrb[0].mxu0 %v95
  %v224 = vpop.f32.mrb[0].mxu0
  %v225 = vadd.f32 %v73, %v224
  %v226 = vpop.f32.mrb[0].mxu0
  %227 = vmatprep.mubr.f32.mxu0 0.0
  %228 = vmatmul.mubr.f32.gmra.mrb[0].mxu0 %v98
  %v229 = vpop.f32.mrb[0].mxu0
  %v230 = vadd.f32 %v73, %v229
  %v231 = vpop.f32.mrb[0].mxu0
  %232 = vmatprep.mubr.f32.mxu0 0.0
  %233 = vmatmul.mubr.f32.gmra.mrb[0].mxu0 %v101
  %v234 = vpop.f32.mrb[0].mxu0
  %v235 = vadd.f32 %v73, %v234
  %v236 = vpop.f32.mrb[0].mxu0
  %237 = vmatprep.mubr.f32.mxu0 0.0
  %238 = vmatmul.mubr.f32.gmra.mrb[0].mxu0 %v104
  %v239 = vpop.f32.mrb[0].mxu0
  %v240 = vadd.f32 %v73, %v239
  %v241 = vpop.f32.mrb[0].mxu0
  %242 = vmatprep.mubr.f32.mxu0 0.0
  %243 = vmatmul.mubr.f32.gmra.mrb[0].mxu0 %v107
  %v244 = vpop.f32.mrb[0].mxu0
  %v245 = vadd.f32 %v73, %v244
  %v246 = vpop.f32.mrb[0].mxu0
  %247 = vmatprep.mubr.f32.mxu0 0.0
  %248 = vmatmul.mubr.f32.gmra.mrb[0].mxu0 %v110
  %v249 = vpop.f32.mrb[0].mxu0
  %v250 = vadd.f32 %v73, %v249
  %v251 = vpop.f32.mrb[0].mxu0
  %252 = vmatprep.mubr.f32.mxu0 0.0
  %253 = vmatmul.mubr.f32.gmra.mrb[0].mxu0 %v113
  %v254 = vpop.f32.mrb[0].mxu0
  %v255 = vadd.f32 %v73, %v254
  %v256 = vpop.f32.mrb[0].mxu0
  %257 = vmatprep.mubr.f32.mxu0 0.0
  %258 = vmatmul.mubr.f32.gmra.mrb[0].mxu0 %v116
  %v259 = vpop.f32.mrb[0].mxu0
  %v260 = vadd.f32 %v73, %v259
  %v261 = vpop.f32.mrb[0].mxu0
  %262 = vmatprep.mubr.f32.mxu0 0.0
  %263 = vmatmul.mubr.f32.gmra.mrb[0].mxu0 %v119
  %v264 = vpop.f32.mrb[0].mxu0
  %v265 = vadd.f32 %v73, %v264
  %v266 = vpop.f32.mrb[0].mxu0
  %267 = vmatprep.mubr.f32.mxu0 0.0
  %268 = vmatmul.mubr.f32.gmra.mrb[0].mxu0 %v122
  %v269 = vpop.f32.mrb[0].mxu0
  %v270 = vadd.f32 %v73, %v269
  %v271 = vpop.f32.mrb[0].mxu0
  %272 = vdwg.mxu0
  %v273 = vmax.f32 %v195, 0.0
  %v274 = vmax.f32 %v200, 0.0
  %v275 = vmax.f32 %v205, 0.0
  %v276 = vmax.f32 %v210, 0.0
  %v277 = vmax.f32 %v215, 0.0
  %v278 = vmax.f32 %v220, 0.0
  %v279 = vmax.f32 %v225, 0.0
  %v280 = vmax.f32 %v230, 0.0
  %v281 = vmax.f32 %v235, 0.0
  %v282 = vmax.f32 %v240, 0.0
  %v283 = vmax.f32 %v245, 0.0
  %v284 = vmax.f32 %v250, 0.0
  %v285 = vmax.f32 %v255, 0.0
  %v286 = vmax.f32 %v260, 0.0
  %v287 = vmax.f32 %v265, 0.0
  %v288 = vmax.f32 %v270, 0.0
  %v289 = vld [vmem:[%s4] sm:$0xff]
  %v290 = vld [vmem:[%s4 + $0x8] sm:$0xff]
  %v291 = vld [vmem:[%s5] sm:$0x1]
  %v293 = vlaneseq
  %v294 = vshrl.u32 %v293, 7
  %v295 = vsub.s32 0, %v294
  %v296 = vrot.slane %v291, %v295
  %vm298 = vcmask 130048
  %v300 = vsel %vm298, %v273, 0
  %v303 = vsel %vm298, %v274, 0
  %v306 = vsel %vm298, %v275, 0
  %v309 = vsel %vm298, %v276, 0
  %v312 = vsel %vm298, %v277, 0
  %v315 = vsel %vm298, %v278, 0
  %v318 = vsel %vm298, %v279, 0
  %v321 = vsel %vm298, %v280, 0
  %v324 = vsel %vm298, %v281, 0
  %v327 = vsel %vm298, %v282, 0
  %v330 = vsel %vm298, %v283, 0
  %v333 = vsel %vm298, %v284, 0
  %v336 = vsel %vm298, %v285, 0
  %v339 = vsel %vm298, %v286, 0
  %v342 = vsel %vm298, %v287, 0
  %v345 = vsel %vm298, %v288, 0
  %347 = vmatprep.subr.mxu0 0.0
  %348 = vmatpush1.msra.mxu0 %v289
  %349 = vmatprep.subr.mxu0 0.0
  %350 = vmatpush1.msra.mxu0 %v290
  %351 = vmatprep.subr.mxu0 0.0
  %352 = vmatpush1.msra.mxu0 0.0
  %353 = vmatprep.subr.mxu0 0.0
  %354 = vmatpush1.msra.mxu0 0.0
  %355 = vmatprep.subr.mxu0 0.0
  %356 = vmatpush1.msra.mxu0 0.0
  %357 = vmatprep.subr.mxu0 0.0
  %358 = vmatpush1.msra.mxu0 0.0
  %359 = vmatprep.subr.mxu0 0.0
  %360 = vmatpush1.msra.mxu0 0.0
  %361 = vmatprep.subr.mxu0 0.0
  %362 = vmatpush1.msra.mxu0 0.0
  %363 = vmatprep.subr.mxu0 0.0
  %364 = vmatpush1.msra.mxu0 0.0
  %365 = vmatprep.subr.mxu0 0.0
  %366 = vmatpush1.msra.mxu0 0.0
  %367 = vmatprep.subr.mxu0 0.0
  %368 = vmatpush1.msra.mxu0 0.0
  %369 = vmatprep.subr.mxu0 0.0
  %370 = vmatpush1.msra.mxu0 0.0
  %371 = vmatprep.subr.mxu0 0.0
  %372 = vmatpush1.msra.mxu0 0.0
  %373 = vmatprep.subr.mxu0 0.0
  %374 = vmatpush1.msra.mxu0 0.0
  %375 = vmatprep.subr.mxu0 0.0
  %376 = vmatpush1.msra.mxu0 0.0
  %377 = vmatprep.subr.mxu0 0.0
  %378 = vmatpush1.msra.mxu0 0.0
  %379 = vmatprep.subr.mxu0 0.0
  %380 = vmatpush1.msra.mxu0 0.0
  %381 = vmatprep.subr.mxu0 0.0
  %382 = vmatpush1.msra.mxu0 0.0
  %383 = vmatprep.subr.mxu0 0.0
  %384 = vmatpush1.msra.mxu0 0.0
  %385 = vmatprep.subr.mxu0 0.0
  %386 = vmatpush1.msra.mxu0 0.0
  %387 = vmatprep.subr.mxu0 0.0
  %388 = vmatpush1.msra.mxu0 0.0
  %389 = vmatprep.subr.mxu0 0.0
  %390 = vmatpush1.msra.mxu0 0.0
  %391 = vmatprep.subr.mxu0 0.0
  %392 = vmatpush1.msra.mxu0 0.0
  %393 = vmatprep.subr.mxu0 0.0
  %394 = vmatpush1.msra.mxu0 0.0
  %395 = vmatprep.subr.mxu0 0.0
  %396 = vmatpush1.msra.mxu0 0.0
  %397 = vmatprep.subr.mxu0 0.0
  %398 = vmatpush1.msra.mxu0 0.0
  %399 = vmatprep.subr.mxu0 0.0
  %400 = vmatpush1.msra.mxu0 0.0
  %401 = vmatprep.subr.mxu0 0.0
  %402 = vmatpush1.msra.mxu0 0.0
  %403 = vmatprep.subr.mxu0 0.0
  %404 = vmatpush1.msra.mxu0 0.0
  %405 = vmatprep.subr.mxu0 0.0
  %406 = vmatpush1.msra.mxu0 0.0
  %407 = vmatprep.subr.mxu0 0.0
  %408 = vmatpush1.msra.mxu0 0.0
  %409 = vmatprep.subr.mxu0 0.0
  %410 = vmatpush1.msra.mxu0 0.0
  %411 = vmatprep.mubr.f32.mxu0 0.0
  %412 = vmatmul.mubr.f32.gmra.mrb[0].mxu0 %v300
  %v413 = vpop.f32.mrb[0].mxu0
  %v414 = vadd.f32 %v296, %v413
  %v415 = vpop.f32.mrb[0].mxu0
  %416 = vmatprep.mubr.f32.mxu0 0.0
  %417 = vmatmul.mubr.f32.gmra.mrb[0].mxu0 %v303
  %v418 = vpop.f32.mrb[0].mxu0
  %v419 = vadd.f32 %v296, %v418
  %v420 = vpop.f32.mrb[0].mxu0
  %421 = vmatprep.mubr.f32.mxu0 0.0
  %422 = vmatmul.mubr.f32.gmra.mrb[0].mxu0 %v306
  %v423 = vpop.f32.mrb[0].mxu0
  %v424 = vadd.f32 %v296, %v423
  %v425 = vpop.f32.mrb[0].mxu0
  %426 = vmatprep.mubr.f32.mxu0 0.0
  %427 = vmatmul.mubr.f32.gmra.mrb[0].mxu0 %v309
  %v428 = vpop.f32.mrb[0].mxu0
  %v429 = vadd.f32 %v296, %v428
  %v430 = vpop.f32.mrb[0].mxu0
  %431 = vmatprep.mubr.f32.mxu0 0.0
  %432 = vmatmul.mubr.f32.gmra.mrb[0].mxu0 %v312
  %v433 = vpop.f32.mrb[0].mxu0
  %v434 = vadd.f32 %v296, %v433
  %v435 = vpop.f32.mrb[0].mxu0
  %436 = vmatprep.mubr.f32.mxu0 0.0
  %437 = vmatmul.mubr.f32.gmra.mrb[0].mxu0 %v315
  %v438 = vpop.f32.mrb[0].mxu0
  %v439 = vadd.f32 %v296, %v438
  %v440 = vpop.f32.mrb[0].mxu0
  %441 = vmatprep.mubr.f32.mxu0 0.0
  %442 = vmatmul.mubr.f32.gmra.mrb[0].mxu0 %v318
  %v443 = vpop.f32.mrb[0].mxu0
  %v444 = vadd.f32 %v296, %v443
  %v445 = vpop.f32.mrb[0].mxu0
  %446 = vmatprep.mubr.f32.mxu0 0.0
  %447 = vmatmul.mubr.f32.gmra.mrb[0].mxu0 %v321
  %v448 = vpop.f32.mrb[0].mxu0
  %v449 = vadd.f32 %v296, %v448
  %v450 = vpop.f32.mrb[0].mxu0
  %451 = vmatprep.mubr.f32.mxu0 0.0
  %452 = vmatmul.mubr.f32.gmra.mrb[0].mxu0 %v324
  %v453 = vpop.f32.mrb[0].mxu0
  %v454 = vadd.f32 %v296, %v453
  %v455 = vpop.f32.mrb[0].mxu0
  %456 = vmatprep.mubr.f32.mxu0 0.0
  %457 = vmatmul.mubr.f32.gmra.mrb[0].mxu0 %v327
  %v458 = vpop.f32.mrb[0].mxu0
  %v459 = vadd.f32 %v296, %v458
  %v460 = vpop.f32.mrb[0].mxu0
  %461 = vmatprep.mubr.f32.mxu0 0.0
  %462 = vmatmul.mubr.f32.gmra.mrb[0].mxu0 %v330
  %v463 = vpop.f32.mrb[0].mxu0
  %v464 = vadd.f32 %v296, %v463
  %v465 = vpop.f32.mrb[0].mxu0
  %466 = vmatprep.mubr.f32.mxu0 0.0
  %467 = vmatmul.mubr.f32.gmra.mrb[0].mxu0 %v333
  %v468 = vpop.f32.mrb[0].mxu0
  %v469 = vadd.f32 %v296, %v468
  %v470 = vpop.f32.mrb[0].mxu0
  %471 = vmatprep.mubr.f32.mxu0 0.0
  %472 = vmatmul.mubr.f32.gmra.mrb[0].mxu0 %v336
  %v473 = vpop.f32.mrb[0].mxu0
  %v474 = vadd.f32 %v296, %v473
  %v475 = vpop.f32.mrb[0].mxu0
  %476 = vmatprep.mubr.f32.mxu0 0.0
  %477 = vmatmul.mubr.f32.gmra.mrb[0].mxu0 %v339
  %v478 = vpop.f32.mrb[0].mxu0
  %v479 = vadd.f32 %v296, %v478
  %v480 = vpop.f32.mrb[0].mxu0
  %481 = vmatprep.mubr.f32.mxu0 0.0
  %482 = vmatmul.mubr.f32.gmra.mrb[0].mxu0 %v342
  %v483 = vpop.f32.mrb[0].mxu0
  %v484 = vadd.f32 %v296, %v483
  %v485 = vpop.f32.mrb[0].mxu0
  %486 = vmatprep.mubr.f32.mxu0 0.0
  %487 = vmatmul.mubr.f32.gmra.mrb[0].mxu0 %v345
  %v488 = vpop.f32.mrb[0].mxu0
  %v489 = vadd.f32 %v296, %v488
  %v490 = vpop.f32.mrb[0].mxu0
  %491 = vdwg.mxu0
  %v492 = vmax.f32 %v414, 0.0
  %v493 = vmax.f32 %v419, 0.0
  %v494 = vmax.f32 %v424, 0.0
  %v495 = vmax.f32 %v429, 0.0
  %v496 = vmax.f32 %v434, 0.0
  %v497 = vmax.f32 %v439, 0.0
  %v498 = vmax.f32 %v444, 0.0
  %v499 = vmax.f32 %v449, 0.0
  %v500 = vmax.f32 %v454, 0.0
  %v501 = vmax.f32 %v459, 0.0
  %v502 = vmax.f32 %v464, 0.0
  %v503 = vmax.f32 %v469, 0.0
  %v504 = vmax.f32 %v474, 0.0
  %v505 = vmax.f32 %v479, 0.0
  %v506 = vmax.f32 %v484, 0.0
  %v507 = vmax.f32 %v489, 0.0
  %v508 = vld [vmem:[%s6] sm:$0xff]
  %v509 = vld [vmem:[%s6 + $0x8] sm:$0xff]
  %v510 = vld [vmem:[%s7] sm:$0x1]
  %v512 = vlaneseq
  %v513 = vshrl.u32 %v512, 7
  %v514 = vsub.s32 0, %v513
  %v515 = vrot.slane %v510, %v514
  %v518 = vsel %vm298, %v492, 0
  %v521 = vsel %vm298, %v493, 0
  %v524 = vsel %vm298, %v494, 0
  %v527 = vsel %vm298, %v495, 0
  %v530 = vsel %vm298, %v496, 0
  %v533 = vsel %vm298, %v497, 0
  %v536 = vsel %vm298, %v498, 0
  %v539 = vsel %vm298, %v499, 0
  %v542 = vsel %vm298, %v500, 0
  %v545 = vsel %vm298, %v501, 0
  %v548 = vsel %vm298, %v502, 0
  %v551 = vsel %vm298, %v503, 0
  %v554 = vsel %vm298, %v504, 0
  %v557 = vsel %vm298, %v505, 0
  %v560 = vsel %vm298, %v506, 0
  %v563 = vsel %vm298, %v507, 0
  %565 = vmatprep.subr.mxu0 0.0
  %566 = vmatpush1.msra.mxu0 %v508
  %567 = vmatprep.subr.mxu0 0.0
  %568 = vmatpush1.msra.mxu0 %v509
  %569 = vmatprep.subr.mxu0 0.0
  %570 = vmatpush1.msra.mxu0 0.0
  %571 = vmatprep.subr.mxu0 0.0
  %572 = vmatpush1.msra.mxu0 0.0
  %573 = vmatprep.subr.mxu0 0.0
  %574 = vmatpush1.msra.mxu0 0.0
  %575 = vmatprep.subr.mxu0 0.0
  %576 = vmatpush1.msra.mxu0 0.0
  %577 = vmatprep.subr.mxu0 0.0
  %578 = vmatpush1.msra.mxu0 0.0
  %579 = vmatprep.subr.mxu0 0.0
  %580 = vmatpush1.msra.mxu0 0.0
  %581 = vmatprep.subr.mxu0 0.0
  %582 = vmatpush1.msra.mxu0 0.0
  %583 = vmatprep.subr.mxu0 0.0
  %584 = vmatpush1.msra.mxu0 0.0
  %585 = vmatprep.subr.mxu0 0.0
  %586 = vmatpush1.msra.mxu0 0.0
  %587 = vmatprep.subr.mxu0 0.0
  %588 = vmatpush1.msra.mxu0 0.0
  %589 = vmatprep.subr.mxu0 0.0
  %590 = vmatpush1.msra.mxu0 0.0
  %591 = vmatprep.subr.mxu0 0.0
  %592 = vmatpush1.msra.mxu0 0.0
  %593 = vmatprep.subr.mxu0 0.0
  %594 = vmatpush1.msra.mxu0 0.0
  %595 = vmatprep.subr.mxu0 0.0
  %596 = vmatpush1.msra.mxu0 0.0
  %597 = vmatprep.subr.mxu0 0.0
  %598 = vmatpush1.msra.mxu0 0.0
  %599 = vmatprep.subr.mxu0 0.0
  %600 = vmatpush1.msra.mxu0 0.0
  %601 = vmatprep.subr.mxu0 0.0
  %602 = vmatpush1.msra.mxu0 0.0
  %603 = vmatprep.subr.mxu0 0.0
  %604 = vmatpush1.msra.mxu0 0.0
  %605 = vmatprep.subr.mxu0 0.0
  %606 = vmatpush1.msra.mxu0 0.0
  %607 = vmatprep.subr.mxu0 0.0
  %608 = vmatpush1.msra.mxu0 0.0
  %609 = vmatprep.subr.mxu0 0.0
  %610 = vmatpush1.msra.mxu0 0.0
  %611 = vmatprep.subr.mxu0 0.0
  %612 = vmatpush1.msra.mxu0 0.0
  %613 = vmatprep.subr.mxu0 0.0
  %614 = vmatpush1.msra.mxu0 0.0
  %615 = vmatprep.subr.mxu0 0.0
  %616 = vmatpush1.msra.mxu0 0.0
  %617 = vmatprep.subr.mxu0 0.0
  %618 = vmatpush1.msra.mxu0 0.0
  %619 = vmatprep.subr.mxu0 0.0
  %620 = vmatpush1.msra.mxu0 0.0
  %621 = vmatprep.subr.mxu0 0.0
  %622 = vmatpush1.msra.mxu0 0.0
  %623 = vmatprep.subr.mxu0 0.0
  %624 = vmatpush1.msra.mxu0 0.0
  %625 = vmatprep.subr.mxu0 0.0
  %626 = vmatpush1.msra.mxu0 0.0
  %627 = vmatprep.subr.mxu0 0.0
  %628 = vmatpush1.msra.mxu0 0.0
  %629 = vmatprep.mubr.f32.mxu0 0.0
  %630 = vmatmul.mubr.f32.gmra.mrb[0].mxu0 %v518
  %v631 = vpop.f32.mrb[0].mxu0
  %v632 = vadd.f32 %v515, %v631
  %v633 = vpop.f32.mrb[0].mxu0
  %634 = vmatprep.mubr.f32.mxu0 0.0
  %635 = vmatmul.mubr.f32.gmra.mrb[0].mxu0 %v521
  %v636 = vpop.f32.mrb[0].mxu0
  %v637 = vadd.f32 %v515, %v636
  %v638 = vpop.f32.mrb[0].mxu0
  %639 = vmatprep.mubr.f32.mxu0 0.0
  %640 = vmatmul.mubr.f32.gmra.mrb[0].mxu0 %v524
  %v641 = vpop.f32.mrb[0].mxu0
  %v642 = vadd.f32 %v515, %v641
  %v643 = vpop.f32.mrb[0].mxu0
  %644 = vmatprep.mubr.f32.mxu0 0.0
  %645 = vmatmul.mubr.f32.gmra.mrb[0].mxu0 %v527
  %v646 = vpop.f32.mrb[0].mxu0
  %v647 = vadd.f32 %v515, %v646
  %v648 = vpop.f32.mrb[0].mxu0
  %649 = vmatprep.mubr.f32.mxu0 0.0
  %650 = vmatmul.mubr.f32.gmra.mrb[0].mxu0 %v530
  %v651 = vpop.f32.mrb[0].mxu0
  %v652 = vadd.f32 %v515, %v651
  %v653 = vpop.f32.mrb[0].mxu0
  %654 = vmatprep.mubr.f32.mxu0 0.0
  %655 = vmatmul.mubr.f32.gmra.mrb[0].mxu0 %v533
  %v656 = vpop.f32.mrb[0].mxu0
  %v657 = vadd.f32 %v515, %v656
  %v658 = vpop.f32.mrb[0].mxu0
  %659 = vmatprep.mubr.f32.mxu0 0.0
  %660 = vmatmul.mubr.f32.gmra.mrb[0].mxu0 %v536
  %v661 = vpop.f32.mrb[0].mxu0
  %v662 = vadd.f32 %v515, %v661
  %v663 = vpop.f32.mrb[0].mxu0
  %664 = vmatprep.mubr.f32.mxu0 0.0
  %665 = vmatmul.mubr.f32.gmra.mrb[0].mxu0 %v539
  %v666 = vpop.f32.mrb[0].mxu0
  %v667 = vadd.f32 %v515, %v666
  %v668 = vpop.f32.mrb[0].mxu0
  %669 = vmatprep.mubr.f32.mxu0 0.0
  %670 = vmatmul.mubr.f32.gmra.mrb[0].mxu0 %v542
  %v671 = vpop.f32.mrb[0].mxu0
  %v672 = vadd.f32 %v515, %v671
  %v673 = vpop.f32.mrb[0].mxu0
  %674 = vmatprep.mubr.f32.mxu0 0.0
  %675 = vmatmul.mubr.f32.gmra.mrb[0].mxu0 %v545
  %v676 = vpop.f32.mrb[0].mxu0
  %v677 = vadd.f32 %v515, %v676
  %v678 = vpop.f32.mrb[0].mxu0
  %679 = vmatprep.mubr.f32.mxu0 0.0
  %680 = vmatmul.mubr.f32.gmra.mrb[0].mxu0 %v548
  %v681 = vpop.f32.mrb[0].mxu0
  %v682 = vadd.f32 %v515, %v681
  %v683 = vpop.f32.mrb[0].mxu0
  %684 = vmatprep.mubr.f32.mxu0 0.0
  %685 = vmatmul.mubr.f32.gmra.mrb[0].mxu0 %v551
  %v686 = vpop.f32.mrb[0].mxu0
  %v687 = vadd.f32 %v515, %v686
  %v688 = vpop.f32.mrb[0].mxu0
  %689 = vmatprep.mubr.f32.mxu0 0.0
  %690 = vmatmul.mubr.f32.gmra.mrb[0].mxu0 %v554
  %v691 = vpop.f32.mrb[0].mxu0
  %v692 = vadd.f32 %v515, %v691
  %v693 = vpop.f32.mrb[0].mxu0
  %694 = vmatprep.mubr.f32.mxu0 0.0
  %695 = vmatmul.mubr.f32.gmra.mrb[0].mxu0 %v557
  %v696 = vpop.f32.mrb[0].mxu0
  %v697 = vadd.f32 %v515, %v696
  %v698 = vpop.f32.mrb[0].mxu0
  %699 = vmatprep.mubr.f32.mxu0 0.0
  %700 = vmatmul.mubr.f32.gmra.mrb[0].mxu0 %v560
  %v701 = vpop.f32.mrb[0].mxu0
  %v702 = vadd.f32 %v515, %v701
  %v703 = vpop.f32.mrb[0].mxu0
  %704 = vmatprep.mubr.f32.mxu0 0.0
  %705 = vmatmul.mubr.f32.gmra.mrb[0].mxu0 %v563
  %v706 = vpop.f32.mrb[0].mxu0
  %v707 = vadd.f32 %v515, %v706
  %v708 = vpop.f32.mrb[0].mxu0
  %709 = vdwg.mxu0
  %v710 = vmax.f32 %v632, 0.0
  %v711 = vmax.f32 %v637, 0.0
  %v712 = vmax.f32 %v642, 0.0
  %v713 = vmax.f32 %v647, 0.0
  %v714 = vmax.f32 %v652, 0.0
  %v715 = vmax.f32 %v657, 0.0
  %v716 = vmax.f32 %v662, 0.0
  %v717 = vmax.f32 %v667, 0.0
  %v718 = vmax.f32 %v672, 0.0
  %v719 = vmax.f32 %v677, 0.0
  %v720 = vmax.f32 %v682, 0.0
  %v721 = vmax.f32 %v687, 0.0
  %v722 = vmax.f32 %v692, 0.0
  %v723 = vmax.f32 %v697, 0.0
  %v724 = vmax.f32 %v702, 0.0
  %v725 = vmax.f32 %v707, 0.0
  %vm726 = vcmask 261120
  %v727 = vsel %vm726, %v710, -inf
  %v728 = vrot.slane %v727, 4
  %v729 = vmax.f32 %v727, %v728
  %v730 = vrot.slane %v729, 2
  %v731 = vmax.f32 %v729, %v730
  %v732 = vrot.slane %v731, 1
  %v733 = vmax.f32 %v731, %v732
  %v734 = vsel %vm726, %v711, -inf
  %v735 = vrot.slane %v734, 4
  %v736 = vmax.f32 %v734, %v735
  %v737 = vrot.slane %v736, 2
  %v738 = vmax.f32 %v736, %v737
  %v739 = vrot.slane %v738, 1
  %v740 = vmax.f32 %v738, %v739
  %v741 = vsel %vm726, %v712, -inf
  %v742 = vrot.slane %v741, 4
  %v743 = vmax.f32 %v741, %v742
  %v744 = vrot.slane %v743, 2
  %v745 = vmax.f32 %v743, %v744
  %v746 = vrot.slane %v745, 1
  %v747 = vmax.f32 %v745, %v746
  %v748 = vsel %vm726, %v713, -inf
  %v749 = vrot.slane %v748, 4
  %v750 = vmax.f32 %v748, %v749
  %v751 = vrot.slane %v750, 2
  %v752 = vmax.f32 %v750, %v751
  %v753 = vrot.slane %v752, 1
  %v754 = vmax.f32 %v752, %v753
  %v755 = vsel %vm726, %v714, -inf
  %v756 = vrot.slane %v755, 4
  %v757 = vmax.f32 %v755, %v756
  %v758 = vrot.slane %v757, 2
  %v759 = vmax.f32 %v757, %v758
  %v760 = vrot.slane %v759, 1
  %v761 = vmax.f32 %v759, %v760
  %v762 = vsel %vm726, %v715, -inf
  %v763 = vrot.slane %v762, 4
  %v764 = vmax.f32 %v762, %v763
  %v765 = vrot.slane %v764, 2
  %v766 = vmax.f32 %v764, %v765
  %v767 = vrot.slane %v766, 1
  %v768 = vmax.f32 %v766, %v767
  %v769 = vsel %vm726, %v716, -inf
  %v770 = vrot.slane %v769, 4
  %v771 = vmax.f32 %v769, %v770
  %v772 = vrot.slane %v771, 2
  %v773 = vmax.f32 %v771, %v772
  %v774 = vrot.slane %v773, 1
  %v775 = vmax.f32 %v773, %v774
  %v776 = vsel %vm726, %v717, -inf
  %v777 = vrot.slane %v776, 4
  %v778 = vmax.f32 %v776, %v777
  %v779 = vrot.slane %v778, 2
  %v780 = vmax.f32 %v778, %v779
  %v781 = vrot.slane %v780, 1
  %v782 = vmax.f32 %v780, %v781
  %v783 = vsel %vm726, %v718, -inf
  %v784 = vrot.slane %v783, 4
  %v785 = vmax.f32 %v783, %v784
  %v786 = vrot.slane %v785, 2
  %v787 = vmax.f32 %v785, %v786
  %v788 = vrot.slane %v787, 1
  %v789 = vmax.f32 %v787, %v788
  %v790 = vsel %vm726, %v719, -inf
  %v791 = vrot.slane %v790, 4
  %v792 = vmax.f32 %v790, %v791
  %v793 = vrot.slane %v792, 2
  %v794 = vmax.f32 %v792, %v793
  %v795 = vrot.slane %v794, 1
  %v796 = vmax.f32 %v794, %v795
  %v797 = vsel %vm726, %v720, -inf
  %v798 = vrot.slane %v797, 4
  %v799 = vmax.f32 %v797, %v798
  %v800 = vrot.slane %v799, 2
  %v801 = vmax.f32 %v799, %v800
  %v802 = vrot.slane %v801, 1
  %v803 = vmax.f32 %v801, %v802
  %v804 = vsel %vm726, %v721, -inf
  %v805 = vrot.slane %v804, 4
  %v806 = vmax.f32 %v804, %v805
  %v807 = vrot.slane %v806, 2
  %v808 = vmax.f32 %v806, %v807
  %v809 = vrot.slane %v808, 1
  %v810 = vmax.f32 %v808, %v809
  %v811 = vsel %vm726, %v722, -inf
  %v812 = vrot.slane %v811, 4
  %v813 = vmax.f32 %v811, %v812
  %v814 = vrot.slane %v813, 2
  %v815 = vmax.f32 %v813, %v814
  %v816 = vrot.slane %v815, 1
  %v817 = vmax.f32 %v815, %v816
  %v818 = vsel %vm726, %v723, -inf
  %v819 = vrot.slane %v818, 4
  %v820 = vmax.f32 %v818, %v819
  %v821 = vrot.slane %v820, 2
  %v822 = vmax.f32 %v820, %v821
  %v823 = vrot.slane %v822, 1
  %v824 = vmax.f32 %v822, %v823
  %v825 = vsel %vm726, %v724, -inf
  %v826 = vrot.slane %v825, 4
  %v827 = vmax.f32 %v825, %v826
  %v828 = vrot.slane %v827, 2
  %v829 = vmax.f32 %v827, %v828
  %v830 = vrot.slane %v829, 1
  %v831 = vmax.f32 %v829, %v830
  %v832 = vsel %vm726, %v725, -inf
  %v833 = vrot.slane %v832, 4
  %v834 = vmax.f32 %v832, %v833
  %v835 = vrot.slane %v834, 2
  %v836 = vmax.f32 %v834, %v835
  %v837 = vrot.slane %v836, 1
  %v838 = vmax.f32 %v836, %v837
  %v839 = vld [vmem:[%s1] sm:$0xff]
  %v840 = vld [vmem:[%s1 + $0x8] sm:$0xff]
  %v841 = vld [vmem:[%s1 + $0x10] sm:$0xff]
  %v842 = vld [vmem:[%s1 + $0x18] sm:$0xff]
  %v843 = vld [vmem:[%s1 + $0x20] sm:$0xff]
  %v844 = vld [vmem:[%s1 + $0x28] sm:$0xff]
  %v845 = vld [vmem:[%s1 + $0x30] sm:$0xff]
  %v846 = vld [vmem:[%s1 + $0x38] sm:$0xff]
  %v847 = vld [vmem:[%s1 + $0x40] sm:$0xff]
  %v848 = vld [vmem:[%s1 + $0x48] sm:$0xff]
  %v849 = vld [vmem:[%s1 + $0x50] sm:$0xff]
  %v850 = vld [vmem:[%s1 + $0x58] sm:$0xff]
  %v851 = vld [vmem:[%s1 + $0x60] sm:$0xff]
  %v852 = vld [vmem:[%s1 + $0x68] sm:$0xff]
  %v853 = vld [vmem:[%s1 + $0x70] sm:$0xff]
  %v854 = vld [vmem:[%s1 + $0x78] sm:$0xff]
  %v855 = vld [vmem:[%s1 + $0x80] sm:$0xff]
  %v856 = vld [vmem:[%s1 + $0x88] sm:$0xff]
  %v857 = vld [vmem:[%s1 + $0x90] sm:$0xff]
  %v858 = vld [vmem:[%s1 + $0x98] sm:$0xff]
  %v859 = vld [vmem:[%s1 + $0xa0] sm:$0xff]
  %v860 = vld [vmem:[%s1 + $0xa8] sm:$0xff]
  %v861 = vld [vmem:[%s1 + $0xb0] sm:$0xff]
  %v862 = vld [vmem:[%s1 + $0xb8] sm:$0xff]
  %v863 = vld [vmem:[%s1 + $0xc0] sm:$0xff]
  %v864 = vld [vmem:[%s1 + $0xc8] sm:$0xff]
  %v865 = vld [vmem:[%s1 + $0xd0] sm:$0xff]
  %v866 = vld [vmem:[%s1 + $0xd8] sm:$0xff]
  %v867 = vld [vmem:[%s1 + $0xe0] sm:$0xff]
  %v868 = vld [vmem:[%s1 + $0xe8] sm:$0xff]
  %v869 = vld [vmem:[%s1 + $0xf0] sm:$0xff]
  %v870 = vld [vmem:[%s1 + $0xf8] sm:$0xff]
  %v871 = vld [vmem:[%s8] sm:$0xff]
  %v872 = vld [vmem:[%s8 + $0x8] sm:$0xff]
  %v873 = vld [vmem:[%s8 + $0x10] sm:$0xff]
  %v874 = vld [vmem:[%s8 + $0x18] sm:$0xff]
  %v875 = vld [vmem:[%s8 + $0x20] sm:$0x7]
  %v876 = vld [vmem:[%s9] sm:$0x1]
  %v878 = vlaneseq
  %v879 = vshrl.u32 %v878, 7
  %v880 = vsub.s32 0, %v879
  %v881 = vrot.slane %v876, %v880
  %v884 = vsel %vm75, %v839, 0
  %v887 = vsel %vm75, %v840, 0
  %v890 = vsel %vm75, %v841, 0
  %v893 = vsel %vm75, %v842, 0
  %v896 = vsel %vm75, %v843, 0
  %v899 = vsel %vm75, %v844, 0
  %v902 = vsel %vm75, %v845, 0
  %v905 = vsel %vm75, %v846, 0
  %v908 = vsel %vm75, %v847, 0
  %v911 = vsel %vm75, %v848, 0
  %v914 = vsel %vm75, %v849, 0
  %v917 = vsel %vm75, %v850, 0
  %v920 = vsel %vm75, %v851, 0
  %v923 = vsel %vm75, %v852, 0
  %v926 = vsel %vm75, %v853, 0
  %v929 = vsel %vm75, %v854, 0
  %v932 = vsel %vm75, %v855, 0
  %v935 = vsel %vm75, %v856, 0
  %v938 = vsel %vm75, %v857, 0
  %v941 = vsel %vm75, %v858, 0
  %v944 = vsel %vm75, %v859, 0
  %v947 = vsel %vm75, %v860, 0
  %v950 = vsel %vm75, %v861, 0
  %v953 = vsel %vm75, %v862, 0
  %v956 = vsel %vm75, %v863, 0
  %v959 = vsel %vm75, %v864, 0
  %v962 = vsel %vm75, %v865, 0
  %v965 = vsel %vm75, %v866, 0
  %v968 = vsel %vm75, %v867, 0
  %v971 = vsel %vm75, %v868, 0
  %v974 = vsel %vm75, %v869, 0
  %v977 = vsel %vm75, %v870, 0
  %v980 = vsel %vm124, %v875, 0
  %982 = vmatprep.subr.mxu0 0.0
  %983 = vmatpush1.msra.mxu0 %v871
  %984 = vmatprep.subr.mxu0 0.0
  %985 = vmatpush1.msra.mxu0 %v872
  %986 = vmatprep.subr.mxu0 0.0
  %987 = vmatpush1.msra.mxu0 %v873
  %988 = vmatprep.subr.mxu0 0.0
  %989 = vmatpush1.msra.mxu0 %v874
  %990 = vmatprep.subr.mxu0 0.0
  %991 = vmatpush1.msra.mxu0 %v980
  %992 = vmatprep.subr.mxu0 0.0
  %993 = vmatpush1.msra.mxu0 0.0
  %994 = vmatprep.subr.mxu0 0.0
  %995 = vmatpush1.msra.mxu0 0.0
  %996 = vmatprep.subr.mxu0 0.0
  %997 = vmatpush1.msra.mxu0 0.0
  %998 = vmatprep.subr.mxu0 0.0
  %999 = vmatpush1.msra.mxu0 0.0
  %1000 = vmatprep.subr.mxu0 0.0
  %1001 = vmatpush1.msra.mxu0 0.0
  %1002 = vmatprep.subr.mxu0 0.0
  %1003 = vmatpush1.msra.mxu0 0.0
  %1004 = vmatprep.subr.mxu0 0.0
  %1005 = vmatpush1.msra.mxu0 0.0
  %1006 = vmatprep.subr.mxu0 0.0
  %1007 = vmatpush1.msra.mxu0 0.0
  %1008 = vmatprep.subr.mxu0 0.0
  %1009 = vmatpush1.msra.mxu0 0.0
  %1010 = vmatprep.subr.mxu0 0.0
  %1011 = vmatpush1.msra.mxu0 0.0
  %1012 = vmatprep.subr.mxu0 0.0
  %1013 = vmatpush1.msra.mxu0 0.0
  %1014 = vmatprep.subr.mxu0 0.0
  %1015 = vmatpush1.msra.mxu0 0.0
  %1016 = vmatprep.subr.mxu0 0.0
  %1017 = vmatpush1.msra.mxu0 0.0
  %1018 = vmatprep.subr.mxu0 0.0
  %1019 = vmatpush1.msra.mxu0 0.0
  %1020 = vmatprep.subr.mxu0 0.0
  %1021 = vmatpush1.msra.mxu0 0.0
  %1022 = vmatprep.subr.mxu0 0.0
  %1023 = vmatpush1.msra.mxu0 0.0
  %1024 = vmatprep.subr.mxu0 0.0
  %1025 = vmatpush1.msra.mxu0 0.0
  %1026 = vmatprep.subr.mxu0 0.0
  %1027 = vmatpush1.msra.mxu0 0.0
  %1028 = vmatprep.subr.mxu0 0.0
  %1029 = vmatpush1.msra.mxu0 0.0
  %1030 = vmatprep.subr.mxu0 0.0
  %1031 = vmatpush1.msra.mxu0 0.0
  %1032 = vmatprep.subr.mxu0 0.0
  %1033 = vmatpush1.msra.mxu0 0.0
  %1034 = vmatprep.subr.mxu0 0.0
  %1035 = vmatpush1.msra.mxu0 0.0
  %1036 = vmatprep.subr.mxu0 0.0
  %1037 = vmatpush1.msra.mxu0 0.0
  %1038 = vmatprep.subr.mxu0 0.0
  %1039 = vmatpush1.msra.mxu0 0.0
  %1040 = vmatprep.subr.mxu0 0.0
  %1041 = vmatpush1.msra.mxu0 0.0
  %1042 = vmatprep.subr.mxu0 0.0
  %1043 = vmatpush1.msra.mxu0 0.0
  %1044 = vmatprep.subr.mxu0 0.0
  %1045 = vmatpush1.msra.mxu0 0.0
  %1046 = vmatprep.mubr.f32.mxu0 0.0
  %1047 = vmatmul.mubr.f32.gmra.mrb[0].mxu0 %v884
  %v1048 = vpop.f32.mrb[0].mxu0
  %v1049 = vadd.f32 %v881, %v1048
  %v1050 = vpop.f32.mrb[0].mxu0
  %1051 = vmatprep.mubr.f32.mxu0 0.0
  %1052 = vmatmul.mubr.f32.gmra.mrb[0].mxu0 %v887
  %v1053 = vpop.f32.mrb[0].mxu0
  %v1054 = vadd.f32 %v881, %v1053
  %v1055 = vpop.f32.mrb[0].mxu0
  %1056 = vmatprep.mubr.f32.mxu0 0.0
  %1057 = vmatmul.mubr.f32.gmra.mrb[0].mxu0 %v890
  %v1058 = vpop.f32.mrb[0].mxu0
  %v1059 = vadd.f32 %v881, %v1058
  %v1060 = vpop.f32.mrb[0].mxu0
  %1061 = vmatprep.mubr.f32.mxu0 0.0
  %1062 = vmatmul.mubr.f32.gmra.mrb[0].mxu0 %v893
  %v1063 = vpop.f32.mrb[0].mxu0
  %v1064 = vadd.f32 %v881, %v1063
  %v1065 = vpop.f32.mrb[0].mxu0
  %1066 = vmatprep.mubr.f32.mxu0 0.0
  %1067 = vmatmul.mubr.f32.gmra.mrb[0].mxu0 %v896
  %v1068 = vpop.f32.mrb[0].mxu0
  %v1069 = vadd.f32 %v881, %v1068
  %v1070 = vpop.f32.mrb[0].mxu0
  %1071 = vmatprep.mubr.f32.mxu0 0.0
  %1072 = vmatmul.mubr.f32.gmra.mrb[0].mxu0 %v899
  %v1073 = vpop.f32.mrb[0].mxu0
  %v1074 = vadd.f32 %v881, %v1073
  %v1075 = vpop.f32.mrb[0].mxu0
  %1076 = vmatprep.mubr.f32.mxu0 0.0
  %1077 = vmatmul.mubr.f32.gmra.mrb[0].mxu0 %v902
  %v1078 = vpop.f32.mrb[0].mxu0
  %v1079 = vadd.f32 %v881, %v1078
  %v1080 = vpop.f32.mrb[0].mxu0
  %1081 = vmatprep.mubr.f32.mxu0 0.0
  %1082 = vmatmul.mubr.f32.gmra.mrb[0].mxu0 %v905
  %v1083 = vpop.f32.mrb[0].mxu0
  %v1084 = vadd.f32 %v881, %v1083
  %v1085 = vpop.f32.mrb[0].mxu0
  %1086 = vmatprep.mubr.f32.mxu0 0.0
  %1087 = vmatmul.mubr.f32.gmra.mrb[0].mxu0 %v908
  %v1088 = vpop.f32.mrb[0].mxu0
  %v1089 = vadd.f32 %v881, %v1088
  %v1090 = vpop.f32.mrb[0].mxu0
  %1091 = vmatprep.mubr.f32.mxu0 0.0
  %1092 = vmatmul.mubr.f32.gmra.mrb[0].mxu0 %v911
  %v1093 = vpop.f32.mrb[0].mxu0
  %v1094 = vadd.f32 %v881, %v1093
  %v1095 = vpop.f32.mrb[0].mxu0
  %1096 = vmatprep.mubr.f32.mxu0 0.0
  %1097 = vmatmul.mubr.f32.gmra.mrb[0].mxu0 %v914
  %v1098 = vpop.f32.mrb[0].mxu0
  %v1099 = vadd.f32 %v881, %v1098
  %v1100 = vpop.f32.mrb[0].mxu0
  %1101 = vmatprep.mubr.f32.mxu0 0.0
  %1102 = vmatmul.mubr.f32.gmra.mrb[0].mxu0 %v917
  %v1103 = vpop.f32.mrb[0].mxu0
  %v1104 = vadd.f32 %v881, %v1103
  %v1105 = vpop.f32.mrb[0].mxu0
  %1106 = vmatprep.mubr.f32.mxu0 0.0
  %1107 = vmatmul.mubr.f32.gmra.mrb[0].mxu0 %v920
  %v1108 = vpop.f32.mrb[0].mxu0
  %v1109 = vadd.f32 %v881, %v1108
  %v1110 = vpop.f32.mrb[0].mxu0
  %1111 = vmatprep.mubr.f32.mxu0 0.0
  %1112 = vmatmul.mubr.f32.gmra.mrb[0].mxu0 %v923
  %v1113 = vpop.f32.mrb[0].mxu0
  %v1114 = vadd.f32 %v881, %v1113
  %v1115 = vpop.f32.mrb[0].mxu0
  %1116 = vmatprep.mubr.f32.mxu0 0.0
  %1117 = vmatmul.mubr.f32.gmra.mrb[0].mxu0 %v926
  %v1118 = vpop.f32.mrb[0].mxu0
  %v1119 = vadd.f32 %v881, %v1118
  %v1120 = vpop.f32.mrb[0].mxu0
  %1121 = vmatprep.mubr.f32.mxu0 0.0
  %1122 = vmatmul.mubr.f32.gmra.mrb[0].mxu0 %v929
  %v1123 = vpop.f32.mrb[0].mxu0
  %v1124 = vadd.f32 %v881, %v1123
  %v1125 = vpop.f32.mrb[0].mxu0
  %1126 = vmatprep.mubr.f32.mxu0 0.0
  %1127 = vmatmul.mubr.f32.gmra.mrb[0].mxu0 %v932
  %v1128 = vpop.f32.mrb[0].mxu0
  %v1129 = vadd.f32 %v881, %v1128
  %v1130 = vpop.f32.mrb[0].mxu0
  %1131 = vmatprep.mubr.f32.mxu0 0.0
  %1132 = vmatmul.mubr.f32.gmra.mrb[0].mxu0 %v935
  %v1133 = vpop.f32.mrb[0].mxu0
  %v1134 = vadd.f32 %v881, %v1133
  %v1135 = vpop.f32.mrb[0].mxu0
  %1136 = vmatprep.mubr.f32.mxu0 0.0
  %1137 = vmatmul.mubr.f32.gmra.mrb[0].mxu0 %v938
  %v1138 = vpop.f32.mrb[0].mxu0
  %v1139 = vadd.f32 %v881, %v1138
  %v1140 = vpop.f32.mrb[0].mxu0
  %1141 = vmatprep.mubr.f32.mxu0 0.0
  %1142 = vmatmul.mubr.f32.gmra.mrb[0].mxu0 %v941
  %v1143 = vpop.f32.mrb[0].mxu0
  %v1144 = vadd.f32 %v881, %v1143
  %v1145 = vpop.f32.mrb[0].mxu0
  %1146 = vmatprep.mubr.f32.mxu0 0.0
  %1147 = vmatmul.mubr.f32.gmra.mrb[0].mxu0 %v944
  %v1148 = vpop.f32.mrb[0].mxu0
  %v1149 = vadd.f32 %v881, %v1148
  %v1150 = vpop.f32.mrb[0].mxu0
  %1151 = vmatprep.mubr.f32.mxu0 0.0
  %1152 = vmatmul.mubr.f32.gmra.mrb[0].mxu0 %v947
  %v1153 = vpop.f32.mrb[0].mxu0
  %v1154 = vadd.f32 %v881, %v1153
  %v1155 = vpop.f32.mrb[0].mxu0
  %1156 = vmatprep.mubr.f32.mxu0 0.0
  %1157 = vmatmul.mubr.f32.gmra.mrb[0].mxu0 %v950
  %v1158 = vpop.f32.mrb[0].mxu0
  %v1159 = vadd.f32 %v881, %v1158
  %v1160 = vpop.f32.mrb[0].mxu0
  %1161 = vmatprep.mubr.f32.mxu0 0.0
  %1162 = vmatmul.mubr.f32.gmra.mrb[0].mxu0 %v953
  %v1163 = vpop.f32.mrb[0].mxu0
  %v1164 = vadd.f32 %v881, %v1163
  %v1165 = vpop.f32.mrb[0].mxu0
  %1166 = vmatprep.mubr.f32.mxu0 0.0
  %1167 = vmatmul.mubr.f32.gmra.mrb[0].mxu0 %v956
  %v1168 = vpop.f32.mrb[0].mxu0
  %v1169 = vadd.f32 %v881, %v1168
  %v1170 = vpop.f32.mrb[0].mxu0
  %1171 = vmatprep.mubr.f32.mxu0 0.0
  %1172 = vmatmul.mubr.f32.gmra.mrb[0].mxu0 %v959
  %v1173 = vpop.f32.mrb[0].mxu0
  %v1174 = vadd.f32 %v881, %v1173
  %v1175 = vpop.f32.mrb[0].mxu0
  %1176 = vmatprep.mubr.f32.mxu0 0.0
  %1177 = vmatmul.mubr.f32.gmra.mrb[0].mxu0 %v962
  %v1178 = vpop.f32.mrb[0].mxu0
  %v1179 = vadd.f32 %v881, %v1178
  %v1180 = vpop.f32.mrb[0].mxu0
  %1181 = vmatprep.mubr.f32.mxu0 0.0
  %1182 = vmatmul.mubr.f32.gmra.mrb[0].mxu0 %v965
  %v1183 = vpop.f32.mrb[0].mxu0
  %v1184 = vadd.f32 %v881, %v1183
  %v1185 = vpop.f32.mrb[0].mxu0
  %1186 = vmatprep.mubr.f32.mxu0 0.0
  %1187 = vmatmul.mubr.f32.gmra.mrb[0].mxu0 %v968
  %v1188 = vpop.f32.mrb[0].mxu0
  %v1189 = vadd.f32 %v881, %v1188
  %v1190 = vpop.f32.mrb[0].mxu0
  %1191 = vmatprep.mubr.f32.mxu0 0.0
  %1192 = vmatmul.mubr.f32.gmra.mrb[0].mxu0 %v971
  %v1193 = vpop.f32.mrb[0].mxu0
  %v1194 = vadd.f32 %v881, %v1193
  %v1195 = vpop.f32.mrb[0].mxu0
  %1196 = vmatprep.mubr.f32.mxu0 0.0
  %1197 = vmatmul.mubr.f32.gmra.mrb[0].mxu0 %v974
  %v1198 = vpop.f32.mrb[0].mxu0
  %v1199 = vadd.f32 %v881, %v1198
  %v1200 = vpop.f32.mrb[0].mxu0
  %1201 = vmatprep.mubr.f32.mxu0 0.0
  %1202 = vmatmul.mubr.f32.gmra.mrb[0].mxu0 %v977
  %v1203 = vpop.f32.mrb[0].mxu0
  %v1204 = vadd.f32 %v881, %v1203
  %v1205 = vpop.f32.mrb[0].mxu0
  %1206 = vdwg.mxu0
  %v1207 = vmax.f32 %v1049, 0.0
  %v1208 = vmax.f32 %v1054, 0.0
  %v1209 = vmax.f32 %v1059, 0.0
  %v1210 = vmax.f32 %v1064, 0.0
  %v1211 = vmax.f32 %v1069, 0.0
  %v1212 = vmax.f32 %v1074, 0.0
  %v1213 = vmax.f32 %v1079, 0.0
  %v1214 = vmax.f32 %v1084, 0.0
  %v1215 = vmax.f32 %v1089, 0.0
  %v1216 = vmax.f32 %v1094, 0.0
  %v1217 = vmax.f32 %v1099, 0.0
  %v1218 = vmax.f32 %v1104, 0.0
  %v1219 = vmax.f32 %v1109, 0.0
  %v1220 = vmax.f32 %v1114, 0.0
  %v1221 = vmax.f32 %v1119, 0.0
  %v1222 = vmax.f32 %v1124, 0.0
  %v1223 = vmax.f32 %v1129, 0.0
  %v1224 = vmax.f32 %v1134, 0.0
  %v1225 = vmax.f32 %v1139, 0.0
  %v1226 = vmax.f32 %v1144, 0.0
  %v1227 = vmax.f32 %v1149, 0.0
  %v1228 = vmax.f32 %v1154, 0.0
  %v1229 = vmax.f32 %v1159, 0.0
  %v1230 = vmax.f32 %v1164, 0.0
  %v1231 = vmax.f32 %v1169, 0.0
  %v1232 = vmax.f32 %v1174, 0.0
  %v1233 = vmax.f32 %v1179, 0.0
  %v1234 = vmax.f32 %v1184, 0.0
  %v1235 = vmax.f32 %v1189, 0.0
  %v1236 = vmax.f32 %v1194, 0.0
  %v1237 = vmax.f32 %v1199, 0.0
  %v1238 = vmax.f32 %v1204, 0.0
  %v1239 = vld [vmem:[%s10] sm:$0xff]
  %v1240 = vld [vmem:[%s10 + $0x8] sm:$0xff]
  %v1241 = vld [vmem:[%s11] sm:$0x1]
  %v1243 = vlaneseq
  %v1244 = vshrl.u32 %v1243, 7
  %v1245 = vsub.s32 0, %v1244
  %v1246 = vrot.slane %v1241, %v1245
  %v1249 = vsel %vm298, %v1207, 0
  %v1252 = vsel %vm298, %v1208, 0
  %v1255 = vsel %vm298, %v1209, 0
  %v1258 = vsel %vm298, %v1210, 0
  %v1261 = vsel %vm298, %v1211, 0
  %v1264 = vsel %vm298, %v1212, 0
  %v1267 = vsel %vm298, %v1213, 0
  %v1270 = vsel %vm298, %v1214, 0
  %v1273 = vsel %vm298, %v1215, 0
  %v1276 = vsel %vm298, %v1216, 0
  %v1279 = vsel %vm298, %v1217, 0
  %v1282 = vsel %vm298, %v1218, 0
  %v1285 = vsel %vm298, %v1219, 0
  %v1288 = vsel %vm298, %v1220, 0
  %v1291 = vsel %vm298, %v1221, 0
  %v1294 = vsel %vm298, %v1222, 0
  %v1297 = vsel %vm298, %v1223, 0
  %v1300 = vsel %vm298, %v1224, 0
  %v1303 = vsel %vm298, %v1225, 0
  %v1306 = vsel %vm298, %v1226, 0
  %v1309 = vsel %vm298, %v1227, 0
  %v1312 = vsel %vm298, %v1228, 0
  %v1315 = vsel %vm298, %v1229, 0
  %v1318 = vsel %vm298, %v1230, 0
  %v1321 = vsel %vm298, %v1231, 0
  %v1324 = vsel %vm298, %v1232, 0
  %v1327 = vsel %vm298, %v1233, 0
  %v1330 = vsel %vm298, %v1234, 0
  %v1333 = vsel %vm298, %v1235, 0
  %v1336 = vsel %vm298, %v1236, 0
  %v1339 = vsel %vm298, %v1237, 0
  %v1342 = vsel %vm298, %v1238, 0
  %1344 = vmatprep.subr.mxu0 0.0
  %1345 = vmatpush1.msra.mxu0 %v1239
  %1346 = vmatprep.subr.mxu0 0.0
  %1347 = vmatpush1.msra.mxu0 %v1240
  %1348 = vmatprep.subr.mxu0 0.0
  %1349 = vmatpush1.msra.mxu0 0.0
  %1350 = vmatprep.subr.mxu0 0.0
  %1351 = vmatpush1.msra.mxu0 0.0
  %1352 = vmatprep.subr.mxu0 0.0
  %1353 = vmatpush1.msra.mxu0 0.0
  %1354 = vmatprep.subr.mxu0 0.0
  %1355 = vmatpush1.msra.mxu0 0.0
  %1356 = vmatprep.subr.mxu0 0.0
  %1357 = vmatpush1.msra.mxu0 0.0
  %1358 = vmatprep.subr.mxu0 0.0
  %1359 = vmatpush1.msra.mxu0 0.0
  %1360 = vmatprep.subr.mxu0 0.0
  %1361 = vmatpush1.msra.mxu0 0.0
  %1362 = vmatprep.subr.mxu0 0.0
  %1363 = vmatpush1.msra.mxu0 0.0
  %1364 = vmatprep.subr.mxu0 0.0
  %1365 = vmatpush1.msra.mxu0 0.0
  %1366 = vmatprep.subr.mxu0 0.0
  %1367 = vmatpush1.msra.mxu0 0.0
  %1368 = vmatprep.subr.mxu0 0.0
  %1369 = vmatpush1.msra.mxu0 0.0
  %1370 = vmatprep.subr.mxu0 0.0
  %1371 = vmatpush1.msra.mxu0 0.0
  %1372 = vmatprep.subr.mxu0 0.0
  %1373 = vmatpush1.msra.mxu0 0.0
  %1374 = vmatprep.subr.mxu0 0.0
  %1375 = vmatpush1.msra.mxu0 0.0
  %1376 = vmatprep.subr.mxu0 0.0
  %1377 = vmatpush1.msra.mxu0 0.0
  %1378 = vmatprep.subr.mxu0 0.0
  %1379 = vmatpush1.msra.mxu0 0.0
  %1380 = vmatprep.subr.mxu0 0.0
  %1381 = vmatpush1.msra.mxu0 0.0
  %1382 = vmatprep.subr.mxu0 0.0
  %1383 = vmatpush1.msra.mxu0 0.0
  %1384 = vmatprep.subr.mxu0 0.0
  %1385 = vmatpush1.msra.mxu0 0.0
  %1386 = vmatprep.subr.mxu0 0.0
  %1387 = vmatpush1.msra.mxu0 0.0
  %1388 = vmatprep.subr.mxu0 0.0
  %1389 = vmatpush1.msra.mxu0 0.0
  %1390 = vmatprep.subr.mxu0 0.0
  %1391 = vmatpush1.msra.mxu0 0.0
  %1392 = vmatprep.subr.mxu0 0.0
  %1393 = vmatpush1.msra.mxu0 0.0
  %1394 = vmatprep.subr.mxu0 0.0
  %1395 = vmatpush1.msra.mxu0 0.0
  %1396 = vmatprep.subr.mxu0 0.0
  %1397 = vmatpush1.msra.mxu0 0.0
  %1398 = vmatprep.subr.mxu0 0.0
  %1399 = vmatpush1.msra.mxu0 0.0
  %1400 = vmatprep.subr.mxu0 0.0
  %1401 = vmatpush1.msra.mxu0 0.0
  %1402 = vmatprep.subr.mxu0 0.0
  %1403 = vmatpush1.msra.mxu0 0.0
  %1404 = vmatprep.subr.mxu0 0.0
  %1405 = vmatpush1.msra.mxu0 0.0
  %1406 = vmatprep.subr.mxu0 0.0
  %1407 = vmatpush1.msra.mxu0 0.0
  %1408 = vmatprep.mubr.f32.mxu0 0.0
  %1409 = vmatmul.mubr.f32.gmra.mrb[0].mxu0 %v1249
  %v1410 = vpop.f32.mrb[0].mxu0
  %v1411 = vadd.f32 %v1246, %v1410
  %v1412 = vpop.f32.mrb[0].mxu0
  %1413 = vmatprep.mubr.f32.mxu0 0.0
  %1414 = vmatmul.mubr.f32.gmra.mrb[0].mxu0 %v1252
  %v1415 = vpop.f32.mrb[0].mxu0
  %v1416 = vadd.f32 %v1246, %v1415
  %v1417 = vpop.f32.mrb[0].mxu0
  %1418 = vmatprep.mubr.f32.mxu0 0.0
  %1419 = vmatmul.mubr.f32.gmra.mrb[0].mxu0 %v1255
  %v1420 = vpop.f32.mrb[0].mxu0
  %v1421 = vadd.f32 %v1246, %v1420
  %v1422 = vpop.f32.mrb[0].mxu0
  %1423 = vmatprep.mubr.f32.mxu0 0.0
  %1424 = vmatmul.mubr.f32.gmra.mrb[0].mxu0 %v1258
  %v1425 = vpop.f32.mrb[0].mxu0
  %v1426 = vadd.f32 %v1246, %v1425
  %v1427 = vpop.f32.mrb[0].mxu0
  %1428 = vmatprep.mubr.f32.mxu0 0.0
  %1429 = vmatmul.mubr.f32.gmra.mrb[0].mxu0 %v1261
  %v1430 = vpop.f32.mrb[0].mxu0
  %v1431 = vadd.f32 %v1246, %v1430
  %v1432 = vpop.f32.mrb[0].mxu0
  %1433 = vmatprep.mubr.f32.mxu0 0.0
  %1434 = vmatmul.mubr.f32.gmra.mrb[0].mxu0 %v1264
  %v1435 = vpop.f32.mrb[0].mxu0
  %v1436 = vadd.f32 %v1246, %v1435
  %v1437 = vpop.f32.mrb[0].mxu0
  %1438 = vmatprep.mubr.f32.mxu0 0.0
  %1439 = vmatmul.mubr.f32.gmra.mrb[0].mxu0 %v1267
  %v1440 = vpop.f32.mrb[0].mxu0
  %v1441 = vadd.f32 %v1246, %v1440
  %v1442 = vpop.f32.mrb[0].mxu0
  %1443 = vmatprep.mubr.f32.mxu0 0.0
  %1444 = vmatmul.mubr.f32.gmra.mrb[0].mxu0 %v1270
  %v1445 = vpop.f32.mrb[0].mxu0
  %v1446 = vadd.f32 %v1246, %v1445
  %v1447 = vpop.f32.mrb[0].mxu0
  %1448 = vmatprep.mubr.f32.mxu0 0.0
  %1449 = vmatmul.mubr.f32.gmra.mrb[0].mxu0 %v1273
  %v1450 = vpop.f32.mrb[0].mxu0
  %v1451 = vadd.f32 %v1246, %v1450
  %v1452 = vpop.f32.mrb[0].mxu0
  %1453 = vmatprep.mubr.f32.mxu0 0.0
  %1454 = vmatmul.mubr.f32.gmra.mrb[0].mxu0 %v1276
  %v1455 = vpop.f32.mrb[0].mxu0
  %v1456 = vadd.f32 %v1246, %v1455
  %v1457 = vpop.f32.mrb[0].mxu0
  %1458 = vmatprep.mubr.f32.mxu0 0.0
  %1459 = vmatmul.mubr.f32.gmra.mrb[0].mxu0 %v1279
  %v1460 = vpop.f32.mrb[0].mxu0
  %v1461 = vadd.f32 %v1246, %v1460
  %v1462 = vpop.f32.mrb[0].mxu0
  %1463 = vmatprep.mubr.f32.mxu0 0.0
  %1464 = vmatmul.mubr.f32.gmra.mrb[0].mxu0 %v1282
  %v1465 = vpop.f32.mrb[0].mxu0
  %v1466 = vadd.f32 %v1246, %v1465
  %v1467 = vpop.f32.mrb[0].mxu0
  %1468 = vmatprep.mubr.f32.mxu0 0.0
  %1469 = vmatmul.mubr.f32.gmra.mrb[0].mxu0 %v1285
  %v1470 = vpop.f32.mrb[0].mxu0
  %v1471 = vadd.f32 %v1246, %v1470
  %v1472 = vpop.f32.mrb[0].mxu0
  %1473 = vmatprep.mubr.f32.mxu0 0.0
  %1474 = vmatmul.mubr.f32.gmra.mrb[0].mxu0 %v1288
  %v1475 = vpop.f32.mrb[0].mxu0
  %v1476 = vadd.f32 %v1246, %v1475
  %v1477 = vpop.f32.mrb[0].mxu0
  %1478 = vmatprep.mubr.f32.mxu0 0.0
  %1479 = vmatmul.mubr.f32.gmra.mrb[0].mxu0 %v1291
  %v1480 = vpop.f32.mrb[0].mxu0
  %v1481 = vadd.f32 %v1246, %v1480
  %v1482 = vpop.f32.mrb[0].mxu0
  %1483 = vmatprep.mubr.f32.mxu0 0.0
  %1484 = vmatmul.mubr.f32.gmra.mrb[0].mxu0 %v1294
  %v1485 = vpop.f32.mrb[0].mxu0
  %v1486 = vadd.f32 %v1246, %v1485
  %v1487 = vpop.f32.mrb[0].mxu0
  %1488 = vmatprep.mubr.f32.mxu0 0.0
  %1489 = vmatmul.mubr.f32.gmra.mrb[0].mxu0 %v1297
  %v1490 = vpop.f32.mrb[0].mxu0
  %v1491 = vadd.f32 %v1246, %v1490
  %v1492 = vpop.f32.mrb[0].mxu0
  %1493 = vmatprep.mubr.f32.mxu0 0.0
  %1494 = vmatmul.mubr.f32.gmra.mrb[0].mxu0 %v1300
  %v1495 = vpop.f32.mrb[0].mxu0
  %v1496 = vadd.f32 %v1246, %v1495
  %v1497 = vpop.f32.mrb[0].mxu0
  %1498 = vmatprep.mubr.f32.mxu0 0.0
  %1499 = vmatmul.mubr.f32.gmra.mrb[0].mxu0 %v1303
  %v1500 = vpop.f32.mrb[0].mxu0
  %v1501 = vadd.f32 %v1246, %v1500
  %v1502 = vpop.f32.mrb[0].mxu0
  %1503 = vmatprep.mubr.f32.mxu0 0.0
  %1504 = vmatmul.mubr.f32.gmra.mrb[0].mxu0 %v1306
  %v1505 = vpop.f32.mrb[0].mxu0
  %v1506 = vadd.f32 %v1246, %v1505
  %v1507 = vpop.f32.mrb[0].mxu0
  %1508 = vmatprep.mubr.f32.mxu0 0.0
  %1509 = vmatmul.mubr.f32.gmra.mrb[0].mxu0 %v1309
  %v1510 = vpop.f32.mrb[0].mxu0
  %v1511 = vadd.f32 %v1246, %v1510
  %v1512 = vpop.f32.mrb[0].mxu0
  %1513 = vmatprep.mubr.f32.mxu0 0.0
  %1514 = vmatmul.mubr.f32.gmra.mrb[0].mxu0 %v1312
  %v1515 = vpop.f32.mrb[0].mxu0
  %v1516 = vadd.f32 %v1246, %v1515
  %v1517 = vpop.f32.mrb[0].mxu0
  %1518 = vmatprep.mubr.f32.mxu0 0.0
  %1519 = vmatmul.mubr.f32.gmra.mrb[0].mxu0 %v1315
  %v1520 = vpop.f32.mrb[0].mxu0
  %v1521 = vadd.f32 %v1246, %v1520
  %v1522 = vpop.f32.mrb[0].mxu0
  %1523 = vmatprep.mubr.f32.mxu0 0.0
  %1524 = vmatmul.mubr.f32.gmra.mrb[0].mxu0 %v1318
  %v1525 = vpop.f32.mrb[0].mxu0
  %v1526 = vadd.f32 %v1246, %v1525
  %v1527 = vpop.f32.mrb[0].mxu0
  %1528 = vmatprep.mubr.f32.mxu0 0.0
  %1529 = vmatmul.mubr.f32.gmra.mrb[0].mxu0 %v1321
  %v1530 = vpop.f32.mrb[0].mxu0
  %v1531 = vadd.f32 %v1246, %v1530
  %v1532 = vpop.f32.mrb[0].mxu0
  %1533 = vmatprep.mubr.f32.mxu0 0.0
  %1534 = vmatmul.mubr.f32.gmra.mrb[0].mxu0 %v1324
  %v1535 = vpop.f32.mrb[0].mxu0
  %v1536 = vadd.f32 %v1246, %v1535
  %v1537 = vpop.f32.mrb[0].mxu0
  %1538 = vmatprep.mubr.f32.mxu0 0.0
  %1539 = vmatmul.mubr.f32.gmra.mrb[0].mxu0 %v1327
  %v1540 = vpop.f32.mrb[0].mxu0
  %v1541 = vadd.f32 %v1246, %v1540
  %v1542 = vpop.f32.mrb[0].mxu0
  %1543 = vmatprep.mubr.f32.mxu0 0.0
  %1544 = vmatmul.mubr.f32.gmra.mrb[0].mxu0 %v1330
  %v1545 = vpop.f32.mrb[0].mxu0
  %v1546 = vadd.f32 %v1246, %v1545
  %v1547 = vpop.f32.mrb[0].mxu0
  %1548 = vmatprep.mubr.f32.mxu0 0.0
  %1549 = vmatmul.mubr.f32.gmra.mrb[0].mxu0 %v1333
  %v1550 = vpop.f32.mrb[0].mxu0
  %v1551 = vadd.f32 %v1246, %v1550
  %v1552 = vpop.f32.mrb[0].mxu0
  %1553 = vmatprep.mubr.f32.mxu0 0.0
  %1554 = vmatmul.mubr.f32.gmra.mrb[0].mxu0 %v1336
  %v1555 = vpop.f32.mrb[0].mxu0
  %v1556 = vadd.f32 %v1246, %v1555
  %v1557 = vpop.f32.mrb[0].mxu0
  %1558 = vmatprep.mubr.f32.mxu0 0.0
  %1559 = vmatmul.mubr.f32.gmra.mrb[0].mxu0 %v1339
  %v1560 = vpop.f32.mrb[0].mxu0
  %v1561 = vadd.f32 %v1246, %v1560
  %v1562 = vpop.f32.mrb[0].mxu0
  %1563 = vmatprep.mubr.f32.mxu0 0.0
  %1564 = vmatmul.mubr.f32.gmra.mrb[0].mxu0 %v1342
  %v1565 = vpop.f32.mrb[0].mxu0
  %v1566 = vadd.f32 %v1246, %v1565
  %v1567 = vpop.f32.mrb[0].mxu0
  %1568 = vdwg.mxu0
  %v1569 = vmax.f32 %v1411, 0.0
  %v1570 = vmax.f32 %v1416, 0.0
  %v1571 = vmax.f32 %v1421, 0.0
  %v1572 = vmax.f32 %v1426, 0.0
  %v1573 = vmax.f32 %v1431, 0.0
  %v1574 = vmax.f32 %v1436, 0.0
  %v1575 = vmax.f32 %v1441, 0.0
  %v1576 = vmax.f32 %v1446, 0.0
  %v1577 = vmax.f32 %v1451, 0.0
  %v1578 = vmax.f32 %v1456, 0.0
  %v1579 = vmax.f32 %v1461, 0.0
  %v1580 = vmax.f32 %v1466, 0.0
  %v1581 = vmax.f32 %v1471, 0.0
  %v1582 = vmax.f32 %v1476, 0.0
  %v1583 = vmax.f32 %v1481, 0.0
  %v1584 = vmax.f32 %v1486, 0.0
  %v1585 = vmax.f32 %v1491, 0.0
  %v1586 = vmax.f32 %v1496, 0.0
  %v1587 = vmax.f32 %v1501, 0.0
  %v1588 = vmax.f32 %v1506, 0.0
  %v1589 = vmax.f32 %v1511, 0.0
  %v1590 = vmax.f32 %v1516, 0.0
  %v1591 = vmax.f32 %v1521, 0.0
  %v1592 = vmax.f32 %v1526, 0.0
  %v1593 = vmax.f32 %v1531, 0.0
  %v1594 = vmax.f32 %v1536, 0.0
  %v1595 = vmax.f32 %v1541, 0.0
  %v1596 = vmax.f32 %v1546, 0.0
  %v1597 = vmax.f32 %v1551, 0.0
  %v1598 = vmax.f32 %v1556, 0.0
  %v1599 = vmax.f32 %v1561, 0.0
  %v1600 = vmax.f32 %v1566, 0.0
  %v1601 = vld [vmem:[%s12] sm:$0xff]
  %v1602 = vld [vmem:[%s12 + $0x8] sm:$0xff]
  %v1603 = vld [vmem:[%s13] sm:$0x1]
  %v1605 = vlaneseq
  %v1606 = vshrl.u32 %v1605, 7
  %v1607 = vsub.s32 0, %v1606
  %v1608 = vrot.slane %v1603, %v1607
  %v1611 = vsel %vm298, %v1569, 0
  %v1614 = vsel %vm298, %v1570, 0
  %v1617 = vsel %vm298, %v1571, 0
  %v1620 = vsel %vm298, %v1572, 0
  %v1623 = vsel %vm298, %v1573, 0
  %v1626 = vsel %vm298, %v1574, 0
  %v1629 = vsel %vm298, %v1575, 0
  %v1632 = vsel %vm298, %v1576, 0
  %v1635 = vsel %vm298, %v1577, 0
  %v1638 = vsel %vm298, %v1578, 0
  %v1641 = vsel %vm298, %v1579, 0
  %v1644 = vsel %vm298, %v1580, 0
  %v1647 = vsel %vm298, %v1581, 0
  %v1650 = vsel %vm298, %v1582, 0
  %v1653 = vsel %vm298, %v1583, 0
  %v1656 = vsel %vm298, %v1584, 0
  %v1659 = vsel %vm298, %v1585, 0
  %v1662 = vsel %vm298, %v1586, 0
  %v1665 = vsel %vm298, %v1587, 0
  %v1668 = vsel %vm298, %v1588, 0
  %v1671 = vsel %vm298, %v1589, 0
  %v1674 = vsel %vm298, %v1590, 0
  %v1677 = vsel %vm298, %v1591, 0
  %v1680 = vsel %vm298, %v1592, 0
  %v1683 = vsel %vm298, %v1593, 0
  %v1686 = vsel %vm298, %v1594, 0
  %v1689 = vsel %vm298, %v1595, 0
  %v1692 = vsel %vm298, %v1596, 0
  %v1695 = vsel %vm298, %v1597, 0
  %v1698 = vsel %vm298, %v1598, 0
  %v1701 = vsel %vm298, %v1599, 0
  %v1704 = vsel %vm298, %v1600, 0
  %1706 = vmatprep.subr.mxu0 0.0
  %1707 = vmatpush1.msra.mxu0 %v1601
  %1708 = vmatprep.subr.mxu0 0.0
  %1709 = vmatpush1.msra.mxu0 %v1602
  %1710 = vmatprep.subr.mxu0 0.0
  %1711 = vmatpush1.msra.mxu0 0.0
  %1712 = vmatprep.subr.mxu0 0.0
  %1713 = vmatpush1.msra.mxu0 0.0
  %1714 = vmatprep.subr.mxu0 0.0
  %1715 = vmatpush1.msra.mxu0 0.0
  %1716 = vmatprep.subr.mxu0 0.0
  %1717 = vmatpush1.msra.mxu0 0.0
  %1718 = vmatprep.subr.mxu0 0.0
  %1719 = vmatpush1.msra.mxu0 0.0
  %1720 = vmatprep.subr.mxu0 0.0
  %1721 = vmatpush1.msra.mxu0 0.0
  %1722 = vmatprep.subr.mxu0 0.0
  %1723 = vmatpush1.msra.mxu0 0.0
  %1724 = vmatprep.subr.mxu0 0.0
  %1725 = vmatpush1.msra.mxu0 0.0
  %1726 = vmatprep.subr.mxu0 0.0
  %1727 = vmatpush1.msra.mxu0 0.0
  %1728 = vmatprep.subr.mxu0 0.0
  %1729 = vmatpush1.msra.mxu0 0.0
  %1730 = vmatprep.subr.mxu0 0.0
  %1731 = vmatpush1.msra.mxu0 0.0
  %1732 = vmatprep.subr.mxu0 0.0
  %1733 = vmatpush1.msra.mxu0 0.0
  %1734 = vmatprep.subr.mxu0 0.0
  %1735 = vmatpush1.msra.mxu0 0.0
  %1736 = vmatprep.subr.mxu0 0.0
  %1737 = vmatpush1.msra.mxu0 0.0
  %1738 = vmatprep.subr.mxu0 0.0
  %1739 = vmatpush1.msra.mxu0 0.0
  %1740 = vmatprep.subr.mxu0 0.0
  %1741 = vmatpush1.msra.mxu0 0.0
  %1742 = vmatprep.subr.mxu0 0.0
  %1743 = vmatpush1.msra.mxu0 0.0
  %1744 = vmatprep.subr.mxu0 0.0
  %1745 = vmatpush1.msra.mxu0 0.0
  %1746 = vmatprep.subr.mxu0 0.0
  %1747 = vmatpush1.msra.mxu0 0.0
  %1748 = vmatprep.subr.mxu0 0.0
  %1749 = vmatpush1.msra.mxu0 0.0
  %1750 = vmatprep.subr.mxu0 0.0
  %1751 = vmatpush1.msra.mxu0 0.0
  %1752 = vmatprep.subr.mxu0 0.0
  %1753 = vmatpush1.msra.mxu0 0.0
  %1754 = vmatprep.subr.mxu0 0.0
  %1755 = vmatpush1.msra.mxu0 0.0
  %1756 = vmatprep.subr.mxu0 0.0
  %1757 = vmatpush1.msra.mxu0 0.0
  %1758 = vmatprep.subr.mxu0 0.0
  %1759 = vmatpush1.msra.mxu0 0.0
  %1760 = vmatprep.subr.mxu0 0.0
  %1761 = vmatpush1.msra.mxu0 0.0
  %1762 = vmatprep.subr.mxu0 0.0
  %1763 = vmatpush1.msra.mxu0 0.0
  %1764 = vmatprep.subr.mxu0 0.0
  %1765 = vmatpush1.msra.mxu0 0.0
  %1766 = vmatprep.subr.mxu0 0.0
  %1767 = vmatpush1.msra.mxu0 0.0
  %1768 = vmatprep.subr.mxu0 0.0
  %1769 = vmatpush1.msra.mxu0 0.0
  %1770 = vmatprep.mubr.f32.mxu0 0.0
  %1771 = vmatmul.mubr.f32.gmra.mrb[0].mxu0 %v1611
  %v1772 = vpop.f32.mrb[0].mxu0
  %v1773 = vadd.f32 %v1608, %v1772
  %v1774 = vpop.f32.mrb[0].mxu0
  %1775 = vmatprep.mubr.f32.mxu0 0.0
  %1776 = vmatmul.mubr.f32.gmra.mrb[0].mxu0 %v1614
  %v1777 = vpop.f32.mrb[0].mxu0
  %v1778 = vadd.f32 %v1608, %v1777
  %v1779 = vpop.f32.mrb[0].mxu0
  %1780 = vmatprep.mubr.f32.mxu0 0.0
  %1781 = vmatmul.mubr.f32.gmra.mrb[0].mxu0 %v1617
  %v1782 = vpop.f32.mrb[0].mxu0
  %v1783 = vadd.f32 %v1608, %v1782
  %v1784 = vpop.f32.mrb[0].mxu0
  %1785 = vmatprep.mubr.f32.mxu0 0.0
  %1786 = vmatmul.mubr.f32.gmra.mrb[0].mxu0 %v1620
  %v1787 = vpop.f32.mrb[0].mxu0
  %v1788 = vadd.f32 %v1608, %v1787
  %v1789 = vpop.f32.mrb[0].mxu0
  %1790 = vmatprep.mubr.f32.mxu0 0.0
  %1791 = vmatmul.mubr.f32.gmra.mrb[0].mxu0 %v1623
  %v1792 = vpop.f32.mrb[0].mxu0
  %v1793 = vadd.f32 %v1608, %v1792
  %v1794 = vpop.f32.mrb[0].mxu0
  %1795 = vmatprep.mubr.f32.mxu0 0.0
  %1796 = vmatmul.mubr.f32.gmra.mrb[0].mxu0 %v1626
  %v1797 = vpop.f32.mrb[0].mxu0
  %v1798 = vadd.f32 %v1608, %v1797
  %v1799 = vpop.f32.mrb[0].mxu0
  %1800 = vmatprep.mubr.f32.mxu0 0.0
  %1801 = vmatmul.mubr.f32.gmra.mrb[0].mxu0 %v1629
  %v1802 = vpop.f32.mrb[0].mxu0
  %v1803 = vadd.f32 %v1608, %v1802
  %v1804 = vpop.f32.mrb[0].mxu0
  %1805 = vmatprep.mubr.f32.mxu0 0.0
  %1806 = vmatmul.mubr.f32.gmra.mrb[0].mxu0 %v1632
  %v1807 = vpop.f32.mrb[0].mxu0
  %v1808 = vadd.f32 %v1608, %v1807
  %v1809 = vpop.f32.mrb[0].mxu0
  %1810 = vmatprep.mubr.f32.mxu0 0.0
  %1811 = vmatmul.mubr.f32.gmra.mrb[0].mxu0 %v1635
  %v1812 = vpop.f32.mrb[0].mxu0
  %v1813 = vadd.f32 %v1608, %v1812
  %v1814 = vpop.f32.mrb[0].mxu0
  %1815 = vmatprep.mubr.f32.mxu0 0.0
  %1816 = vmatmul.mubr.f32.gmra.mrb[0].mxu0 %v1638
  %v1817 = vpop.f32.mrb[0].mxu0
  %v1818 = vadd.f32 %v1608, %v1817
  %v1819 = vpop.f32.mrb[0].mxu0
  %1820 = vmatprep.mubr.f32.mxu0 0.0
  %1821 = vmatmul.mubr.f32.gmra.mrb[0].mxu0 %v1641
  %v1822 = vpop.f32.mrb[0].mxu0
  %v1823 = vadd.f32 %v1608, %v1822
  %v1824 = vpop.f32.mrb[0].mxu0
  %1825 = vmatprep.mubr.f32.mxu0 0.0
  %1826 = vmatmul.mubr.f32.gmra.mrb[0].mxu0 %v1644
  %v1827 = vpop.f32.mrb[0].mxu0
  %v1828 = vadd.f32 %v1608, %v1827
  %v1829 = vpop.f32.mrb[0].mxu0
  %1830 = vmatprep.mubr.f32.mxu0 0.0
  %1831 = vmatmul.mubr.f32.gmra.mrb[0].mxu0 %v1647
  %v1832 = vpop.f32.mrb[0].mxu0
  %v1833 = vadd.f32 %v1608, %v1832
  %v1834 = vpop.f32.mrb[0].mxu0
  %1835 = vmatprep.mubr.f32.mxu0 0.0
  %1836 = vmatmul.mubr.f32.gmra.mrb[0].mxu0 %v1650
  %v1837 = vpop.f32.mrb[0].mxu0
  %v1838 = vadd.f32 %v1608, %v1837
  %v1839 = vpop.f32.mrb[0].mxu0
  %1840 = vmatprep.mubr.f32.mxu0 0.0
  %1841 = vmatmul.mubr.f32.gmra.mrb[0].mxu0 %v1653
  %v1842 = vpop.f32.mrb[0].mxu0
  %v1843 = vadd.f32 %v1608, %v1842
  %v1844 = vpop.f32.mrb[0].mxu0
  %1845 = vmatprep.mubr.f32.mxu0 0.0
  %1846 = vmatmul.mubr.f32.gmra.mrb[0].mxu0 %v1656
  %v1847 = vpop.f32.mrb[0].mxu0
  %v1848 = vadd.f32 %v1608, %v1847
  %v1849 = vpop.f32.mrb[0].mxu0
  %1850 = vmatprep.mubr.f32.mxu0 0.0
  %1851 = vmatmul.mubr.f32.gmra.mrb[0].mxu0 %v1659
  %v1852 = vpop.f32.mrb[0].mxu0
  %v1853 = vadd.f32 %v1608, %v1852
  %v1854 = vpop.f32.mrb[0].mxu0
  %1855 = vmatprep.mubr.f32.mxu0 0.0
  %1856 = vmatmul.mubr.f32.gmra.mrb[0].mxu0 %v1662
  %v1857 = vpop.f32.mrb[0].mxu0
  %v1858 = vadd.f32 %v1608, %v1857
  %v1859 = vpop.f32.mrb[0].mxu0
  %1860 = vmatprep.mubr.f32.mxu0 0.0
  %1861 = vmatmul.mubr.f32.gmra.mrb[0].mxu0 %v1665
  %v1862 = vpop.f32.mrb[0].mxu0
  %v1863 = vadd.f32 %v1608, %v1862
  %v1864 = vpop.f32.mrb[0].mxu0
  %1865 = vmatprep.mubr.f32.mxu0 0.0
  %1866 = vmatmul.mubr.f32.gmra.mrb[0].mxu0 %v1668
  %v1867 = vpop.f32.mrb[0].mxu0
  %v1868 = vadd.f32 %v1608, %v1867
  %v1869 = vpop.f32.mrb[0].mxu0
  %1870 = vmatprep.mubr.f32.mxu0 0.0
  %1871 = vmatmul.mubr.f32.gmra.mrb[0].mxu0 %v1671
  %v1872 = vpop.f32.mrb[0].mxu0
  %v1873 = vadd.f32 %v1608, %v1872
  %v1874 = vpop.f32.mrb[0].mxu0
  %1875 = vmatprep.mubr.f32.mxu0 0.0
  %1876 = vmatmul.mubr.f32.gmra.mrb[0].mxu0 %v1674
  %v1877 = vpop.f32.mrb[0].mxu0
  %v1878 = vadd.f32 %v1608, %v1877
  %v1879 = vpop.f32.mrb[0].mxu0
  %1880 = vmatprep.mubr.f32.mxu0 0.0
  %1881 = vmatmul.mubr.f32.gmra.mrb[0].mxu0 %v1677
  %v1882 = vpop.f32.mrb[0].mxu0
  %v1883 = vadd.f32 %v1608, %v1882
  %v1884 = vpop.f32.mrb[0].mxu0
  %1885 = vmatprep.mubr.f32.mxu0 0.0
  %1886 = vmatmul.mubr.f32.gmra.mrb[0].mxu0 %v1680
  %v1887 = vpop.f32.mrb[0].mxu0
  %v1888 = vadd.f32 %v1608, %v1887
  %v1889 = vpop.f32.mrb[0].mxu0
  %1890 = vmatprep.mubr.f32.mxu0 0.0
  %1891 = vmatmul.mubr.f32.gmra.mrb[0].mxu0 %v1683
  %v1892 = vpop.f32.mrb[0].mxu0
  %v1893 = vadd.f32 %v1608, %v1892
  %v1894 = vpop.f32.mrb[0].mxu0
  %1895 = vmatprep.mubr.f32.mxu0 0.0
  %1896 = vmatmul.mubr.f32.gmra.mrb[0].mxu0 %v1686
  %v1897 = vpop.f32.mrb[0].mxu0
  %v1898 = vadd.f32 %v1608, %v1897
  %v1899 = vpop.f32.mrb[0].mxu0
  %1900 = vmatprep.mubr.f32.mxu0 0.0
  %1901 = vmatmul.mubr.f32.gmra.mrb[0].mxu0 %v1689
  %v1902 = vpop.f32.mrb[0].mxu0
  %v1903 = vadd.f32 %v1608, %v1902
  %v1904 = vpop.f32.mrb[0].mxu0
  %1905 = vmatprep.mubr.f32.mxu0 0.0
  %1906 = vmatmul.mubr.f32.gmra.mrb[0].mxu0 %v1692
  %v1907 = vpop.f32.mrb[0].mxu0
  %v1908 = vadd.f32 %v1608, %v1907
  %v1909 = vpop.f32.mrb[0].mxu0
  %1910 = vmatprep.mubr.f32.mxu0 0.0
  %1911 = vmatmul.mubr.f32.gmra.mrb[0].mxu0 %v1695
  %v1912 = vpop.f32.mrb[0].mxu0
  %v1913 = vadd.f32 %v1608, %v1912
  %v1914 = vpop.f32.mrb[0].mxu0
  %1915 = vmatprep.mubr.f32.mxu0 0.0
  %1916 = vmatmul.mubr.f32.gmra.mrb[0].mxu0 %v1698
  %v1917 = vpop.f32.mrb[0].mxu0
  %v1918 = vadd.f32 %v1608, %v1917
  %v1919 = vpop.f32.mrb[0].mxu0
  %1920 = vmatprep.mubr.f32.mxu0 0.0
  %1921 = vmatmul.mubr.f32.gmra.mrb[0].mxu0 %v1701
  %v1922 = vpop.f32.mrb[0].mxu0
  %v1923 = vadd.f32 %v1608, %v1922
  %v1924 = vpop.f32.mrb[0].mxu0
  %1925 = vmatprep.mubr.f32.mxu0 0.0
  %1926 = vmatmul.mubr.f32.gmra.mrb[0].mxu0 %v1704
  %v1927 = vpop.f32.mrb[0].mxu0
  %v1928 = vadd.f32 %v1608, %v1927
  %v1929 = vpop.f32.mrb[0].mxu0
  %1930 = vdwg.mxu0
  %v1931 = vmax.f32 %v1773, 0.0
  %v1932 = vmax.f32 %v1778, 0.0
  %v1933 = vmax.f32 %v1783, 0.0
  %v1934 = vmax.f32 %v1788, 0.0
  %v1935 = vmax.f32 %v1793, 0.0
  %v1936 = vmax.f32 %v1798, 0.0
  %v1937 = vmax.f32 %v1803, 0.0
  %v1938 = vmax.f32 %v1808, 0.0
  %v1939 = vmax.f32 %v1813, 0.0
  %v1940 = vmax.f32 %v1818, 0.0
  %v1941 = vmax.f32 %v1823, 0.0
  %v1942 = vmax.f32 %v1828, 0.0
  %v1943 = vmax.f32 %v1833, 0.0
  %v1944 = vmax.f32 %v1838, 0.0
  %v1945 = vmax.f32 %v1843, 0.0
  %v1946 = vmax.f32 %v1848, 0.0
  %v1947 = vmax.f32 %v1853, 0.0
  %v1948 = vmax.f32 %v1858, 0.0
  %v1949 = vmax.f32 %v1863, 0.0
  %v1950 = vmax.f32 %v1868, 0.0
  %v1951 = vmax.f32 %v1873, 0.0
  %v1952 = vmax.f32 %v1878, 0.0
  %v1953 = vmax.f32 %v1883, 0.0
  %v1954 = vmax.f32 %v1888, 0.0
  %v1955 = vmax.f32 %v1893, 0.0
  %v1956 = vmax.f32 %v1898, 0.0
  %v1957 = vmax.f32 %v1903, 0.0
  %v1958 = vmax.f32 %v1908, 0.0
  %v1959 = vmax.f32 %v1913, 0.0
  %v1960 = vmax.f32 %v1918, 0.0
  %v1961 = vmax.f32 %v1923, 0.0
  %v1962 = vmax.f32 %v1928, 0.0
  %v1963 = vsel %vm726, %v1931, -inf
  %v1964 = vsel %vm726, %v1932, -inf
  %v1965 = vmax.f32 %v1963, %v1964
  %v1966 = vrot.slane %v1965, 4
  %v1967 = vmax.f32 %v1965, %v1966
  %v1968 = vrot.slane %v1967, 2
  %v1969 = vmax.f32 %v1967, %v1968
  %v1970 = vrot.slane %v1969, 1
  %v1971 = vmax.f32 %v1969, %v1970
  %v1972 = vsel %vm726, %v1933, -inf
  %v1973 = vsel %vm726, %v1934, -inf
  %v1974 = vmax.f32 %v1972, %v1973
  %v1975 = vrot.slane %v1974, 4
  %v1976 = vmax.f32 %v1974, %v1975
  %v1977 = vrot.slane %v1976, 2
  %v1978 = vmax.f32 %v1976, %v1977
  %v1979 = vrot.slane %v1978, 1
  %v1980 = vmax.f32 %v1978, %v1979
  %v1981 = vsel %vm726, %v1935, -inf
  %v1982 = vsel %vm726, %v1936, -inf
  %v1983 = vmax.f32 %v1981, %v1982
  %v1984 = vrot.slane %v1983, 4
  %v1985 = vmax.f32 %v1983, %v1984
  %v1986 = vrot.slane %v1985, 2
  %v1987 = vmax.f32 %v1985, %v1986
  %v1988 = vrot.slane %v1987, 1
  %v1989 = vmax.f32 %v1987, %v1988
  %v1990 = vsel %vm726, %v1937, -inf
  %v1991 = vsel %vm726, %v1938, -inf
  %v1992 = vmax.f32 %v1990, %v1991
  %v1993 = vrot.slane %v1992, 4
  %v1994 = vmax.f32 %v1992, %v1993
  %v1995 = vrot.slane %v1994, 2
  %v1996 = vmax.f32 %v1994, %v1995
  %v1997 = vrot.slane %v1996, 1
  %v1998 = vmax.f32 %v1996, %v1997
  %v1999 = vsel %vm726, %v1939, -inf
  %v2000 = vsel %vm726, %v1940, -inf
  %v2001 = vmax.f32 %v1999, %v2000
  %v2002 = vrot.slane %v2001, 4
  %v2003 = vmax.f32 %v2001, %v2002
  %v2004 = vrot.slane %v2003, 2
  %v2005 = vmax.f32 %v2003, %v2004
  %v2006 = vrot.slane %v2005, 1
  %v2007 = vmax.f32 %v2005, %v2006
  %v2008 = vsel %vm726, %v1941, -inf
  %v2009 = vsel %vm726, %v1942, -inf
  %v2010 = vmax.f32 %v2008, %v2009
  %v2011 = vrot.slane %v2010, 4
  %v2012 = vmax.f32 %v2010, %v2011
  %v2013 = vrot.slane %v2012, 2
  %v2014 = vmax.f32 %v2012, %v2013
  %v2015 = vrot.slane %v2014, 1
  %v2016 = vmax.f32 %v2014, %v2015
  %v2017 = vsel %vm726, %v1943, -inf
  %v2018 = vsel %vm726, %v1944, -inf
  %v2019 = vmax.f32 %v2017, %v2018
  %v2020 = vrot.slane %v2019, 4
  %v2021 = vmax.f32 %v2019, %v2020
  %v2022 = vrot.slane %v2021, 2
  %v2023 = vmax.f32 %v2021, %v2022
  %v2024 = vrot.slane %v2023, 1
  %v2025 = vmax.f32 %v2023, %v2024
  %v2026 = vsel %vm726, %v1945, -inf
  %v2027 = vsel %vm726, %v1946, -inf
  %v2028 = vmax.f32 %v2026, %v2027
  %v2029 = vrot.slane %v2028, 4
  %v2030 = vmax.f32 %v2028, %v2029
  %v2031 = vrot.slane %v2030, 2
  %v2032 = vmax.f32 %v2030, %v2031
  %v2033 = vrot.slane %v2032, 1
  %v2034 = vmax.f32 %v2032, %v2033
  %v2035 = vsel %vm726, %v1947, -inf
  %v2036 = vsel %vm726, %v1948, -inf
  %v2037 = vmax.f32 %v2035, %v2036
  %v2038 = vrot.slane %v2037, 4
  %v2039 = vmax.f32 %v2037, %v2038
  %v2040 = vrot.slane %v2039, 2
  %v2041 = vmax.f32 %v2039, %v2040
  %v2042 = vrot.slane %v2041, 1
  %v2043 = vmax.f32 %v2041, %v2042
  %v2044 = vsel %vm726, %v1949, -inf
  %v2045 = vsel %vm726, %v1950, -inf
  %v2046 = vmax.f32 %v2044, %v2045
  %v2047 = vrot.slane %v2046, 4
  %v2048 = vmax.f32 %v2046, %v2047
  %v2049 = vrot.slane %v2048, 2
  %v2050 = vmax.f32 %v2048, %v2049
  %v2051 = vrot.slane %v2050, 1
  %v2052 = vmax.f32 %v2050, %v2051
  %v2053 = vsel %vm726, %v1951, -inf
  %v2054 = vsel %vm726, %v1952, -inf
  %v2055 = vmax.f32 %v2053, %v2054
  %v2056 = vrot.slane %v2055, 4
  %v2057 = vmax.f32 %v2055, %v2056
  %v2058 = vrot.slane %v2057, 2
  %v2059 = vmax.f32 %v2057, %v2058
  %v2060 = vrot.slane %v2059, 1
  %v2061 = vmax.f32 %v2059, %v2060
  %v2062 = vsel %vm726, %v1953, -inf
  %v2063 = vsel %vm726, %v1954, -inf
  %v2064 = vmax.f32 %v2062, %v2063
  %v2065 = vrot.slane %v2064, 4
  %v2066 = vmax.f32 %v2064, %v2065
  %v2067 = vrot.slane %v2066, 2
  %v2068 = vmax.f32 %v2066, %v2067
  %v2069 = vrot.slane %v2068, 1
  %v2070 = vmax.f32 %v2068, %v2069
  %v2071 = vsel %vm726, %v1955, -inf
  %v2072 = vsel %vm726, %v1956, -inf
  %v2073 = vmax.f32 %v2071, %v2072
  %v2074 = vrot.slane %v2073, 4
  %v2075 = vmax.f32 %v2073, %v2074
  %v2076 = vrot.slane %v2075, 2
  %v2077 = vmax.f32 %v2075, %v2076
  %v2078 = vrot.slane %v2077, 1
  %v2079 = vmax.f32 %v2077, %v2078
  %v2080 = vsel %vm726, %v1957, -inf
  %v2081 = vsel %vm726, %v1958, -inf
  %v2082 = vmax.f32 %v2080, %v2081
  %v2083 = vrot.slane %v2082, 4
  %v2084 = vmax.f32 %v2082, %v2083
  %v2085 = vrot.slane %v2084, 2
  %v2086 = vmax.f32 %v2084, %v2085
  %v2087 = vrot.slane %v2086, 1
  %v2088 = vmax.f32 %v2086, %v2087
  %v2089 = vsel %vm726, %v1959, -inf
  %v2090 = vsel %vm726, %v1960, -inf
  %v2091 = vmax.f32 %v2089, %v2090
  %v2092 = vrot.slane %v2091, 4
  %v2093 = vmax.f32 %v2091, %v2092
  %v2094 = vrot.slane %v2093, 2
  %v2095 = vmax.f32 %v2093, %v2094
  %v2096 = vrot.slane %v2095, 1
  %v2097 = vmax.f32 %v2095, %v2096
  %v2098 = vsel %vm726, %v1961, -inf
  %v2099 = vsel %vm726, %v1962, -inf
  %v2100 = vmax.f32 %v2098, %v2099
  %v2101 = vrot.slane %v2100, 4
  %v2102 = vmax.f32 %v2100, %v2101
  %v2103 = vrot.slane %v2102, 2
  %v2104 = vmax.f32 %v2102, %v2103
  %v2105 = vrot.slane %v2104, 1
  %v2106 = vmax.f32 %v2104, %v2105
  %vm2123 = vcmask 1041409
  %v2124 = vsel %vm2123, %v740, %v733
  %vm2125 = vcmask 1042434
  %v2126 = vsel %vm2125, %v747, %v2124
  %vm2127 = vcmask 1043459
  %v2128 = vsel %vm2127, %v754, %v2126
  %vm2129 = vcmask 1044484
  %v2130 = vsel %vm2129, %v761, %v2128
  %vm2131 = vcmask 1045509
  %v2132 = vsel %vm2131, %v768, %v2130
  %vm2133 = vcmask 1046534
  %v2134 = vsel %vm2133, %v775, %v2132
  %vm2135 = vcmask 1047559
  %v2136 = vsel %vm2135, %v782, %v2134
  %v2137 = vsel %vm2123, %v796, %v789
  %v2138 = vsel %vm2125, %v803, %v2137
  %v2139 = vsel %vm2127, %v810, %v2138
  %v2140 = vsel %vm2129, %v817, %v2139
  %v2141 = vsel %vm2131, %v824, %v2140
  %v2142 = vsel %vm2133, %v831, %v2141
  %v2143 = vsel %vm2135, %v838, %v2142
  %v2162 = vsel %vm2123, %v1980, %v1971
  %v2163 = vsel %vm2125, %v1989, %v2162
  %v2164 = vsel %vm2127, %v1998, %v2163
  %v2165 = vsel %vm2129, %v2007, %v2164
  %v2166 = vsel %vm2131, %v2016, %v2165
  %v2167 = vsel %vm2133, %v2025, %v2166
  %v2168 = vsel %vm2135, %v2034, %v2167
  %v2169 = vsel %vm2123, %v2052, %v2043
  %v2170 = vsel %vm2125, %v2061, %v2169
  %v2171 = vsel %vm2127, %v2070, %v2170
  %v2172 = vsel %vm2129, %v2079, %v2171
  %v2173 = vsel %vm2131, %v2088, %v2172
  %v2174 = vsel %vm2133, %v2097, %v2173
  %v2175 = vsel %vm2135, %v2106, %v2174
  %2176 = vrot.lane.b32.xlu0 %v2168, 32
  %v2177 = vpop.permute.xlu0 %2176
  %2178 = vrot.lane.b32.xlu0 %v2175, 32
  %v2179 = vpop.permute.xlu0 %2178
  %v2182 = vsel %vm726, %v2136, %v2177
  %v2183 = vsel %vm726, %v2143, %v2179
  %vm2184 = vcmask 523264
  %2185 = vst.msk [vmem:[%s14] sm:$0xff] %vm2184, %v2182
  %2186 = vst.msk [vmem:[%s14 + $0x8] sm:$0xff] %vm2184, %v2183
  // Predicated region
  $region58: #{_lambda_.5} parent=0 // pred_check
    _
  $region59: #{_lambda_.5} parent=0 // pred_check_branch
    %2188 = sbr.rel (0) target = $region61
  $region60: #{_lambda_.5} parent=0 // pred_region
    _
  $region61: #{_lambda_.5} parent=0 // pred_fallthru
    _
  // Predicated region
  $region62: #{_lambda_.5} parent=0 // pred_check
    _
  $region63: #{_lambda_.5} parent=0 // pred_check_branch
    %2190 = sbr.rel (0) target = $region65
  $region64: #{_lambda_.5} parent=0 // pred_region
    _
  $region65: #{_lambda_.5} parent=0 // pred_fallthru
    _

// kernel: _lambda_.7
$region0: #{_lambda_.7}
  #allocation0 [shape = 'u32[]', space=smem, size = 0x4, offset = 0x4, fixed_abs, tag = 'smem constant byte address 0x4 - core index']
  #allocation1 [shape = 'u32[144,128]{1,0:T(1,128)}', space=vmem, size = 0x12000, scoped, tag = 'internal scratch']
  %s0 = inlined_call_operand.vmem [shape: f32[64,33], index: 0, kind: input, shape index: {}]
  %s1 = inlined_call_operand.vmem [shape: f32[33,32], index: 1, kind: input, shape index: {}]
  %s2 = inlined_call_operand.vmem [shape: f32[1,32], index: 2, kind: input, shape index: {}]
  %s3 = inlined_call_operand.vmem [shape: f32[32,32], index: 3, kind: input, shape index: {}]
  %s4 = inlined_call_operand.vmem [shape: f32[1,32], index: 4, kind: input, shape index: {}]
  %s5 = inlined_call_operand.vmem [shape: f32[64,32], index: 5, kind: output, shape index: {}]
  %s6 = sld [smem:[#allocation0]]
  $region30: #{_lambda_.7} parent=0
    _
  %s8 = ssub.s32 1, %s6
  %s9 = scalar_select 0, %s8, %s6
  // Predicated region
  $region2: #{_lambda_.7} parent=0 // pred_check
    _
  $region3: #{_lambda_.7} parent=0 // pred_check_branch
    %11 = sbr.rel (0) target = $region5
  $region4: #{_lambda_.7} parent=0 // pred_region
    _
  $region5: #{_lambda_.7} parent=0 // pred_fallthru
    _
  // Predicated region
  $region6: #{_lambda_.7} parent=0 // pred_check
    _
  $region7: #{_lambda_.7} parent=0 // pred_check_branch
    %13 = sbr.rel (0) target = $region9
  $region8: #{_lambda_.7} parent=0 // pred_region
    _
  $region9: #{_lambda_.7} parent=0 // pred_fallthru
    _
  // Predicated region
  $region10: #{_lambda_.7} parent=0 // pred_check
    _
  $region11: #{_lambda_.7} parent=0 // pred_check_branch
    %15 = sbr.rel (0) target = $region13
  $region12: #{_lambda_.7} parent=0 // pred_region
    _
  $region13: #{_lambda_.7} parent=0 // pred_fallthru
    _
  // Predicated region
  $region14: #{_lambda_.7} parent=0 // pred_check
    _
  $region15: #{_lambda_.7} parent=0 // pred_check_branch
    %17 = sbr.rel (0) target = $region17
  $region16: #{_lambda_.7} parent=0 // pred_region
    _
  $region17: #{_lambda_.7} parent=0 // pred_fallthru
    _
  // Predicated region
  $region18: #{_lambda_.7} parent=0 // pred_check
    _
  $region19: #{_lambda_.7} parent=0 // pred_check_branch
    %19 = sbr.rel (0) target = $region21
  $region20: #{_lambda_.7} parent=0 // pred_region
    _
  $region21: #{_lambda_.7} parent=0 // pred_fallthru
    _
  %v20 = vld [vmem:[%s0] sm:$0xff]
  %v21 = vld [vmem:[%s0 + $0x8] sm:$0xff]
  %v22 = vld [vmem:[%s0 + $0x10] sm:$0xff]
  %v23 = vld [vmem:[%s0 + $0x18] sm:$0xff]
  %v24 = vld [vmem:[%s0 + $0x20] sm:$0xff]
  %v25 = vld [vmem:[%s0 + $0x28] sm:$0xff]
  %v26 = vld [vmem:[%s0 + $0x30] sm:$0xff]
  %v27 = vld [vmem:[%s0 + $0x38] sm:$0xff]
  %v28 = vld [vmem:[%s1] sm:$0xff]
  %v29 = vld [vmem:[%s1 + $0x8] sm:$0xff]
  %v30 = vld [vmem:[%s1 + $0x10] sm:$0xff]
  %v31 = vld [vmem:[%s1 + $0x18] sm:$0xff]
  %v32 = vld [vmem:[%s1 + $0x20] sm:$0x1]
  %v33 = vld [vmem:[%s2] sm:$0x1]
  %v35 = vlaneseq
  %v36 = vshrl.u32 %v35, 7
  %v37 = vsub.s32 0, %v36
  %v38 = vrot.slane %v33, %v37
  %vm40 = vcmask 269312
  %v42 = vsel %vm40, %v20, 0
  %v45 = vsel %vm40, %v21, 0
  %v48 = vsel %vm40, %v22, 0
  %v51 = vsel %vm40, %v23, 0
  %v54 = vsel %vm40, %v24, 0
  %v57 = vsel %vm40, %v25, 0
  %v60 = vsel %vm40, %v26, 0
  %v63 = vsel %vm40, %v27, 0
  %vm65 = vcmask 1040384
  %v67 = vsel %vm65, %v32, 0
  %69 = vmatprep.subr.mxu0 0.0
  %70 = vmatpush1.msra.mxu0 %v28
  %71 = vmatprep.subr.mxu0 0.0
  %72 = vmatpush1.msra.mxu0 %v29
  %73 = vmatprep.subr.mxu0 0.0
  %74 = vmatpush1.msra.mxu0 %v30
  %75 = vmatprep.subr.mxu0 0.0
  %76 = vmatpush1.msra.mxu0 %v31
  %77 = vmatprep.subr.mxu0 0.0
  %78 = vmatpush1.msra.mxu0 %v67
  %79 = vmatprep.subr.mxu0 0.0
  %80 = vmatpush1.msra.mxu0 0.0
  %81 = vmatprep.subr.mxu0 0.0
  %82 = vmatpush1.msra.mxu0 0.0
  %83 = vmatprep.subr.mxu0 0.0
  %84 = vmatpush1.msra.mxu0 0.0
  %85 = vmatprep.subr.mxu0 0.0
  %86 = vmatpush1.msra.mxu0 0.0
  %87 = vmatprep.subr.mxu0 0.0
  %88 = vmatpush1.msra.mxu0 0.0
  %89 = vmatprep.subr.mxu0 0.0
  %90 = vmatpush1.msra.mxu0 0.0
  %91 = vmatprep.subr.mxu0 0.0
  %92 = vmatpush1.msra.mxu0 0.0
  %93 = vmatprep.subr.mxu0 0.0
  %94 = vmatpush1.msra.mxu0 0.0
  %95 = vmatprep.subr.mxu0 0.0
  %96 = vmatpush1.msra.mxu0 0.0
  %97 = vmatprep.subr.mxu0 0.0
  %98 = vmatpush1.msra.mxu0 0.0
  %99 = vmatprep.subr.mxu0 0.0
  %100 = vmatpush1.msra.mxu0 0.0
  %101 = vmatprep.subr.mxu0 0.0
  %102 = vmatpush1.msra.mxu0 0.0
  %103 = vmatprep.subr.mxu0 0.0
  %104 = vmatpush1.msra.mxu0 0.0
  %105 = vmatprep.subr.mxu0 0.0
  %106 = vmatpush1.msra.mxu0 0.0
  %107 = vmatprep.subr.mxu0 0.0
  %108 = vmatpush1.msra.mxu0 0.0
  %109 = vmatprep.subr.mxu0 0.0
  %110 = vmatpush1.msra.mxu0 0.0
  %111 = vmatprep.subr.mxu0 0.0
  %112 = vmatpush1.msra.mxu0 0.0
  %113 = vmatprep.subr.mxu0 0.0
  %114 = vmatpush1.msra.mxu0 0.0
  %115 = vmatprep.subr.mxu0 0.0
  %116 = vmatpush1.msra.mxu0 0.0
  %117 = vmatprep.subr.mxu0 0.0
  %118 = vmatpush1.msra.mxu0 0.0
  %119 = vmatprep.subr.mxu0 0.0
  %120 = vmatpush1.msra.mxu0 0.0
  %121 = vmatprep.subr.mxu0 0.0
  %122 = vmatpush1.msra.mxu0 0.0
  %123 = vmatprep.subr.mxu0 0.0
  %124 = vmatpush1.msra.mxu0 0.0
  %125 = vmatprep.subr.mxu0 0.0
  %126 = vmatpush1.msra.mxu0 0.0
  %127 = vmatprep.subr.mxu0 0.0
  %128 = vmatpush1.msra.mxu0 0.0
  %129 = vmatprep.subr.mxu0 0.0
  %130 = vmatpush1.msra.mxu0 0.0
  %131 = vmatprep.subr.mxu0 0.0
  %132 = vmatpush1.msra.mxu0 0.0
  %133 = vmatprep.mubr.f32.mxu0 0.0
  %134 = vmatmul.mubr.f32.gmra.mrb[0].mxu0 %v42
  %v135 = vpop.f32.mrb[0].mxu0
  %v136 = vadd.f32 %v38, %v135
  %v137 = vpop.f32.mrb[0].mxu0
  %138 = vmatprep.mubr.f32.mxu0 0.0
  %139 = vmatmul.mubr.f32.gmra.mrb[0].mxu0 %v45
  %v140 = vpop.f32.mrb[0].mxu0
  %v141 = vadd.f32 %v38, %v140
  %v142 = vpop.f32.mrb[0].mxu0
  %143 = vmatprep.mubr.f32.mxu0 0.0
  %144 = vmatmul.mubr.f32.gmra.mrb[0].mxu0 %v48
  %v145 = vpop.f32.mrb[0].mxu0
  %v146 = vadd.f32 %v38, %v145
  %v147 = vpop.f32.mrb[0].mxu0
  %148 = vmatprep.mubr.f32.mxu0 0.0
  %149 = vmatmul.mubr.f32.gmra.mrb[0].mxu0 %v51
  %v150 = vpop.f32.mrb[0].mxu0
  %v151 = vadd.f32 %v38, %v150
  %v152 = vpop.f32.mrb[0].mxu0
  %153 = vmatprep.mubr.f32.mxu0 0.0
  %154 = vmatmul.mubr.f32.gmra.mrb[0].mxu0 %v54
  %v155 = vpop.f32.mrb[0].mxu0
  %v156 = vadd.f32 %v38, %v155
  %v157 = vpop.f32.mrb[0].mxu0
  %158 = vmatprep.mubr.f32.mxu0 0.0
  %159 = vmatmul.mubr.f32.gmra.mrb[0].mxu0 %v57
  %v160 = vpop.f32.mrb[0].mxu0
  %v161 = vadd.f32 %v38, %v160
  %v162 = vpop.f32.mrb[0].mxu0
  %163 = vmatprep.mubr.f32.mxu0 0.0
  %164 = vmatmul.mubr.f32.gmra.mrb[0].mxu0 %v60
  %v165 = vpop.f32.mrb[0].mxu0
  %v166 = vadd.f32 %v38, %v165
  %v167 = vpop.f32.mrb[0].mxu0
  %168 = vmatprep.mubr.f32.mxu0 0.0
  %169 = vmatmul.mubr.f32.gmra.mrb[0].mxu0 %v63
  %v170 = vpop.f32.mrb[0].mxu0
  %v171 = vadd.f32 %v38, %v170
  %v172 = vpop.f32.mrb[0].mxu0
  %173 = vdwg.mxu0
  %v174 = vmax.f32 %v136, 0.0
  %v175 = vmax.f32 %v141, 0.0
  %v176 = vmax.f32 %v146, 0.0
  %v177 = vmax.f32 %v151, 0.0
  %v178 = vmax.f32 %v156, 0.0
  %v179 = vmax.f32 %v161, 0.0
  %v180 = vmax.f32 %v166, 0.0
  %v181 = vmax.f32 %v171, 0.0
  %v182 = vld [vmem:[%s3] sm:$0xff]
  %v183 = vld [vmem:[%s3 + $0x8] sm:$0xff]
  %v184 = vld [vmem:[%s3 + $0x10] sm:$0xff]
  %v185 = vld [vmem:[%s3 + $0x18] sm:$0xff]
  %v186 = vld [vmem:[%s4] sm:$0x1]
  %v188 = vlaneseq
  %v189 = vshrl.u32 %v188, 7
  %v190 = vsub.s32 0, %v189
  %v191 = vrot.slane %v186, %v190
  %vm193 = vcmask 261120
  %v195 = vsel %vm193, %v174, 0
  %v198 = vsel %vm193, %v175, 0
  %v201 = vsel %vm193, %v176, 0
  %v204 = vsel %vm193, %v177, 0
  %v207 = vsel %vm193, %v178, 0
  %v210 = vsel %vm193, %v179, 0
  %v213 = vsel %vm193, %v180, 0
  %v216 = vsel %vm193, %v181, 0
  %218 = vmatprep.subr.mxu0 0.0
  %219 = vmatpush1.msra.mxu0 %v182
  %220 = vmatprep.subr.mxu0 0.0
  %221 = vmatpush1.msra.mxu0 %v183
  %222 = vmatprep.subr.mxu0 0.0
  %223 = vmatpush1.msra.mxu0 %v184
  %224 = vmatprep.subr.mxu0 0.0
  %225 = vmatpush1.msra.mxu0 %v185
  %226 = vmatprep.subr.mxu0 0.0
  %227 = vmatpush1.msra.mxu0 0.0
  %228 = vmatprep.subr.mxu0 0.0
  %229 = vmatpush1.msra.mxu0 0.0
  %230 = vmatprep.subr.mxu0 0.0
  %231 = vmatpush1.msra.mxu0 0.0
  %232 = vmatprep.subr.mxu0 0.0
  %233 = vmatpush1.msra.mxu0 0.0
  %234 = vmatprep.subr.mxu0 0.0
  %235 = vmatpush1.msra.mxu0 0.0
  %236 = vmatprep.subr.mxu0 0.0
  %237 = vmatpush1.msra.mxu0 0.0
  %238 = vmatprep.subr.mxu0 0.0
  %239 = vmatpush1.msra.mxu0 0.0
  %240 = vmatprep.subr.mxu0 0.0
  %241 = vmatpush1.msra.mxu0 0.0
  %242 = vmatprep.subr.mxu0 0.0
  %243 = vmatpush1.msra.mxu0 0.0
  %244 = vmatprep.subr.mxu0 0.0
  %245 = vmatpush1.msra.mxu0 0.0
  %246 = vmatprep.subr.mxu0 0.0
  %247 = vmatpush1.msra.mxu0 0.0
  %248 = vmatprep.subr.mxu0 0.0
  %249 = vmatpush1.msra.mxu0 0.0
  %250 = vmatprep.subr.mxu0 0.0
  %251 = vmatpush1.msra.mxu0 0.0
  %252 = vmatprep.subr.mxu0 0.0
  %253 = vmatpush1.msra.mxu0 0.0
  %254 = vmatprep.subr.mxu0 0.0
  %255 = vmatpush1.msra.mxu0 0.0
  %256 = vmatprep.subr.mxu0 0.0
  %257 = vmatpush1.msra.mxu0 0.0
  %258 = vmatprep.subr.mxu0 0.0
  %259 = vmatpush1.msra.mxu0 0.0
  %260 = vmatprep.subr.mxu0 0.0
  %261 = vmatpush1.msra.mxu0 0.0
  %262 = vmatprep.subr.mxu0 0.0
  %263 = vmatpush1.msra.mxu0 0.0
  %264 = vmatprep.subr.mxu0 0.0
  %265 = vmatpush1.msra.mxu0 0.0
  %266 = vmatprep.subr.mxu0 0.0
  %267 = vmatpush1.msra.mxu0 0.0
  %268 = vmatprep.subr.mxu0 0.0
  %269 = vmatpush1.msra.mxu0 0.0
  %270 = vmatprep.subr.mxu0 0.0
  %271 = vmatpush1.msra.mxu0 0.0
  %272 = vmatprep.subr.mxu0 0.0
  %273 = vmatpush1.msra.mxu0 0.0
  %274 = vmatprep.subr.mxu0 0.0
  %275 = vmatpush1.msra.mxu0 0.0
  %276 = vmatprep.subr.mxu0 0.0
  %277 = vmatpush1.msra.mxu0 0.0
  %278 = vmatprep.subr.mxu0 0.0
  %279 = vmatpush1.msra.mxu0 0.0
  %280 = vmatprep.subr.mxu0 0.0
  %281 = vmatpush1.msra.mxu0 0.0
  %282 = vmatprep.mubr.f32.mxu0 0.0
  %283 = vmatmul.mubr.f32.gmra.mrb[0].mxu0 %v195
  %v284 = vpop.f32.mrb[0].mxu0
  %v285 = vadd.f32 %v191, %v284
  %v286 = vpop.f32.mrb[0].mxu0
  %287 = vmatprep.mubr.f32.mxu0 0.0
  %288 = vmatmul.mubr.f32.gmra.mrb[0].mxu0 %v198
  %v289 = vpop.f32.mrb[0].mxu0
  %v290 = vadd.f32 %v191, %v289
  %v291 = vpop.f32.mrb[0].mxu0
  %292 = vmatprep.mubr.f32.mxu0 0.0
  %293 = vmatmul.mubr.f32.gmra.mrb[0].mxu0 %v201
  %v294 = vpop.f32.mrb[0].mxu0
  %v295 = vadd.f32 %v191, %v294
  %v296 = vpop.f32.mrb[0].mxu0
  %297 = vmatprep.mubr.f32.mxu0 0.0
  %298 = vmatmul.mubr.f32.gmra.mrb[0].mxu0 %v204
  %v299 = vpop.f32.mrb[0].mxu0
  %v300 = vadd.f32 %v191, %v299
  %v301 = vpop.f32.mrb[0].mxu0
  %302 = vmatprep.mubr.f32.mxu0 0.0
  %303 = vmatmul.mubr.f32.gmra.mrb[0].mxu0 %v207
  %v304 = vpop.f32.mrb[0].mxu0
  %v305 = vadd.f32 %v191, %v304
  %v306 = vpop.f32.mrb[0].mxu0
  %307 = vmatprep.mubr.f32.mxu0 0.0
  %308 = vmatmul.mubr.f32.gmra.mrb[0].mxu0 %v210
  %v309 = vpop.f32.mrb[0].mxu0
  %v310 = vadd.f32 %v191, %v309
  %v311 = vpop.f32.mrb[0].mxu0
  %312 = vmatprep.mubr.f32.mxu0 0.0
  %313 = vmatmul.mubr.f32.gmra.mrb[0].mxu0 %v213
  %v314 = vpop.f32.mrb[0].mxu0
  %v315 = vadd.f32 %v191, %v314
  %v316 = vpop.f32.mrb[0].mxu0
  %317 = vmatprep.mubr.f32.mxu0 0.0
  %318 = vmatmul.mubr.f32.gmra.mrb[0].mxu0 %v216
  %v319 = vpop.f32.mrb[0].mxu0
  %v320 = vadd.f32 %v191, %v319
  %v321 = vpop.f32.mrb[0].mxu0
  %322 = vdwg.mxu0
  %v323 = vmax.f32 %v285, 0.0
  %v324 = vmax.f32 %v290, 0.0
  %v325 = vmax.f32 %v295, 0.0
  %v326 = vmax.f32 %v300, 0.0
  %v327 = vmax.f32 %v305, 0.0
  %v328 = vmax.f32 %v310, 0.0
  %v329 = vmax.f32 %v315, 0.0
  %v330 = vmax.f32 %v320, 0.0
  %331 = vst.msk [vmem:[%s5] sm:$0xff] %vm193, %v323
  %332 = vst.msk [vmem:[%s5 + $0x8] sm:$0xff] %vm193, %v324
  %333 = vst.msk [vmem:[%s5 + $0x10] sm:$0xff] %vm193, %v325
  %334 = vst.msk [vmem:[%s5 + $0x18] sm:$0xff] %vm193, %v326
  %335 = vst.msk [vmem:[%s5 + $0x20] sm:$0xff] %vm193, %v327
  %336 = vst.msk [vmem:[%s5 + $0x28] sm:$0xff] %vm193, %v328
  %337 = vst.msk [vmem:[%s5 + $0x30] sm:$0xff] %vm193, %v329
  %338 = vst.msk [vmem:[%s5 + $0x38] sm:$0xff] %vm193, %v330
  // Predicated region
  $region22: #{_lambda_.7} parent=0 // pred_check
    _
  $region23: #{_lambda_.7} parent=0 // pred_check_branch
    %340 = sbr.rel (0) target = $region25
  $region24: #{_lambda_.7} parent=0 // pred_region
    _
  $region25: #{_lambda_.7} parent=0 // pred_fallthru
    _
  // Predicated region
  $region26: #{_lambda_.7} parent=0 // pred_check
    _
  $region27: #{_lambda_.7} parent=0 // pred_check_branch
    %342 = sbr.rel (0) target = $region29
  $region28: #{_lambda_.7} parent=0 // pred_region
    _
  $region29: #{_lambda_.7} parent=0 // pred_fallthru
    _

</llo_original>
